<compile_context>
chip_gen: v5e
topology: v5e:2x2
jax: 0.10.0
libtpu: 0.0.40
codegen_flags: <defaults>
</compile_context>

<pallas_src>
import jax
import jax.numpy as jnp
from jax import lax
from jax.experimental import pallas as pl
from jax.experimental.pallas import tpu as pltpu


W_MULT = 0.5
MATRIX_SIZE = 32
C_IN = 232
C_IN_PAD = 256            # pad channels to a multiple of 128 lanes
C1 = int(128 * W_MULT)    # 64
C2 = int(64 * W_MULT)     # 32
EPS = 1e-5
LPAD = 8                  # left halo width in VMEM scratches (sublane-aligned interior)


# ----------------------------------------------------------------------------
# Kernel 1: fused conv1+BN+ReLU -> conv2+BN+ReLU -> conv3 -> Gram
# Single grid step; all intermediates live in VMEM scratch.
# ----------------------------------------------------------------------------
def _fused_convs_gram_kernel(x_ref, w1_ref, b1_ref, w2_ref, b2_ref, w3_ref, b3_ref,
                             g_ref, pad1_ref, pad2_ref):
    B, Hp, Wp, _ = x_ref.shape
    H, W = Hp - 2, Wp - 2
    M = B * H * W

    def conv3x3(src_ref, w_ref, b_ref, col0, relu):
        # src_ref: (B, H+2, *, Cin) zero-haloed; tap dx reads cols [col0+dx, col0+dx+W).
        # 9 shifted (M, Cin) x (Cin, Cout) MXU matmuls accumulated in a local f32.
        acc = None
        for dy in range(3):
            for dx in range(3):
                patch = src_ref[:, dy:dy + H, col0 + dx:col0 + dx + W, :]
                patch = patch.reshape(M, patch.shape[-1]).astype(w_ref.dtype)
                tap = jnp.dot(patch, w_ref[dy, dx],
                              preferred_element_type=jnp.float32)
                acc = tap if acc is None else acc + tap
        acc = acc + b_ref[...]          # folded BN bias (or plain conv bias)
        if relu:
            acc = jnp.maximum(acc, 0.0)
        return acc                      # (M, Cout) f32

    # conv1 (BN scale pre-folded into w1) + ReLU
    a1 = conv3x3(x_ref, w1_ref, b1_ref, 0, True)                 # (M, C1)

    # place conv1 output into a zero-haloed VMEM scratch; interior starts at
    # sublane column LPAD (=8) so the store is tile-aligned.
    pad1_ref[...] = jnp.zeros_like(pad1_ref)
    pad1_ref[:, 1:1 + H, LPAD:LPAD + W, :] = a1.reshape(B, H, W, a1.shape[-1])

    # conv2 + ReLU
    a2 = conv3x3(pad1_ref, w2_ref, b2_ref, LPAD - 1, True)       # (M, C2)

    pad2_ref[...] = jnp.zeros_like(pad2_ref)
    pad2_ref[:, 1:1 + H, LPAD:LPAD + W, :] = a2.reshape(B, H, W, a2.shape[-1])

    # conv3 (no BN, no ReLU)
    a3 = conv3x3(pad2_ref, w3_ref, b3_ref, LPAD - 1, False)      # (M, C3) f32

    # Gram per batch element: g_b = f_b^T f_b / (H*W), f_b = (H*W, C3)
    inv = 1.0 / float(H * W)
    for b in range(B):
        f = a3[b * H * W:(b + 1) * H * W, :]
        g = lax.dot_general(f, f, (((0,), (0,)), ((), ())),
                            preferred_element_type=jnp.float32)
        g_ref[b] = (g * inv).astype(g_ref.dtype)


def fused_convs_gram(xp, w1, b1, w2, b2, w3, b3):
    # xp: (B, H+2, W+2, C_IN_PAD) f32 (spatially + channel padded)
    B, Hp, Wp, _ = xp.shape
    H, W = Hp - 2, Wp - 2
    c1, c2, c3 = w1.shape[-1], w2.shape[-1], w3.shape[-1]

    def full(shape):
        return pl.BlockSpec(shape, lambda i, _s=shape: (0,) * len(_s))

    return pl.pallas_call(
        _fused_convs_gram_kernel,
        out_shape=jax.ShapeDtypeStruct((B, c3, c3), jnp.float32),
        grid=(1,),
        in_specs=[full(xp.shape), full(w1.shape), full(b1.shape),
                  full(w2.shape), full(b2.shape), full(w3.shape), full(b3.shape)],
        out_specs=full((B, c3, c3)),
        scratch_shapes=[pltpu.VMEM((B, H + 2, W + LPAD + 1, c1), jnp.float32),
                        pltpu.VMEM((B, H + 2, W + LPAD + 1, c2), jnp.float32)],
        compiler_params=pltpu.CompilerParams(
            dimension_semantics=("arbitrary",)),
    )(xp, w1, b1, w2, b2, w3, b3)


# ----------------------------------------------------------------------------
# Kernel 2: fully-connected layer, tiled over the output-N dimension so the
# bf16 weight tiles are double-buffered behind the matmul ("parallel" -> both
# TensorCores on v7x).
# ----------------------------------------------------------------------------
def _fc_kernel(x_ref, w_ref, b_ref, o_ref):
    x = x_ref[...].astype(w_ref.dtype)
    o_ref[...] = (jnp.dot(x, w_ref[...], preferred_element_type=jnp.float32)
                  + b_ref[...])


def fc(x, w, b, *, tn=256):
    # x: (B, K) f32;  w: (K, N) bf16;  b: (N,) f32
    B, K = x.shape
    N = w.shape[-1]
    assert N % tn == 0
    return pl.pallas_call(
        _fc_kernel,
        out_shape=jax.ShapeDtypeStruct((B, N), jnp.float32),
        grid=(N // tn,),
        in_specs=[pl.BlockSpec((B, K), lambda j: (0, 0)),
                  pl.BlockSpec((K, tn), lambda j: (0, j)),
                  pl.BlockSpec((1, tn), lambda j: (0, j))],
        out_specs=pl.BlockSpec((B, tn), lambda j: (0, j)),
        compiler_params=pltpu.CompilerParams(
            dimension_semantics=("parallel",)),
    )(x, w, b.reshape(1, -1))


# ----------------------------------------------------------------------------
# Parameter construction (deterministic, synthetic) + host-side folding
# ----------------------------------------------------------------------------
def make_params(key):
    ks = jax.random.split(key, 16)
    p = {}

    def conv_layer(kw, kb, kg, kbe, km, kv, cin, cout, has_bn):
        w = jax.random.normal(kw, (3, 3, cin, cout), jnp.float32) * 0.05
        conv_b = jax.random.normal(kb, (cout,), jnp.float32) * 0.05
        if has_bn:
            gamma = 1.0 + 0.1 * jax.random.normal(kg, (cout,), jnp.float32)
            beta = 0.1 * jax.random.normal(kbe, (cout,), jnp.float32)
            mean = 0.1 * jax.random.normal(km, (cout,), jnp.float32)
            var = jax.random.uniform(kv, (cout,), jnp.float32, 0.5, 1.5)
            scale = gamma * lax.rsqrt(var + EPS)
            bias = (conv_b - mean) * scale + beta
        else:
            scale = jnp.ones((cout,), jnp.float32)
            bias = conv_b
        return w, scale, bias

    p['w1'], p['s1'], p['b1'] = conv_layer(*ks[0:6], C_IN, C1, True)
    p['w2'], p['s2'], p['b2'] = conv_layer(*ks[6:12], C1, C2, True)
    p['w3'], p['s3'], p['b3'] = conv_layer(ks[12], ks[13], None, None, None, None,
                                           C2, MATRIX_SIZE, False)
    n = MATRIX_SIZE * MATRIX_SIZE
    p['fc_w'] = jax.random.normal(ks[14], (n, n), jnp.float32) * 0.02  # (in, out)
    p['fc_b'] = jax.random.normal(ks[15], (n,), jnp.float32) * 0.02
    return p


def prepare_params(p):
    """Fold BN scale into conv weights, pad Cin to a lane multiple, cast to bf16."""
    kp = {}
    w1 = p['w1'] * p['s1'][None, None, None, :]
    w1 = jnp.pad(w1, ((0, 0), (0, 0), (0, C_IN_PAD - C_IN), (0, 0)))
    kp['w1'] = w1.astype(jnp.bfloat16)
    kp['b1'] = p['b1'].reshape(1, -1)
    kp['w2'] = (p['w2'] * p['s2'][None, None, None, :]).astype(jnp.bfloat16)
    kp['b2'] = p['b2'].reshape(1, -1)
    kp['w3'] = (p['w3'] * p['s3'][None, None, None, :]).astype(jnp.bfloat16)
    kp['b3'] = p['b3'].reshape(1, -1)
    kp['fc_w'] = p['fc_w'].astype(jnp.bfloat16)
    kp['fc_b'] = p['fc_b']
    return kp


@jax.jit
def cnn_forward(x_nchw, kp):
    # x_nchw: (B, 232, H, W) -- PyTorch input convention
    x = jnp.transpose(x_nchw, (0, 2, 3, 1)).astype(jnp.float32)      # NHWC
    B = x.shape[0]
    cin = x.shape[-1]
    # one tiny pad of the input (spatial halo + channel pad 232->256);
    # all later halos are built in VMEM inside the fused kernel.
    xp = jnp.pad(x, ((0, 0), (1, 1), (1, 1), (0, C_IN_PAD - cin)))
    g = fused_convs_gram(xp, kp['w1'], kp['b1'], kp['w2'], kp['b2'],
                         kp['w3'], kp['b3'])                         # (B, 32, 32)
    flat = g.reshape(B, -1)                                          # (B, 1024)
    return fc(flat, kp['fc_w'], kp['fc_b'])                          # (B, 1024)


# TODO(synk): BatchNorm is implemented in eval mode (running stats folded into
# conv weights/bias); train-mode batch statistics are not computed.

if __name__ == "__main__":
    key = jax.random.PRNGKey(0)
    kparam_key, kx = jax.random.split(key)
    params = make_params(kparam_key)
    kparams = prepare_params(params)

    B, H, Wsp = 2, 8, 8
    x = jax.random.normal(kx, (B, C_IN, H, Wsp), dtype=jnp.float32)

    out = cnn_forward(x, kparams)
    out = jax.block_until_ready(out)
    assert out.shape == (B, MATRIX_SIZE * MATRIX_SIZE), out.shape
    assert bool(jnp.all(jnp.isfinite(out)))
    print("KERNEL_OK")
</pallas_src>

<mosaic_0001>
module attributes {stable_mosaic.version = 11 : i64} {
  func.func @_fused_convs_gram_kernel(%arg0: i32, %arg1: memref<2x10x10x256xf32, #tpu.memory_space<vmem>>, %arg2: memref<3x3x256x64xbf16, #tpu.memory_space<vmem>>, %arg3: memref<1x64xf32, #tpu.memory_space<vmem>>, %arg4: memref<3x3x64x32xbf16, #tpu.memory_space<vmem>>, %arg5: memref<1x32xf32, #tpu.memory_space<vmem>>, %arg6: memref<3x3x32x32xbf16, #tpu.memory_space<vmem>>, %arg7: memref<1x32xf32, #tpu.memory_space<vmem>>, %arg8: memref<2x32x32xf32, #tpu.memory_space<vmem>>, %arg9: memref<2x10x17x64xf32, #tpu.memory_space<vmem>>, %arg10: memref<2x10x17x32xf32, #tpu.memory_space<vmem>>) attributes {dimension_semantics = [#tpu.dimension_semantics<arbitrary>], iteration_bounds = array<i64: 1>, scalar_prefetch = 0 : i64, scratch_operands = 2 : i64, tpu.core_type = #tpu.core_type<tc>, window_params = [{pipeline_mode = #tpu.pipeline_mode<synchronous>, transform_indices = @transform_0, window_bounds = array<i64: 2, 10, 10, 256>}, {pipeline_mode = #tpu.pipeline_mode<synchronous>, transform_indices = @transform_1, window_bounds = array<i64: 3, 3, 256, 64>}, {pipeline_mode = #tpu.pipeline_mode<synchronous>, transform_indices = @transform_2, window_bounds = array<i64: 1, 64>}, {pipeline_mode = #tpu.pipeline_mode<synchronous>, transform_indices = @transform_3, window_bounds = array<i64: 3, 3, 64, 32>}, {pipeline_mode = #tpu.pipeline_mode<synchronous>, transform_indices = @transform_4, window_bounds = array<i64: 1, 32>}, {pipeline_mode = #tpu.pipeline_mode<synchronous>, transform_indices = @transform_5, window_bounds = array<i64: 3, 3, 32, 32>}, {pipeline_mode = #tpu.pipeline_mode<synchronous>, transform_indices = @transform_6, window_bounds = array<i64: 1, 32>}, {pipeline_mode = #tpu.pipeline_mode<synchronous>, transform_indices = @transform_7, window_bounds = array<i64: 2, 32, 32>}]} {
    %c0 = arith.constant 0 : index
    %c0_0 = arith.constant 0 : index
    %c0_1 = arith.constant 0 : index
    %c0_2 = arith.constant 0 : index
    %0 = vector.load %arg1[%c0, %c0_0, %c0_1, %c0_2] : memref<2x10x10x256xf32, #tpu.memory_space<vmem>>, vector<2x8x8x256xf32>
    %1 = vector.shape_cast %0 : vector<2x8x8x256xf32> to vector<128x256xf32>
    %2 = arith.truncf %1 : vector<128x256xf32> to vector<128x256xbf16>
    %c0_3 = arith.constant 0 : index
    %c0_4 = arith.constant 0 : index
    %c0_5 = arith.constant 0 : index
    %c0_6 = arith.constant 0 : index
    %3 = vector.load %arg2[%c0_3, %c0_4, %c0_5, %c0_6] : memref<3x3x256x64xbf16, #tpu.memory_space<vmem>>, vector<1x1x256x64xbf16>
    %4 = vector.shape_cast %3 : vector<1x1x256x64xbf16> to vector<256x64xbf16>
    %cst = arith.constant dense<0.000000e+00> : vector<128x64xf32>
    %5 = tpu.matmul %2, %4, %cst {dimension_numbers = #tpu.dot_dimension_numbers<[1], [0], [0], [1], [0, 0, 1, 1], [], []>} : vector<128x256xbf16>, vector<256x64xbf16>, vector<128x64xf32> -> vector<128x64xf32>
    %c0_7 = arith.constant 0 : index
    %c0_8 = arith.constant 0 : index
    %c1 = arith.constant 1 : index
    %c0_9 = arith.constant 0 : index
    %6 = vector.load %arg1[%c0_7, %c0_8, %c1, %c0_9] : memref<2x10x10x256xf32, #tpu.memory_space<vmem>>, vector<2x8x8x256xf32>
    %7 = vector.shape_cast %6 : vector<2x8x8x256xf32> to vector<128x256xf32>
    %8 = arith.truncf %7 : vector<128x256xf32> to vector<128x256xbf16>
    %c0_10 = arith.constant 0 : index
    %c1_11 = arith.constant 1 : index
    %c0_12 = arith.constant 0 : index
    %c0_13 = arith.constant 0 : index
    %9 = vector.load %arg2[%c0_10, %c1_11, %c0_12, %c0_13] : memref<3x3x256x64xbf16, #tpu.memory_space<vmem>>, vector<1x1x256x64xbf16>
    %10 = vector.shape_cast %9 : vector<1x1x256x64xbf16> to vector<256x64xbf16>
    %cst_14 = arith.constant dense<0.000000e+00> : vector<128x64xf32>
    %11 = tpu.matmul %8, %10, %cst_14 {dimension_numbers = #tpu.dot_dimension_numbers<[1], [0], [0], [1], [0, 0, 1, 1], [], []>} : vector<128x256xbf16>, vector<256x64xbf16>, vector<128x64xf32> -> vector<128x64xf32>
    %12 = arith.addf %5, %11 : vector<128x64xf32>
    %c0_15 = arith.constant 0 : index
    %c0_16 = arith.constant 0 : index
    %c2 = arith.constant 2 : index
    %c0_17 = arith.constant 0 : index
    %13 = vector.load %arg1[%c0_15, %c0_16, %c2, %c0_17] : memref<2x10x10x256xf32, #tpu.memory_space<vmem>>, vector<2x8x8x256xf32>
    %14 = vector.shape_cast %13 : vector<2x8x8x256xf32> to vector<128x256xf32>
    %15 = arith.truncf %14 : vector<128x256xf32> to vector<128x256xbf16>
    %c0_18 = arith.constant 0 : index
    %c2_19 = arith.constant 2 : index
    %c0_20 = arith.constant 0 : index
    %c0_21 = arith.constant 0 : index
    %16 = vector.load %arg2[%c0_18, %c2_19, %c0_20, %c0_21] : memref<3x3x256x64xbf16, #tpu.memory_space<vmem>>, vector<1x1x256x64xbf16>
    %17 = vector.shape_cast %16 : vector<1x1x256x64xbf16> to vector<256x64xbf16>
    %cst_22 = arith.constant dense<0.000000e+00> : vector<128x64xf32>
    %18 = tpu.matmul %15, %17, %cst_22 {dimension_numbers = #tpu.dot_dimension_numbers<[1], [0], [0], [1], [0, 0, 1, 1], [], []>} : vector<128x256xbf16>, vector<256x64xbf16>, vector<128x64xf32> -> vector<128x64xf32>
    %19 = arith.addf %12, %18 : vector<128x64xf32>
    %c0_23 = arith.constant 0 : index
    %c1_24 = arith.constant 1 : index
    %c0_25 = arith.constant 0 : index
    %c0_26 = arith.constant 0 : index
    %20 = vector.load %arg1[%c0_23, %c1_24, %c0_25, %c0_26] : memref<2x10x10x256xf32, #tpu.memory_space<vmem>>, vector<2x8x8x256xf32>
    %21 = vector.shape_cast %20 : vector<2x8x8x256xf32> to vector<128x256xf32>
    %22 = arith.truncf %21 : vector<128x256xf32> to vector<128x256xbf16>
    %c1_27 = arith.constant 1 : index
    %c0_28 = arith.constant 0 : index
    %c0_29 = arith.constant 0 : index
    %c0_30 = arith.constant 0 : index
    %23 = vector.load %arg2[%c1_27, %c0_28, %c0_29, %c0_30] : memref<3x3x256x64xbf16, #tpu.memory_space<vmem>>, vector<1x1x256x64xbf16>
    %24 = vector.shape_cast %23 : vector<1x1x256x64xbf16> to vector<256x64xbf16>
    %cst_31 = arith.constant dense<0.000000e+00> : vector<128x64xf32>
    %25 = tpu.matmul %22, %24, %cst_31 {dimension_numbers = #tpu.dot_dimension_numbers<[1], [0], [0], [1], [0, 0, 1, 1], [], []>} : vector<128x256xbf16>, vector<256x64xbf16>, vector<128x64xf32> -> vector<128x64xf32>
    %26 = arith.addf %19, %25 : vector<128x64xf32>
    %c0_32 = arith.constant 0 : index
    %c1_33 = arith.constant 1 : index
    %c1_34 = arith.constant 1 : index
    %c0_35 = arith.constant 0 : index
    %27 = vector.load %arg1[%c0_32, %c1_33, %c1_34, %c0_35] : memref<2x10x10x256xf32, #tpu.memory_space<vmem>>, vector<2x8x8x256xf32>
    %28 = vector.shape_cast %27 : vector<2x8x8x256xf32> to vector<128x256xf32>
    %29 = arith.truncf %28 : vector<128x256xf32> to vector<128x256xbf16>
    %c1_36 = arith.constant 1 : index
    %c1_37 = arith.constant 1 : index
    %c0_38 = arith.constant 0 : index
    %c0_39 = arith.constant 0 : index
    %30 = vector.load %arg2[%c1_36, %c1_37, %c0_38, %c0_39] : memref<3x3x256x64xbf16, #tpu.memory_space<vmem>>, vector<1x1x256x64xbf16>
    %31 = vector.shape_cast %30 : vector<1x1x256x64xbf16> to vector<256x64xbf16>
    %cst_40 = arith.constant dense<0.000000e+00> : vector<128x64xf32>
    %32 = tpu.matmul %29, %31, %cst_40 {dimension_numbers = #tpu.dot_dimension_numbers<[1], [0], [0], [1], [0, 0, 1, 1], [], []>} : vector<128x256xbf16>, vector<256x64xbf16>, vector<128x64xf32> -> vector<128x64xf32>
    %33 = arith.addf %26, %32 : vector<128x64xf32>
    %c0_41 = arith.constant 0 : index
    %c1_42 = arith.constant 1 : index
    %c2_43 = arith.constant 2 : index
    %c0_44 = arith.constant 0 : index
    %34 = vector.load %arg1[%c0_41, %c1_42, %c2_43, %c0_44] : memref<2x10x10x256xf32, #tpu.memory_space<vmem>>, vector<2x8x8x256xf32>
    %35 = vector.shape_cast %34 : vector<2x8x8x256xf32> to vector<128x256xf32>
    %36 = arith.truncf %35 : vector<128x256xf32> to vector<128x256xbf16>
    %c1_45 = arith.constant 1 : index
    %c2_46 = arith.constant 2 : index
    %c0_47 = arith.constant 0 : index
    %c0_48 = arith.constant 0 : index
    %37 = vector.load %arg2[%c1_45, %c2_46, %c0_47, %c0_48] : memref<3x3x256x64xbf16, #tpu.memory_space<vmem>>, vector<1x1x256x64xbf16>
    %38 = vector.shape_cast %37 : vector<1x1x256x64xbf16> to vector<256x64xbf16>
    %cst_49 = arith.constant dense<0.000000e+00> : vector<128x64xf32>
    %39 = tpu.matmul %36, %38, %cst_49 {dimension_numbers = #tpu.dot_dimension_numbers<[1], [0], [0], [1], [0, 0, 1, 1], [], []>} : vector<128x256xbf16>, vector<256x64xbf16>, vector<128x64xf32> -> vector<128x64xf32>
    %40 = arith.addf %33, %39 : vector<128x64xf32>
    %c0_50 = arith.constant 0 : index
    %c2_51 = arith.constant 2 : index
    %c0_52 = arith.constant 0 : index
    %c0_53 = arith.constant 0 : index
    %41 = vector.load %arg1[%c0_50, %c2_51, %c0_52, %c0_53] : memref<2x10x10x256xf32, #tpu.memory_space<vmem>>, vector<2x8x8x256xf32>
    %42 = vector.shape_cast %41 : vector<2x8x8x256xf32> to vector<128x256xf32>
    %43 = arith.truncf %42 : vector<128x256xf32> to vector<128x256xbf16>
    %c2_54 = arith.constant 2 : index
    %c0_55 = arith.constant 0 : index
    %c0_56 = arith.constant 0 : index
    %c0_57 = arith.constant 0 : index
    %44 = vector.load %arg2[%c2_54, %c0_55, %c0_56, %c0_57] : memref<3x3x256x64xbf16, #tpu.memory_space<vmem>>, vector<1x1x256x64xbf16>
    %45 = vector.shape_cast %44 : vector<1x1x256x64xbf16> to vector<256x64xbf16>
    %cst_58 = arith.constant dense<0.000000e+00> : vector<128x64xf32>
    %46 = tpu.matmul %43, %45, %cst_58 {dimension_numbers = #tpu.dot_dimension_numbers<[1], [0], [0], [1], [0, 0, 1, 1], [], []>} : vector<128x256xbf16>, vector<256x64xbf16>, vector<128x64xf32> -> vector<128x64xf32>
    %47 = arith.addf %40, %46 : vector<128x64xf32>
    %c0_59 = arith.constant 0 : index
    %c2_60 = arith.constant 2 : index
    %c1_61 = arith.constant 1 : index
    %c0_62 = arith.constant 0 : index
    %48 = vector.load %arg1[%c0_59, %c2_60, %c1_61, %c0_62] : memref<2x10x10x256xf32, #tpu.memory_space<vmem>>, vector<2x8x8x256xf32>
    %49 = vector.shape_cast %48 : vector<2x8x8x256xf32> to vector<128x256xf32>
    %50 = arith.truncf %49 : vector<128x256xf32> to vector<128x256xbf16>
    %c2_63 = arith.constant 2 : index
    %c1_64 = arith.constant 1 : index
    %c0_65 = arith.constant 0 : index
    %c0_66 = arith.constant 0 : index
    %51 = vector.load %arg2[%c2_63, %c1_64, %c0_65, %c0_66] : memref<3x3x256x64xbf16, #tpu.memory_space<vmem>>, vector<1x1x256x64xbf16>
    %52 = vector.shape_cast %51 : vector<1x1x256x64xbf16> to vector<256x64xbf16>
    %cst_67 = arith.constant dense<0.000000e+00> : vector<128x64xf32>
    %53 = tpu.matmul %50, %52, %cst_67 {dimension_numbers = #tpu.dot_dimension_numbers<[1], [0], [0], [1], [0, 0, 1, 1], [], []>} : vector<128x256xbf16>, vector<256x64xbf16>, vector<128x64xf32> -> vector<128x64xf32>
    %54 = arith.addf %47, %53 : vector<128x64xf32>
    %c0_68 = arith.constant 0 : index
    %c2_69 = arith.constant 2 : index
    %c2_70 = arith.constant 2 : index
    %c0_71 = arith.constant 0 : index
    %55 = vector.load %arg1[%c0_68, %c2_69, %c2_70, %c0_71] : memref<2x10x10x256xf32, #tpu.memory_space<vmem>>, vector<2x8x8x256xf32>
    %56 = vector.shape_cast %55 : vector<2x8x8x256xf32> to vector<128x256xf32>
    %57 = arith.truncf %56 : vector<128x256xf32> to vector<128x256xbf16>
    %c2_72 = arith.constant 2 : index
    %c2_73 = arith.constant 2 : index
    %c0_74 = arith.constant 0 : index
    %c0_75 = arith.constant 0 : index
    %58 = vector.load %arg2[%c2_72, %c2_73, %c0_74, %c0_75] : memref<3x3x256x64xbf16, #tpu.memory_space<vmem>>, vector<1x1x256x64xbf16>
    %59 = vector.shape_cast %58 : vector<1x1x256x64xbf16> to vector<256x64xbf16>
    %cst_76 = arith.constant dense<0.000000e+00> : vector<128x64xf32>
    %60 = tpu.matmul %57, %59, %cst_76 {dimension_numbers = #tpu.dot_dimension_numbers<[1], [0], [0], [1], [0, 0, 1, 1], [], []>} : vector<128x256xbf16>, vector<256x64xbf16>, vector<128x64xf32> -> vector<128x64xf32>
    %61 = arith.addf %54, %60 : vector<128x64xf32>
    %c0_77 = arith.constant 0 : index
    %c0_78 = arith.constant 0 : index
    %62 = vector.load %arg3[%c0_77, %c0_78] : memref<1x64xf32, #tpu.memory_space<vmem>>, vector<1x64xf32>
    %63 = vector.broadcast %62 : vector<1x64xf32> to vector<128x64xf32>
    %64 = arith.addf %61, %63 : vector<128x64xf32>
    %cst_79 = arith.constant 0.000000e+00 : f32
    %65 = vector.broadcast %cst_79 : f32 to vector<128x64xf32>
    %66 = arith.maximumf %64, %65 : vector<128x64xf32>
    %cst_80 = arith.constant 0.000000e+00 : f32
    %67 = vector.broadcast %cst_80 : f32 to vector<2x10x17x64xf32>
    %c0_81 = arith.constant 0 : index
    %c0_82 = arith.constant 0 : index
    %c0_83 = arith.constant 0 : index
    %c0_84 = arith.constant 0 : index
    %68 = vector.load %arg9[%c0_81, %c0_82, %c0_83, %c0_84] : memref<2x10x17x64xf32, #tpu.memory_space<vmem>>, vector<2x10x17x64xf32>
    tpu.vector_store %arg9[%c0_81, %c0_82, %c0_83, %c0_84], %67 {strides = array<i32>} : memref<2x10x17x64xf32, #tpu.memory_space<vmem>>, vector<2x10x17x64xf32>,
    %69 = vector.shape_cast %66 : vector<128x64xf32> to vector<2x8x8x64xf32>
    %c0_85 = arith.constant 0 : index
    %c1_86 = arith.constant 1 : index
    %c8 = arith.constant 8 : index
    %c0_87 = arith.constant 0 : index
    %70 = vector.load %arg9[%c0_85, %c1_86, %c8, %c0_87] : memref<2x10x17x64xf32, #tpu.memory_space<vmem>>, vector<2x8x8x64xf32>
    tpu.vector_store %arg9[%c0_85, %c1_86, %c8, %c0_87], %69 {strides = array<i32>} : memref<2x10x17x64xf32, #tpu.memory_space<vmem>>, vector<2x8x8x64xf32>,
    %c0_88 = arith.constant 0 : index
    %c0_89 = arith.constant 0 : index
    %c7 = arith.constant 7 : index
    %c0_90 = arith.constant 0 : index
    %71 = vector.load %arg9[%c0_88, %c0_89, %c7, %c0_90] : memref<2x10x17x64xf32, #tpu.memory_space<vmem>>, vector<2x8x8x64xf32>
    %72 = vector.shape_cast %71 : vector<2x8x8x64xf32> to vector<128x64xf32>
    %73 = arith.truncf %72 : vector<128x64xf32> to vector<128x64xbf16>
    %c0_91 = arith.constant 0 : index
    %c0_92 = arith.constant 0 : index
    %c0_93 = arith.constant 0 : index
    %c0_94 = arith.constant 0 : index
    %74 = vector.load %arg4[%c0_91, %c0_92, %c0_93, %c0_94] : memref<3x3x64x32xbf16, #tpu.memory_space<vmem>>, vector<1x1x64x32xbf16>
    %75 = vector.shape_cast %74 : vector<1x1x64x32xbf16> to vector<64x32xbf16>
    %cst_95 = arith.constant dense<0.000000e+00> : vector<128x32xf32>
    %76 = tpu.matmul %73, %75, %cst_95 {dimension_numbers = #tpu.dot_dimension_numbers<[1], [0], [0], [1], [0, 0, 1, 1], [], []>} : vector<128x64xbf16>, vector<64x32xbf16>, vector<128x32xf32> -> vector<128x32xf32>
    %c0_96 = arith.constant 0 : index
    %c0_97 = arith.constant 0 : index
    %c8_98 = arith.constant 8 : index
    %c0_99 = arith.constant 0 : index
    %77 = vector.load %arg9[%c0_96, %c0_97, %c8_98, %c0_99] : memref<2x10x17x64xf32, #tpu.memory_space<vmem>>, vector<2x8x8x64xf32>
    %78 = vector.shape_cast %77 : vector<2x8x8x64xf32> to vector<128x64xf32>
    %79 = arith.truncf %78 : vector<128x64xf32> to vector<128x64xbf16>
    %c0_100 = arith.constant 0 : index
    %c1_101 = arith.constant 1 : index
    %c0_102 = arith.constant 0 : index
    %c0_103 = arith.constant 0 : index
    %80 = vector.load %arg4[%c0_100, %c1_101, %c0_102, %c0_103] : memref<3x3x64x32xbf16, #tpu.memory_space<vmem>>, vector<1x1x64x32xbf16>
    %81 = vector.shape_cast %80 : vector<1x1x64x32xbf16> to vector<64x32xbf16>
    %cst_104 = arith.constant dense<0.000000e+00> : vector<128x32xf32>
    %82 = tpu.matmul %79, %81, %cst_104 {dimension_numbers = #tpu.dot_dimension_numbers<[1], [0], [0], [1], [0, 0, 1, 1], [], []>} : vector<128x64xbf16>, vector<64x32xbf16>, vector<128x32xf32> -> vector<128x32xf32>
    %83 = arith.addf %76, %82 : vector<128x32xf32>
    %c0_105 = arith.constant 0 : index
    %c0_106 = arith.constant 0 : index
    %c9 = arith.constant 9 : index
    %c0_107 = arith.constant 0 : index
    %84 = vector.load %arg9[%c0_105, %c0_106, %c9, %c0_107] : memref<2x10x17x64xf32, #tpu.memory_space<vmem>>, vector<2x8x8x64xf32>
    %85 = vector.shape_cast %84 : vector<2x8x8x64xf32> to vector<128x64xf32>
    %86 = arith.truncf %85 : vector<128x64xf32> to vector<128x64xbf16>
    %c0_108 = arith.constant 0 : index
    %c2_109 = arith.constant 2 : index
    %c0_110 = arith.constant 0 : index
    %c0_111 = arith.constant 0 : index
    %87 = vector.load %arg4[%c0_108, %c2_109, %c0_110, %c0_111] : memref<3x3x64x32xbf16, #tpu.memory_space<vmem>>, vector<1x1x64x32xbf16>
    %88 = vector.shape_cast %87 : vector<1x1x64x32xbf16> to vector<64x32xbf16>
    %cst_112 = arith.constant dense<0.000000e+00> : vector<128x32xf32>
    %89 = tpu.matmul %86, %88, %cst_112 {dimension_numbers = #tpu.dot_dimension_numbers<[1], [0], [0], [1], [0, 0, 1, 1], [], []>} : vector<128x64xbf16>, vector<64x32xbf16>, vector<128x32xf32> -> vector<128x32xf32>
    %90 = arith.addf %83, %89 : vector<128x32xf32>
    %c0_113 = arith.constant 0 : index
    %c1_114 = arith.constant 1 : index
    %c7_115 = arith.constant 7 : index
    %c0_116 = arith.constant 0 : index
    %91 = vector.load %arg9[%c0_113, %c1_114, %c7_115, %c0_116] : memref<2x10x17x64xf32, #tpu.memory_space<vmem>>, vector<2x8x8x64xf32>
    %92 = vector.shape_cast %91 : vector<2x8x8x64xf32> to vector<128x64xf32>
    %93 = arith.truncf %92 : vector<128x64xf32> to vector<128x64xbf16>
    %c1_117 = arith.constant 1 : index
    %c0_118 = arith.constant 0 : index
    %c0_119 = arith.constant 0 : index
    %c0_120 = arith.constant 0 : index
    %94 = vector.load %arg4[%c1_117, %c0_118, %c0_119, %c0_120] : memref<3x3x64x32xbf16, #tpu.memory_space<vmem>>, vector<1x1x64x32xbf16>
    %95 = vector.shape_cast %94 : vector<1x1x64x32xbf16> to vector<64x32xbf16>
    %cst_121 = arith.constant dense<0.000000e+00> : vector<128x32xf32>
    %96 = tpu.matmul %93, %95, %cst_121 {dimension_numbers = #tpu.dot_dimension_numbers<[1], [0], [0], [1], [0, 0, 1, 1], [], []>} : vector<128x64xbf16>, vector<64x32xbf16>, vector<128x32xf32> -> vector<128x32xf32>
    %97 = arith.addf %90, %96 : vector<128x32xf32>
    %c0_122 = arith.constant 0 : index
    %c1_123 = arith.constant 1 : index
    %c8_124 = arith.constant 8 : index
    %c0_125 = arith.constant 0 : index
    %98 = vector.load %arg9[%c0_122, %c1_123, %c8_124, %c0_125] : memref<2x10x17x64xf32, #tpu.memory_space<vmem>>, vector<2x8x8x64xf32>
    %99 = vector.shape_cast %98 : vector<2x8x8x64xf32> to vector<128x64xf32>
    %100 = arith.truncf %99 : vector<128x64xf32> to vector<128x64xbf16>
    %c1_126 = arith.constant 1 : index
    %c1_127 = arith.constant 1 : index
    %c0_128 = arith.constant 0 : index
    %c0_129 = arith.constant 0 : index
    %101 = vector.load %arg4[%c1_126, %c1_127, %c0_128, %c0_129] : memref<3x3x64x32xbf16, #tpu.memory_space<vmem>>, vector<1x1x64x32xbf16>
    %102 = vector.shape_cast %101 : vector<1x1x64x32xbf16> to vector<64x32xbf16>
    %cst_130 = arith.constant dense<0.000000e+00> : vector<128x32xf32>
    %103 = tpu.matmul %100, %102, %cst_130 {dimension_numbers = #tpu.dot_dimension_numbers<[1], [0], [0], [1], [0, 0, 1, 1], [], []>} : vector<128x64xbf16>, vector<64x32xbf16>, vector<128x32xf32> -> vector<128x32xf32>
    %104 = arith.addf %97, %103 : vector<128x32xf32>
    %c0_131 = arith.constant 0 : index
    %c1_132 = arith.constant 1 : index
    %c9_133 = arith.constant 9 : index
    %c0_134 = arith.constant 0 : index
    %105 = vector.load %arg9[%c0_131, %c1_132, %c9_133, %c0_134] : memref<2x10x17x64xf32, #tpu.memory_space<vmem>>, vector<2x8x8x64xf32>
    %106 = vector.shape_cast %105 : vector<2x8x8x64xf32> to vector<128x64xf32>
    %107 = arith.truncf %106 : vector<128x64xf32> to vector<128x64xbf16>
    %c1_135 = arith.constant 1 : index
    %c2_136 = arith.constant 2 : index
    %c0_137 = arith.constant 0 : index
    %c0_138 = arith.constant 0 : index
    %108 = vector.load %arg4[%c1_135, %c2_136, %c0_137, %c0_138] : memref<3x3x64x32xbf16, #tpu.memory_space<vmem>>, vector<1x1x64x32xbf16>
    %109 = vector.shape_cast %108 : vector<1x1x64x32xbf16> to vector<64x32xbf16>
    %cst_139 = arith.constant dense<0.000000e+00> : vector<128x32xf32>
    %110 = tpu.matmul %107, %109, %cst_139 {dimension_numbers = #tpu.dot_dimension_numbers<[1], [0], [0], [1], [0, 0, 1, 1], [], []>} : vector<128x64xbf16>, vector<64x32xbf16>, vector<128x32xf32> -> vector<128x32xf32>
    %111 = arith.addf %104, %110 : vector<128x32xf32>
    %c0_140 = arith.constant 0 : index
    %c2_141 = arith.constant 2 : index
    %c7_142 = arith.constant 7 : index
    %c0_143 = arith.constant 0 : index
    %112 = vector.load %arg9[%c0_140, %c2_141, %c7_142, %c0_143] : memref<2x10x17x64xf32, #tpu.memory_space<vmem>>, vector<2x8x8x64xf32>
    %113 = vector.shape_cast %112 : vector<2x8x8x64xf32> to vector<128x64xf32>
    %114 = arith.truncf %113 : vector<128x64xf32> to vector<128x64xbf16>
    %c2_144 = arith.constant 2 : index
    %c0_145 = arith.constant 0 : index
    %c0_146 = arith.constant 0 : index
    %c0_147 = arith.constant 0 : index
    %115 = vector.load %arg4[%c2_144, %c0_145, %c0_146, %c0_147] : memref<3x3x64x32xbf16, #tpu.memory_space<vmem>>, vector<1x1x64x32xbf16>
    %116 = vector.shape_cast %115 : vector<1x1x64x32xbf16> to vector<64x32xbf16>
    %cst_148 = arith.constant dense<0.000000e+00> : vector<128x32xf32>
    %117 = tpu.matmul %114, %116, %cst_148 {dimension_numbers = #tpu.dot_dimension_numbers<[1], [0], [0], [1], [0, 0, 1, 1], [], []>} : vector<128x64xbf16>, vector<64x32xbf16>, vector<128x32xf32> -> vector<128x32xf32>
    %118 = arith.addf %111, %117 : vector<128x32xf32>
    %c0_149 = arith.constant 0 : index
    %c2_150 = arith.constant 2 : index
    %c8_151 = arith.constant 8 : index
    %c0_152 = arith.constant 0 : index
    %119 = vector.load %arg9[%c0_149, %c2_150, %c8_151, %c0_152] : memref<2x10x17x64xf32, #tpu.memory_space<vmem>>, vector<2x8x8x64xf32>
    %120 = vector.shape_cast %119 : vector<2x8x8x64xf32> to vector<128x64xf32>
    %121 = arith.truncf %120 : vector<128x64xf32> to vector<128x64xbf16>
    %c2_153 = arith.constant 2 : index
    %c1_154 = arith.constant 1 : index
    %c0_155 = arith.constant 0 : index
    %c0_156 = arith.constant 0 : index
    %122 = vector.load %arg4[%c2_153, %c1_154, %c0_155, %c0_156] : memref<3x3x64x32xbf16, #tpu.memory_space<vmem>>, vector<1x1x64x32xbf16>
    %123 = vector.shape_cast %122 : vector<1x1x64x32xbf16> to vector<64x32xbf16>
    %cst_157 = arith.constant dense<0.000000e+00> : vector<128x32xf32>
    %124 = tpu.matmul %121, %123, %cst_157 {dimension_numbers = #tpu.dot_dimension_numbers<[1], [0], [0], [1], [0, 0, 1, 1], [], []>} : vector<128x64xbf16>, vector<64x32xbf16>, vector<128x32xf32> -> vector<128x32xf32>
    %125 = arith.addf %118, %124 : vector<128x32xf32>
    %c0_158 = arith.constant 0 : index
    %c2_159 = arith.constant 2 : index
    %c9_160 = arith.constant 9 : index
    %c0_161 = arith.constant 0 : index
    %126 = vector.load %arg9[%c0_158, %c2_159, %c9_160, %c0_161] : memref<2x10x17x64xf32, #tpu.memory_space<vmem>>, vector<2x8x8x64xf32>
    %127 = vector.shape_cast %126 : vector<2x8x8x64xf32> to vector<128x64xf32>
    %128 = arith.truncf %127 : vector<128x64xf32> to vector<128x64xbf16>
    %c2_162 = arith.constant 2 : index
    %c2_163 = arith.constant 2 : index
    %c0_164 = arith.constant 0 : index
    %c0_165 = arith.constant 0 : index
    %129 = vector.load %arg4[%c2_162, %c2_163, %c0_164, %c0_165] : memref<3x3x64x32xbf16, #tpu.memory_space<vmem>>, vector<1x1x64x32xbf16>
    %130 = vector.shape_cast %129 : vector<1x1x64x32xbf16> to vector<64x32xbf16>
    %cst_166 = arith.constant dense<0.000000e+00> : vector<128x32xf32>
    %131 = tpu.matmul %128, %130, %cst_166 {dimension_numbers = #tpu.dot_dimension_numbers<[1], [0], [0], [1], [0, 0, 1, 1], [], []>} : vector<128x64xbf16>, vector<64x32xbf16>, vector<128x32xf32> -> vector<128x32xf32>
    %132 = arith.addf %125, %131 : vector<128x32xf32>
    %c0_167 = arith.constant 0 : index
    %c0_168 = arith.constant 0 : index
    %133 = vector.load %arg5[%c0_167, %c0_168] : memref<1x32xf32, #tpu.memory_space<vmem>>, vector<1x32xf32>
    %134 = vector.broadcast %133 : vector<1x32xf32> to vector<128x32xf32>
    %135 = arith.addf %132, %134 : vector<128x32xf32>
    %cst_169 = arith.constant 0.000000e+00 : f32
    %136 = vector.broadcast %cst_169 : f32 to vector<128x32xf32>
    %137 = arith.maximumf %135, %136 : vector<128x32xf32>
    %cst_170 = arith.constant 0.000000e+00 : f32
    %138 = vector.broadcast %cst_170 : f32 to vector<2x10x17x32xf32>
    %c0_171 = arith.constant 0 : index
    %c0_172 = arith.constant 0 : index
    %c0_173 = arith.constant 0 : index
    %c0_174 = arith.constant 0 : index
    %139 = vector.load %arg10[%c0_171, %c0_172, %c0_173, %c0_174] : memref<2x10x17x32xf32, #tpu.memory_space<vmem>>, vector<2x10x17x32xf32>
    tpu.vector_store %arg10[%c0_171, %c0_172, %c0_173, %c0_174], %138 {strides = array<i32>} : memref<2x10x17x32xf32, #tpu.memory_space<vmem>>, vector<2x10x17x32xf32>,
    %140 = vector.shape_cast %137 : vector<128x32xf32> to vector<2x8x8x32xf32>
    %c0_175 = arith.constant 0 : index
    %c1_176 = arith.constant 1 : index
    %c8_177 = arith.constant 8 : index
    %c0_178 = arith.constant 0 : index
    %141 = vector.load %arg10[%c0_175, %c1_176, %c8_177, %c0_178] : memref<2x10x17x32xf32, #tpu.memory_space<vmem>>, vector<2x8x8x32xf32>
    tpu.vector_store %arg10[%c0_175, %c1_176, %c8_177, %c0_178], %140 {strides = array<i32>} : memref<2x10x17x32xf32, #tpu.memory_space<vmem>>, vector<2x8x8x32xf32>,
    %c0_179 = arith.constant 0 : index
    %c0_180 = arith.constant 0 : index
    %c7_181 = arith.constant 7 : index
    %c0_182 = arith.constant 0 : index
    %142 = vector.load %arg10[%c0_179, %c0_180, %c7_181, %c0_182] : memref<2x10x17x32xf32, #tpu.memory_space<vmem>>, vector<2x8x8x32xf32>
    %143 = vector.shape_cast %142 : vector<2x8x8x32xf32> to vector<128x32xf32>
    %144 = arith.truncf %143 : vector<128x32xf32> to vector<128x32xbf16>
    %c0_183 = arith.constant 0 : index
    %c0_184 = arith.constant 0 : index
    %c0_185 = arith.constant 0 : index
    %c0_186 = arith.constant 0 : index
    %145 = vector.load %arg6[%c0_183, %c0_184, %c0_185, %c0_186] : memref<3x3x32x32xbf16, #tpu.memory_space<vmem>>, vector<1x1x32x32xbf16>
    %146 = vector.shape_cast %145 : vector<1x1x32x32xbf16> to vector<32x32xbf16>
    %cst_187 = arith.constant dense<0.000000e+00> : vector<128x32xf32>
    %147 = tpu.matmul %144, %146, %cst_187 {dimension_numbers = #tpu.dot_dimension_numbers<[1], [0], [0], [1], [0, 0, 1, 1], [], []>} : vector<128x32xbf16>, vector<32x32xbf16>, vector<128x32xf32> -> vector<128x32xf32>
    %c0_188 = arith.constant 0 : index
    %c0_189 = arith.constant 0 : index
    %c8_190 = arith.constant 8 : index
    %c0_191 = arith.constant 0 : index
    %148 = vector.load %arg10[%c0_188, %c0_189, %c8_190, %c0_191] : memref<2x10x17x32xf32, #tpu.memory_space<vmem>>, vector<2x8x8x32xf32>
    %149 = vector.shape_cast %148 : vector<2x8x8x32xf32> to vector<128x32xf32>
    %150 = arith.truncf %149 : vector<128x32xf32> to vector<128x32xbf16>
    %c0_192 = arith.constant 0 : index
    %c1_193 = arith.constant 1 : index
    %c0_194 = arith.constant 0 : index
    %c0_195 = arith.constant 0 : index
    %151 = vector.load %arg6[%c0_192, %c1_193, %c0_194, %c0_195] : memref<3x3x32x32xbf16, #tpu.memory_space<vmem>>, vector<1x1x32x32xbf16>
    %152 = vector.shape_cast %151 : vector<1x1x32x32xbf16> to vector<32x32xbf16>
    %cst_196 = arith.constant dense<0.000000e+00> : vector<128x32xf32>
    %153 = tpu.matmul %150, %152, %cst_196 {dimension_numbers = #tpu.dot_dimension_numbers<[1], [0], [0], [1], [0, 0, 1, 1], [], []>} : vector<128x32xbf16>, vector<32x32xbf16>, vector<128x32xf32> -> vector<128x32xf32>
    %154 = arith.addf %147, %153 : vector<128x32xf32>
    %c0_197 = arith.constant 0 : index
    %c0_198 = arith.constant 0 : index
    %c9_199 = arith.constant 9 : index
    %c0_200 = arith.constant 0 : index
    %155 = vector.load %arg10[%c0_197, %c0_198, %c9_199, %c0_200] : memref<2x10x17x32xf32, #tpu.memory_space<vmem>>, vector<2x8x8x32xf32>
    %156 = vector.shape_cast %155 : vector<2x8x8x32xf32> to vector<128x32xf32>
    %157 = arith.truncf %156 : vector<128x32xf32> to vector<128x32xbf16>
    %c0_201 = arith.constant 0 : index
    %c2_202 = arith.constant 2 : index
    %c0_203 = arith.constant 0 : index
    %c0_204 = arith.constant 0 : index
    %158 = vector.load %arg6[%c0_201, %c2_202, %c0_203, %c0_204] : memref<3x3x32x32xbf16, #tpu.memory_space<vmem>>, vector<1x1x32x32xbf16>
    %159 = vector.shape_cast %158 : vector<1x1x32x32xbf16> to vector<32x32xbf16>
    %cst_205 = arith.constant dense<0.000000e+00> : vector<128x32xf32>
    %160 = tpu.matmul %157, %159, %cst_205 {dimension_numbers = #tpu.dot_dimension_numbers<[1], [0], [0], [1], [0, 0, 1, 1], [], []>} : vector<128x32xbf16>, vector<32x32xbf16>, vector<128x32xf32> -> vector<128x32xf32>
    %161 = arith.addf %154, %160 : vector<128x32xf32>
    %c0_206 = arith.constant 0 : index
    %c1_207 = arith.constant 1 : index
    %c7_208 = arith.constant 7 : index
    %c0_209 = arith.constant 0 : index
    %162 = vector.load %arg10[%c0_206, %c1_207, %c7_208, %c0_209] : memref<2x10x17x32xf32, #tpu.memory_space<vmem>>, vector<2x8x8x32xf32>
    %163 = vector.shape_cast %162 : vector<2x8x8x32xf32> to vector<128x32xf32>
    %164 = arith.truncf %163 : vector<128x32xf32> to vector<128x32xbf16>
    %c1_210 = arith.constant 1 : index
    %c0_211 = arith.constant 0 : index
    %c0_212 = arith.constant 0 : index
    %c0_213 = arith.constant 0 : index
    %165 = vector.load %arg6[%c1_210, %c0_211, %c0_212, %c0_213] : memref<3x3x32x32xbf16, #tpu.memory_space<vmem>>, vector<1x1x32x32xbf16>
    %166 = vector.shape_cast %165 : vector<1x1x32x32xbf16> to vector<32x32xbf16>
    %cst_214 = arith.constant dense<0.000000e+00> : vector<128x32xf32>
    %167 = tpu.matmul %164, %166, %cst_214 {dimension_numbers = #tpu.dot_dimension_numbers<[1], [0], [0], [1], [0, 0, 1, 1], [], []>} : vector<128x32xbf16>, vector<32x32xbf16>, vector<128x32xf32> -> vector<128x32xf32>
    %168 = arith.addf %161, %167 : vector<128x32xf32>
    %c0_215 = arith.constant 0 : index
    %c1_216 = arith.constant 1 : index
    %c8_217 = arith.constant 8 : index
    %c0_218 = arith.constant 0 : index
    %169 = vector.load %arg10[%c0_215, %c1_216, %c8_217, %c0_218] : memref<2x10x17x32xf32, #tpu.memory_space<vmem>>, vector<2x8x8x32xf32>
    %170 = vector.shape_cast %169 : vector<2x8x8x32xf32> to vector<128x32xf32>
    %171 = arith.truncf %170 : vector<128x32xf32> to vector<128x32xbf16>
    %c1_219 = arith.constant 1 : index
    %c1_220 = arith.constant 1 : index
    %c0_221 = arith.constant 0 : index
    %c0_222 = arith.constant 0 : index
    %172 = vector.load %arg6[%c1_219, %c1_220, %c0_221, %c0_222] : memref<3x3x32x32xbf16, #tpu.memory_space<vmem>>, vector<1x1x32x32xbf16>
    %173 = vector.shape_cast %172 : vector<1x1x32x32xbf16> to vector<32x32xbf16>
    %cst_223 = arith.constant dense<0.000000e+00> : vector<128x32xf32>
    %174 = tpu.matmul %171, %173, %cst_223 {dimension_numbers = #tpu.dot_dimension_numbers<[1], [0], [0], [1], [0, 0, 1, 1], [], []>} : vector<128x32xbf16>, vector<32x32xbf16>, vector<128x32xf32> -> vector<128x32xf32>
    %175 = arith.addf %168, %174 : vector<128x32xf32>
    %c0_224 = arith.constant 0 : index
    %c1_225 = arith.constant 1 : index
    %c9_226 = arith.constant 9 : index
    %c0_227 = arith.constant 0 : index
    %176 = vector.load %arg10[%c0_224, %c1_225, %c9_226, %c0_227] : memref<2x10x17x32xf32, #tpu.memory_space<vmem>>, vector<2x8x8x32xf32>
    %177 = vector.shape_cast %176 : vector<2x8x8x32xf32> to vector<128x32xf32>
    %178 = arith.truncf %177 : vector<128x32xf32> to vector<128x32xbf16>
    %c1_228 = arith.constant 1 : index
    %c2_229 = arith.constant 2 : index
    %c0_230 = arith.constant 0 : index
    %c0_231 = arith.constant 0 : index
    %179 = vector.load %arg6[%c1_228, %c2_229, %c0_230, %c0_231] : memref<3x3x32x32xbf16, #tpu.memory_space<vmem>>, vector<1x1x32x32xbf16>
    %180 = vector.shape_cast %179 : vector<1x1x32x32xbf16> to vector<32x32xbf16>
    %cst_232 = arith.constant dense<0.000000e+00> : vector<128x32xf32>
    %181 = tpu.matmul %178, %180, %cst_232 {dimension_numbers = #tpu.dot_dimension_numbers<[1], [0], [0], [1], [0, 0, 1, 1], [], []>} : vector<128x32xbf16>, vector<32x32xbf16>, vector<128x32xf32> -> vector<128x32xf32>
    %182 = arith.addf %175, %181 : vector<128x32xf32>
    %c0_233 = arith.constant 0 : index
    %c2_234 = arith.constant 2 : index
    %c7_235 = arith.constant 7 : index
    %c0_236 = arith.constant 0 : index
    %183 = vector.load %arg10[%c0_233, %c2_234, %c7_235, %c0_236] : memref<2x10x17x32xf32, #tpu.memory_space<vmem>>, vector<2x8x8x32xf32>
    %184 = vector.shape_cast %183 : vector<2x8x8x32xf32> to vector<128x32xf32>
    %185 = arith.truncf %184 : vector<128x32xf32> to vector<128x32xbf16>
    %c2_237 = arith.constant 2 : index
    %c0_238 = arith.constant 0 : index
    %c0_239 = arith.constant 0 : index
    %c0_240 = arith.constant 0 : index
    %186 = vector.load %arg6[%c2_237, %c0_238, %c0_239, %c0_240] : memref<3x3x32x32xbf16, #tpu.memory_space<vmem>>, vector<1x1x32x32xbf16>
    %187 = vector.shape_cast %186 : vector<1x1x32x32xbf16> to vector<32x32xbf16>
    %cst_241 = arith.constant dense<0.000000e+00> : vector<128x32xf32>
    %188 = tpu.matmul %185, %187, %cst_241 {dimension_numbers = #tpu.dot_dimension_numbers<[1], [0], [0], [1], [0, 0, 1, 1], [], []>} : vector<128x32xbf16>, vector<32x32xbf16>, vector<128x32xf32> -> vector<128x32xf32>
    %189 = arith.addf %182, %188 : vector<128x32xf32>
    %c0_242 = arith.constant 0 : index
    %c2_243 = arith.constant 2 : index
    %c8_244 = arith.constant 8 : index
    %c0_245 = arith.constant 0 : index
    %190 = vector.load %arg10[%c0_242, %c2_243, %c8_244, %c0_245] : memref<2x10x17x32xf32, #tpu.memory_space<vmem>>, vector<2x8x8x32xf32>
    %191 = vector.shape_cast %190 : vector<2x8x8x32xf32> to vector<128x32xf32>
    %192 = arith.truncf %191 : vector<128x32xf32> to vector<128x32xbf16>
    %c2_246 = arith.constant 2 : index
    %c1_247 = arith.constant 1 : index
    %c0_248 = arith.constant 0 : index
    %c0_249 = arith.constant 0 : index
    %193 = vector.load %arg6[%c2_246, %c1_247, %c0_248, %c0_249] : memref<3x3x32x32xbf16, #tpu.memory_space<vmem>>, vector<1x1x32x32xbf16>
    %194 = vector.shape_cast %193 : vector<1x1x32x32xbf16> to vector<32x32xbf16>
    %cst_250 = arith.constant dense<0.000000e+00> : vector<128x32xf32>
    %195 = tpu.matmul %192, %194, %cst_250 {dimension_numbers = #tpu.dot_dimension_numbers<[1], [0], [0], [1], [0, 0, 1, 1], [], []>} : vector<128x32xbf16>, vector<32x32xbf16>, vector<128x32xf32> -> vector<128x32xf32>
    %196 = arith.addf %189, %195 : vector<128x32xf32>
    %c0_251 = arith.constant 0 : index
    %c2_252 = arith.constant 2 : index
    %c9_253 = arith.constant 9 : index
    %c0_254 = arith.constant 0 : index
    %197 = vector.load %arg10[%c0_251, %c2_252, %c9_253, %c0_254] : memref<2x10x17x32xf32, #tpu.memory_space<vmem>>, vector<2x8x8x32xf32>
    %198 = vector.shape_cast %197 : vector<2x8x8x32xf32> to vector<128x32xf32>
    %199 = arith.truncf %198 : vector<128x32xf32> to vector<128x32xbf16>
    %c2_255 = arith.constant 2 : index
    %c2_256 = arith.constant 2 : index
    %c0_257 = arith.constant 0 : index
    %c0_258 = arith.constant 0 : index
    %200 = vector.load %arg6[%c2_255, %c2_256, %c0_257, %c0_258] : memref<3x3x32x32xbf16, #tpu.memory_space<vmem>>, vector<1x1x32x32xbf16>
    %201 = vector.shape_cast %200 : vector<1x1x32x32xbf16> to vector<32x32xbf16>
    %cst_259 = arith.constant dense<0.000000e+00> : vector<128x32xf32>
    %202 = tpu.matmul %199, %201, %cst_259 {dimension_numbers = #tpu.dot_dimension_numbers<[1], [0], [0], [1], [0, 0, 1, 1], [], []>} : vector<128x32xbf16>, vector<32x32xbf16>, vector<128x32xf32> -> vector<128x32xf32>
    %203 = arith.addf %196, %202 : vector<128x32xf32>
    %c0_260 = arith.constant 0 : index
    %c0_261 = arith.constant 0 : index
    %204 = vector.load %arg7[%c0_260, %c0_261] : memref<1x32xf32, #tpu.memory_space<vmem>>, vector<1x32xf32>
    %205 = vector.broadcast %204 : vector<1x32xf32> to vector<128x32xf32>
    %206 = arith.addf %203, %205 : vector<128x32xf32>
    %207 = vector.extract_strided_slice %206 {offsets = [0, 0], sizes = [64, 32], strides = [1, 1]} : vector<128x32xf32> to vector<64x32xf32>
    %cst_262 = arith.constant dense<0.000000e+00> : vector<32x32xf32>
    %208 = tpu.matmul %207, %207, %cst_262 {dimension_numbers = #tpu.dot_dimension_numbers<[0], [0], [1], [1], [0, 1, 1, 1], [], []>} : vector<64x32xf32>, vector<64x32xf32>, vector<32x32xf32> -> vector<32x32xf32>
    %cst_263 = arith.constant 1.562500e-02 : f32
    %209 = vector.broadcast %cst_263 : f32 to vector<32x32xf32>
    %210 = arith.mulf %208, %209 : vector<32x32xf32>
    %c0_264 = arith.constant 0 : index
    %c0_265 = arith.constant 0 : index
    %c0_266 = arith.constant 0 : index
    %211 = vector.load %arg8[%c0_264, %c0_265, %c0_266] : memref<2x32x32xf32, #tpu.memory_space<vmem>>, vector<1x32x32xf32>
    %212 = vector.shape_cast %211 : vector<1x32x32xf32> to vector<32x32xf32>
    %213 = vector.shape_cast %210 : vector<32x32xf32> to vector<1x32x32xf32>
    tpu.vector_store %arg8[%c0_264, %c0_265, %c0_266], %213 {strides = array<i32>} : memref<2x32x32xf32, #tpu.memory_space<vmem>>, vector<1x32x32xf32>,
    %214 = vector.extract_strided_slice %206 {offsets = [64, 0], sizes = [64, 32], strides = [1, 1]} : vector<128x32xf32> to vector<64x32xf32>
    %cst_267 = arith.constant dense<0.000000e+00> : vector<32x32xf32>
    %215 = tpu.matmul %214, %214, %cst_267 {dimension_numbers = #tpu.dot_dimension_numbers<[0], [0], [1], [1], [0, 1, 1, 1], [], []>} : vector<64x32xf32>, vector<64x32xf32>, vector<32x32xf32> -> vector<32x32xf32>
    %cst_268 = arith.constant 1.562500e-02 : f32
    %216 = vector.broadcast %cst_268 : f32 to vector<32x32xf32>
    %217 = arith.mulf %215, %216 : vector<32x32xf32>
    %c1_269 = arith.constant 1 : index
    %c0_270 = arith.constant 0 : index
    %c0_271 = arith.constant 0 : index
    %218 = vector.load %arg8[%c1_269, %c0_270, %c0_271] : memref<2x32x32xf32, #tpu.memory_space<vmem>>, vector<1x32x32xf32>
    %219 = vector.shape_cast %218 : vector<1x32x32xf32> to vector<32x32xf32>
    %220 = vector.shape_cast %217 : vector<32x32xf32> to vector<1x32x32xf32>
    tpu.vector_store %arg8[%c1_269, %c0_270, %c0_271], %220 {strides = array<i32>} : memref<2x32x32xf32, #tpu.memory_space<vmem>>, vector<1x32x32xf32>,
    return
  }
  func.func @transform_0(%arg0: i32) -> (i32, i32, i32, i32) {
    %c0_i32 = arith.constant 0 : i32
    %c0_i32_0 = arith.constant 0 : i32
    %c0_i32_1 = arith.constant 0 : i32
    %c0_i32_2 = arith.constant 0 : i32
    %c0_i32_3 = arith.constant 0 : i32
    return %c0_i32, %c0_i32_0, %c0_i32_1, %c0_i32_2 : i32, i32, i32, i32
  }
  func.func @transform_1(%arg0: i32) -> (i32, i32, i32, i32) {
    %c0_i32 = arith.constant 0 : i32
    %c0_i32_0 = arith.constant 0 : i32
    %c0_i32_1 = arith.constant 0 : i32
    %c0_i32_2 = arith.constant 0 : i32
    %c0_i32_3 = arith.constant 0 : i32
    return %c0_i32, %c0_i32_0, %c0_i32_1, %c0_i32_2 : i32, i32, i32, i32
  }
  func.func @transform_2(%arg0: i32) -> (i32, i32) {
    %c0_i32 = arith.constant 0 : i32
    %c0_i32_0 = arith.constant 0 : i32
    %c0_i32_1 = arith.constant 0 : i32
    return %c0_i32, %c0_i32_0 : i32, i32
  }
  func.func @transform_3(%arg0: i32) -> (i32, i32, i32, i32) {
    %c0_i32 = arith.constant 0 : i32
    %c0_i32_0 = arith.constant 0 : i32
    %c0_i32_1 = arith.constant 0 : i32
    %c0_i32_2 = arith.constant 0 : i32
    %c0_i32_3 = arith.constant 0 : i32
    return %c0_i32, %c0_i32_0, %c0_i32_1, %c0_i32_2 : i32, i32, i32, i32
  }
  func.func @transform_4(%arg0: i32) -> (i32, i32) {
    %c0_i32 = arith.constant 0 : i32
    %c0_i32_0 = arith.constant 0 : i32
    %c0_i32_1 = arith.constant 0 : i32
    return %c0_i32, %c0_i32_0 : i32, i32
  }
  func.func @transform_5(%arg0: i32) -> (i32, i32, i32, i32) {
    %c0_i32 = arith.constant 0 : i32
    %c0_i32_0 = arith.constant 0 : i32
    %c0_i32_1 = arith.constant 0 : i32
    %c0_i32_2 = arith.constant 0 : i32
    %c0_i32_3 = arith.constant 0 : i32
    return %c0_i32, %c0_i32_0, %c0_i32_1, %c0_i32_2 : i32, i32, i32, i32
  }
  func.func @transform_6(%arg0: i32) -> (i32, i32) {
    %c0_i32 = arith.constant 0 : i32
    %c0_i32_0 = arith.constant 0 : i32
    %c0_i32_1 = arith.constant 0 : i32
    return %c0_i32, %c0_i32_0 : i32, i32
  }
  func.func @transform_7(%arg0: i32) -> (i32, i32, i32) {
    %c0_i32 = arith.constant 0 : i32
    %c0_i32_0 = arith.constant 0 : i32
    %c0_i32_1 = arith.constant 0 : i32
    %c0_i32_2 = arith.constant 0 : i32
    return %c0_i32, %c0_i32_0, %c0_i32_1 : i32, i32, i32
  }
}

module attributes {stable_mosaic.version = 11 : i64} {
  func.func @_fc_kernel(%arg0: i32, %arg1: memref<2x1024xf32, #tpu.memory_space<vmem>>, %arg2: memref<1024x256xbf16, #tpu.memory_space<vmem>>, %arg3: memref<1x256xf32, #tpu.memory_space<vmem>>, %arg4: memref<2x256xf32, #tpu.memory_space<vmem>>) attributes {dimension_semantics = [#tpu.dimension_semantics<parallel>], iteration_bounds = array<i64: 4>, scalar_prefetch = 0 : i64, scratch_operands = 0 : i64, tpu.core_type = #tpu.core_type<tc>, window_params = [{pipeline_mode = #tpu.pipeline_mode<synchronous>, transform_indices = @transform_0, window_bounds = array<i64: 2, 1024>}, {transform_indices = @transform_1, window_bounds = array<i64: 1024, 256>}, {transform_indices = @transform_2, window_bounds = array<i64: 1, 256>}, {transform_indices = @transform_3, window_bounds = array<i64: 2, 256>}]} {
    %c0 = arith.constant 0 : index
    %c0_0 = arith.constant 0 : index
    %0 = vector.load %arg1[%c0, %c0_0] : memref<2x1024xf32, #tpu.memory_space<vmem>>, vector<2x1024xf32>
    %1 = arith.truncf %0 : vector<2x1024xf32> to vector<2x1024xbf16>
    %c0_1 = arith.constant 0 : index
    %c0_2 = arith.constant 0 : index
    %2 = vector.load %arg2[%c0_1, %c0_2] : memref<1024x256xbf16, #tpu.memory_space<vmem>>, vector<1024x256xbf16>
    %cst = arith.constant dense<0.000000e+00> : vector<2x256xf32>
    %3 = tpu.matmul %1, %2, %cst {dimension_numbers = #tpu.dot_dimension_numbers<[1], [0], [0], [1], [0, 0, 1, 1], [], []>} : vector<2x1024xbf16>, vector<1024x256xbf16>, vector<2x256xf32> -> vector<2x256xf32>
    %c0_3 = arith.constant 0 : index
    %c0_4 = arith.constant 0 : index
    %4 = vector.load %arg3[%c0_3, %c0_4] : memref<1x256xf32, #tpu.memory_space<vmem>>, vector<1x256xf32>
    %5 = vector.broadcast %4 : vector<1x256xf32> to vector<2x256xf32>
    %6 = arith.addf %3, %5 : vector<2x256xf32>
    %c0_5 = arith.constant 0 : index
    %c0_6 = arith.constant 0 : index
    %7 = vector.load %arg4[%c0_5, %c0_6] : memref<2x256xf32, #tpu.memory_space<vmem>>, vector<2x256xf32>
    tpu.vector_store %arg4[%c0_5, %c0_6], %6 {strides = array<i32>} : memref<2x256xf32, #tpu.memory_space<vmem>>, vector<2x256xf32>,
    return
  }
  func.func @transform_0(%arg0: i32) -> (i32, i32) {
    %c0_i32 = arith.constant 0 : i32
    %c0_i32_0 = arith.constant 0 : i32
    %c0_i32_1 = arith.constant 0 : i32
    return %c0_i32, %c0_i32_0 : i32, i32
  }
  func.func @transform_1(%arg0: i32) -> (i32, i32) {
    %c0_i32 = arith.constant 0 : i32
    %c0_i32_0 = arith.constant 0 : i32
    return %c0_i32, %arg0 : i32, i32
  }
  func.func @transform_2(%arg0: i32) -> (i32, i32) {
    %c0_i32 = arith.constant 0 : i32
    %c0_i32_0 = arith.constant 0 : i32
    return %c0_i32, %arg0 : i32, i32
  }
  func.func @transform_3(%arg0: i32) -> (i32, i32) {
    %c0_i32 = arith.constant 0 : i32
    %c0_i32_0 = arith.constant 0 : i32
    return %c0_i32, %arg0 : i32, i32
  }
}

</mosaic_0001>

<llo_original>
// kernel: cnn_forward.3
$region0: #{cnn_forward.3}
  #allocation0 [shape = 'u32[]', space=smem, size = 0x4, offset = 0x4, fixed_abs, tag = 'smem constant byte address 0x4 - core index']
  #allocation1 [shape = 'u32[72,128]{1,0:T(1,128)}', space=vmem, size = 0x9000, scoped, tag = 'internal scratch']
  %s0 = inlined_call_operand.vmem [shape: f32[2,1024], index: 0, kind: input, shape index: {}]
  %s1 = inlined_call_operand.hbm [shape: bf16[1024,1024], index: 1, kind: input, shape index: {}]
  %s2 = inlined_call_operand.hbm [shape: f32[1,1024], index: 2, kind: input, shape index: {}]
  %s3 = inlined_call_operand.hbm [shape: f32[2,1024], index: 3, kind: output, shape index: {}]
  %s4 = sld [smem:[#allocation0]]
  $region53: #{cnn_forward.3} parent=0
    _
  %s6 = ssub.s32 1, %s4
  %s7 = scalar_select 0, %s6, %s4
  $region1: #{cnn_forward.3} parent=0
    #allocation2 [shape = 'u8[1048576]{0}', space=vmem, size = 0x100000, scoped, tag = 'input window, operand 1']
    #allocation3 [shape = 's32[2]{0}', space=sflag, size = 0x8, scoped, tag = 'scoped memory for cnn_forward.3']
    #allocation4 [shape = 's32[2]{0}', space=sflag, size = 0x8, scoped, tag = 'scoped memory for cnn_forward.3']
    #allocation5 [shape = 'u8[2048]{0}', space=vmem, size = 0x800, scoped, tag = 'input window, operand 2']
    #allocation6 [shape = 's32[2]{0}', space=sflag, size = 0x8, scoped, tag = 'scoped memory for cnn_forward.3']
    #allocation7 [shape = 'u8[4096]{0}', space=vmem, size = 0x1000, scoped, tag = 'output window, operand 0']
    %8 = vsyncpa [#allocation3], 0
    %s9 = scalar_lea.sflag [#allocation3], 1
    %10 = vsyncpa %s9, 0
    %11 = vsyncpa [#allocation6], 0
    %s12 = scalar_lea.sflag [#allocation6], 1
    %13 = vsyncpa %s12, 0
    %14 = vsyncpa [#allocation4], 0
    %s15 = scalar_lea.sflag [#allocation4], 1
    %16 = vsyncpa %s15, 0
    loop: start=0, step=1, limit=6
    $region2: #{cnn_forward.3} parent=1 // loop_pre_header
      _
    $region3: #{cnn_forward.3} parent=1 // loop_header
      %s18 = sphi 0, %s22
      %p19 = scmp.ge.s32.totalorder %s18, 6
      %s26 = sphi 0, %s26
      %s28 = sphi 0, %s26
      %s29 = sphi 0, %s28
      %s43 = sphi 0, %s29
      %s49 = sphi 0, %s51
      %s52 = sphi 0, %s49
      %s53 = sphi 0, %s52
      %s69 = sphi 0, %s53
      %s75 = sphi 0, %s77
      %s78 = sphi 0, %s75
      %s79 = sphi 0, %s78
      %s95 = sphi 0, %s79
      %s101 = sphi 0, %s103
      %s104 = sphi 0, %s101
      %s105 = sphi 0, %s104
      %s121 = sphi 0, %s105
    $region4: #{cnn_forward.3} parent=1 // loop_header_branch
      %21 = sbr.rel (%p19) target = $region8
    $region5: #{cnn_forward.3} parent=1 // loop_body
      %s23 = ssub.s32 %s18, 1
      %s24 = ssub.s32 %s18, 2
      %s25 = sadd.s32 %s18, 1
      %s27 = sadd.s32 %s26, 1
      %p30 = scmp.eq.s32.totalorder %s18, 3
      %p31 = scmp.ne.s32.totalorder %s26, %s28
      %p32 = scmp.eq.s32.totalorder %s18, 0
      %p33 = por %p31, %p32
      %p34 = scmp.ne.s32.totalorder %s26, %s28
      %p35 = scmp.eq.s32.totalorder %s23, 3
      %p36 = por %p34, %p35
      %p37 = scmp.ne.s32.totalorder %s28, %s29
      %p38 = scmp.eq.s32.totalorder %s23, 0
      %p39 = por %p37, %p38
      %p40 = scmp.ne.s32.totalorder %s28, %s29
      %p41 = scmp.eq.s32.totalorder %s24, 3
      %p42 = por %p40, %p41
      %p44 = scmp.ne.s32.totalorder %s29, %s43
      %p45 = scmp.eq.s32.totalorder %s24, 0
      %p46 = por %p44, %p45
      %s47 = ssub.s32 %s18, %s25
      %p48 = scmp.eq.s32.totalorder %s47, 0
      %s50 = sadd.s32 %s49, 1
      %s51 = scalar_select %p48, %s49, %s50
      %p54 = pneg %p48
      %p55 = scmp.eq.s32.totalorder %s18, 3
      %p56 = por %p54, %p55
      %p57 = scmp.ne.s32.totalorder %s49, %s52
      %p58 = scmp.eq.s32.totalorder %s18, 0
      %p59 = por %p57, %p58
      %p60 = scmp.ne.s32.totalorder %s49, %s52
      %p61 = scmp.eq.s32.totalorder %s23, 3
      %p62 = por %p60, %p61
      %p63 = scmp.ne.s32.totalorder %s52, %s53
      %p64 = scmp.eq.s32.totalorder %s23, 0
      %p65 = por %p63, %p64
      %p66 = scmp.ne.s32.totalorder %s52, %s53
      %p67 = scmp.eq.s32.totalorder %s24, 3
      %p68 = por %p66, %p67
      %p70 = scmp.ne.s32.totalorder %s53, %s69
      %p71 = scmp.eq.s32.totalorder %s24, 0
      %p72 = por %p70, %p71
      %s73 = ssub.s32 %s18, %s25
      %p74 = scmp.eq.s32.totalorder %s73, 0
      %s76 = sadd.s32 %s75, 1
      %s77 = scalar_select %p74, %s75, %s76
      %p80 = pneg %p74
      %p81 = scmp.eq.s32.totalorder %s18, 3
      %p82 = por %p80, %p81
      %p83 = scmp.ne.s32.totalorder %s75, %s78
      %p84 = scmp.eq.s32.totalorder %s18, 0
      %p85 = por %p83, %p84
      %p86 = scmp.ne.s32.totalorder %s75, %s78
      %p87 = scmp.eq.s32.totalorder %s23, 3
      %p88 = por %p86, %p87
      %p89 = scmp.ne.s32.totalorder %s78, %s79
      %p90 = scmp.eq.s32.totalorder %s23, 0
      %p91 = por %p89, %p90
      %p92 = scmp.ne.s32.totalorder %s78, %s79
      %p93 = scmp.eq.s32.totalorder %s24, 3
      %p94 = por %p92, %p93
      %p96 = scmp.ne.s32.totalorder %s79, %s95
      %p97 = scmp.eq.s32.totalorder %s24, 0
      %p98 = por %p96, %p97
      %s99 = ssub.s32 %s18, %s25
      %p100 = scmp.eq.s32.totalorder %s99, 0
      %s102 = sadd.s32 %s101, 1
      %s103 = scalar_select %p100, %s101, %s102
      %p106 = pneg %p100
      %p107 = scmp.eq.s32.totalorder %s18, 3
      %p108 = por %p106, %p107
      %p109 = scmp.ne.s32.totalorder %s101, %s104
      %p110 = scmp.eq.s32.totalorder %s18, 0
      %p111 = por %p109, %p110
      %p112 = scmp.ne.s32.totalorder %s101, %s104
      %p113 = scmp.eq.s32.totalorder %s23, 3
      %p114 = por %p112, %p113
      %p115 = scmp.ne.s32.totalorder %s104, %s105
      %p116 = scmp.eq.s32.totalorder %s23, 0
      %p117 = por %p115, %p116
      %p118 = scmp.ne.s32.totalorder %s104, %s105
      %p119 = scmp.eq.s32.totalorder %s24, 3
      %p120 = por %p118, %p119
      %p122 = scmp.ne.s32.totalorder %s105, %s121
      %p123 = scmp.eq.s32.totalorder %s24, 0
      %p124 = por %p122, %p123
      %p125 = scmp.le.s32.totalorder 1, %s18
      %p126 = scmp.lt.s32.totalorder %s18, 5
      %p127 = pnand %p125, %p126
      %p128 = pneg %p127
      // Predicated region
      $region9: #{cnn_forward.3} parent=5 // pred_check
        _
      $region10: #{cnn_forward.3} parent=5 // pred_check_branch
        %130 = sbr.rel (%p127) target = $region12
      $region11: #{cnn_forward.3} parent=5 // pred_region
        %s131 = ssub.s32 %s18, 1
        // Predicated region
        $region13: #{cnn_forward.3} parent=11 // pred_check
          %p132 = pneg %p39
        $region14: #{cnn_forward.3} parent=11 // pred_check_branch
          %134 = sbr.rel (%p132) target = $region16
        $region15: #{cnn_forward.3} parent=11 // pred_region
          _
        $region16: #{cnn_forward.3} parent=11 // pred_fallthru
          _
      $region12: #{cnn_forward.3} parent=5 // pred_fallthru
        _
      %p135 = scmp.lt.s32.totalorder %s18, 4
      // Predicated region
      $region17: #{cnn_forward.3} parent=5 // pred_check
        %p136 = pneg %p135
      $region18: #{cnn_forward.3} parent=5 // pred_check_branch
        %138 = sbr.rel (%p136) target = $region20
      $region19: #{cnn_forward.3} parent=5 // pred_region
        // Predicated region
        $region21: #{cnn_forward.3} parent=19 // pred_check
          %p139 = pneg %p59
        $region22: #{cnn_forward.3} parent=19 // pred_check_branch
          %141 = sbr.rel (%p139) target = $region24
        $region23: #{cnn_forward.3} parent=19 // pred_region
          %s142 = sand.u32 %s49, 1
          %s143 = scalar_lea.sflag [#allocation3], %s142
          %s144 = sand.u32 %s49, 1
          %s145 = smul.addr %s144, 1024
          %s146 = scalar_lea.vmem [#allocation2], %s145
          %s147 = smul.u32 2, %s18
          %149 = vsyncadd %s143, 0
          %s150 = smul.addr %s147, 4
          %s151 = scalar_lea.hbm %s1, %s150
          %s152 = sshll.u32 %s151, 4
          %s153 = int_to_ptr.hbm [resolvable:$true] %s152
          %s154 = sshll.u32 %s146, 4
          %s155 = int_to_ptr.vmem [resolvable:$true] %s154
          %160 = dma.hbm_to_vmem [thread:$0]  %s153, 16384, %s155, %s143, 512, 128, 8
        $region24: #{cnn_forward.3} parent=19 // pred_fallthru
          _
        // Predicated region
        $region25: #{cnn_forward.3} parent=19 // pred_check
          %p161 = pneg %p85
        $region26: #{cnn_forward.3} parent=19 // pred_check_branch
          %163 = sbr.rel (%p161) target = $region28
        $region27: #{cnn_forward.3} parent=19 // pred_region
          %s164 = sand.u32 %s75, 1
          %s165 = scalar_lea.sflag [#allocation6], %s164
          %s166 = sand.u32 %s75, 1
          %s167 = smul.addr %s166, 2
          %s168 = scalar_lea.vmem [#allocation5], %s167
          %s169 = smul.u32 2, %s18
          %171 = vsyncadd %s165, 0
          %s172 = scalar_lea.hbm %s2, %s169
          %s174 = sshll.u32 %s172, 4
          %s175 = int_to_ptr.hbm [resolvable:$true] %s174
          %s176 = sshll.u32 %s168, 4
          %s177 = int_to_ptr.vmem [resolvable:$true] %s176
          %179 = dma.hbm_to_vmem [thread:$0]  %s175, 32, %s177, %s165
        $region28: #{cnn_forward.3} parent=19 // pred_fallthru
          _
      $region20: #{cnn_forward.3} parent=5 // pred_fallthru
        _
      %p180 = scmp.le.s32.totalorder 1, %s18
      %p181 = scmp.lt.s32.totalorder %s18, 5
      %p182 = pnand %p180, %p181
      %p183 = pneg %p182
      // Predicated region
      $region29: #{cnn_forward.3} parent=5 // pred_check
        _
      $region30: #{cnn_forward.3} parent=5 // pred_check_branch
        %185 = sbr.rel (%p182) target = $region32
      $region31: #{cnn_forward.3} parent=5 // pred_region
        %s186 = ssub.s32 %s18, 1
        %s187 = sand.u32 %s52, 1
        %s188 = scalar_lea.sflag [#allocation3], %s187
        %s189 = sand.u32 %s52, 1
        %s190 = smul.addr %s189, 1024
        %s191 = scalar_lea.vmem [#allocation2], %s190
        // Predicated region
        $region33: #{cnn_forward.3} parent=31 // pred_check
          %p192 = pneg %p65
        $region34: #{cnn_forward.3} parent=31 // pred_check_branch
          %194 = sbr.rel (%p192) target = $region36
        $region35: #{cnn_forward.3} parent=31 // pred_region
          %196 = dma.done %s188, 16384
        $region36: #{cnn_forward.3} parent=31 // pred_fallthru
          _
        %s197 = sand.u32 %s78, 1
        %s198 = scalar_lea.sflag [#allocation6], %s197
        %s199 = sand.u32 %s78, 1
        %s200 = smul.addr %s199, 2
        %s201 = scalar_lea.vmem [#allocation5], %s200
        // Predicated region
        $region37: #{cnn_forward.3} parent=31 // pred_check
          %p202 = pneg %p91
        $region38: #{cnn_forward.3} parent=31 // pred_check_branch
          %204 = sbr.rel (%p202) target = $region40
        $region39: #{cnn_forward.3} parent=31 // pred_region
          %206 = dma.done %s198, 32
        $region40: #{cnn_forward.3} parent=31 // pred_fallthru
          _
        %p207 = pneg %p39
        %p208 = pneg %p36
        %s209 = sand.u32 %s52, 1
        %s210 = scalar_lea.sflag [#allocation3], %s209
        %s211 = sand.u32 %s52, 1
        %s212 = smul.addr %s211, 1024
        %s213 = scalar_lea.vmem [#allocation2], %s212
        %p214 = pneg %p65
        %p215 = pneg %p62
        %s216 = sand.u32 %s78, 1
        %s217 = scalar_lea.sflag [#allocation6], %s216
        %s218 = sand.u32 %s78, 1
        %s219 = smul.addr %s218, 2
        %s220 = scalar_lea.vmem [#allocation5], %s219
        %p221 = pneg %p91
        %p222 = pneg %p88
        %p223 = pneg %p117
        %p224 = pneg %p114
        %s225 = sand.u32 %s104, 1
        %s226 = scalar_lea.sflag [#allocation4], %s225
        %s227 = sand.u32 %s104, 1
        %s228 = smul.addr %s227, 4
        %s229 = scalar_lea.vmem [#allocation7], %s228
        %s230 = smul.u32 2, %s23
        %s231 = smul.u32 2, %s23
        %s232 = smul.u32 2, %s23
        %v233 = vld [vmem:[%s0] sm:$0xff]
        %v234 = vld [vmem:[%s0 + $0x8] sm:$0xff]
        %237 = vst [vmem:[#allocation1] ss:$4 sm:$0xff] %v233
        %s238 = scalar_lea.vmem [#allocation1], 32
        %239 = vst [vmem:[%s238] ss:$4 sm:$0xff] %v234
        %v240 = vld.sshfl [vmem:[#allocation1] sm:$0xff pattern:$0x73625140]
        %v241 = vld.sshfl [vmem:[#allocation1 + $0x8] sm:$0xff pattern:$0x73625140]
        %v242 = vld.sshfl [vmem:[#allocation1 + $0x10] sm:$0xff pattern:$0x73625140]
        %v243 = vld.sshfl [vmem:[#allocation1 + $0x18] sm:$0xff pattern:$0x73625140]
        %v244 = vld.sshfl [vmem:[#allocation1 + $0x20] sm:$0xff pattern:$0x73625140]
        %v245 = vld.sshfl [vmem:[#allocation1 + $0x28] sm:$0xff pattern:$0x73625140]
        %v246 = vld.sshfl [vmem:[#allocation1 + $0x30] sm:$0xff pattern:$0x73625140]
        %v247 = vld.sshfl [vmem:[#allocation1 + $0x38] sm:$0xff pattern:$0x73625140]
        %v256 = vpack.c.bf16 %v240, %v240
        %v257 = vpack.c.bf16 %v241, %v241
        %v258 = vpack.c.bf16 %v242, %v242
        %v259 = vpack.c.bf16 %v243, %v243
        %v260 = vpack.c.bf16 %v244, %v244
        %v261 = vpack.c.bf16 %v245, %v245
        %v262 = vpack.c.bf16 %v246, %v246
        %v263 = vpack.c.bf16 %v247, %v247
        %v264 = vld [vmem:[%s191] sm:$0xff]
        %v265 = vld [vmem:[%s191 + $0x8] sm:$0xff]
        %v266 = vld [vmem:[%s191 + $0x10] sm:$0xff]
        %v267 = vld [vmem:[%s191 + $0x18] sm:$0xff]
        %v268 = vld [vmem:[%s191 + $0x20] sm:$0xff]
        %v269 = vld [vmem:[%s191 + $0x28] sm:$0xff]
        %v270 = vld [vmem:[%s191 + $0x30] sm:$0xff]
        %v271 = vld [vmem:[%s191 + $0x38] sm:$0xff]
        %v272 = vld [vmem:[%s191 + $0x40] sm:$0xff]
        %v273 = vld [vmem:[%s191 + $0x48] sm:$0xff]
        %v274 = vld [vmem:[%s191 + $0x50] sm:$0xff]
        %v275 = vld [vmem:[%s191 + $0x58] sm:$0xff]
        %v276 = vld [vmem:[%s191 + $0x60] sm:$0xff]
        %v277 = vld [vmem:[%s191 + $0x68] sm:$0xff]
        %v278 = vld [vmem:[%s191 + $0x70] sm:$0xff]
        %v279 = vld [vmem:[%s191 + $0x78] sm:$0xff]
        %v280 = vld [vmem:[%s191 + $0x80] sm:$0xff]
        %v281 = vld [vmem:[%s191 + $0x88] sm:$0xff]
        %v282 = vld [vmem:[%s191 + $0x90] sm:$0xff]
        %v283 = vld [vmem:[%s191 + $0x98] sm:$0xff]
        %v284 = vld [vmem:[%s191 + $0xa0] sm:$0xff]
        %v285 = vld [vmem:[%s191 + $0xa8] sm:$0xff]
        %v286 = vld [vmem:[%s191 + $0xb0] sm:$0xff]
        %v287 = vld [vmem:[%s191 + $0xb8] sm:$0xff]
        %v288 = vld [vmem:[%s191 + $0xc0] sm:$0xff]
        %v289 = vld [vmem:[%s191 + $0xc8] sm:$0xff]
        %v290 = vld [vmem:[%s191 + $0xd0] sm:$0xff]
        %v291 = vld [vmem:[%s191 + $0xd8] sm:$0xff]
        %v292 = vld [vmem:[%s191 + $0xe0] sm:$0xff]
        %v293 = vld [vmem:[%s191 + $0xe8] sm:$0xff]
        %v294 = vld [vmem:[%s191 + $0xf0] sm:$0xff]
        %v295 = vld [vmem:[%s191 + $0xf8] sm:$0xff]
        %v296 = vld [vmem:[%s191 + $0x100] sm:$0xff]
        %v297 = vld [vmem:[%s191 + $0x108] sm:$0xff]
        %v298 = vld [vmem:[%s191 + $0x110] sm:$0xff]
        %v299 = vld [vmem:[%s191 + $0x118] sm:$0xff]
        %v300 = vld [vmem:[%s191 + $0x120] sm:$0xff]
        %v301 = vld [vmem:[%s191 + $0x128] sm:$0xff]
        %v302 = vld [vmem:[%s191 + $0x130] sm:$0xff]
        %v303 = vld [vmem:[%s191 + $0x138] sm:$0xff]
        %v304 = vld [vmem:[%s191 + $0x140] sm:$0xff]
        %v305 = vld [vmem:[%s191 + $0x148] sm:$0xff]
        %v306 = vld [vmem:[%s191 + $0x150] sm:$0xff]
        %v307 = vld [vmem:[%s191 + $0x158] sm:$0xff]
        %v308 = vld [vmem:[%s191 + $0x160] sm:$0xff]
        %v309 = vld [vmem:[%s191 + $0x168] sm:$0xff]
        %v310 = vld [vmem:[%s191 + $0x170] sm:$0xff]
        %v311 = vld [vmem:[%s191 + $0x178] sm:$0xff]
        %v312 = vld [vmem:[%s191 + $0x180] sm:$0xff]
        %v313 = vld [vmem:[%s191 + $0x188] sm:$0xff]
        %v314 = vld [vmem:[%s191 + $0x190] sm:$0xff]
        %v315 = vld [vmem:[%s191 + $0x198] sm:$0xff]
        %v316 = vld [vmem:[%s191 + $0x1a0] sm:$0xff]
        %v317 = vld [vmem:[%s191 + $0x1a8] sm:$0xff]
        %v318 = vld [vmem:[%s191 + $0x1b0] sm:$0xff]
        %v319 = vld [vmem:[%s191 + $0x1b8] sm:$0xff]
        %v320 = vld [vmem:[%s191 + $0x1c0] sm:$0xff]
        %v321 = vld [vmem:[%s191 + $0x1c8] sm:$0xff]
        %v322 = vld [vmem:[%s191 + $0x1d0] sm:$0xff]
        %v323 = vld [vmem:[%s191 + $0x1d8] sm:$0xff]
        %v324 = vld [vmem:[%s191 + $0x1e0] sm:$0xff]
        %v325 = vld [vmem:[%s191 + $0x1e8] sm:$0xff]
        %v326 = vld [vmem:[%s191 + $0x1f0] sm:$0xff]
        %v327 = vld [vmem:[%s191 + $0x1f8] sm:$0xff]
        %v328 = vld [vmem:[%s191 + $0x200] sm:$0xff]
        %v329 = vld [vmem:[%s191 + $0x208] sm:$0xff]
        %v330 = vld [vmem:[%s191 + $0x210] sm:$0xff]
        %v331 = vld [vmem:[%s191 + $0x218] sm:$0xff]
        %v332 = vld [vmem:[%s191 + $0x220] sm:$0xff]
        %v333 = vld [vmem:[%s191 + $0x228] sm:$0xff]
        %v334 = vld [vmem:[%s191 + $0x230] sm:$0xff]
        %v335 = vld [vmem:[%s191 + $0x238] sm:$0xff]
        %v336 = vld [vmem:[%s191 + $0x240] sm:$0xff]
        %v337 = vld [vmem:[%s191 + $0x248] sm:$0xff]
        %v338 = vld [vmem:[%s191 + $0x250] sm:$0xff]
        %v339 = vld [vmem:[%s191 + $0x258] sm:$0xff]
        %v340 = vld [vmem:[%s191 + $0x260] sm:$0xff]
        %v341 = vld [vmem:[%s191 + $0x268] sm:$0xff]
        %v342 = vld [vmem:[%s191 + $0x270] sm:$0xff]
        %v343 = vld [vmem:[%s191 + $0x278] sm:$0xff]
        %v344 = vld [vmem:[%s191 + $0x280] sm:$0xff]
        %v345 = vld [vmem:[%s191 + $0x288] sm:$0xff]
        %v346 = vld [vmem:[%s191 + $0x290] sm:$0xff]
        %v347 = vld [vmem:[%s191 + $0x298] sm:$0xff]
        %v348 = vld [vmem:[%s191 + $0x2a0] sm:$0xff]
        %v349 = vld [vmem:[%s191 + $0x2a8] sm:$0xff]
        %v350 = vld [vmem:[%s191 + $0x2b0] sm:$0xff]
        %v351 = vld [vmem:[%s191 + $0x2b8] sm:$0xff]
        %v352 = vld [vmem:[%s191 + $0x2c0] sm:$0xff]
        %v353 = vld [vmem:[%s191 + $0x2c8] sm:$0xff]
        %v354 = vld [vmem:[%s191 + $0x2d0] sm:$0xff]
        %v355 = vld [vmem:[%s191 + $0x2d8] sm:$0xff]
        %v356 = vld [vmem:[%s191 + $0x2e0] sm:$0xff]
        %v357 = vld [vmem:[%s191 + $0x2e8] sm:$0xff]
        %v358 = vld [vmem:[%s191 + $0x2f0] sm:$0xff]
        %v359 = vld [vmem:[%s191 + $0x2f8] sm:$0xff]
        %v360 = vld [vmem:[%s191 + $0x300] sm:$0xff]
        %v361 = vld [vmem:[%s191 + $0x308] sm:$0xff]
        %v362 = vld [vmem:[%s191 + $0x310] sm:$0xff]
        %v363 = vld [vmem:[%s191 + $0x318] sm:$0xff]
        %v364 = vld [vmem:[%s191 + $0x320] sm:$0xff]
        %v365 = vld [vmem:[%s191 + $0x328] sm:$0xff]
        %v366 = vld [vmem:[%s191 + $0x330] sm:$0xff]
        %v367 = vld [vmem:[%s191 + $0x338] sm:$0xff]
        %v368 = vld [vmem:[%s191 + $0x340] sm:$0xff]
        %v369 = vld [vmem:[%s191 + $0x348] sm:$0xff]
        %v370 = vld [vmem:[%s191 + $0x350] sm:$0xff]
        %v371 = vld [vmem:[%s191 + $0x358] sm:$0xff]
        %v372 = vld [vmem:[%s191 + $0x360] sm:$0xff]
        %v373 = vld [vmem:[%s191 + $0x368] sm:$0xff]
        %v374 = vld [vmem:[%s191 + $0x370] sm:$0xff]
        %v375 = vld [vmem:[%s191 + $0x378] sm:$0xff]
        %v376 = vld [vmem:[%s191 + $0x380] sm:$0xff]
        %v377 = vld [vmem:[%s191 + $0x388] sm:$0xff]
        %v378 = vld [vmem:[%s191 + $0x390] sm:$0xff]
        %v379 = vld [vmem:[%s191 + $0x398] sm:$0xff]
        %v380 = vld [vmem:[%s191 + $0x3a0] sm:$0xff]
        %v381 = vld [vmem:[%s191 + $0x3a8] sm:$0xff]
        %v382 = vld [vmem:[%s191 + $0x3b0] sm:$0xff]
        %v383 = vld [vmem:[%s191 + $0x3b8] sm:$0xff]
        %v384 = vld [vmem:[%s191 + $0x3c0] sm:$0xff]
        %v385 = vld [vmem:[%s191 + $0x3c8] sm:$0xff]
        %v386 = vld [vmem:[%s191 + $0x3d0] sm:$0xff]
        %v387 = vld [vmem:[%s191 + $0x3d8] sm:$0xff]
        %v388 = vld [vmem:[%s191 + $0x3e0] sm:$0xff]
        %v389 = vld [vmem:[%s191 + $0x3e8] sm:$0xff]
        %v390 = vld [vmem:[%s191 + $0x3f0] sm:$0xff]
        %v391 = vld [vmem:[%s191 + $0x3f8] sm:$0xff]
        %v392 = vld [vmem:[%s201] sm:$0x3]
        %v394 = vperm.slane %v392, 0
        %v395 = vperm.slane %v392, 1
        %v526 = vunpack.c.l.b16 %v264
        %v527 = vunpack.c.h.b16 %v264
        %v528 = vunpack.c.l.b16 %v265
        %v529 = vunpack.c.h.b16 %v265
        %v530 = vunpack.c.l.b16 %v266
        %v531 = vunpack.c.h.b16 %v266
        %v532 = vunpack.c.l.b16 %v267
        %v533 = vunpack.c.h.b16 %v267
        %v534 = vunpack.c.l.b16 %v268
        %v535 = vunpack.c.h.b16 %v268
        %v536 = vunpack.c.l.b16 %v269
        %v537 = vunpack.c.h.b16 %v269
        %v538 = vunpack.c.l.b16 %v270
        %v539 = vunpack.c.h.b16 %v270
        %v540 = vunpack.c.l.b16 %v271
        %v541 = vunpack.c.h.b16 %v271
        %v542 = vunpack.c.l.b16 %v272
        %v543 = vunpack.c.h.b16 %v272
        %v544 = vunpack.c.l.b16 %v273
        %v545 = vunpack.c.h.b16 %v273
        %v546 = vunpack.c.l.b16 %v274
        %v547 = vunpack.c.h.b16 %v274
        %v548 = vunpack.c.l.b16 %v275
        %v549 = vunpack.c.h.b16 %v275
        %v550 = vunpack.c.l.b16 %v276
        %v551 = vunpack.c.h.b16 %v276
        %v552 = vunpack.c.l.b16 %v277
        %v553 = vunpack.c.h.b16 %v277
        %v554 = vunpack.c.l.b16 %v278
        %v555 = vunpack.c.h.b16 %v278
        %v556 = vunpack.c.l.b16 %v279
        %v557 = vunpack.c.h.b16 %v279
        %v558 = vunpack.c.l.b16 %v280
        %v559 = vunpack.c.h.b16 %v280
        %v560 = vunpack.c.l.b16 %v281
        %v561 = vunpack.c.h.b16 %v281
        %v562 = vunpack.c.l.b16 %v282
        %v563 = vunpack.c.h.b16 %v282
        %v564 = vunpack.c.l.b16 %v283
        %v565 = vunpack.c.h.b16 %v283
        %v566 = vunpack.c.l.b16 %v284
        %v567 = vunpack.c.h.b16 %v284
        %v568 = vunpack.c.l.b16 %v285
        %v569 = vunpack.c.h.b16 %v285
        %v570 = vunpack.c.l.b16 %v286
        %v571 = vunpack.c.h.b16 %v286
        %v572 = vunpack.c.l.b16 %v287
        %v573 = vunpack.c.h.b16 %v287
        %v574 = vunpack.c.l.b16 %v288
        %v575 = vunpack.c.h.b16 %v288
        %v576 = vunpack.c.l.b16 %v289
        %v577 = vunpack.c.h.b16 %v289
        %v578 = vunpack.c.l.b16 %v290
        %v579 = vunpack.c.h.b16 %v290
        %v580 = vunpack.c.l.b16 %v291
        %v581 = vunpack.c.h.b16 %v291
        %v582 = vunpack.c.l.b16 %v292
        %v583 = vunpack.c.h.b16 %v292
        %v584 = vunpack.c.l.b16 %v293
        %v585 = vunpack.c.h.b16 %v293
        %v586 = vunpack.c.l.b16 %v294
        %v587 = vunpack.c.h.b16 %v294
        %v588 = vunpack.c.l.b16 %v295
        %v589 = vunpack.c.h.b16 %v295
        %v590 = vunpack.c.l.b16 %v296
        %v591 = vunpack.c.h.b16 %v296
        %v592 = vunpack.c.l.b16 %v297
        %v593 = vunpack.c.h.b16 %v297
        %v594 = vunpack.c.l.b16 %v298
        %v595 = vunpack.c.h.b16 %v298
        %v596 = vunpack.c.l.b16 %v299
        %v597 = vunpack.c.h.b16 %v299
        %v598 = vunpack.c.l.b16 %v300
        %v599 = vunpack.c.h.b16 %v300
        %v600 = vunpack.c.l.b16 %v301
        %v601 = vunpack.c.h.b16 %v301
        %v602 = vunpack.c.l.b16 %v302
        %v603 = vunpack.c.h.b16 %v302
        %v604 = vunpack.c.l.b16 %v303
        %v605 = vunpack.c.h.b16 %v303
        %v606 = vunpack.c.l.b16 %v304
        %v607 = vunpack.c.h.b16 %v304
        %v608 = vunpack.c.l.b16 %v305
        %v609 = vunpack.c.h.b16 %v305
        %v610 = vunpack.c.l.b16 %v306
        %v611 = vunpack.c.h.b16 %v306
        %v612 = vunpack.c.l.b16 %v307
        %v613 = vunpack.c.h.b16 %v307
        %v614 = vunpack.c.l.b16 %v308
        %v615 = vunpack.c.h.b16 %v308
        %v616 = vunpack.c.l.b16 %v309
        %v617 = vunpack.c.h.b16 %v309
        %v618 = vunpack.c.l.b16 %v310
        %v619 = vunpack.c.h.b16 %v310
        %v620 = vunpack.c.l.b16 %v311
        %v621 = vunpack.c.h.b16 %v311
        %v622 = vunpack.c.l.b16 %v312
        %v623 = vunpack.c.h.b16 %v312
        %v624 = vunpack.c.l.b16 %v313
        %v625 = vunpack.c.h.b16 %v313
        %v626 = vunpack.c.l.b16 %v314
        %v627 = vunpack.c.h.b16 %v314
        %v628 = vunpack.c.l.b16 %v315
        %v629 = vunpack.c.h.b16 %v315
        %v630 = vunpack.c.l.b16 %v316
        %v631 = vunpack.c.h.b16 %v316
        %v632 = vunpack.c.l.b16 %v317
        %v633 = vunpack.c.h.b16 %v317
        %v634 = vunpack.c.l.b16 %v318
        %v635 = vunpack.c.h.b16 %v318
        %v636 = vunpack.c.l.b16 %v319
        %v637 = vunpack.c.h.b16 %v319
        %v638 = vunpack.c.l.b16 %v320
        %v639 = vunpack.c.h.b16 %v320
        %v640 = vunpack.c.l.b16 %v321
        %v641 = vunpack.c.h.b16 %v321
        %v642 = vunpack.c.l.b16 %v322
        %v643 = vunpack.c.h.b16 %v322
        %v644 = vunpack.c.l.b16 %v323
        %v645 = vunpack.c.h.b16 %v323
        %v646 = vunpack.c.l.b16 %v324
        %v647 = vunpack.c.h.b16 %v324
        %v648 = vunpack.c.l.b16 %v325
        %v649 = vunpack.c.h.b16 %v325
        %v650 = vunpack.c.l.b16 %v326
        %v651 = vunpack.c.h.b16 %v326
        %v652 = vunpack.c.l.b16 %v327
        %v653 = vunpack.c.h.b16 %v327
        %v654 = vunpack.c.l.b16 %v328
        %v655 = vunpack.c.h.b16 %v328
        %v656 = vunpack.c.l.b16 %v329
        %v657 = vunpack.c.h.b16 %v329
        %v658 = vunpack.c.l.b16 %v330
        %v659 = vunpack.c.h.b16 %v330
        %v660 = vunpack.c.l.b16 %v331
        %v661 = vunpack.c.h.b16 %v331
        %v662 = vunpack.c.l.b16 %v332
        %v663 = vunpack.c.h.b16 %v332
        %v664 = vunpack.c.l.b16 %v333
        %v665 = vunpack.c.h.b16 %v333
        %v666 = vunpack.c.l.b16 %v334
        %v667 = vunpack.c.h.b16 %v334
        %v668 = vunpack.c.l.b16 %v335
        %v669 = vunpack.c.h.b16 %v335
        %v670 = vunpack.c.l.b16 %v336
        %v671 = vunpack.c.h.b16 %v336
        %v672 = vunpack.c.l.b16 %v337
        %v673 = vunpack.c.h.b16 %v337
        %v674 = vunpack.c.l.b16 %v338
        %v675 = vunpack.c.h.b16 %v338
        %v676 = vunpack.c.l.b16 %v339
        %v677 = vunpack.c.h.b16 %v339
        %v678 = vunpack.c.l.b16 %v340
        %v679 = vunpack.c.h.b16 %v340
        %v680 = vunpack.c.l.b16 %v341
        %v681 = vunpack.c.h.b16 %v341
        %v682 = vunpack.c.l.b16 %v342
        %v683 = vunpack.c.h.b16 %v342
        %v684 = vunpack.c.l.b16 %v343
        %v685 = vunpack.c.h.b16 %v343
        %v686 = vunpack.c.l.b16 %v344
        %v687 = vunpack.c.h.b16 %v344
        %v688 = vunpack.c.l.b16 %v345
        %v689 = vunpack.c.h.b16 %v345
        %v690 = vunpack.c.l.b16 %v346
        %v691 = vunpack.c.h.b16 %v346
        %v692 = vunpack.c.l.b16 %v347
        %v693 = vunpack.c.h.b16 %v347
        %v694 = vunpack.c.l.b16 %v348
        %v695 = vunpack.c.h.b16 %v348
        %v696 = vunpack.c.l.b16 %v349
        %v697 = vunpack.c.h.b16 %v349
        %v698 = vunpack.c.l.b16 %v350
        %v699 = vunpack.c.h.b16 %v350
        %v700 = vunpack.c.l.b16 %v351
        %v701 = vunpack.c.h.b16 %v351
        %v702 = vunpack.c.l.b16 %v352
        %v703 = vunpack.c.h.b16 %v352
        %v704 = vunpack.c.l.b16 %v353
        %v705 = vunpack.c.h.b16 %v353
        %v706 = vunpack.c.l.b16 %v354
        %v707 = vunpack.c.h.b16 %v354
        %v708 = vunpack.c.l.b16 %v355
        %v709 = vunpack.c.h.b16 %v355
        %v710 = vunpack.c.l.b16 %v356
        %v711 = vunpack.c.h.b16 %v356
        %v712 = vunpack.c.l.b16 %v357
        %v713 = vunpack.c.h.b16 %v357
        %v714 = vunpack.c.l.b16 %v358
        %v715 = vunpack.c.h.b16 %v358
        %v716 = vunpack.c.l.b16 %v359
        %v717 = vunpack.c.h.b16 %v359
        %v718 = vunpack.c.l.b16 %v360
        %v719 = vunpack.c.h.b16 %v360
        %v720 = vunpack.c.l.b16 %v361
        %v721 = vunpack.c.h.b16 %v361
        %v722 = vunpack.c.l.b16 %v362
        %v723 = vunpack.c.h.b16 %v362
        %v724 = vunpack.c.l.b16 %v363
        %v725 = vunpack.c.h.b16 %v363
        %v726 = vunpack.c.l.b16 %v364
        %v727 = vunpack.c.h.b16 %v364
        %v728 = vunpack.c.l.b16 %v365
        %v729 = vunpack.c.h.b16 %v365
        %v730 = vunpack.c.l.b16 %v366
        %v731 = vunpack.c.h.b16 %v366
        %v732 = vunpack.c.l.b16 %v367
        %v733 = vunpack.c.h.b16 %v367
        %v734 = vunpack.c.l.b16 %v368
        %v735 = vunpack.c.h.b16 %v368
        %v736 = vunpack.c.l.b16 %v369
        %v737 = vunpack.c.h.b16 %v369
        %v738 = vunpack.c.l.b16 %v370
        %v739 = vunpack.c.h.b16 %v370
        %v740 = vunpack.c.l.b16 %v371
        %v741 = vunpack.c.h.b16 %v371
        %v742 = vunpack.c.l.b16 %v372
        %v743 = vunpack.c.h.b16 %v372
        %v744 = vunpack.c.l.b16 %v373
        %v745 = vunpack.c.h.b16 %v373
        %v746 = vunpack.c.l.b16 %v374
        %v747 = vunpack.c.h.b16 %v374
        %v748 = vunpack.c.l.b16 %v375
        %v749 = vunpack.c.h.b16 %v375
        %v750 = vunpack.c.l.b16 %v376
        %v751 = vunpack.c.h.b16 %v376
        %v752 = vunpack.c.l.b16 %v377
        %v753 = vunpack.c.h.b16 %v377
        %v754 = vunpack.c.l.b16 %v378
        %v755 = vunpack.c.h.b16 %v378
        %v756 = vunpack.c.l.b16 %v379
        %v757 = vunpack.c.h.b16 %v379
        %v758 = vunpack.c.l.b16 %v380
        %v759 = vunpack.c.h.b16 %v380
        %v760 = vunpack.c.l.b16 %v381
        %v761 = vunpack.c.h.b16 %v381
        %v762 = vunpack.c.l.b16 %v382
        %v763 = vunpack.c.h.b16 %v382
        %v764 = vunpack.c.l.b16 %v383
        %v765 = vunpack.c.h.b16 %v383
        %v766 = vunpack.c.l.b16 %v384
        %v767 = vunpack.c.h.b16 %v384
        %v768 = vunpack.c.l.b16 %v385
        %v769 = vunpack.c.h.b16 %v385
        %v770 = vunpack.c.l.b16 %v386
        %v771 = vunpack.c.h.b16 %v386
        %v772 = vunpack.c.l.b16 %v387
        %v773 = vunpack.c.h.b16 %v387
        %v774 = vunpack.c.l.b16 %v388
        %v775 = vunpack.c.h.b16 %v388
        %v776 = vunpack.c.l.b16 %v389
        %v777 = vunpack.c.h.b16 %v389
        %v778 = vunpack.c.l.b16 %v390
        %v779 = vunpack.c.h.b16 %v390
        %v780 = vunpack.c.l.b16 %v391
        %v781 = vunpack.c.h.b16 %v391
        %v782 = vpack.c.b16 %v528, %v526
        %v783 = vpack.c.b16 %v529, %v527
        %v784 = vpack.c.b16 %v532, %v530
        %v785 = vpack.c.b16 %v533, %v531
        %v786 = vpack.c.b16 %v536, %v534
        %v787 = vpack.c.b16 %v537, %v535
        %v788 = vpack.c.b16 %v540, %v538
        %v789 = vpack.c.b16 %v541, %v539
        %v790 = vpack.c.b16 %v544, %v542
        %v791 = vpack.c.b16 %v545, %v543
        %v792 = vpack.c.b16 %v548, %v546
        %v793 = vpack.c.b16 %v549, %v547
        %v794 = vpack.c.b16 %v552, %v550
        %v795 = vpack.c.b16 %v553, %v551
        %v796 = vpack.c.b16 %v556, %v554
        %v797 = vpack.c.b16 %v557, %v555
        %v798 = vpack.c.b16 %v560, %v558
        %v799 = vpack.c.b16 %v561, %v559
        %v800 = vpack.c.b16 %v564, %v562
        %v801 = vpack.c.b16 %v565, %v563
        %v802 = vpack.c.b16 %v568, %v566
        %v803 = vpack.c.b16 %v569, %v567
        %v804 = vpack.c.b16 %v572, %v570
        %v805 = vpack.c.b16 %v573, %v571
        %v806 = vpack.c.b16 %v576, %v574
        %v807 = vpack.c.b16 %v577, %v575
        %v808 = vpack.c.b16 %v580, %v578
        %v809 = vpack.c.b16 %v581, %v579
        %v810 = vpack.c.b16 %v584, %v582
        %v811 = vpack.c.b16 %v585, %v583
        %v812 = vpack.c.b16 %v588, %v586
        %v813 = vpack.c.b16 %v589, %v587
        %v814 = vpack.c.b16 %v592, %v590
        %v815 = vpack.c.b16 %v593, %v591
        %v816 = vpack.c.b16 %v596, %v594
        %v817 = vpack.c.b16 %v597, %v595
        %v818 = vpack.c.b16 %v600, %v598
        %v819 = vpack.c.b16 %v601, %v599
        %v820 = vpack.c.b16 %v604, %v602
        %v821 = vpack.c.b16 %v605, %v603
        %v822 = vpack.c.b16 %v608, %v606
        %v823 = vpack.c.b16 %v609, %v607
        %v824 = vpack.c.b16 %v612, %v610
        %v825 = vpack.c.b16 %v613, %v611
        %v826 = vpack.c.b16 %v616, %v614
        %v827 = vpack.c.b16 %v617, %v615
        %v828 = vpack.c.b16 %v620, %v618
        %v829 = vpack.c.b16 %v621, %v619
        %v830 = vpack.c.b16 %v624, %v622
        %v831 = vpack.c.b16 %v625, %v623
        %v832 = vpack.c.b16 %v628, %v626
        %v833 = vpack.c.b16 %v629, %v627
        %v834 = vpack.c.b16 %v632, %v630
        %v835 = vpack.c.b16 %v633, %v631
        %v836 = vpack.c.b16 %v636, %v634
        %v837 = vpack.c.b16 %v637, %v635
        %v838 = vpack.c.b16 %v640, %v638
        %v839 = vpack.c.b16 %v641, %v639
        %v840 = vpack.c.b16 %v644, %v642
        %v841 = vpack.c.b16 %v645, %v643
        %v842 = vpack.c.b16 %v648, %v646
        %v843 = vpack.c.b16 %v649, %v647
        %v844 = vpack.c.b16 %v652, %v650
        %v845 = vpack.c.b16 %v653, %v651
        %v846 = vpack.c.b16 %v656, %v654
        %v847 = vpack.c.b16 %v657, %v655
        %v848 = vpack.c.b16 %v660, %v658
        %v849 = vpack.c.b16 %v661, %v659
        %v850 = vpack.c.b16 %v664, %v662
        %v851 = vpack.c.b16 %v665, %v663
        %v852 = vpack.c.b16 %v668, %v666
        %v853 = vpack.c.b16 %v669, %v667
        %v854 = vpack.c.b16 %v672, %v670
        %v855 = vpack.c.b16 %v673, %v671
        %v856 = vpack.c.b16 %v676, %v674
        %v857 = vpack.c.b16 %v677, %v675
        %v858 = vpack.c.b16 %v680, %v678
        %v859 = vpack.c.b16 %v681, %v679
        %v860 = vpack.c.b16 %v684, %v682
        %v861 = vpack.c.b16 %v685, %v683
        %v862 = vpack.c.b16 %v688, %v686
        %v863 = vpack.c.b16 %v689, %v687
        %v864 = vpack.c.b16 %v692, %v690
        %v865 = vpack.c.b16 %v693, %v691
        %v866 = vpack.c.b16 %v696, %v694
        %v867 = vpack.c.b16 %v697, %v695
        %v868 = vpack.c.b16 %v700, %v698
        %v869 = vpack.c.b16 %v701, %v699
        %v870 = vpack.c.b16 %v704, %v702
        %v871 = vpack.c.b16 %v705, %v703
        %v872 = vpack.c.b16 %v708, %v706
        %v873 = vpack.c.b16 %v709, %v707
        %v874 = vpack.c.b16 %v712, %v710
        %v875 = vpack.c.b16 %v713, %v711
        %v876 = vpack.c.b16 %v716, %v714
        %v877 = vpack.c.b16 %v717, %v715
        %v878 = vpack.c.b16 %v720, %v718
        %v879 = vpack.c.b16 %v721, %v719
        %v880 = vpack.c.b16 %v724, %v722
        %v881 = vpack.c.b16 %v725, %v723
        %v882 = vpack.c.b16 %v728, %v726
        %v883 = vpack.c.b16 %v729, %v727
        %v884 = vpack.c.b16 %v732, %v730
        %v885 = vpack.c.b16 %v733, %v731
        %v886 = vpack.c.b16 %v736, %v734
        %v887 = vpack.c.b16 %v737, %v735
        %v888 = vpack.c.b16 %v740, %v738
        %v889 = vpack.c.b16 %v741, %v739
        %v890 = vpack.c.b16 %v744, %v742
        %v891 = vpack.c.b16 %v745, %v743
        %v892 = vpack.c.b16 %v748, %v746
        %v893 = vpack.c.b16 %v749, %v747
        %v894 = vpack.c.b16 %v752, %v750
        %v895 = vpack.c.b16 %v753, %v751
        %v896 = vpack.c.b16 %v756, %v754
        %v897 = vpack.c.b16 %v757, %v755
        %v898 = vpack.c.b16 %v760, %v758
        %v899 = vpack.c.b16 %v761, %v759
        %v900 = vpack.c.b16 %v764, %v762
        %v901 = vpack.c.b16 %v765, %v763
        %v902 = vpack.c.b16 %v768, %v766
        %v903 = vpack.c.b16 %v769, %v767
        %v904 = vpack.c.b16 %v772, %v770
        %v905 = vpack.c.b16 %v773, %v771
        %v906 = vpack.c.b16 %v776, %v774
        %v907 = vpack.c.b16 %v777, %v775
        %v908 = vpack.c.b16 %v780, %v778
        %v909 = vpack.c.b16 %v781, %v779
        %1038 = vmatpush.bf16.msra.mxu0 %v796
        %1039 = vmatpush.bf16.msra.mxu0 %v794
        %1040 = vmatpush.bf16.msra.mxu0 %v792
        %1041 = vmatpush.bf16.msra.mxu0 %v790
        %1042 = vmatpush.bf16.msra.mxu0 %v788
        %1043 = vmatpush.bf16.msra.mxu0 %v786
        %1044 = vmatpush.bf16.msra.mxu0 %v784
        %1045 = vmatpush.bf16.msra.mxu0 %v782
        %1046 = vmatmul.bf16.gmra.mxu0 %v256
        %v1047 = vpop.f32.mrf.mxu0
        %v1048 = vadd.f32 %v394, %v1047
        %v1049 = vpop.f32.mrf.mxu0
        %1050 = vdwg.mxu0
        %1051 = vmatpush.bf16.msra.mxu0 %v812
        %1052 = vmatpush.bf16.msra.mxu0 %v810
        %1053 = vmatpush.bf16.msra.mxu0 %v808
        %1054 = vmatpush.bf16.msra.mxu0 %v806
        %1055 = vmatpush.bf16.msra.mxu0 %v804
        %1056 = vmatpush.bf16.msra.mxu0 %v802
        %1057 = vmatpush.bf16.msra.mxu0 %v800
        %1058 = vmatpush.bf16.msra.mxu0 %v798
        %1059 = vmatmul.bf16.gmra.mxu0 %v257
        %v1060 = vpop.f32.mrf.mxu0
        %v1061 = vadd.f32 %v1048, %v1060
        %v1062 = vpop.f32.mrf.mxu0
        %1063 = vdwg.mxu0
        %1064 = vmatpush.bf16.msra.mxu0 %v828
        %1065 = vmatpush.bf16.msra.mxu0 %v826
        %1066 = vmatpush.bf16.msra.mxu0 %v824
        %1067 = vmatpush.bf16.msra.mxu0 %v822
        %1068 = vmatpush.bf16.msra.mxu0 %v820
        %1069 = vmatpush.bf16.msra.mxu0 %v818
        %1070 = vmatpush.bf16.msra.mxu0 %v816
        %1071 = vmatpush.bf16.msra.mxu0 %v814
        %1072 = vmatmul.bf16.gmra.mxu0 %v258
        %v1073 = vpop.f32.mrf.mxu0
        %v1074 = vadd.f32 %v1061, %v1073
        %v1075 = vpop.f32.mrf.mxu0
        %1076 = vdwg.mxu0
        %1077 = vmatpush.bf16.msra.mxu0 %v844
        %1078 = vmatpush.bf16.msra.mxu0 %v842
        %1079 = vmatpush.bf16.msra.mxu0 %v840
        %1080 = vmatpush.bf16.msra.mxu0 %v838
        %1081 = vmatpush.bf16.msra.mxu0 %v836
        %1082 = vmatpush.bf16.msra.mxu0 %v834
        %1083 = vmatpush.bf16.msra.mxu0 %v832
        %1084 = vmatpush.bf16.msra.mxu0 %v830
        %1085 = vmatmul.bf16.gmra.mxu0 %v259
        %v1086 = vpop.f32.mrf.mxu0
        %v1087 = vadd.f32 %v1074, %v1086
        %v1088 = vpop.f32.mrf.mxu0
        %1089 = vdwg.mxu0
        %1090 = vmatpush.bf16.msra.mxu0 %v860
        %1091 = vmatpush.bf16.msra.mxu0 %v858
        %1092 = vmatpush.bf16.msra.mxu0 %v856
        %1093 = vmatpush.bf16.msra.mxu0 %v854
        %1094 = vmatpush.bf16.msra.mxu0 %v852
        %1095 = vmatpush.bf16.msra.mxu0 %v850
        %1096 = vmatpush.bf16.msra.mxu0 %v848
        %1097 = vmatpush.bf16.msra.mxu0 %v846
        %1098 = vmatmul.bf16.gmra.mxu0 %v260
        %v1099 = vpop.f32.mrf.mxu0
        %v1100 = vadd.f32 %v1087, %v1099
        %v1101 = vpop.f32.mrf.mxu0
        %1102 = vdwg.mxu0
        %1103 = vmatpush.bf16.msra.mxu0 %v876
        %1104 = vmatpush.bf16.msra.mxu0 %v874
        %1105 = vmatpush.bf16.msra.mxu0 %v872
        %1106 = vmatpush.bf16.msra.mxu0 %v870
        %1107 = vmatpush.bf16.msra.mxu0 %v868
        %1108 = vmatpush.bf16.msra.mxu0 %v866
        %1109 = vmatpush.bf16.msra.mxu0 %v864
        %1110 = vmatpush.bf16.msra.mxu0 %v862
        %1111 = vmatmul.bf16.gmra.mxu0 %v261
        %v1112 = vpop.f32.mrf.mxu0
        %v1113 = vadd.f32 %v1100, %v1112
        %v1114 = vpop.f32.mrf.mxu0
        %1115 = vdwg.mxu0
        %1116 = vmatpush.bf16.msra.mxu0 %v892
        %1117 = vmatpush.bf16.msra.mxu0 %v890
        %1118 = vmatpush.bf16.msra.mxu0 %v888
        %1119 = vmatpush.bf16.msra.mxu0 %v886
        %1120 = vmatpush.bf16.msra.mxu0 %v884
        %1121 = vmatpush.bf16.msra.mxu0 %v882
        %1122 = vmatpush.bf16.msra.mxu0 %v880
        %1123 = vmatpush.bf16.msra.mxu0 %v878
        %1124 = vmatmul.bf16.gmra.mxu0 %v262
        %v1125 = vpop.f32.mrf.mxu0
        %v1126 = vadd.f32 %v1113, %v1125
        %v1127 = vpop.f32.mrf.mxu0
        %1128 = vdwg.mxu0
        %1129 = vmatpush.bf16.msra.mxu0 %v908
        %1130 = vmatpush.bf16.msra.mxu0 %v906
        %1131 = vmatpush.bf16.msra.mxu0 %v904
        %1132 = vmatpush.bf16.msra.mxu0 %v902
        %1133 = vmatpush.bf16.msra.mxu0 %v900
        %1134 = vmatpush.bf16.msra.mxu0 %v898
        %1135 = vmatpush.bf16.msra.mxu0 %v896
        %1136 = vmatpush.bf16.msra.mxu0 %v894
        %1137 = vmatmul.bf16.gmra.mxu0 %v263
        %v1138 = vpop.f32.mrf.mxu0
        %v1139 = vadd.f32 %v1126, %v1138
        %v1140 = vpop.f32.mrf.mxu0
        %1141 = vdwg.mxu0
        %1142 = vmatpush.bf16.msra.mxu0 %v797
        %1143 = vmatpush.bf16.msra.mxu0 %v795
        %1144 = vmatpush.bf16.msra.mxu0 %v793
        %1145 = vmatpush.bf16.msra.mxu0 %v791
        %1146 = vmatpush.bf16.msra.mxu0 %v789
        %1147 = vmatpush.bf16.msra.mxu0 %v787
        %1148 = vmatpush.bf16.msra.mxu0 %v785
        %1149 = vmatpush.bf16.msra.mxu0 %v783
        %1150 = vmatmul.bf16.gmra.mxu0 %v256
        %v1151 = vpop.f32.mrf.mxu0
        %v1152 = vadd.f32 %v395, %v1151
        %v1153 = vpop.f32.mrf.mxu0
        %1154 = vdwg.mxu0
        %1155 = vmatpush.bf16.msra.mxu0 %v813
        %1156 = vmatpush.bf16.msra.mxu0 %v811
        %1157 = vmatpush.bf16.msra.mxu0 %v809
        %1158 = vmatpush.bf16.msra.mxu0 %v807
        %1159 = vmatpush.bf16.msra.mxu0 %v805
        %1160 = vmatpush.bf16.msra.mxu0 %v803
        %1161 = vmatpush.bf16.msra.mxu0 %v801
        %1162 = vmatpush.bf16.msra.mxu0 %v799
        %1163 = vmatmul.bf16.gmra.mxu0 %v257
        %v1164 = vpop.f32.mrf.mxu0
        %v1165 = vadd.f32 %v1152, %v1164
        %v1166 = vpop.f32.mrf.mxu0
        %1167 = vdwg.mxu0
        %1168 = vmatpush.bf16.msra.mxu0 %v829
        %1169 = vmatpush.bf16.msra.mxu0 %v827
        %1170 = vmatpush.bf16.msra.mxu0 %v825
        %1171 = vmatpush.bf16.msra.mxu0 %v823
        %1172 = vmatpush.bf16.msra.mxu0 %v821
        %1173 = vmatpush.bf16.msra.mxu0 %v819
        %1174 = vmatpush.bf16.msra.mxu0 %v817
        %1175 = vmatpush.bf16.msra.mxu0 %v815
        %1176 = vmatmul.bf16.gmra.mxu0 %v258
        %v1177 = vpop.f32.mrf.mxu0
        %v1178 = vadd.f32 %v1165, %v1177
        %v1179 = vpop.f32.mrf.mxu0
        %1180 = vdwg.mxu0
        %1181 = vmatpush.bf16.msra.mxu0 %v845
        %1182 = vmatpush.bf16.msra.mxu0 %v843
        %1183 = vmatpush.bf16.msra.mxu0 %v841
        %1184 = vmatpush.bf16.msra.mxu0 %v839
        %1185 = vmatpush.bf16.msra.mxu0 %v837
        %1186 = vmatpush.bf16.msra.mxu0 %v835
        %1187 = vmatpush.bf16.msra.mxu0 %v833
        %1188 = vmatpush.bf16.msra.mxu0 %v831
        %1189 = vmatmul.bf16.gmra.mxu0 %v259
        %v1190 = vpop.f32.mrf.mxu0
        %v1191 = vadd.f32 %v1178, %v1190
        %v1192 = vpop.f32.mrf.mxu0
        %1193 = vdwg.mxu0
        %1194 = vmatpush.bf16.msra.mxu0 %v861
        %1195 = vmatpush.bf16.msra.mxu0 %v859
        %1196 = vmatpush.bf16.msra.mxu0 %v857
        %1197 = vmatpush.bf16.msra.mxu0 %v855
        %1198 = vmatpush.bf16.msra.mxu0 %v853
        %1199 = vmatpush.bf16.msra.mxu0 %v851
        %1200 = vmatpush.bf16.msra.mxu0 %v849
        %1201 = vmatpush.bf16.msra.mxu0 %v847
        %1202 = vmatmul.bf16.gmra.mxu0 %v260
        %v1203 = vpop.f32.mrf.mxu0
        %v1204 = vadd.f32 %v1191, %v1203
        %v1205 = vpop.f32.mrf.mxu0
        %1206 = vdwg.mxu0
        %1207 = vmatpush.bf16.msra.mxu0 %v877
        %1208 = vmatpush.bf16.msra.mxu0 %v875
        %1209 = vmatpush.bf16.msra.mxu0 %v873
        %1210 = vmatpush.bf16.msra.mxu0 %v871
        %1211 = vmatpush.bf16.msra.mxu0 %v869
        %1212 = vmatpush.bf16.msra.mxu0 %v867
        %1213 = vmatpush.bf16.msra.mxu0 %v865
        %1214 = vmatpush.bf16.msra.mxu0 %v863
        %1215 = vmatmul.bf16.gmra.mxu0 %v261
        %v1216 = vpop.f32.mrf.mxu0
        %v1217 = vadd.f32 %v1204, %v1216
        %v1218 = vpop.f32.mrf.mxu0
        %1219 = vdwg.mxu0
        %1220 = vmatpush.bf16.msra.mxu0 %v893
        %1221 = vmatpush.bf16.msra.mxu0 %v891
        %1222 = vmatpush.bf16.msra.mxu0 %v889
        %1223 = vmatpush.bf16.msra.mxu0 %v887
        %1224 = vmatpush.bf16.msra.mxu0 %v885
        %1225 = vmatpush.bf16.msra.mxu0 %v883
        %1226 = vmatpush.bf16.msra.mxu0 %v881
        %1227 = vmatpush.bf16.msra.mxu0 %v879
        %1228 = vmatmul.bf16.gmra.mxu0 %v262
        %v1229 = vpop.f32.mrf.mxu0
        %v1230 = vadd.f32 %v1217, %v1229
        %v1231 = vpop.f32.mrf.mxu0
        %1232 = vdwg.mxu0
        %1233 = vmatpush.bf16.msra.mxu0 %v909
        %1234 = vmatpush.bf16.msra.mxu0 %v907
        %1235 = vmatpush.bf16.msra.mxu0 %v905
        %1236 = vmatpush.bf16.msra.mxu0 %v903
        %1237 = vmatpush.bf16.msra.mxu0 %v901
        %1238 = vmatpush.bf16.msra.mxu0 %v899
        %1239 = vmatpush.bf16.msra.mxu0 %v897
        %1240 = vmatpush.bf16.msra.mxu0 %v895
        %1241 = vmatmul.bf16.gmra.mxu0 %v263
        %v1242 = vpop.f32.mrf.mxu0
        %v1243 = vadd.f32 %v1230, %v1242
        %v1244 = vpop.f32.mrf.mxu0
        %1245 = vdwg.mxu0
        %v1248 = vrot.slane %v1243, 6
        %vm1249 = vcmask 1041408
        %v1250 = vsel %vm1249, %v1139, %v1248
        %1252 = vst [vmem:[%s229] sm:$0xf] %v1250
        %s1253 = sand.u32 %s104, 1
        %s1254 = scalar_lea.sflag [#allocation4], %s1253
        %s1255 = sand.u32 %s104, 1
        %s1256 = smul.addr %s1255, 4
        %s1257 = scalar_lea.vmem [#allocation7], %s1256
        // Predicated region
        $region41: #{cnn_forward.3} parent=31 // pred_check
          %p1258 = pneg %p114
        $region42: #{cnn_forward.3} parent=31 // pred_check_branch
          %1260 = sbr.rel (%p1258) target = $region44
        $region43: #{cnn_forward.3} parent=31 // pred_region
          %s1261 = smul.u32 2, %s23
          %1263 = vsyncadd %s1254, 0
          %s1264 = smul.addr %s1261, 2
          %s1265 = scalar_lea.hbm %s3, %s1264
          %s1267 = sshll.u32 %s1257, 4
          %s1268 = int_to_ptr.vmem [resolvable:$true] %s1267
          %s1269 = sshll.u32 %s1265, 4
          %s1270 = int_to_ptr.hbm [resolvable:$true] %s1269
          %1272 = dma.vmem_to_hbm [thread:$0]  %s1268, 64, %s1270, %s1254
        $region44: #{cnn_forward.3} parent=31 // pred_fallthru
          _
      $region32: #{cnn_forward.3} parent=5 // pred_fallthru
        _
      %p1273 = scmp.le.s32.totalorder 2, %s18
      // Predicated region
      $region45: #{cnn_forward.3} parent=5 // pred_check
        %p1274 = pneg %p1273
      $region46: #{cnn_forward.3} parent=5 // pred_check_branch
        %1276 = sbr.rel (%p1274) target = $region48
      $region47: #{cnn_forward.3} parent=5 // pred_region
        %s1277 = ssub.s32 %s18, 2
        // Predicated region
        $region49: #{cnn_forward.3} parent=47 // pred_check
          %p1278 = pneg %p120
        $region50: #{cnn_forward.3} parent=47 // pred_check_branch
          %1280 = sbr.rel (%p1278) target = $region52
        $region51: #{cnn_forward.3} parent=47 // pred_region
          %s1281 = sand.u32 %s105, 1
          %s1282 = scalar_lea.sflag [#allocation4], %s1281
          %s1283 = sand.u32 %s105, 1
          %s1284 = smul.addr %s1283, 4
          %s1285 = scalar_lea.vmem [#allocation7], %s1284
          %1287 = dma.done %s1282, 64
        $region52: #{cnn_forward.3} parent=47 // pred_fallthru
          _
      $region48: #{cnn_forward.3} parent=5 // pred_fallthru
        _
    $region6: #{cnn_forward.3} parent=1 // loop_footer
      %s22 = sadd.s32 1, %s18
    $region7: #{cnn_forward.3} parent=1 // loop_footer_branch
      %17 = sbr.rel target = $region3
    $region8: #{cnn_forward.3} parent=1 // loop_exit
      _
    %1288 = vsyncpa [#allocation3], 1
    %s1289 = scalar_lea.sflag [#allocation3], 1
    %1290 = vsyncpa %s1289, 1
    %1291 = vsyncpa [#allocation6], 1
    %s1292 = scalar_lea.sflag [#allocation6], 1
    %1293 = vsyncpa %s1292, 1
    %1294 = vsyncpa [#allocation4], 1
    %s1295 = scalar_lea.sflag [#allocation4], 1
    %1296 = vsyncpa %s1295, 1

// kernel: cnn_forward.2
$region0: #{cnn_forward.2}
  #allocation0 [shape = 'u32[]', space=smem, size = 0x4, offset = 0x4, fixed_abs, tag = 'smem constant byte address 0x4 - core index']
  #allocation1 [shape = 'u32[72,128]{1,0:T(1,128)}', space=vmem, size = 0x9000, scoped, tag = 'internal scratch']
  #allocation2 [shape = 'f32[2,10,17,64]{3,2,1,0:T(8,128)}', space=vmem, size = 0x3c000, scoped, tag = 'scratch operand']
  #allocation3 [shape = 'f32[2,10,17,32]{3,2,1,0:T(8,128)}', space=vmem, size = 0x3c000, scoped, tag = 'scratch operand']
  %s0 = inlined_call_operand.vmem [shape: f32[2,10,10,256], index: 0, kind: input, shape index: {}]
  %s1 = inlined_call_operand.vmem [shape: bf16[3,3,256,64], index: 1, kind: input, shape index: {}]
  %s2 = inlined_call_operand.hbm [shape: f32[1,64], index: 2, kind: input, shape index: {}]
  %s3 = inlined_call_operand.vmem [shape: bf16[3,3,64,32], index: 3, kind: input, shape index: {}]
  %s4 = inlined_call_operand.hbm [shape: f32[1,32], index: 4, kind: input, shape index: {}]
  %s5 = inlined_call_operand.hbm [shape: bf16[3,3,32,32], index: 5, kind: input, shape index: {}]
  %s6 = inlined_call_operand.hbm [shape: f32[1,32], index: 6, kind: input, shape index: {}]
  %s7 = inlined_call_operand.vmem [shape: f32[2,32,32], index: 7, kind: output, shape index: {}]
  %s8 = sld [smem:[#allocation0]]
  $region54: #{cnn_forward.2} parent=0
    _
  %s10 = ssub.s32 1, %s8
  %s11 = scalar_select 0, %s10, %s8
  $region1: #{cnn_forward.2} parent=0
    #allocation4 [shape = 'u8[512]{0}', space=vmem, size = 0x400, scoped, tag = 'input window, operand 2, single buffered']
    #allocation5 [shape = 's32[1]{0}', space=sflag, size = 0x4, scoped, tag = 'scoped memory for cnn_forward.2']
    #allocation6 [shape = 'u8[512]{0}', space=vmem, size = 0x400, scoped, tag = 'input window, operand 4, single buffered']
    #allocation7 [shape = 's32[1]{0}', space=sflag, size = 0x4, scoped, tag = 'scoped memory for cnn_forward.2']
    #allocation8 [shape = 'u8[73728]{0}', space=vmem, size = 0x12000, scoped, tag = 'input window, operand 5, single buffered']
    #allocation9 [shape = 'u8[512]{0}', space=vmem, size = 0x400, scoped, tag = 'input window, operand 6, single buffered']
    #allocation10 [shape = 's32[1]{0}', space=sflag, size = 0x4, scoped, tag = 'scoped memory for cnn_forward.2']
    %12 = vsyncpa [#allocation5], 0
    %13 = vsyncpa [#allocation7], 0
    %14 = vsyncpa [#allocation10], 0
    // Predicated region
    $region2: #{cnn_forward.2} parent=1 // pred_check
      _
    $region3: #{cnn_forward.2} parent=1 // pred_check_branch
      %16 = sbr.rel (0) target = $region5
    $region4: #{cnn_forward.2} parent=1 // pred_region
      _
    $region5: #{cnn_forward.2} parent=1 // pred_fallthru
      _
    // Predicated region
    $region6: #{cnn_forward.2} parent=1 // pred_check
      _
    $region7: #{cnn_forward.2} parent=1 // pred_check_branch
      %18 = sbr.rel (0) target = $region9
    $region8: #{cnn_forward.2} parent=1 // pred_region
      _
    $region9: #{cnn_forward.2} parent=1 // pred_fallthru
      _
    // Predicated region
    $region10: #{cnn_forward.2} parent=1 // pred_check
      _
    $region11: #{cnn_forward.2} parent=1 // pred_check_branch
      %20 = sbr.rel (0) target = $region13
    $region12: #{cnn_forward.2} parent=1 // pred_region
      %22 = vsyncadd [#allocation5], 0
      %s24 = sshll.u32 %s2, 4
      %s25 = int_to_ptr.hbm [resolvable:$true] %s24
      %s26 = sshll.u32 [#allocation4], 4
      %s27 = int_to_ptr.vmem [resolvable:$true] %s26
      %29 = dma.hbm_to_vmem [thread:$0]  %s25, 16, %s27, [#allocation5]
    $region13: #{cnn_forward.2} parent=1 // pred_fallthru
      _
    // Predicated region
    $region14: #{cnn_forward.2} parent=1 // pred_check
      _
    $region15: #{cnn_forward.2} parent=1 // pred_check_branch
      %31 = sbr.rel (0) target = $region17
    $region16: #{cnn_forward.2} parent=1 // pred_region
      _
    $region17: #{cnn_forward.2} parent=1 // pred_fallthru
      _
    // Predicated region
    $region18: #{cnn_forward.2} parent=1 // pred_check
      _
    $region19: #{cnn_forward.2} parent=1 // pred_check_branch
      %33 = sbr.rel (0) target = $region21
    $region20: #{cnn_forward.2} parent=1 // pred_region
      %35 = vsyncadd [#allocation7], 0
      %s37 = sshll.u32 %s4, 4
      %s38 = int_to_ptr.hbm [resolvable:$true] %s37
      %s39 = sshll.u32 [#allocation6], 4
      %s40 = int_to_ptr.vmem [resolvable:$true] %s39
      %42 = dma.hbm_to_vmem [thread:$0]  %s38, 16, %s40, [#allocation7]
    $region21: #{cnn_forward.2} parent=1 // pred_fallthru
      _
    // Predicated region
    $region22: #{cnn_forward.2} parent=1 // pred_check
      _
    $region23: #{cnn_forward.2} parent=1 // pred_check_branch
      %44 = sbr.rel (0) target = $region25
    $region24: #{cnn_forward.2} parent=1 // pred_region
      %46 = vsyncadd [#allocation7], 0
      %s47 = sshll.u32 %s5, 4
      %s48 = int_to_ptr.hbm [resolvable:$true] %s47
      %s49 = sshll.u32 [#allocation8], 4
      %s50 = int_to_ptr.vmem [resolvable:$true] %s49
      %55 = dma.hbm_to_vmem [thread:$0]  %s48, 2304, %s50, [#allocation7], 64, 64, 4
    $region25: #{cnn_forward.2} parent=1 // pred_fallthru
      _
    // Predicated region
    $region26: #{cnn_forward.2} parent=1 // pred_check
      _
    $region27: #{cnn_forward.2} parent=1 // pred_check_branch
      %57 = sbr.rel (0) target = $region29
    $region28: #{cnn_forward.2} parent=1 // pred_region
      %59 = vsyncadd [#allocation10], 0
      %s61 = sshll.u32 %s6, 4
      %s62 = int_to_ptr.hbm [resolvable:$true] %s61
      %s63 = sshll.u32 [#allocation9], 4
      %s64 = int_to_ptr.vmem [resolvable:$true] %s63
      %66 = dma.hbm_to_vmem [thread:$0]  %s62, 16, %s64, [#allocation10]
    $region29: #{cnn_forward.2} parent=1 // pred_fallthru
      _
    // Predicated region
    $region30: #{cnn_forward.2} parent=1 // pred_check
      _
    $region31: #{cnn_forward.2} parent=1 // pred_check_branch
      %68 = sbr.rel (0) target = $region33
    $region32: #{cnn_forward.2} parent=1 // pred_region
      %70 = dma.done [#allocation5], 16
    $region33: #{cnn_forward.2} parent=1 // pred_fallthru
      _
    // Predicated region
    $region34: #{cnn_forward.2} parent=1 // pred_check
      _
    $region35: #{cnn_forward.2} parent=1 // pred_check_branch
      %72 = sbr.rel (0) target = $region37
    $region36: #{cnn_forward.2} parent=1 // pred_region
      %74 = dma.done [#allocation7], 16
    $region37: #{cnn_forward.2} parent=1 // pred_fallthru
      _
    // Predicated region
    $region38: #{cnn_forward.2} parent=1 // pred_check
      _
    $region39: #{cnn_forward.2} parent=1 // pred_check_branch
      %76 = sbr.rel (0) target = $region41
    $region40: #{cnn_forward.2} parent=1 // pred_region
      %78 = dma.done [#allocation7], 2304
    $region41: #{cnn_forward.2} parent=1 // pred_fallthru
      _
    // Predicated region
    $region42: #{cnn_forward.2} parent=1 // pred_check
      _
    $region43: #{cnn_forward.2} parent=1 // pred_check_branch
      %80 = sbr.rel (0) target = $region45
    $region44: #{cnn_forward.2} parent=1 // pred_region
      %82 = dma.done [#allocation10], 16
    $region45: #{cnn_forward.2} parent=1 // pred_fallthru
      _
    %v84 = vld [vmem:[%s0] sm:$0xff]
    %v85 = vld [vmem:[%s0 + $0x8] sm:$0xff]
    %v86 = vld [vmem:[%s0 + $0x20] sm:$0xff]
    %v87 = vld [vmem:[%s0 + $0x28] sm:$0xff]
    %v88 = vld [vmem:[%s0 + $0x40] sm:$0xff]
    %v89 = vld [vmem:[%s0 + $0x48] sm:$0xff]
    %v90 = vld [vmem:[%s0 + $0x60] sm:$0xff]
    %v91 = vld [vmem:[%s0 + $0x68] sm:$0xff]
    %v92 = vld [vmem:[%s0 + $0x80] sm:$0xff]
    %v93 = vld [vmem:[%s0 + $0x88] sm:$0xff]
    %v94 = vld [vmem:[%s0 + $0xa0] sm:$0xff]
    %v95 = vld [vmem:[%s0 + $0xa8] sm:$0xff]
    %v96 = vld [vmem:[%s0 + $0xc0] sm:$0xff]
    %v97 = vld [vmem:[%s0 + $0xc8] sm:$0xff]
    %v98 = vld [vmem:[%s0 + $0xe0] sm:$0xff]
    %v99 = vld [vmem:[%s0 + $0xe8] sm:$0xff]
    %v100 = vld [vmem:[%s0 + $0x140] sm:$0xff]
    %v101 = vld [vmem:[%s0 + $0x148] sm:$0xff]
    %v102 = vld [vmem:[%s0 + $0x160] sm:$0xff]
    %v103 = vld [vmem:[%s0 + $0x168] sm:$0xff]
    %v104 = vld [vmem:[%s0 + $0x180] sm:$0xff]
    %v105 = vld [vmem:[%s0 + $0x188] sm:$0xff]
    %v106 = vld [vmem:[%s0 + $0x1a0] sm:$0xff]
    %v107 = vld [vmem:[%s0 + $0x1a8] sm:$0xff]
    %v108 = vld [vmem:[%s0 + $0x1c0] sm:$0xff]
    %v109 = vld [vmem:[%s0 + $0x1c8] sm:$0xff]
    %v110 = vld [vmem:[%s0 + $0x1e0] sm:$0xff]
    %v111 = vld [vmem:[%s0 + $0x1e8] sm:$0xff]
    %v112 = vld [vmem:[%s0 + $0x200] sm:$0xff]
    %v113 = vld [vmem:[%s0 + $0x208] sm:$0xff]
    %v114 = vld [vmem:[%s0 + $0x220] sm:$0xff]
    %v115 = vld [vmem:[%s0 + $0x228] sm:$0xff]
    %v116 = vpack.c.bf16 %v86, %v84
    %v117 = vpack.c.bf16 %v87, %v85
    %v118 = vpack.c.bf16 %v90, %v88
    %v119 = vpack.c.bf16 %v91, %v89
    %v120 = vpack.c.bf16 %v94, %v92
    %v121 = vpack.c.bf16 %v95, %v93
    %v122 = vpack.c.bf16 %v98, %v96
    %v123 = vpack.c.bf16 %v99, %v97
    %v124 = vpack.c.bf16 %v102, %v100
    %v125 = vpack.c.bf16 %v103, %v101
    %v126 = vpack.c.bf16 %v106, %v104
    %v127 = vpack.c.bf16 %v107, %v105
    %v128 = vpack.c.bf16 %v110, %v108
    %v129 = vpack.c.bf16 %v111, %v109
    %v130 = vpack.c.bf16 %v114, %v112
    %v131 = vpack.c.bf16 %v115, %v113
    %v132 = vld [vmem:[%s1] sm:$0xf]
    %v133 = vld [vmem:[%s1 + $0x4] sm:$0xf]
    %v134 = vld [vmem:[%s1 + $0x8] sm:$0xf]
    %v135 = vld [vmem:[%s1 + $0xc] sm:$0xf]
    %v136 = vld [vmem:[%s1 + $0x10] sm:$0xf]
    %v137 = vld [vmem:[%s1 + $0x14] sm:$0xf]
    %v138 = vld [vmem:[%s1 + $0x18] sm:$0xf]
    %v139 = vld [vmem:[%s1 + $0x1c] sm:$0xf]
    %v140 = vld [vmem:[%s1 + $0x20] sm:$0xf]
    %v141 = vld [vmem:[%s1 + $0x24] sm:$0xf]
    %v142 = vld [vmem:[%s1 + $0x28] sm:$0xf]
    %v143 = vld [vmem:[%s1 + $0x2c] sm:$0xf]
    %v144 = vld [vmem:[%s1 + $0x30] sm:$0xf]
    %v145 = vld [vmem:[%s1 + $0x34] sm:$0xf]
    %v146 = vld [vmem:[%s1 + $0x38] sm:$0xf]
    %v147 = vld [vmem:[%s1 + $0x3c] sm:$0xf]
    %v148 = vld [vmem:[%s1 + $0x40] sm:$0xf]
    %v149 = vld [vmem:[%s1 + $0x44] sm:$0xf]
    %v150 = vld [vmem:[%s1 + $0x48] sm:$0xf]
    %v151 = vld [vmem:[%s1 + $0x4c] sm:$0xf]
    %v152 = vld [vmem:[%s1 + $0x50] sm:$0xf]
    %v153 = vld [vmem:[%s1 + $0x54] sm:$0xf]
    %v154 = vld [vmem:[%s1 + $0x58] sm:$0xf]
    %v155 = vld [vmem:[%s1 + $0x5c] sm:$0xf]
    %v156 = vld [vmem:[%s1 + $0x60] sm:$0xf]
    %v157 = vld [vmem:[%s1 + $0x64] sm:$0xf]
    %v158 = vld [vmem:[%s1 + $0x68] sm:$0xf]
    %v159 = vld [vmem:[%s1 + $0x6c] sm:$0xf]
    %v160 = vld [vmem:[%s1 + $0x70] sm:$0xf]
    %v161 = vld [vmem:[%s1 + $0x74] sm:$0xf]
    %v162 = vld [vmem:[%s1 + $0x78] sm:$0xf]
    %v163 = vld [vmem:[%s1 + $0x7c] sm:$0xf]
    %v164 = vld [vmem:[%s0] sm:$0xfe]
    %v165 = vld [vmem:[%s0 + $0x8] sm:$0xfe]
    %v166 = vld [vmem:[%s0 + $0x10] sm:$0x1]
    %v167 = vld [vmem:[%s0 + $0x18] sm:$0x1]
    %v168 = vld [vmem:[%s0 + $0x20] sm:$0xfe]
    %v169 = vld [vmem:[%s0 + $0x28] sm:$0xfe]
    %v170 = vld [vmem:[%s0 + $0x30] sm:$0x1]
    %v171 = vld [vmem:[%s0 + $0x38] sm:$0x1]
    %v172 = vld [vmem:[%s0 + $0x40] sm:$0xfe]
    %v173 = vld [vmem:[%s0 + $0x48] sm:$0xfe]
    %v174 = vld [vmem:[%s0 + $0x50] sm:$0x1]
    %v175 = vld [vmem:[%s0 + $0x58] sm:$0x1]
    %v176 = vld [vmem:[%s0 + $0x60] sm:$0xfe]
    %v177 = vld [vmem:[%s0 + $0x68] sm:$0xfe]
    %v178 = vld [vmem:[%s0 + $0x70] sm:$0x1]
    %v179 = vld [vmem:[%s0 + $0x78] sm:$0x1]
    %v180 = vld [vmem:[%s0 + $0x80] sm:$0xfe]
    %v181 = vld [vmem:[%s0 + $0x88] sm:$0xfe]
    %v182 = vld [vmem:[%s0 + $0x90] sm:$0x1]
    %v183 = vld [vmem:[%s0 + $0x98] sm:$0x1]
    %v184 = vld [vmem:[%s0 + $0xa0] sm:$0xfe]
    %v185 = vld [vmem:[%s0 + $0xa8] sm:$0xfe]
    %v186 = vld [vmem:[%s0 + $0xb0] sm:$0x1]
    %v187 = vld [vmem:[%s0 + $0xb8] sm:$0x1]
    %v188 = vld [vmem:[%s0 + $0xc0] sm:$0xfe]
    %v189 = vld [vmem:[%s0 + $0xc8] sm:$0xfe]
    %v190 = vld [vmem:[%s0 + $0xd0] sm:$0x1]
    %v191 = vld [vmem:[%s0 + $0xd8] sm:$0x1]
    %v192 = vld [vmem:[%s0 + $0xe0] sm:$0xfe]
    %v193 = vld [vmem:[%s0 + $0xe8] sm:$0xfe]
    %v194 = vld [vmem:[%s0 + $0xf0] sm:$0x1]
    %v195 = vld [vmem:[%s0 + $0xf8] sm:$0x1]
    %v196 = vld [vmem:[%s0 + $0x140] sm:$0xfe]
    %v197 = vld [vmem:[%s0 + $0x148] sm:$0xfe]
    %v198 = vld [vmem:[%s0 + $0x150] sm:$0x1]
    %v199 = vld [vmem:[%s0 + $0x158] sm:$0x1]
    %v200 = vld [vmem:[%s0 + $0x160] sm:$0xfe]
    %v201 = vld [vmem:[%s0 + $0x168] sm:$0xfe]
    %v202 = vld [vmem:[%s0 + $0x170] sm:$0x1]
    %v203 = vld [vmem:[%s0 + $0x178] sm:$0x1]
    %v204 = vld [vmem:[%s0 + $0x180] sm:$0xfe]
    %v205 = vld [vmem:[%s0 + $0x188] sm:$0xfe]
    %v206 = vld [vmem:[%s0 + $0x190] sm:$0x1]
    %v207 = vld [vmem:[%s0 + $0x198] sm:$0x1]
    %v208 = vld [vmem:[%s0 + $0x1a0] sm:$0xfe]
    %v209 = vld [vmem:[%s0 + $0x1a8] sm:$0xfe]
    %v210 = vld [vmem:[%s0 + $0x1b0] sm:$0x1]
    %v211 = vld [vmem:[%s0 + $0x1b8] sm:$0x1]
    %v212 = vld [vmem:[%s0 + $0x1c0] sm:$0xfe]
    %v213 = vld [vmem:[%s0 + $0x1c8] sm:$0xfe]
    %v214 = vld [vmem:[%s0 + $0x1d0] sm:$0x1]
    %v215 = vld [vmem:[%s0 + $0x1d8] sm:$0x1]
    %v216 = vld [vmem:[%s0 + $0x1e0] sm:$0xfe]
    %v217 = vld [vmem:[%s0 + $0x1e8] sm:$0xfe]
    %v218 = vld [vmem:[%s0 + $0x1f0] sm:$0x1]
    %v219 = vld [vmem:[%s0 + $0x1f8] sm:$0x1]
    %v220 = vld [vmem:[%s0 + $0x200] sm:$0xfe]
    %v221 = vld [vmem:[%s0 + $0x208] sm:$0xfe]
    %v222 = vld [vmem:[%s0 + $0x210] sm:$0x1]
    %v223 = vld [vmem:[%s0 + $0x218] sm:$0x1]
    %v224 = vld [vmem:[%s0 + $0x220] sm:$0xfe]
    %v225 = vld [vmem:[%s0 + $0x228] sm:$0xfe]
    %v226 = vld [vmem:[%s0 + $0x230] sm:$0x1]
    %v227 = vld [vmem:[%s0 + $0x238] sm:$0x1]
    %vm292 = vcmask 1046528
    %v293 = vrot.slane %v164, 1
    %v294 = vrot.slane %v166, 1
    %v295 = vsel %vm292, %v293, %v294
    %v296 = vrot.slane %v165, 1
    %v297 = vrot.slane %v167, 1
    %v298 = vsel %vm292, %v296, %v297
    %v299 = vrot.slane %v168, 1
    %v300 = vrot.slane %v170, 1
    %v301 = vsel %vm292, %v299, %v300
    %v302 = vrot.slane %v169, 1
    %v303 = vrot.slane %v171, 1
    %v304 = vsel %vm292, %v302, %v303
    %v305 = vrot.slane %v172, 1
    %v306 = vrot.slane %v174, 1
    %v307 = vsel %vm292, %v305, %v306
    %v308 = vrot.slane %v173, 1
    %v309 = vrot.slane %v175, 1
    %v310 = vsel %vm292, %v308, %v309
    %v311 = vrot.slane %v176, 1
    %v312 = vrot.slane %v178, 1
    %v313 = vsel %vm292, %v311, %v312
    %v314 = vrot.slane %v177, 1
    %v315 = vrot.slane %v179, 1
    %v316 = vsel %vm292, %v314, %v315
    %v317 = vrot.slane %v180, 1
    %v318 = vrot.slane %v182, 1
    %v319 = vsel %vm292, %v317, %v318
    %v320 = vrot.slane %v181, 1
    %v321 = vrot.slane %v183, 1
    %v322 = vsel %vm292, %v320, %v321
    %v323 = vrot.slane %v184, 1
    %v324 = vrot.slane %v186, 1
    %v325 = vsel %vm292, %v323, %v324
    %v326 = vrot.slane %v185, 1
    %v327 = vrot.slane %v187, 1
    %v328 = vsel %vm292, %v326, %v327
    %v329 = vrot.slane %v188, 1
    %v330 = vrot.slane %v190, 1
    %v331 = vsel %vm292, %v329, %v330
    %v332 = vrot.slane %v189, 1
    %v333 = vrot.slane %v191, 1
    %v334 = vsel %vm292, %v332, %v333
    %v335 = vrot.slane %v192, 1
    %v336 = vrot.slane %v194, 1
    %v337 = vsel %vm292, %v335, %v336
    %v338 = vrot.slane %v193, 1
    %v339 = vrot.slane %v195, 1
    %v340 = vsel %vm292, %v338, %v339
    %v341 = vrot.slane %v196, 1
    %v342 = vrot.slane %v198, 1
    %v343 = vsel %vm292, %v341, %v342
    %v344 = vrot.slane %v197, 1
    %v345 = vrot.slane %v199, 1
    %v346 = vsel %vm292, %v344, %v345
    %v347 = vrot.slane %v200, 1
    %v348 = vrot.slane %v202, 1
    %v349 = vsel %vm292, %v347, %v348
    %v350 = vrot.slane %v201, 1
    %v351 = vrot.slane %v203, 1
    %v352 = vsel %vm292, %v350, %v351
    %v353 = vrot.slane %v204, 1
    %v354 = vrot.slane %v206, 1
    %v355 = vsel %vm292, %v353, %v354
    %v356 = vrot.slane %v205, 1
    %v357 = vrot.slane %v207, 1
    %v358 = vsel %vm292, %v356, %v357
    %v359 = vrot.slane %v208, 1
    %v360 = vrot.slane %v210, 1
    %v361 = vsel %vm292, %v359, %v360
    %v362 = vrot.slane %v209, 1
    %v363 = vrot.slane %v211, 1
    %v364 = vsel %vm292, %v362, %v363
    %v365 = vrot.slane %v212, 1
    %v366 = vrot.slane %v214, 1
    %v367 = vsel %vm292, %v365, %v366
    %v368 = vrot.slane %v213, 1
    %v369 = vrot.slane %v215, 1
    %v370 = vsel %vm292, %v368, %v369
    %v371 = vrot.slane %v216, 1
    %v372 = vrot.slane %v218, 1
    %v373 = vsel %vm292, %v371, %v372
    %v374 = vrot.slane %v217, 1
    %v375 = vrot.slane %v219, 1
    %v376 = vsel %vm292, %v374, %v375
    %v377 = vrot.slane %v220, 1
    %v378 = vrot.slane %v222, 1
    %v379 = vsel %vm292, %v377, %v378
    %v380 = vrot.slane %v221, 1
    %v381 = vrot.slane %v223, 1
    %v382 = vsel %vm292, %v380, %v381
    %v383 = vrot.slane %v224, 1
    %v384 = vrot.slane %v226, 1
    %v385 = vsel %vm292, %v383, %v384
    %v386 = vrot.slane %v225, 1
    %v387 = vrot.slane %v227, 1
    %v388 = vsel %vm292, %v386, %v387
    %v421 = vpack.c.bf16 %v301, %v295
    %v422 = vpack.c.bf16 %v304, %v298
    %v423 = vpack.c.bf16 %v313, %v307
    %v424 = vpack.c.bf16 %v316, %v310
    %v425 = vpack.c.bf16 %v325, %v319
    %v426 = vpack.c.bf16 %v328, %v322
    %v427 = vpack.c.bf16 %v337, %v331
    %v428 = vpack.c.bf16 %v340, %v334
    %v429 = vpack.c.bf16 %v349, %v343
    %v430 = vpack.c.bf16 %v352, %v346
    %v431 = vpack.c.bf16 %v361, %v355
    %v432 = vpack.c.bf16 %v364, %v358
    %v433 = vpack.c.bf16 %v373, %v367
    %v434 = vpack.c.bf16 %v376, %v370
    %v435 = vpack.c.bf16 %v385, %v379
    %v436 = vpack.c.bf16 %v388, %v382
    %s437 = scalar_lea.vmem %s1, 128
    %v438 = vld [vmem:[%s437] sm:$0xf]
    %v439 = vld [vmem:[%s437 + $0x4] sm:$0xf]
    %v440 = vld [vmem:[%s437 + $0x8] sm:$0xf]
    %v441 = vld [vmem:[%s437 + $0xc] sm:$0xf]
    %v442 = vld [vmem:[%s437 + $0x10] sm:$0xf]
    %v443 = vld [vmem:[%s437 + $0x14] sm:$0xf]
    %v444 = vld [vmem:[%s437 + $0x18] sm:$0xf]
    %v445 = vld [vmem:[%s437 + $0x1c] sm:$0xf]
    %v446 = vld [vmem:[%s437 + $0x20] sm:$0xf]
    %v447 = vld [vmem:[%s437 + $0x24] sm:$0xf]
    %v448 = vld [vmem:[%s437 + $0x28] sm:$0xf]
    %v449 = vld [vmem:[%s437 + $0x2c] sm:$0xf]
    %v450 = vld [vmem:[%s437 + $0x30] sm:$0xf]
    %v451 = vld [vmem:[%s437 + $0x34] sm:$0xf]
    %v452 = vld [vmem:[%s437 + $0x38] sm:$0xf]
    %v453 = vld [vmem:[%s437 + $0x3c] sm:$0xf]
    %v454 = vld [vmem:[%s437 + $0x40] sm:$0xf]
    %v455 = vld [vmem:[%s437 + $0x44] sm:$0xf]
    %v456 = vld [vmem:[%s437 + $0x48] sm:$0xf]
    %v457 = vld [vmem:[%s437 + $0x4c] sm:$0xf]
    %v458 = vld [vmem:[%s437 + $0x50] sm:$0xf]
    %v459 = vld [vmem:[%s437 + $0x54] sm:$0xf]
    %v460 = vld [vmem:[%s437 + $0x58] sm:$0xf]
    %v461 = vld [vmem:[%s437 + $0x5c] sm:$0xf]
    %v462 = vld [vmem:[%s437 + $0x60] sm:$0xf]
    %v463 = vld [vmem:[%s437 + $0x64] sm:$0xf]
    %v464 = vld [vmem:[%s437 + $0x68] sm:$0xf]
    %v465 = vld [vmem:[%s437 + $0x6c] sm:$0xf]
    %v466 = vld [vmem:[%s437 + $0x70] sm:$0xf]
    %v467 = vld [vmem:[%s437 + $0x74] sm:$0xf]
    %v468 = vld [vmem:[%s437 + $0x78] sm:$0xf]
    %v469 = vld [vmem:[%s437 + $0x7c] sm:$0xf]
    %v502 = vunpack.c.l.b16 %v438
    %v503 = vunpack.c.l.b16 %v439
    %v504 = vunpack.c.l.b16 %v440
    %v505 = vunpack.c.l.b16 %v441
    %v506 = vunpack.c.l.b16 %v442
    %v507 = vunpack.c.l.b16 %v443
    %v508 = vunpack.c.l.b16 %v444
    %v509 = vunpack.c.l.b16 %v445
    %v510 = vunpack.c.l.b16 %v446
    %v511 = vunpack.c.l.b16 %v447
    %v512 = vunpack.c.l.b16 %v448
    %v513 = vunpack.c.l.b16 %v449
    %v514 = vunpack.c.l.b16 %v450
    %v515 = vunpack.c.l.b16 %v451
    %v516 = vunpack.c.l.b16 %v452
    %v517 = vunpack.c.l.b16 %v453
    %v518 = vunpack.c.l.b16 %v454
    %v519 = vunpack.c.l.b16 %v455
    %v520 = vunpack.c.l.b16 %v456
    %v521 = vunpack.c.l.b16 %v457
    %v522 = vunpack.c.l.b16 %v458
    %v523 = vunpack.c.l.b16 %v459
    %v524 = vunpack.c.l.b16 %v460
    %v525 = vunpack.c.l.b16 %v461
    %v526 = vunpack.c.l.b16 %v462
    %v527 = vunpack.c.l.b16 %v463
    %v528 = vunpack.c.l.b16 %v464
    %v529 = vunpack.c.l.b16 %v465
    %v530 = vunpack.c.l.b16 %v466
    %v531 = vunpack.c.l.b16 %v467
    %v532 = vunpack.c.l.b16 %v468
    %v533 = vunpack.c.l.b16 %v469
    %v534 = vpack.c.b16 %v503, %v502
    %v535 = vpack.c.b16 %v505, %v504
    %v536 = vpack.c.b16 %v507, %v506
    %v537 = vpack.c.b16 %v509, %v508
    %v538 = vpack.c.b16 %v511, %v510
    %v539 = vpack.c.b16 %v513, %v512
    %v540 = vpack.c.b16 %v515, %v514
    %v541 = vpack.c.b16 %v517, %v516
    %v542 = vpack.c.b16 %v519, %v518
    %v543 = vpack.c.b16 %v521, %v520
    %v544 = vpack.c.b16 %v523, %v522
    %v545 = vpack.c.b16 %v525, %v524
    %v546 = vpack.c.b16 %v527, %v526
    %v547 = vpack.c.b16 %v529, %v528
    %v548 = vpack.c.b16 %v531, %v530
    %v549 = vpack.c.b16 %v533, %v532
    %566 = vmatpush.bf16.msra.mxu0 %v541
    %567 = vmatpush.bf16.msra.mxu0 %v540
    %568 = vmatpush.bf16.msra.mxu0 %v539
    %569 = vmatpush.bf16.msra.mxu0 %v538
    %570 = vmatpush.bf16.msra.mxu0 %v537
    %571 = vmatpush.bf16.msra.mxu0 %v536
    %572 = vmatpush.bf16.msra.mxu0 %v535
    %573 = vmatpush.bf16.msra.mxu0 %v534
    %574 = vmatmul.bf16.gmra.mxu0 %v421
    %v575 = vpop.f32.mrf.mxu0
    %v576 = vadd.f32 0.0, %v575
    %v577 = vpop.f32.mrf.mxu0
    %v578 = vadd.f32 0.0, %v577
    %579 = vmatmul.bf16.gmra.mxu0 %v423
    %v580 = vpop.f32.mrf.mxu0
    %v581 = vadd.f32 0.0, %v580
    %v582 = vpop.f32.mrf.mxu0
    %v583 = vadd.f32 0.0, %v582
    %584 = vmatmul.bf16.gmra.mxu0 %v425
    %v585 = vpop.f32.mrf.mxu0
    %v586 = vadd.f32 0.0, %v585
    %v587 = vpop.f32.mrf.mxu0
    %v588 = vadd.f32 0.0, %v587
    %589 = vmatmul.bf16.gmra.mxu0 %v427
    %v590 = vpop.f32.mrf.mxu0
    %v591 = vadd.f32 0.0, %v590
    %v592 = vpop.f32.mrf.mxu0
    %v593 = vadd.f32 0.0, %v592
    %594 = vmatmul.bf16.gmra.mxu0 %v429
    %v595 = vpop.f32.mrf.mxu0
    %v596 = vadd.f32 0.0, %v595
    %v597 = vpop.f32.mrf.mxu0
    %v598 = vadd.f32 0.0, %v597
    %599 = vmatmul.bf16.gmra.mxu0 %v431
    %v600 = vpop.f32.mrf.mxu0
    %v601 = vadd.f32 0.0, %v600
    %v602 = vpop.f32.mrf.mxu0
    %v603 = vadd.f32 0.0, %v602
    %604 = vmatmul.bf16.gmra.mxu0 %v433
    %v605 = vpop.f32.mrf.mxu0
    %v606 = vadd.f32 0.0, %v605
    %v607 = vpop.f32.mrf.mxu0
    %v608 = vadd.f32 0.0, %v607
    %609 = vmatmul.bf16.gmra.mxu0 %v435
    %v610 = vpop.f32.mrf.mxu0
    %v611 = vadd.f32 0.0, %v610
    %v612 = vpop.f32.mrf.mxu0
    %v613 = vadd.f32 0.0, %v612
    %614 = vdwg.mxu0
    %615 = vmatpush.bf16.msra.mxu0 %v549
    %616 = vmatpush.bf16.msra.mxu0 %v548
    %617 = vmatpush.bf16.msra.mxu0 %v547
    %618 = vmatpush.bf16.msra.mxu0 %v546
    %619 = vmatpush.bf16.msra.mxu0 %v545
    %620 = vmatpush.bf16.msra.mxu0 %v544
    %621 = vmatpush.bf16.msra.mxu0 %v543
    %622 = vmatpush.bf16.msra.mxu0 %v542
    %623 = vmatmul.bf16.gmra.mxu0 %v422
    %v624 = vpop.f32.mrf.mxu0
    %v625 = vadd.f32 %v576, %v624
    %v626 = vpop.f32.mrf.mxu0
    %v627 = vadd.f32 %v578, %v626
    %628 = vmatmul.bf16.gmra.mxu0 %v424
    %v629 = vpop.f32.mrf.mxu0
    %v630 = vadd.f32 %v581, %v629
    %v631 = vpop.f32.mrf.mxu0
    %v632 = vadd.f32 %v583, %v631
    %633 = vmatmul.bf16.gmra.mxu0 %v426
    %v634 = vpop.f32.mrf.mxu0
    %v635 = vadd.f32 %v586, %v634
    %v636 = vpop.f32.mrf.mxu0
    %v637 = vadd.f32 %v588, %v636
    %638 = vmatmul.bf16.gmra.mxu0 %v428
    %v639 = vpop.f32.mrf.mxu0
    %v640 = vadd.f32 %v591, %v639
    %v641 = vpop.f32.mrf.mxu0
    %v642 = vadd.f32 %v593, %v641
    %643 = vmatmul.bf16.gmra.mxu0 %v430
    %v644 = vpop.f32.mrf.mxu0
    %v645 = vadd.f32 %v596, %v644
    %v646 = vpop.f32.mrf.mxu0
    %v647 = vadd.f32 %v598, %v646
    %648 = vmatmul.bf16.gmra.mxu0 %v432
    %v649 = vpop.f32.mrf.mxu0
    %v650 = vadd.f32 %v601, %v649
    %v651 = vpop.f32.mrf.mxu0
    %v652 = vadd.f32 %v603, %v651
    %653 = vmatmul.bf16.gmra.mxu0 %v434
    %v654 = vpop.f32.mrf.mxu0
    %v655 = vadd.f32 %v606, %v654
    %v656 = vpop.f32.mrf.mxu0
    %v657 = vadd.f32 %v608, %v656
    %658 = vmatmul.bf16.gmra.mxu0 %v436
    %v659 = vpop.f32.mrf.mxu0
    %v660 = vadd.f32 %v611, %v659
    %v661 = vpop.f32.mrf.mxu0
    %v662 = vadd.f32 %v613, %v661
    %663 = vdwg.mxu0
    %v696 = vunpack.c.l.b16 %v132
    %v697 = vunpack.c.l.b16 %v133
    %v698 = vunpack.c.l.b16 %v134
    %v699 = vunpack.c.l.b16 %v135
    %v700 = vunpack.c.l.b16 %v136
    %v701 = vunpack.c.l.b16 %v137
    %v702 = vunpack.c.l.b16 %v138
    %v703 = vunpack.c.l.b16 %v139
    %v704 = vunpack.c.l.b16 %v140
    %v705 = vunpack.c.l.b16 %v141
    %v706 = vunpack.c.l.b16 %v142
    %v707 = vunpack.c.l.b16 %v143
    %v708 = vunpack.c.l.b16 %v144
    %v709 = vunpack.c.l.b16 %v145
    %v710 = vunpack.c.l.b16 %v146
    %v711 = vunpack.c.l.b16 %v147
    %v712 = vunpack.c.l.b16 %v148
    %v713 = vunpack.c.l.b16 %v149
    %v714 = vunpack.c.l.b16 %v150
    %v715 = vunpack.c.l.b16 %v151
    %v716 = vunpack.c.l.b16 %v152
    %v717 = vunpack.c.l.b16 %v153
    %v718 = vunpack.c.l.b16 %v154
    %v719 = vunpack.c.l.b16 %v155
    %v720 = vunpack.c.l.b16 %v156
    %v721 = vunpack.c.l.b16 %v157
    %v722 = vunpack.c.l.b16 %v158
    %v723 = vunpack.c.l.b16 %v159
    %v724 = vunpack.c.l.b16 %v160
    %v725 = vunpack.c.l.b16 %v161
    %v726 = vunpack.c.l.b16 %v162
    %v727 = vunpack.c.l.b16 %v163
    %v728 = vpack.c.b16 %v697, %v696
    %v729 = vpack.c.b16 %v699, %v698
    %v730 = vpack.c.b16 %v701, %v700
    %v731 = vpack.c.b16 %v703, %v702
    %v732 = vpack.c.b16 %v705, %v704
    %v733 = vpack.c.b16 %v707, %v706
    %v734 = vpack.c.b16 %v709, %v708
    %v735 = vpack.c.b16 %v711, %v710
    %v736 = vpack.c.b16 %v713, %v712
    %v737 = vpack.c.b16 %v715, %v714
    %v738 = vpack.c.b16 %v717, %v716
    %v739 = vpack.c.b16 %v719, %v718
    %v740 = vpack.c.b16 %v721, %v720
    %v741 = vpack.c.b16 %v723, %v722
    %v742 = vpack.c.b16 %v725, %v724
    %v743 = vpack.c.b16 %v727, %v726
    %760 = vmatpush.bf16.msra.mxu0 %v735
    %761 = vmatpush.bf16.msra.mxu0 %v734
    %762 = vmatpush.bf16.msra.mxu0 %v733
    %763 = vmatpush.bf16.msra.mxu0 %v732
    %764 = vmatpush.bf16.msra.mxu0 %v731
    %765 = vmatpush.bf16.msra.mxu0 %v730
    %766 = vmatpush.bf16.msra.mxu0 %v729
    %767 = vmatpush.bf16.msra.mxu0 %v728
    %768 = vmatmul.bf16.gmra.mxu0 %v116
    %v769 = vpop.f32.mrf.mxu0
    %v770 = vadd.f32 %v625, %v769
    %v771 = vpop.f32.mrf.mxu0
    %v772 = vadd.f32 %v627, %v771
    %773 = vmatmul.bf16.gmra.mxu0 %v118
    %v774 = vpop.f32.mrf.mxu0
    %v775 = vadd.f32 %v630, %v774
    %v776 = vpop.f32.mrf.mxu0
    %v777 = vadd.f32 %v632, %v776
    %778 = vmatmul.bf16.gmra.mxu0 %v120
    %v779 = vpop.f32.mrf.mxu0
    %v780 = vadd.f32 %v635, %v779
    %v781 = vpop.f32.mrf.mxu0
    %v782 = vadd.f32 %v637, %v781
    %783 = vmatmul.bf16.gmra.mxu0 %v122
    %v784 = vpop.f32.mrf.mxu0
    %v785 = vadd.f32 %v640, %v784
    %v786 = vpop.f32.mrf.mxu0
    %v787 = vadd.f32 %v642, %v786
    %788 = vmatmul.bf16.gmra.mxu0 %v124
    %v789 = vpop.f32.mrf.mxu0
    %v790 = vadd.f32 %v645, %v789
    %v791 = vpop.f32.mrf.mxu0
    %v792 = vadd.f32 %v647, %v791
    %793 = vmatmul.bf16.gmra.mxu0 %v126
    %v794 = vpop.f32.mrf.mxu0
    %v795 = vadd.f32 %v650, %v794
    %v796 = vpop.f32.mrf.mxu0
    %v797 = vadd.f32 %v652, %v796
    %798 = vmatmul.bf16.gmra.mxu0 %v128
    %v799 = vpop.f32.mrf.mxu0
    %v800 = vadd.f32 %v655, %v799
    %v801 = vpop.f32.mrf.mxu0
    %v802 = vadd.f32 %v657, %v801
    %803 = vmatmul.bf16.gmra.mxu0 %v130
    %v804 = vpop.f32.mrf.mxu0
    %v805 = vadd.f32 %v660, %v804
    %v806 = vpop.f32.mrf.mxu0
    %v807 = vadd.f32 %v662, %v806
    %808 = vdwg.mxu0
    %809 = vmatpush.bf16.msra.mxu0 %v743
    %810 = vmatpush.bf16.msra.mxu0 %v742
    %811 = vmatpush.bf16.msra.mxu0 %v741
    %812 = vmatpush.bf16.msra.mxu0 %v740
    %813 = vmatpush.bf16.msra.mxu0 %v739
    %814 = vmatpush.bf16.msra.mxu0 %v738
    %815 = vmatpush.bf16.msra.mxu0 %v737
    %816 = vmatpush.bf16.msra.mxu0 %v736
    %817 = vmatmul.bf16.gmra.mxu0 %v117
    %v818 = vpop.f32.mrf.mxu0
    %v819 = vadd.f32 %v770, %v818
    %v820 = vpop.f32.mrf.mxu0
    %v821 = vadd.f32 %v772, %v820
    %822 = vmatmul.bf16.gmra.mxu0 %v119
    %v823 = vpop.f32.mrf.mxu0
    %v824 = vadd.f32 %v775, %v823
    %v825 = vpop.f32.mrf.mxu0
    %v826 = vadd.f32 %v777, %v825
    %827 = vmatmul.bf16.gmra.mxu0 %v121
    %v828 = vpop.f32.mrf.mxu0
    %v829 = vadd.f32 %v780, %v828
    %v830 = vpop.f32.mrf.mxu0
    %v831 = vadd.f32 %v782, %v830
    %832 = vmatmul.bf16.gmra.mxu0 %v123
    %v833 = vpop.f32.mrf.mxu0
    %v834 = vadd.f32 %v785, %v833
    %v835 = vpop.f32.mrf.mxu0
    %v836 = vadd.f32 %v787, %v835
    %837 = vmatmul.bf16.gmra.mxu0 %v125
    %v838 = vpop.f32.mrf.mxu0
    %v839 = vadd.f32 %v790, %v838
    %v840 = vpop.f32.mrf.mxu0
    %v841 = vadd.f32 %v792, %v840
    %842 = vmatmul.bf16.gmra.mxu0 %v127
    %v843 = vpop.f32.mrf.mxu0
    %v844 = vadd.f32 %v795, %v843
    %v845 = vpop.f32.mrf.mxu0
    %v846 = vadd.f32 %v797, %v845
    %847 = vmatmul.bf16.gmra.mxu0 %v129
    %v848 = vpop.f32.mrf.mxu0
    %v849 = vadd.f32 %v800, %v848
    %v850 = vpop.f32.mrf.mxu0
    %v851 = vadd.f32 %v802, %v850
    %852 = vmatmul.bf16.gmra.mxu0 %v131
    %v853 = vpop.f32.mrf.mxu0
    %v854 = vadd.f32 %v805, %v853
    %v855 = vpop.f32.mrf.mxu0
    %v856 = vadd.f32 %v807, %v855
    %857 = vdwg.mxu0
    %v858 = vld [vmem:[%s0] sm:$0xfc]
    %v859 = vld [vmem:[%s0 + $0x8] sm:$0xfc]
    %v860 = vld [vmem:[%s0 + $0x10] sm:$0x3]
    %v861 = vld [vmem:[%s0 + $0x18] sm:$0x3]
    %v862 = vld [vmem:[%s0 + $0x20] sm:$0xfc]
    %v863 = vld [vmem:[%s0 + $0x28] sm:$0xfc]
    %v864 = vld [vmem:[%s0 + $0x30] sm:$0x3]
    %v865 = vld [vmem:[%s0 + $0x38] sm:$0x3]
    %v866 = vld [vmem:[%s0 + $0x40] sm:$0xfc]
    %v867 = vld [vmem:[%s0 + $0x48] sm:$0xfc]
    %v868 = vld [vmem:[%s0 + $0x50] sm:$0x3]
    %v869 = vld [vmem:[%s0 + $0x58] sm:$0x3]
    %v870 = vld [vmem:[%s0 + $0x60] sm:$0xfc]
    %v871 = vld [vmem:[%s0 + $0x68] sm:$0xfc]
    %v872 = vld [vmem:[%s0 + $0x70] sm:$0x3]
    %v873 = vld [vmem:[%s0 + $0x78] sm:$0x3]
    %v874 = vld [vmem:[%s0 + $0x80] sm:$0xfc]
    %v875 = vld [vmem:[%s0 + $0x88] sm:$0xfc]
    %v876 = vld [vmem:[%s0 + $0x90] sm:$0x3]
    %v877 = vld [vmem:[%s0 + $0x98] sm:$0x3]
    %v878 = vld [vmem:[%s0 + $0xa0] sm:$0xfc]
    %v879 = vld [vmem:[%s0 + $0xa8] sm:$0xfc]
    %v880 = vld [vmem:[%s0 + $0xb0] sm:$0x3]
    %v881 = vld [vmem:[%s0 + $0xb8] sm:$0x3]
    %v882 = vld [vmem:[%s0 + $0xc0] sm:$0xfc]
    %v883 = vld [vmem:[%s0 + $0xc8] sm:$0xfc]
    %v884 = vld [vmem:[%s0 + $0xd0] sm:$0x3]
    %v885 = vld [vmem:[%s0 + $0xd8] sm:$0x3]
    %v886 = vld [vmem:[%s0 + $0xe0] sm:$0xfc]
    %v887 = vld [vmem:[%s0 + $0xe8] sm:$0xfc]
    %v888 = vld [vmem:[%s0 + $0xf0] sm:$0x3]
    %v889 = vld [vmem:[%s0 + $0xf8] sm:$0x3]
    %v890 = vld [vmem:[%s0 + $0x140] sm:$0xfc]
    %v891 = vld [vmem:[%s0 + $0x148] sm:$0xfc]
    %v892 = vld [vmem:[%s0 + $0x150] sm:$0x3]
    %v893 = vld [vmem:[%s0 + $0x158] sm:$0x3]
    %v894 = vld [vmem:[%s0 + $0x160] sm:$0xfc]
    %v895 = vld [vmem:[%s0 + $0x168] sm:$0xfc]
    %v896 = vld [vmem:[%s0 + $0x170] sm:$0x3]
    %v897 = vld [vmem:[%s0 + $0x178] sm:$0x3]
    %v898 = vld [vmem:[%s0 + $0x180] sm:$0xfc]
    %v899 = vld [vmem:[%s0 + $0x188] sm:$0xfc]
    %v900 = vld [vmem:[%s0 + $0x190] sm:$0x3]
    %v901 = vld [vmem:[%s0 + $0x198] sm:$0x3]
    %v902 = vld [vmem:[%s0 + $0x1a0] sm:$0xfc]
    %v903 = vld [vmem:[%s0 + $0x1a8] sm:$0xfc]
    %v904 = vld [vmem:[%s0 + $0x1b0] sm:$0x3]
    %v905 = vld [vmem:[%s0 + $0x1b8] sm:$0x3]
    %v906 = vld [vmem:[%s0 + $0x1c0] sm:$0xfc]
    %v907 = vld [vmem:[%s0 + $0x1c8] sm:$0xfc]
    %v908 = vld [vmem:[%s0 + $0x1d0] sm:$0x3]
    %v909 = vld [vmem:[%s0 + $0x1d8] sm:$0x3]
    %v910 = vld [vmem:[%s0 + $0x1e0] sm:$0xfc]
    %v911 = vld [vmem:[%s0 + $0x1e8] sm:$0xfc]
    %v912 = vld [vmem:[%s0 + $0x1f0] sm:$0x3]
    %v913 = vld [vmem:[%s0 + $0x1f8] sm:$0x3]
    %v914 = vld [vmem:[%s0 + $0x200] sm:$0xfc]
    %v915 = vld [vmem:[%s0 + $0x208] sm:$0xfc]
    %v916 = vld [vmem:[%s0 + $0x210] sm:$0x3]
    %v917 = vld [vmem:[%s0 + $0x218] sm:$0x3]
    %v918 = vld [vmem:[%s0 + $0x220] sm:$0xfc]
    %v919 = vld [vmem:[%s0 + $0x228] sm:$0xfc]
    %v920 = vld [vmem:[%s0 + $0x230] sm:$0x3]
    %v921 = vld [vmem:[%s0 + $0x238] sm:$0x3]
    %vm986 = vcmask 1045504
    %v987 = vrot.slane %v858, 2
    %v988 = vrot.slane %v860, 2
    %v989 = vsel %vm986, %v987, %v988
    %v990 = vrot.slane %v859, 2
    %v991 = vrot.slane %v861, 2
    %v992 = vsel %vm986, %v990, %v991
    %v993 = vrot.slane %v862, 2
    %v994 = vrot.slane %v864, 2
    %v995 = vsel %vm986, %v993, %v994
    %v996 = vrot.slane %v863, 2
    %v997 = vrot.slane %v865, 2
    %v998 = vsel %vm986, %v996, %v997
    %v999 = vrot.slane %v866, 2
    %v1000 = vrot.slane %v868, 2
    %v1001 = vsel %vm986, %v999, %v1000
    %v1002 = vrot.slane %v867, 2
    %v1003 = vrot.slane %v869, 2
    %v1004 = vsel %vm986, %v1002, %v1003
    %v1005 = vrot.slane %v870, 2
    %v1006 = vrot.slane %v872, 2
    %v1007 = vsel %vm986, %v1005, %v1006
    %v1008 = vrot.slane %v871, 2
    %v1009 = vrot.slane %v873, 2
    %v1010 = vsel %vm986, %v1008, %v1009
    %v1011 = vrot.slane %v874, 2
    %v1012 = vrot.slane %v876, 2
    %v1013 = vsel %vm986, %v1011, %v1012
    %v1014 = vrot.slane %v875, 2
    %v1015 = vrot.slane %v877, 2
    %v1016 = vsel %vm986, %v1014, %v1015
    %v1017 = vrot.slane %v878, 2
    %v1018 = vrot.slane %v880, 2
    %v1019 = vsel %vm986, %v1017, %v1018
    %v1020 = vrot.slane %v879, 2
    %v1021 = vrot.slane %v881, 2
    %v1022 = vsel %vm986, %v1020, %v1021
    %v1023 = vrot.slane %v882, 2
    %v1024 = vrot.slane %v884, 2
    %v1025 = vsel %vm986, %v1023, %v1024
    %v1026 = vrot.slane %v883, 2
    %v1027 = vrot.slane %v885, 2
    %v1028 = vsel %vm986, %v1026, %v1027
    %v1029 = vrot.slane %v886, 2
    %v1030 = vrot.slane %v888, 2
    %v1031 = vsel %vm986, %v1029, %v1030
    %v1032 = vrot.slane %v887, 2
    %v1033 = vrot.slane %v889, 2
    %v1034 = vsel %vm986, %v1032, %v1033
    %v1035 = vrot.slane %v890, 2
    %v1036 = vrot.slane %v892, 2
    %v1037 = vsel %vm986, %v1035, %v1036
    %v1038 = vrot.slane %v891, 2
    %v1039 = vrot.slane %v893, 2
    %v1040 = vsel %vm986, %v1038, %v1039
    %v1041 = vrot.slane %v894, 2
    %v1042 = vrot.slane %v896, 2
    %v1043 = vsel %vm986, %v1041, %v1042
    %v1044 = vrot.slane %v895, 2
    %v1045 = vrot.slane %v897, 2
    %v1046 = vsel %vm986, %v1044, %v1045
    %v1047 = vrot.slane %v898, 2
    %v1048 = vrot.slane %v900, 2
    %v1049 = vsel %vm986, %v1047, %v1048
    %v1050 = vrot.slane %v899, 2
    %v1051 = vrot.slane %v901, 2
    %v1052 = vsel %vm986, %v1050, %v1051
    %v1053 = vrot.slane %v902, 2
    %v1054 = vrot.slane %v904, 2
    %v1055 = vsel %vm986, %v1053, %v1054
    %v1056 = vrot.slane %v903, 2
    %v1057 = vrot.slane %v905, 2
    %v1058 = vsel %vm986, %v1056, %v1057
    %v1059 = vrot.slane %v906, 2
    %v1060 = vrot.slane %v908, 2
    %v1061 = vsel %vm986, %v1059, %v1060
    %v1062 = vrot.slane %v907, 2
    %v1063 = vrot.slane %v909, 2
    %v1064 = vsel %vm986, %v1062, %v1063
    %v1065 = vrot.slane %v910, 2
    %v1066 = vrot.slane %v912, 2
    %v1067 = vsel %vm986, %v1065, %v1066
    %v1068 = vrot.slane %v911, 2
    %v1069 = vrot.slane %v913, 2
    %v1070 = vsel %vm986, %v1068, %v1069
    %v1071 = vrot.slane %v914, 2
    %v1072 = vrot.slane %v916, 2
    %v1073 = vsel %vm986, %v1071, %v1072
    %v1074 = vrot.slane %v915, 2
    %v1075 = vrot.slane %v917, 2
    %v1076 = vsel %vm986, %v1074, %v1075
    %v1077 = vrot.slane %v918, 2
    %v1078 = vrot.slane %v920, 2
    %v1079 = vsel %vm986, %v1077, %v1078
    %v1080 = vrot.slane %v919, 2
    %v1081 = vrot.slane %v921, 2
    %v1082 = vsel %vm986, %v1080, %v1081
    %v1115 = vpack.c.bf16 %v995, %v989
    %v1116 = vpack.c.bf16 %v998, %v992
    %v1117 = vpack.c.bf16 %v1007, %v1001
    %v1118 = vpack.c.bf16 %v1010, %v1004
    %v1119 = vpack.c.bf16 %v1019, %v1013
    %v1120 = vpack.c.bf16 %v1022, %v1016
    %v1121 = vpack.c.bf16 %v1031, %v1025
    %v1122 = vpack.c.bf16 %v1034, %v1028
    %v1123 = vpack.c.bf16 %v1043, %v1037
    %v1124 = vpack.c.bf16 %v1046, %v1040
    %v1125 = vpack.c.bf16 %v1055, %v1049
    %v1126 = vpack.c.bf16 %v1058, %v1052
    %v1127 = vpack.c.bf16 %v1067, %v1061
    %v1128 = vpack.c.bf16 %v1070, %v1064
    %v1129 = vpack.c.bf16 %v1079, %v1073
    %v1130 = vpack.c.bf16 %v1082, %v1076
    %s1131 = scalar_lea.vmem %s1, 256
    %v1132 = vld [vmem:[%s1131] sm:$0xf]
    %v1133 = vld [vmem:[%s1131 + $0x4] sm:$0xf]
    %v1134 = vld [vmem:[%s1131 + $0x8] sm:$0xf]
    %v1135 = vld [vmem:[%s1131 + $0xc] sm:$0xf]
    %v1136 = vld [vmem:[%s1131 + $0x10] sm:$0xf]
    %v1137 = vld [vmem:[%s1131 + $0x14] sm:$0xf]
    %v1138 = vld [vmem:[%s1131 + $0x18] sm:$0xf]
    %v1139 = vld [vmem:[%s1131 + $0x1c] sm:$0xf]
    %v1140 = vld [vmem:[%s1131 + $0x20] sm:$0xf]
    %v1141 = vld [vmem:[%s1131 + $0x24] sm:$0xf]
    %v1142 = vld [vmem:[%s1131 + $0x28] sm:$0xf]
    %v1143 = vld [vmem:[%s1131 + $0x2c] sm:$0xf]
    %v1144 = vld [vmem:[%s1131 + $0x30] sm:$0xf]
    %v1145 = vld [vmem:[%s1131 + $0x34] sm:$0xf]
    %v1146 = vld [vmem:[%s1131 + $0x38] sm:$0xf]
    %v1147 = vld [vmem:[%s1131 + $0x3c] sm:$0xf]
    %v1148 = vld [vmem:[%s1131 + $0x40] sm:$0xf]
    %v1149 = vld [vmem:[%s1131 + $0x44] sm:$0xf]
    %v1150 = vld [vmem:[%s1131 + $0x48] sm:$0xf]
    %v1151 = vld [vmem:[%s1131 + $0x4c] sm:$0xf]
    %v1152 = vld [vmem:[%s1131 + $0x50] sm:$0xf]
    %v1153 = vld [vmem:[%s1131 + $0x54] sm:$0xf]
    %v1154 = vld [vmem:[%s1131 + $0x58] sm:$0xf]
    %v1155 = vld [vmem:[%s1131 + $0x5c] sm:$0xf]
    %v1156 = vld [vmem:[%s1131 + $0x60] sm:$0xf]
    %v1157 = vld [vmem:[%s1131 + $0x64] sm:$0xf]
    %v1158 = vld [vmem:[%s1131 + $0x68] sm:$0xf]
    %v1159 = vld [vmem:[%s1131 + $0x6c] sm:$0xf]
    %v1160 = vld [vmem:[%s1131 + $0x70] sm:$0xf]
    %v1161 = vld [vmem:[%s1131 + $0x74] sm:$0xf]
    %v1162 = vld [vmem:[%s1131 + $0x78] sm:$0xf]
    %v1163 = vld [vmem:[%s1131 + $0x7c] sm:$0xf]
    %v1196 = vunpack.c.l.b16 %v1132
    %v1197 = vunpack.c.l.b16 %v1133
    %v1198 = vunpack.c.l.b16 %v1134
    %v1199 = vunpack.c.l.b16 %v1135
    %v1200 = vunpack.c.l.b16 %v1136
    %v1201 = vunpack.c.l.b16 %v1137
    %v1202 = vunpack.c.l.b16 %v1138
    %v1203 = vunpack.c.l.b16 %v1139
    %v1204 = vunpack.c.l.b16 %v1140
    %v1205 = vunpack.c.l.b16 %v1141
    %v1206 = vunpack.c.l.b16 %v1142
    %v1207 = vunpack.c.l.b16 %v1143
    %v1208 = vunpack.c.l.b16 %v1144
    %v1209 = vunpack.c.l.b16 %v1145
    %v1210 = vunpack.c.l.b16 %v1146
    %v1211 = vunpack.c.l.b16 %v1147
    %v1212 = vunpack.c.l.b16 %v1148
    %v1213 = vunpack.c.l.b16 %v1149
    %v1214 = vunpack.c.l.b16 %v1150
    %v1215 = vunpack.c.l.b16 %v1151
    %v1216 = vunpack.c.l.b16 %v1152
    %v1217 = vunpack.c.l.b16 %v1153
    %v1218 = vunpack.c.l.b16 %v1154
    %v1219 = vunpack.c.l.b16 %v1155
    %v1220 = vunpack.c.l.b16 %v1156
    %v1221 = vunpack.c.l.b16 %v1157
    %v1222 = vunpack.c.l.b16 %v1158
    %v1223 = vunpack.c.l.b16 %v1159
    %v1224 = vunpack.c.l.b16 %v1160
    %v1225 = vunpack.c.l.b16 %v1161
    %v1226 = vunpack.c.l.b16 %v1162
    %v1227 = vunpack.c.l.b16 %v1163
    %v1228 = vpack.c.b16 %v1197, %v1196
    %v1229 = vpack.c.b16 %v1199, %v1198
    %v1230 = vpack.c.b16 %v1201, %v1200
    %v1231 = vpack.c.b16 %v1203, %v1202
    %v1232 = vpack.c.b16 %v1205, %v1204
    %v1233 = vpack.c.b16 %v1207, %v1206
    %v1234 = vpack.c.b16 %v1209, %v1208
    %v1235 = vpack.c.b16 %v1211, %v1210
    %v1236 = vpack.c.b16 %v1213, %v1212
    %v1237 = vpack.c.b16 %v1215, %v1214
    %v1238 = vpack.c.b16 %v1217, %v1216
    %v1239 = vpack.c.b16 %v1219, %v1218
    %v1240 = vpack.c.b16 %v1221, %v1220
    %v1241 = vpack.c.b16 %v1223, %v1222
    %v1242 = vpack.c.b16 %v1225, %v1224
    %v1243 = vpack.c.b16 %v1227, %v1226
    %1260 = vmatpush.bf16.msra.mxu0 %v1235
    %1261 = vmatpush.bf16.msra.mxu0 %v1234
    %1262 = vmatpush.bf16.msra.mxu0 %v1233
    %1263 = vmatpush.bf16.msra.mxu0 %v1232
    %1264 = vmatpush.bf16.msra.mxu0 %v1231
    %1265 = vmatpush.bf16.msra.mxu0 %v1230
    %1266 = vmatpush.bf16.msra.mxu0 %v1229
    %1267 = vmatpush.bf16.msra.mxu0 %v1228
    %1268 = vmatmul.bf16.gmra.mxu0 %v1115
    %v1269 = vpop.f32.mrf.mxu0
    %v1270 = vadd.f32 0.0, %v1269
    %v1271 = vpop.f32.mrf.mxu0
    %v1272 = vadd.f32 0.0, %v1271
    %1273 = vmatmul.bf16.gmra.mxu0 %v1117
    %v1274 = vpop.f32.mrf.mxu0
    %v1275 = vadd.f32 0.0, %v1274
    %v1276 = vpop.f32.mrf.mxu0
    %v1277 = vadd.f32 0.0, %v1276
    %1278 = vmatmul.bf16.gmra.mxu0 %v1119
    %v1279 = vpop.f32.mrf.mxu0
    %v1280 = vadd.f32 0.0, %v1279
    %v1281 = vpop.f32.mrf.mxu0
    %v1282 = vadd.f32 0.0, %v1281
    %1283 = vmatmul.bf16.gmra.mxu0 %v1121
    %v1284 = vpop.f32.mrf.mxu0
    %v1285 = vadd.f32 0.0, %v1284
    %v1286 = vpop.f32.mrf.mxu0
    %v1287 = vadd.f32 0.0, %v1286
    %1288 = vmatmul.bf16.gmra.mxu0 %v1123
    %v1289 = vpop.f32.mrf.mxu0
    %v1290 = vadd.f32 0.0, %v1289
    %v1291 = vpop.f32.mrf.mxu0
    %v1292 = vadd.f32 0.0, %v1291
    %1293 = vmatmul.bf16.gmra.mxu0 %v1125
    %v1294 = vpop.f32.mrf.mxu0
    %v1295 = vadd.f32 0.0, %v1294
    %v1296 = vpop.f32.mrf.mxu0
    %v1297 = vadd.f32 0.0, %v1296
    %1298 = vmatmul.bf16.gmra.mxu0 %v1127
    %v1299 = vpop.f32.mrf.mxu0
    %v1300 = vadd.f32 0.0, %v1299
    %v1301 = vpop.f32.mrf.mxu0
    %v1302 = vadd.f32 0.0, %v1301
    %1303 = vmatmul.bf16.gmra.mxu0 %v1129
    %v1304 = vpop.f32.mrf.mxu0
    %v1305 = vadd.f32 0.0, %v1304
    %v1306 = vpop.f32.mrf.mxu0
    %v1307 = vadd.f32 0.0, %v1306
    %1308 = vdwg.mxu0
    %1309 = vmatpush.bf16.msra.mxu0 %v1243
    %1310 = vmatpush.bf16.msra.mxu0 %v1242
    %1311 = vmatpush.bf16.msra.mxu0 %v1241
    %1312 = vmatpush.bf16.msra.mxu0 %v1240
    %1313 = vmatpush.bf16.msra.mxu0 %v1239
    %1314 = vmatpush.bf16.msra.mxu0 %v1238
    %1315 = vmatpush.bf16.msra.mxu0 %v1237
    %1316 = vmatpush.bf16.msra.mxu0 %v1236
    %1317 = vmatmul.bf16.gmra.mxu0 %v1116
    %v1318 = vpop.f32.mrf.mxu0
    %v1319 = vadd.f32 %v1270, %v1318
    %v1320 = vpop.f32.mrf.mxu0
    %v1321 = vadd.f32 %v1272, %v1320
    %1322 = vmatmul.bf16.gmra.mxu0 %v1118
    %v1323 = vpop.f32.mrf.mxu0
    %v1324 = vadd.f32 %v1275, %v1323
    %v1325 = vpop.f32.mrf.mxu0
    %v1326 = vadd.f32 %v1277, %v1325
    %1327 = vmatmul.bf16.gmra.mxu0 %v1120
    %v1328 = vpop.f32.mrf.mxu0
    %v1329 = vadd.f32 %v1280, %v1328
    %v1330 = vpop.f32.mrf.mxu0
    %v1331 = vadd.f32 %v1282, %v1330
    %1332 = vmatmul.bf16.gmra.mxu0 %v1122
    %v1333 = vpop.f32.mrf.mxu0
    %v1334 = vadd.f32 %v1285, %v1333
    %v1335 = vpop.f32.mrf.mxu0
    %v1336 = vadd.f32 %v1287, %v1335
    %1337 = vmatmul.bf16.gmra.mxu0 %v1124
    %v1338 = vpop.f32.mrf.mxu0
    %v1339 = vadd.f32 %v1290, %v1338
    %v1340 = vpop.f32.mrf.mxu0
    %v1341 = vadd.f32 %v1292, %v1340
    %1342 = vmatmul.bf16.gmra.mxu0 %v1126
    %v1343 = vpop.f32.mrf.mxu0
    %v1344 = vadd.f32 %v1295, %v1343
    %v1345 = vpop.f32.mrf.mxu0
    %v1346 = vadd.f32 %v1297, %v1345
    %1347 = vmatmul.bf16.gmra.mxu0 %v1128
    %v1348 = vpop.f32.mrf.mxu0
    %v1349 = vadd.f32 %v1300, %v1348
    %v1350 = vpop.f32.mrf.mxu0
    %v1351 = vadd.f32 %v1302, %v1350
    %1352 = vmatmul.bf16.gmra.mxu0 %v1130
    %v1353 = vpop.f32.mrf.mxu0
    %v1354 = vadd.f32 %v1305, %v1353
    %v1355 = vpop.f32.mrf.mxu0
    %v1356 = vadd.f32 %v1307, %v1355
    %1357 = vdwg.mxu0
    %v1358 = vadd.f32 %v819, %v1319
    %v1359 = vadd.f32 %v821, %v1321
    %v1360 = vadd.f32 %v824, %v1324
    %v1361 = vadd.f32 %v826, %v1326
    %v1362 = vadd.f32 %v829, %v1329
    %v1363 = vadd.f32 %v831, %v1331
    %v1364 = vadd.f32 %v834, %v1334
    %v1365 = vadd.f32 %v836, %v1336
    %v1366 = vadd.f32 %v839, %v1339
    %v1367 = vadd.f32 %v841, %v1341
    %v1368 = vadd.f32 %v844, %v1344
    %v1369 = vadd.f32 %v846, %v1346
    %v1370 = vadd.f32 %v849, %v1349
    %v1371 = vadd.f32 %v851, %v1351
    %v1372 = vadd.f32 %v854, %v1354
    %v1373 = vadd.f32 %v856, %v1356
    %s1374 = scalar_lea.vmem %s0, 32
    %v1375 = vld [vmem:[%s1374] sm:$0xff]
    %v1376 = vld [vmem:[%s1374 + $0x8] sm:$0xff]
    %v1377 = vld [vmem:[%s1374 + $0x20] sm:$0xff]
    %v1378 = vld [vmem:[%s1374 + $0x28] sm:$0xff]
    %v1379 = vld [vmem:[%s1374 + $0x40] sm:$0xff]
    %v1380 = vld [vmem:[%s1374 + $0x48] sm:$0xff]
    %v1381 = vld [vmem:[%s1374 + $0x60] sm:$0xff]
    %v1382 = vld [vmem:[%s1374 + $0x68] sm:$0xff]
    %v1383 = vld [vmem:[%s1374 + $0x80] sm:$0xff]
    %v1384 = vld [vmem:[%s1374 + $0x88] sm:$0xff]
    %v1385 = vld [vmem:[%s1374 + $0xa0] sm:$0xff]
    %v1386 = vld [vmem:[%s1374 + $0xa8] sm:$0xff]
    %v1387 = vld [vmem:[%s1374 + $0xc0] sm:$0xff]
    %v1388 = vld [vmem:[%s1374 + $0xc8] sm:$0xff]
    %v1389 = vld [vmem:[%s1374 + $0xe0] sm:$0xff]
    %v1390 = vld [vmem:[%s1374 + $0xe8] sm:$0xff]
    %v1391 = vld [vmem:[%s1374 + $0x140] sm:$0xff]
    %v1392 = vld [vmem:[%s1374 + $0x148] sm:$0xff]
    %v1393 = vld [vmem:[%s1374 + $0x160] sm:$0xff]
    %v1394 = vld [vmem:[%s1374 + $0x168] sm:$0xff]
    %v1395 = vld [vmem:[%s1374 + $0x180] sm:$0xff]
    %v1396 = vld [vmem:[%s1374 + $0x188] sm:$0xff]
    %v1397 = vld [vmem:[%s1374 + $0x1a0] sm:$0xff]
    %v1398 = vld [vmem:[%s1374 + $0x1a8] sm:$0xff]
    %v1399 = vld [vmem:[%s1374 + $0x1c0] sm:$0xff]
    %v1400 = vld [vmem:[%s1374 + $0x1c8] sm:$0xff]
    %v1401 = vld [vmem:[%s1374 + $0x1e0] sm:$0xff]
    %v1402 = vld [vmem:[%s1374 + $0x1e8] sm:$0xff]
    %v1403 = vld [vmem:[%s1374 + $0x200] sm:$0xff]
    %v1404 = vld [vmem:[%s1374 + $0x208] sm:$0xff]
    %v1405 = vld [vmem:[%s1374 + $0x220] sm:$0xff]
    %v1406 = vld [vmem:[%s1374 + $0x228] sm:$0xff]
    %v1407 = vpack.c.bf16 %v1377, %v1375
    %v1408 = vpack.c.bf16 %v1378, %v1376
    %v1409 = vpack.c.bf16 %v1381, %v1379
    %v1410 = vpack.c.bf16 %v1382, %v1380
    %v1411 = vpack.c.bf16 %v1385, %v1383
    %v1412 = vpack.c.bf16 %v1386, %v1384
    %v1413 = vpack.c.bf16 %v1389, %v1387
    %v1414 = vpack.c.bf16 %v1390, %v1388
    %v1415 = vpack.c.bf16 %v1393, %v1391
    %v1416 = vpack.c.bf16 %v1394, %v1392
    %v1417 = vpack.c.bf16 %v1397, %v1395
    %v1418 = vpack.c.bf16 %v1398, %v1396
    %v1419 = vpack.c.bf16 %v1401, %v1399
    %v1420 = vpack.c.bf16 %v1402, %v1400
    %v1421 = vpack.c.bf16 %v1405, %v1403
    %v1422 = vpack.c.bf16 %v1406, %v1404
    %s1423 = scalar_lea.vmem %s1, 384
    %v1424 = vld [vmem:[%s1423] sm:$0xf]
    %v1425 = vld [vmem:[%s1423 + $0x4] sm:$0xf]
    %v1426 = vld [vmem:[%s1423 + $0x8] sm:$0xf]
    %v1427 = vld [vmem:[%s1423 + $0xc] sm:$0xf]
    %v1428 = vld [vmem:[%s1423 + $0x10] sm:$0xf]
    %v1429 = vld [vmem:[%s1423 + $0x14] sm:$0xf]
    %v1430 = vld [vmem:[%s1423 + $0x18] sm:$0xf]
    %v1431 = vld [vmem:[%s1423 + $0x1c] sm:$0xf]
    %v1432 = vld [vmem:[%s1423 + $0x20] sm:$0xf]
    %v1433 = vld [vmem:[%s1423 + $0x24] sm:$0xf]
    %v1434 = vld [vmem:[%s1423 + $0x28] sm:$0xf]
    %v1435 = vld [vmem:[%s1423 + $0x2c] sm:$0xf]
    %v1436 = vld [vmem:[%s1423 + $0x30] sm:$0xf]
    %v1437 = vld [vmem:[%s1423 + $0x34] sm:$0xf]
    %v1438 = vld [vmem:[%s1423 + $0x38] sm:$0xf]
    %v1439 = vld [vmem:[%s1423 + $0x3c] sm:$0xf]
    %v1440 = vld [vmem:[%s1423 + $0x40] sm:$0xf]
    %v1441 = vld [vmem:[%s1423 + $0x44] sm:$0xf]
    %v1442 = vld [vmem:[%s1423 + $0x48] sm:$0xf]
    %v1443 = vld [vmem:[%s1423 + $0x4c] sm:$0xf]
    %v1444 = vld [vmem:[%s1423 + $0x50] sm:$0xf]
    %v1445 = vld [vmem:[%s1423 + $0x54] sm:$0xf]
    %v1446 = vld [vmem:[%s1423 + $0x58] sm:$0xf]
    %v1447 = vld [vmem:[%s1423 + $0x5c] sm:$0xf]
    %v1448 = vld [vmem:[%s1423 + $0x60] sm:$0xf]
    %v1449 = vld [vmem:[%s1423 + $0x64] sm:$0xf]
    %v1450 = vld [vmem:[%s1423 + $0x68] sm:$0xf]
    %v1451 = vld [vmem:[%s1423 + $0x6c] sm:$0xf]
    %v1452 = vld [vmem:[%s1423 + $0x70] sm:$0xf]
    %v1453 = vld [vmem:[%s1423 + $0x74] sm:$0xf]
    %v1454 = vld [vmem:[%s1423 + $0x78] sm:$0xf]
    %v1455 = vld [vmem:[%s1423 + $0x7c] sm:$0xf]
    %v1488 = vunpack.c.l.b16 %v1424
    %v1489 = vunpack.c.l.b16 %v1425
    %v1490 = vunpack.c.l.b16 %v1426
    %v1491 = vunpack.c.l.b16 %v1427
    %v1492 = vunpack.c.l.b16 %v1428
    %v1493 = vunpack.c.l.b16 %v1429
    %v1494 = vunpack.c.l.b16 %v1430
    %v1495 = vunpack.c.l.b16 %v1431
    %v1496 = vunpack.c.l.b16 %v1432
    %v1497 = vunpack.c.l.b16 %v1433
    %v1498 = vunpack.c.l.b16 %v1434
    %v1499 = vunpack.c.l.b16 %v1435
    %v1500 = vunpack.c.l.b16 %v1436
    %v1501 = vunpack.c.l.b16 %v1437
    %v1502 = vunpack.c.l.b16 %v1438
    %v1503 = vunpack.c.l.b16 %v1439
    %v1504 = vunpack.c.l.b16 %v1440
    %v1505 = vunpack.c.l.b16 %v1441
    %v1506 = vunpack.c.l.b16 %v1442
    %v1507 = vunpack.c.l.b16 %v1443
    %v1508 = vunpack.c.l.b16 %v1444
    %v1509 = vunpack.c.l.b16 %v1445
    %v1510 = vunpack.c.l.b16 %v1446
    %v1511 = vunpack.c.l.b16 %v1447
    %v1512 = vunpack.c.l.b16 %v1448
    %v1513 = vunpack.c.l.b16 %v1449
    %v1514 = vunpack.c.l.b16 %v1450
    %v1515 = vunpack.c.l.b16 %v1451
    %v1516 = vunpack.c.l.b16 %v1452
    %v1517 = vunpack.c.l.b16 %v1453
    %v1518 = vunpack.c.l.b16 %v1454
    %v1519 = vunpack.c.l.b16 %v1455
    %v1520 = vpack.c.b16 %v1489, %v1488
    %v1521 = vpack.c.b16 %v1491, %v1490
    %v1522 = vpack.c.b16 %v1493, %v1492
    %v1523 = vpack.c.b16 %v1495, %v1494
    %v1524 = vpack.c.b16 %v1497, %v1496
    %v1525 = vpack.c.b16 %v1499, %v1498
    %v1526 = vpack.c.b16 %v1501, %v1500
    %v1527 = vpack.c.b16 %v1503, %v1502
    %v1528 = vpack.c.b16 %v1505, %v1504
    %v1529 = vpack.c.b16 %v1507, %v1506
    %v1530 = vpack.c.b16 %v1509, %v1508
    %v1531 = vpack.c.b16 %v1511, %v1510
    %v1532 = vpack.c.b16 %v1513, %v1512
    %v1533 = vpack.c.b16 %v1515, %v1514
    %v1534 = vpack.c.b16 %v1517, %v1516
    %v1535 = vpack.c.b16 %v1519, %v1518
    %1552 = vmatpush.bf16.msra.mxu0 %v1527
    %1553 = vmatpush.bf16.msra.mxu0 %v1526
    %1554 = vmatpush.bf16.msra.mxu0 %v1525
    %1555 = vmatpush.bf16.msra.mxu0 %v1524
    %1556 = vmatpush.bf16.msra.mxu0 %v1523
    %1557 = vmatpush.bf16.msra.mxu0 %v1522
    %1558 = vmatpush.bf16.msra.mxu0 %v1521
    %1559 = vmatpush.bf16.msra.mxu0 %v1520
    %1560 = vmatmul.bf16.gmra.mxu0 %v1407
    %v1561 = vpop.f32.mrf.mxu0
    %v1562 = vadd.f32 0.0, %v1561
    %v1563 = vpop.f32.mrf.mxu0
    %v1564 = vadd.f32 0.0, %v1563
    %1565 = vmatmul.bf16.gmra.mxu0 %v1409
    %v1566 = vpop.f32.mrf.mxu0
    %v1567 = vadd.f32 0.0, %v1566
    %v1568 = vpop.f32.mrf.mxu0
    %v1569 = vadd.f32 0.0, %v1568
    %1570 = vmatmul.bf16.gmra.mxu0 %v1411
    %v1571 = vpop.f32.mrf.mxu0
    %v1572 = vadd.f32 0.0, %v1571
    %v1573 = vpop.f32.mrf.mxu0
    %v1574 = vadd.f32 0.0, %v1573
    %1575 = vmatmul.bf16.gmra.mxu0 %v1413
    %v1576 = vpop.f32.mrf.mxu0
    %v1577 = vadd.f32 0.0, %v1576
    %v1578 = vpop.f32.mrf.mxu0
    %v1579 = vadd.f32 0.0, %v1578
    %1580 = vmatmul.bf16.gmra.mxu0 %v1415
    %v1581 = vpop.f32.mrf.mxu0
    %v1582 = vadd.f32 0.0, %v1581
    %v1583 = vpop.f32.mrf.mxu0
    %v1584 = vadd.f32 0.0, %v1583
    %1585 = vmatmul.bf16.gmra.mxu0 %v1417
    %v1586 = vpop.f32.mrf.mxu0
    %v1587 = vadd.f32 0.0, %v1586
    %v1588 = vpop.f32.mrf.mxu0
    %v1589 = vadd.f32 0.0, %v1588
    %1590 = vmatmul.bf16.gmra.mxu0 %v1419
    %v1591 = vpop.f32.mrf.mxu0
    %v1592 = vadd.f32 0.0, %v1591
    %v1593 = vpop.f32.mrf.mxu0
    %v1594 = vadd.f32 0.0, %v1593
    %1595 = vmatmul.bf16.gmra.mxu0 %v1421
    %v1596 = vpop.f32.mrf.mxu0
    %v1597 = vadd.f32 0.0, %v1596
    %v1598 = vpop.f32.mrf.mxu0
    %v1599 = vadd.f32 0.0, %v1598
    %1600 = vdwg.mxu0
    %1601 = vmatpush.bf16.msra.mxu0 %v1535
    %1602 = vmatpush.bf16.msra.mxu0 %v1534
    %1603 = vmatpush.bf16.msra.mxu0 %v1533
    %1604 = vmatpush.bf16.msra.mxu0 %v1532
    %1605 = vmatpush.bf16.msra.mxu0 %v1531
    %1606 = vmatpush.bf16.msra.mxu0 %v1530
    %1607 = vmatpush.bf16.msra.mxu0 %v1529
    %1608 = vmatpush.bf16.msra.mxu0 %v1528
    %1609 = vmatmul.bf16.gmra.mxu0 %v1408
    %v1610 = vpop.f32.mrf.mxu0
    %v1611 = vadd.f32 %v1562, %v1610
    %v1612 = vpop.f32.mrf.mxu0
    %v1613 = vadd.f32 %v1564, %v1612
    %1614 = vmatmul.bf16.gmra.mxu0 %v1410
    %v1615 = vpop.f32.mrf.mxu0
    %v1616 = vadd.f32 %v1567, %v1615
    %v1617 = vpop.f32.mrf.mxu0
    %v1618 = vadd.f32 %v1569, %v1617
    %1619 = vmatmul.bf16.gmra.mxu0 %v1412
    %v1620 = vpop.f32.mrf.mxu0
    %v1621 = vadd.f32 %v1572, %v1620
    %v1622 = vpop.f32.mrf.mxu0
    %v1623 = vadd.f32 %v1574, %v1622
    %1624 = vmatmul.bf16.gmra.mxu0 %v1414
    %v1625 = vpop.f32.mrf.mxu0
    %v1626 = vadd.f32 %v1577, %v1625
    %v1627 = vpop.f32.mrf.mxu0
    %v1628 = vadd.f32 %v1579, %v1627
    %1629 = vmatmul.bf16.gmra.mxu0 %v1416
    %v1630 = vpop.f32.mrf.mxu0
    %v1631 = vadd.f32 %v1582, %v1630
    %v1632 = vpop.f32.mrf.mxu0
    %v1633 = vadd.f32 %v1584, %v1632
    %1634 = vmatmul.bf16.gmra.mxu0 %v1418
    %v1635 = vpop.f32.mrf.mxu0
    %v1636 = vadd.f32 %v1587, %v1635
    %v1637 = vpop.f32.mrf.mxu0
    %v1638 = vadd.f32 %v1589, %v1637
    %1639 = vmatmul.bf16.gmra.mxu0 %v1420
    %v1640 = vpop.f32.mrf.mxu0
    %v1641 = vadd.f32 %v1592, %v1640
    %v1642 = vpop.f32.mrf.mxu0
    %v1643 = vadd.f32 %v1594, %v1642
    %1644 = vmatmul.bf16.gmra.mxu0 %v1422
    %v1645 = vpop.f32.mrf.mxu0
    %v1646 = vadd.f32 %v1597, %v1645
    %v1647 = vpop.f32.mrf.mxu0
    %v1648 = vadd.f32 %v1599, %v1647
    %1649 = vdwg.mxu0
    %v1650 = vadd.f32 %v1358, %v1611
    %v1651 = vadd.f32 %v1359, %v1613
    %v1652 = vadd.f32 %v1360, %v1616
    %v1653 = vadd.f32 %v1361, %v1618
    %v1654 = vadd.f32 %v1362, %v1621
    %v1655 = vadd.f32 %v1363, %v1623
    %v1656 = vadd.f32 %v1364, %v1626
    %v1657 = vadd.f32 %v1365, %v1628
    %v1658 = vadd.f32 %v1366, %v1631
    %v1659 = vadd.f32 %v1367, %v1633
    %v1660 = vadd.f32 %v1368, %v1636
    %v1661 = vadd.f32 %v1369, %v1638
    %v1662 = vadd.f32 %v1370, %v1641
    %v1663 = vadd.f32 %v1371, %v1643
    %v1664 = vadd.f32 %v1372, %v1646
    %v1665 = vadd.f32 %v1373, %v1648
    %v1666 = vld [vmem:[%s1374] sm:$0xfe]
    %v1667 = vld [vmem:[%s1374 + $0x8] sm:$0xfe]
    %v1668 = vld [vmem:[%s1374 + $0x10] sm:$0x1]
    %v1669 = vld [vmem:[%s1374 + $0x18] sm:$0x1]
    %v1670 = vld [vmem:[%s1374 + $0x20] sm:$0xfe]
    %v1671 = vld [vmem:[%s1374 + $0x28] sm:$0xfe]
    %v1672 = vld [vmem:[%s1374 + $0x30] sm:$0x1]
    %v1673 = vld [vmem:[%s1374 + $0x38] sm:$0x1]
    %v1674 = vld [vmem:[%s1374 + $0x40] sm:$0xfe]
    %v1675 = vld [vmem:[%s1374 + $0x48] sm:$0xfe]
    %v1676 = vld [vmem:[%s1374 + $0x50] sm:$0x1]
    %v1677 = vld [vmem:[%s1374 + $0x58] sm:$0x1]
    %v1678 = vld [vmem:[%s1374 + $0x60] sm:$0xfe]
    %v1679 = vld [vmem:[%s1374 + $0x68] sm:$0xfe]
    %v1680 = vld [vmem:[%s1374 + $0x70] sm:$0x1]
    %v1681 = vld [vmem:[%s1374 + $0x78] sm:$0x1]
    %v1682 = vld [vmem:[%s1374 + $0x80] sm:$0xfe]
    %v1683 = vld [vmem:[%s1374 + $0x88] sm:$0xfe]
    %v1684 = vld [vmem:[%s1374 + $0x90] sm:$0x1]
    %v1685 = vld [vmem:[%s1374 + $0x98] sm:$0x1]
    %v1686 = vld [vmem:[%s1374 + $0xa0] sm:$0xfe]
    %v1687 = vld [vmem:[%s1374 + $0xa8] sm:$0xfe]
    %v1688 = vld [vmem:[%s1374 + $0xb0] sm:$0x1]
    %v1689 = vld [vmem:[%s1374 + $0xb8] sm:$0x1]
    %v1690 = vld [vmem:[%s1374 + $0xc0] sm:$0xfe]
    %v1691 = vld [vmem:[%s1374 + $0xc8] sm:$0xfe]
    %v1692 = vld [vmem:[%s1374 + $0xd0] sm:$0x1]
    %v1693 = vld [vmem:[%s1374 + $0xd8] sm:$0x1]
    %v1694 = vld [vmem:[%s1374 + $0xe0] sm:$0xfe]
    %v1695 = vld [vmem:[%s1374 + $0xe8] sm:$0xfe]
    %v1696 = vld [vmem:[%s1374 + $0xf0] sm:$0x1]
    %v1697 = vld [vmem:[%s1374 + $0xf8] sm:$0x1]
    %v1698 = vld [vmem:[%s1374 + $0x140] sm:$0xfe]
    %v1699 = vld [vmem:[%s1374 + $0x148] sm:$0xfe]
    %v1700 = vld [vmem:[%s1374 + $0x150] sm:$0x1]
    %v1701 = vld [vmem:[%s1374 + $0x158] sm:$0x1]
    %v1702 = vld [vmem:[%s1374 + $0x160] sm:$0xfe]
    %v1703 = vld [vmem:[%s1374 + $0x168] sm:$0xfe]
    %v1704 = vld [vmem:[%s1374 + $0x170] sm:$0x1]
    %v1705 = vld [vmem:[%s1374 + $0x178] sm:$0x1]
    %v1706 = vld [vmem:[%s1374 + $0x180] sm:$0xfe]
    %v1707 = vld [vmem:[%s1374 + $0x188] sm:$0xfe]
    %v1708 = vld [vmem:[%s1374 + $0x190] sm:$0x1]
    %v1709 = vld [vmem:[%s1374 + $0x198] sm:$0x1]
    %v1710 = vld [vmem:[%s1374 + $0x1a0] sm:$0xfe]
    %v1711 = vld [vmem:[%s1374 + $0x1a8] sm:$0xfe]
    %v1712 = vld [vmem:[%s1374 + $0x1b0] sm:$0x1]
    %v1713 = vld [vmem:[%s1374 + $0x1b8] sm:$0x1]
    %v1714 = vld [vmem:[%s1374 + $0x1c0] sm:$0xfe]
    %v1715 = vld [vmem:[%s1374 + $0x1c8] sm:$0xfe]
    %v1716 = vld [vmem:[%s1374 + $0x1d0] sm:$0x1]
    %v1717 = vld [vmem:[%s1374 + $0x1d8] sm:$0x1]
    %v1718 = vld [vmem:[%s1374 + $0x1e0] sm:$0xfe]
    %v1719 = vld [vmem:[%s1374 + $0x1e8] sm:$0xfe]
    %v1720 = vld [vmem:[%s1374 + $0x1f0] sm:$0x1]
    %v1721 = vld [vmem:[%s1374 + $0x1f8] sm:$0x1]
    %v1722 = vld [vmem:[%s1374 + $0x200] sm:$0xfe]
    %v1723 = vld [vmem:[%s1374 + $0x208] sm:$0xfe]
    %v1724 = vld [vmem:[%s1374 + $0x210] sm:$0x1]
    %v1725 = vld [vmem:[%s1374 + $0x218] sm:$0x1]
    %v1726 = vld [vmem:[%s1374 + $0x220] sm:$0xfe]
    %v1727 = vld [vmem:[%s1374 + $0x228] sm:$0xfe]
    %v1728 = vld [vmem:[%s1374 + $0x230] sm:$0x1]
    %v1729 = vld [vmem:[%s1374 + $0x238] sm:$0x1]
    %v1794 = vrot.slane %v1666, 1
    %v1795 = vrot.slane %v1668, 1
    %v1796 = vsel %vm292, %v1794, %v1795
    %v1797 = vrot.slane %v1667, 1
    %v1798 = vrot.slane %v1669, 1
    %v1799 = vsel %vm292, %v1797, %v1798
    %v1800 = vrot.slane %v1670, 1
    %v1801 = vrot.slane %v1672, 1
    %v1802 = vsel %vm292, %v1800, %v1801
    %v1803 = vrot.slane %v1671, 1
    %v1804 = vrot.slane %v1673, 1
    %v1805 = vsel %vm292, %v1803, %v1804
    %v1806 = vrot.slane %v1674, 1
    %v1807 = vrot.slane %v1676, 1
    %v1808 = vsel %vm292, %v1806, %v1807
    %v1809 = vrot.slane %v1675, 1
    %v1810 = vrot.slane %v1677, 1
    %v1811 = vsel %vm292, %v1809, %v1810
    %v1812 = vrot.slane %v1678, 1
    %v1813 = vrot.slane %v1680, 1
    %v1814 = vsel %vm292, %v1812, %v1813
    %v1815 = vrot.slane %v1679, 1
    %v1816 = vrot.slane %v1681, 1
    %v1817 = vsel %vm292, %v1815, %v1816
    %v1818 = vrot.slane %v1682, 1
    %v1819 = vrot.slane %v1684, 1
    %v1820 = vsel %vm292, %v1818, %v1819
    %v1821 = vrot.slane %v1683, 1
    %v1822 = vrot.slane %v1685, 1
    %v1823 = vsel %vm292, %v1821, %v1822
    %v1824 = vrot.slane %v1686, 1
    %v1825 = vrot.slane %v1688, 1
    %v1826 = vsel %vm292, %v1824, %v1825
    %v1827 = vrot.slane %v1687, 1
    %v1828 = vrot.slane %v1689, 1
    %v1829 = vsel %vm292, %v1827, %v1828
    %v1830 = vrot.slane %v1690, 1
    %v1831 = vrot.slane %v1692, 1
    %v1832 = vsel %vm292, %v1830, %v1831
    %v1833 = vrot.slane %v1691, 1
    %v1834 = vrot.slane %v1693, 1
    %v1835 = vsel %vm292, %v1833, %v1834
    %v1836 = vrot.slane %v1694, 1
    %v1837 = vrot.slane %v1696, 1
    %v1838 = vsel %vm292, %v1836, %v1837
    %v1839 = vrot.slane %v1695, 1
    %v1840 = vrot.slane %v1697, 1
    %v1841 = vsel %vm292, %v1839, %v1840
    %v1842 = vrot.slane %v1698, 1
    %v1843 = vrot.slane %v1700, 1
    %v1844 = vsel %vm292, %v1842, %v1843
    %v1845 = vrot.slane %v1699, 1
    %v1846 = vrot.slane %v1701, 1
    %v1847 = vsel %vm292, %v1845, %v1846
    %v1848 = vrot.slane %v1702, 1
    %v1849 = vrot.slane %v1704, 1
    %v1850 = vsel %vm292, %v1848, %v1849
    %v1851 = vrot.slane %v1703, 1
    %v1852 = vrot.slane %v1705, 1
    %v1853 = vsel %vm292, %v1851, %v1852
    %v1854 = vrot.slane %v1706, 1
    %v1855 = vrot.slane %v1708, 1
    %v1856 = vsel %vm292, %v1854, %v1855
    %v1857 = vrot.slane %v1707, 1
    %v1858 = vrot.slane %v1709, 1
    %v1859 = vsel %vm292, %v1857, %v1858
    %v1860 = vrot.slane %v1710, 1
    %v1861 = vrot.slane %v1712, 1
    %v1862 = vsel %vm292, %v1860, %v1861
    %v1863 = vrot.slane %v1711, 1
    %v1864 = vrot.slane %v1713, 1
    %v1865 = vsel %vm292, %v1863, %v1864
    %v1866 = vrot.slane %v1714, 1
    %v1867 = vrot.slane %v1716, 1
    %v1868 = vsel %vm292, %v1866, %v1867
    %v1869 = vrot.slane %v1715, 1
    %v1870 = vrot.slane %v1717, 1
    %v1871 = vsel %vm292, %v1869, %v1870
    %v1872 = vrot.slane %v1718, 1
    %v1873 = vrot.slane %v1720, 1
    %v1874 = vsel %vm292, %v1872, %v1873
    %v1875 = vrot.slane %v1719, 1
    %v1876 = vrot.slane %v1721, 1
    %v1877 = vsel %vm292, %v1875, %v1876
    %v1878 = vrot.slane %v1722, 1
    %v1879 = vrot.slane %v1724, 1
    %v1880 = vsel %vm292, %v1878, %v1879
    %v1881 = vrot.slane %v1723, 1
    %v1882 = vrot.slane %v1725, 1
    %v1883 = vsel %vm292, %v1881, %v1882
    %v1884 = vrot.slane %v1726, 1
    %v1885 = vrot.slane %v1728, 1
    %v1886 = vsel %vm292, %v1884, %v1885
    %v1887 = vrot.slane %v1727, 1
    %v1888 = vrot.slane %v1729, 1
    %v1889 = vsel %vm292, %v1887, %v1888
    %v1922 = vpack.c.bf16 %v1802, %v1796
    %v1923 = vpack.c.bf16 %v1805, %v1799
    %v1924 = vpack.c.bf16 %v1814, %v1808
    %v1925 = vpack.c.bf16 %v1817, %v1811
    %v1926 = vpack.c.bf16 %v1826, %v1820
    %v1927 = vpack.c.bf16 %v1829, %v1823
    %v1928 = vpack.c.bf16 %v1838, %v1832
    %v1929 = vpack.c.bf16 %v1841, %v1835
    %v1930 = vpack.c.bf16 %v1850, %v1844
    %v1931 = vpack.c.bf16 %v1853, %v1847
    %v1932 = vpack.c.bf16 %v1862, %v1856
    %v1933 = vpack.c.bf16 %v1865, %v1859
    %v1934 = vpack.c.bf16 %v1874, %v1868
    %v1935 = vpack.c.bf16 %v1877, %v1871
    %v1936 = vpack.c.bf16 %v1886, %v1880
    %v1937 = vpack.c.bf16 %v1889, %v1883
    %s1938 = scalar_lea.vmem %s1, 512
    %v1939 = vld [vmem:[%s1938] sm:$0xf]
    %v1940 = vld [vmem:[%s1938 + $0x4] sm:$0xf]
    %v1941 = vld [vmem:[%s1938 + $0x8] sm:$0xf]
    %v1942 = vld [vmem:[%s1938 + $0xc] sm:$0xf]
    %v1943 = vld [vmem:[%s1938 + $0x10] sm:$0xf]
    %v1944 = vld [vmem:[%s1938 + $0x14] sm:$0xf]
    %v1945 = vld [vmem:[%s1938 + $0x18] sm:$0xf]
    %v1946 = vld [vmem:[%s1938 + $0x1c] sm:$0xf]
    %v1947 = vld [vmem:[%s1938 + $0x20] sm:$0xf]
    %v1948 = vld [vmem:[%s1938 + $0x24] sm:$0xf]
    %v1949 = vld [vmem:[%s1938 + $0x28] sm:$0xf]
    %v1950 = vld [vmem:[%s1938 + $0x2c] sm:$0xf]
    %v1951 = vld [vmem:[%s1938 + $0x30] sm:$0xf]
    %v1952 = vld [vmem:[%s1938 + $0x34] sm:$0xf]
    %v1953 = vld [vmem:[%s1938 + $0x38] sm:$0xf]
    %v1954 = vld [vmem:[%s1938 + $0x3c] sm:$0xf]
    %v1955 = vld [vmem:[%s1938 + $0x40] sm:$0xf]
    %v1956 = vld [vmem:[%s1938 + $0x44] sm:$0xf]
    %v1957 = vld [vmem:[%s1938 + $0x48] sm:$0xf]
    %v1958 = vld [vmem:[%s1938 + $0x4c] sm:$0xf]
    %v1959 = vld [vmem:[%s1938 + $0x50] sm:$0xf]
    %v1960 = vld [vmem:[%s1938 + $0x54] sm:$0xf]
    %v1961 = vld [vmem:[%s1938 + $0x58] sm:$0xf]
    %v1962 = vld [vmem:[%s1938 + $0x5c] sm:$0xf]
    %v1963 = vld [vmem:[%s1938 + $0x60] sm:$0xf]
    %v1964 = vld [vmem:[%s1938 + $0x64] sm:$0xf]
    %v1965 = vld [vmem:[%s1938 + $0x68] sm:$0xf]
    %v1966 = vld [vmem:[%s1938 + $0x6c] sm:$0xf]
    %v1967 = vld [vmem:[%s1938 + $0x70] sm:$0xf]
    %v1968 = vld [vmem:[%s1938 + $0x74] sm:$0xf]
    %v1969 = vld [vmem:[%s1938 + $0x78] sm:$0xf]
    %v1970 = vld [vmem:[%s1938 + $0x7c] sm:$0xf]
    %v2003 = vunpack.c.l.b16 %v1939
    %v2004 = vunpack.c.l.b16 %v1940
    %v2005 = vunpack.c.l.b16 %v1941
    %v2006 = vunpack.c.l.b16 %v1942
    %v2007 = vunpack.c.l.b16 %v1943
    %v2008 = vunpack.c.l.b16 %v1944
    %v2009 = vunpack.c.l.b16 %v1945
    %v2010 = vunpack.c.l.b16 %v1946
    %v2011 = vunpack.c.l.b16 %v1947
    %v2012 = vunpack.c.l.b16 %v1948
    %v2013 = vunpack.c.l.b16 %v1949
    %v2014 = vunpack.c.l.b16 %v1950
    %v2015 = vunpack.c.l.b16 %v1951
    %v2016 = vunpack.c.l.b16 %v1952
    %v2017 = vunpack.c.l.b16 %v1953
    %v2018 = vunpack.c.l.b16 %v1954
    %v2019 = vunpack.c.l.b16 %v1955
    %v2020 = vunpack.c.l.b16 %v1956
    %v2021 = vunpack.c.l.b16 %v1957
    %v2022 = vunpack.c.l.b16 %v1958
    %v2023 = vunpack.c.l.b16 %v1959
    %v2024 = vunpack.c.l.b16 %v1960
    %v2025 = vunpack.c.l.b16 %v1961
    %v2026 = vunpack.c.l.b16 %v1962
    %v2027 = vunpack.c.l.b16 %v1963
    %v2028 = vunpack.c.l.b16 %v1964
    %v2029 = vunpack.c.l.b16 %v1965
    %v2030 = vunpack.c.l.b16 %v1966
    %v2031 = vunpack.c.l.b16 %v1967
    %v2032 = vunpack.c.l.b16 %v1968
    %v2033 = vunpack.c.l.b16 %v1969
    %v2034 = vunpack.c.l.b16 %v1970
    %v2035 = vpack.c.b16 %v2004, %v2003
    %v2036 = vpack.c.b16 %v2006, %v2005
    %v2037 = vpack.c.b16 %v2008, %v2007
    %v2038 = vpack.c.b16 %v2010, %v2009
    %v2039 = vpack.c.b16 %v2012, %v2011
    %v2040 = vpack.c.b16 %v2014, %v2013
    %v2041 = vpack.c.b16 %v2016, %v2015
    %v2042 = vpack.c.b16 %v2018, %v2017
    %v2043 = vpack.c.b16 %v2020, %v2019
    %v2044 = vpack.c.b16 %v2022, %v2021
    %v2045 = vpack.c.b16 %v2024, %v2023
    %v2046 = vpack.c.b16 %v2026, %v2025
    %v2047 = vpack.c.b16 %v2028, %v2027
    %v2048 = vpack.c.b16 %v2030, %v2029
    %v2049 = vpack.c.b16 %v2032, %v2031
    %v2050 = vpack.c.b16 %v2034, %v2033
    %2067 = vmatpush.bf16.msra.mxu0 %v2042
    %2068 = vmatpush.bf16.msra.mxu0 %v2041
    %2069 = vmatpush.bf16.msra.mxu0 %v2040
    %2070 = vmatpush.bf16.msra.mxu0 %v2039
    %2071 = vmatpush.bf16.msra.mxu0 %v2038
    %2072 = vmatpush.bf16.msra.mxu0 %v2037
    %2073 = vmatpush.bf16.msra.mxu0 %v2036
    %2074 = vmatpush.bf16.msra.mxu0 %v2035
    %2075 = vmatmul.bf16.gmra.mxu0 %v1922
    %v2076 = vpop.f32.mrf.mxu0
    %v2077 = vadd.f32 0.0, %v2076
    %v2078 = vpop.f32.mrf.mxu0
    %v2079 = vadd.f32 0.0, %v2078
    %2080 = vmatmul.bf16.gmra.mxu0 %v1924
    %v2081 = vpop.f32.mrf.mxu0
    %v2082 = vadd.f32 0.0, %v2081
    %v2083 = vpop.f32.mrf.mxu0
    %v2084 = vadd.f32 0.0, %v2083
    %2085 = vmatmul.bf16.gmra.mxu0 %v1926
    %v2086 = vpop.f32.mrf.mxu0
    %v2087 = vadd.f32 0.0, %v2086
    %v2088 = vpop.f32.mrf.mxu0
    %v2089 = vadd.f32 0.0, %v2088
    %2090 = vmatmul.bf16.gmra.mxu0 %v1928
    %v2091 = vpop.f32.mrf.mxu0
    %v2092 = vadd.f32 0.0, %v2091
    %v2093 = vpop.f32.mrf.mxu0
    %v2094 = vadd.f32 0.0, %v2093
    %2095 = vmatmul.bf16.gmra.mxu0 %v1930
    %v2096 = vpop.f32.mrf.mxu0
    %v2097 = vadd.f32 0.0, %v2096
    %v2098 = vpop.f32.mrf.mxu0
    %v2099 = vadd.f32 0.0, %v2098
    %2100 = vmatmul.bf16.gmra.mxu0 %v1932
    %v2101 = vpop.f32.mrf.mxu0
    %v2102 = vadd.f32 0.0, %v2101
    %v2103 = vpop.f32.mrf.mxu0
    %v2104 = vadd.f32 0.0, %v2103
    %2105 = vmatmul.bf16.gmra.mxu0 %v1934
    %v2106 = vpop.f32.mrf.mxu0
    %v2107 = vadd.f32 0.0, %v2106
    %v2108 = vpop.f32.mrf.mxu0
    %v2109 = vadd.f32 0.0, %v2108
    %2110 = vmatmul.bf16.gmra.mxu0 %v1936
    %v2111 = vpop.f32.mrf.mxu0
    %v2112 = vadd.f32 0.0, %v2111
    %v2113 = vpop.f32.mrf.mxu0
    %v2114 = vadd.f32 0.0, %v2113
    %2115 = vdwg.mxu0
    %2116 = vmatpush.bf16.msra.mxu0 %v2050
    %2117 = vmatpush.bf16.msra.mxu0 %v2049
    %2118 = vmatpush.bf16.msra.mxu0 %v2048
    %2119 = vmatpush.bf16.msra.mxu0 %v2047
    %2120 = vmatpush.bf16.msra.mxu0 %v2046
    %2121 = vmatpush.bf16.msra.mxu0 %v2045
    %2122 = vmatpush.bf16.msra.mxu0 %v2044
    %2123 = vmatpush.bf16.msra.mxu0 %v2043
    %2124 = vmatmul.bf16.gmra.mxu0 %v1923
    %v2125 = vpop.f32.mrf.mxu0
    %v2126 = vadd.f32 %v2077, %v2125
    %v2127 = vpop.f32.mrf.mxu0
    %v2128 = vadd.f32 %v2079, %v2127
    %2129 = vmatmul.bf16.gmra.mxu0 %v1925
    %v2130 = vpop.f32.mrf.mxu0
    %v2131 = vadd.f32 %v2082, %v2130
    %v2132 = vpop.f32.mrf.mxu0
    %v2133 = vadd.f32 %v2084, %v2132
    %2134 = vmatmul.bf16.gmra.mxu0 %v1927
    %v2135 = vpop.f32.mrf.mxu0
    %v2136 = vadd.f32 %v2087, %v2135
    %v2137 = vpop.f32.mrf.mxu0
    %v2138 = vadd.f32 %v2089, %v2137
    %2139 = vmatmul.bf16.gmra.mxu0 %v1929
    %v2140 = vpop.f32.mrf.mxu0
    %v2141 = vadd.f32 %v2092, %v2140
    %v2142 = vpop.f32.mrf.mxu0
    %v2143 = vadd.f32 %v2094, %v2142
    %2144 = vmatmul.bf16.gmra.mxu0 %v1931
    %v2145 = vpop.f32.mrf.mxu0
    %v2146 = vadd.f32 %v2097, %v2145
    %v2147 = vpop.f32.mrf.mxu0
    %v2148 = vadd.f32 %v2099, %v2147
    %2149 = vmatmul.bf16.gmra.mxu0 %v1933
    %v2150 = vpop.f32.mrf.mxu0
    %v2151 = vadd.f32 %v2102, %v2150
    %v2152 = vpop.f32.mrf.mxu0
    %v2153 = vadd.f32 %v2104, %v2152
    %2154 = vmatmul.bf16.gmra.mxu0 %v1935
    %v2155 = vpop.f32.mrf.mxu0
    %v2156 = vadd.f32 %v2107, %v2155
    %v2157 = vpop.f32.mrf.mxu0
    %v2158 = vadd.f32 %v2109, %v2157
    %2159 = vmatmul.bf16.gmra.mxu0 %v1937
    %v2160 = vpop.f32.mrf.mxu0
    %v2161 = vadd.f32 %v2112, %v2160
    %v2162 = vpop.f32.mrf.mxu0
    %v2163 = vadd.f32 %v2114, %v2162
    %2164 = vdwg.mxu0
    %v2165 = vadd.f32 %v1650, %v2126
    %v2166 = vadd.f32 %v1651, %v2128
    %v2167 = vadd.f32 %v1652, %v2131
    %v2168 = vadd.f32 %v1653, %v2133
    %v2169 = vadd.f32 %v1654, %v2136
    %v2170 = vadd.f32 %v1655, %v2138
    %v2171 = vadd.f32 %v1656, %v2141
    %v2172 = vadd.f32 %v1657, %v2143
    %v2173 = vadd.f32 %v1658, %v2146
    %v2174 = vadd.f32 %v1659, %v2148
    %v2175 = vadd.f32 %v1660, %v2151
    %v2176 = vadd.f32 %v1661, %v2153
    %v2177 = vadd.f32 %v1662, %v2156
    %v2178 = vadd.f32 %v1663, %v2158
    %v2179 = vadd.f32 %v1664, %v2161
    %v2180 = vadd.f32 %v1665, %v2163
    %v2181 = vld [vmem:[%s1374] sm:$0xfc]
    %v2182 = vld [vmem:[%s1374 + $0x8] sm:$0xfc]
    %v2183 = vld [vmem:[%s1374 + $0x10] sm:$0x3]
    %v2184 = vld [vmem:[%s1374 + $0x18] sm:$0x3]
    %v2185 = vld [vmem:[%s1374 + $0x20] sm:$0xfc]
    %v2186 = vld [vmem:[%s1374 + $0x28] sm:$0xfc]
    %v2187 = vld [vmem:[%s1374 + $0x30] sm:$0x3]
    %v2188 = vld [vmem:[%s1374 + $0x38] sm:$0x3]
    %v2189 = vld [vmem:[%s1374 + $0x40] sm:$0xfc]
    %v2190 = vld [vmem:[%s1374 + $0x48] sm:$0xfc]
    %v2191 = vld [vmem:[%s1374 + $0x50] sm:$0x3]
    %v2192 = vld [vmem:[%s1374 + $0x58] sm:$0x3]
    %v2193 = vld [vmem:[%s1374 + $0x60] sm:$0xfc]
    %v2194 = vld [vmem:[%s1374 + $0x68] sm:$0xfc]
    %v2195 = vld [vmem:[%s1374 + $0x70] sm:$0x3]
    %v2196 = vld [vmem:[%s1374 + $0x78] sm:$0x3]
    %v2197 = vld [vmem:[%s1374 + $0x80] sm:$0xfc]
    %v2198 = vld [vmem:[%s1374 + $0x88] sm:$0xfc]
    %v2199 = vld [vmem:[%s1374 + $0x90] sm:$0x3]
    %v2200 = vld [vmem:[%s1374 + $0x98] sm:$0x3]
    %v2201 = vld [vmem:[%s1374 + $0xa0] sm:$0xfc]
    %v2202 = vld [vmem:[%s1374 + $0xa8] sm:$0xfc]
    %v2203 = vld [vmem:[%s1374 + $0xb0] sm:$0x3]
    %v2204 = vld [vmem:[%s1374 + $0xb8] sm:$0x3]
    %v2205 = vld [vmem:[%s1374 + $0xc0] sm:$0xfc]
    %v2206 = vld [vmem:[%s1374 + $0xc8] sm:$0xfc]
    %v2207 = vld [vmem:[%s1374 + $0xd0] sm:$0x3]
    %v2208 = vld [vmem:[%s1374 + $0xd8] sm:$0x3]
    %v2209 = vld [vmem:[%s1374 + $0xe0] sm:$0xfc]
    %v2210 = vld [vmem:[%s1374 + $0xe8] sm:$0xfc]
    %v2211 = vld [vmem:[%s1374 + $0xf0] sm:$0x3]
    %v2212 = vld [vmem:[%s1374 + $0xf8] sm:$0x3]
    %v2213 = vld [vmem:[%s1374 + $0x140] sm:$0xfc]
    %v2214 = vld [vmem:[%s1374 + $0x148] sm:$0xfc]
    %v2215 = vld [vmem:[%s1374 + $0x150] sm:$0x3]
    %v2216 = vld [vmem:[%s1374 + $0x158] sm:$0x3]
    %v2217 = vld [vmem:[%s1374 + $0x160] sm:$0xfc]
    %v2218 = vld [vmem:[%s1374 + $0x168] sm:$0xfc]
    %v2219 = vld [vmem:[%s1374 + $0x170] sm:$0x3]
    %v2220 = vld [vmem:[%s1374 + $0x178] sm:$0x3]
    %v2221 = vld [vmem:[%s1374 + $0x180] sm:$0xfc]
    %v2222 = vld [vmem:[%s1374 + $0x188] sm:$0xfc]
    %v2223 = vld [vmem:[%s1374 + $0x190] sm:$0x3]
    %v2224 = vld [vmem:[%s1374 + $0x198] sm:$0x3]
    %v2225 = vld [vmem:[%s1374 + $0x1a0] sm:$0xfc]
    %v2226 = vld [vmem:[%s1374 + $0x1a8] sm:$0xfc]
    %v2227 = vld [vmem:[%s1374 + $0x1b0] sm:$0x3]
    %v2228 = vld [vmem:[%s1374 + $0x1b8] sm:$0x3]
    %v2229 = vld [vmem:[%s1374 + $0x1c0] sm:$0xfc]
    %v2230 = vld [vmem:[%s1374 + $0x1c8] sm:$0xfc]
    %v2231 = vld [vmem:[%s1374 + $0x1d0] sm:$0x3]
    %v2232 = vld [vmem:[%s1374 + $0x1d8] sm:$0x3]
    %v2233 = vld [vmem:[%s1374 + $0x1e0] sm:$0xfc]
    %v2234 = vld [vmem:[%s1374 + $0x1e8] sm:$0xfc]
    %v2235 = vld [vmem:[%s1374 + $0x1f0] sm:$0x3]
    %v2236 = vld [vmem:[%s1374 + $0x1f8] sm:$0x3]
    %v2237 = vld [vmem:[%s1374 + $0x200] sm:$0xfc]
    %v2238 = vld [vmem:[%s1374 + $0x208] sm:$0xfc]
    %v2239 = vld [vmem:[%s1374 + $0x210] sm:$0x3]
    %v2240 = vld [vmem:[%s1374 + $0x218] sm:$0x3]
    %v2241 = vld [vmem:[%s1374 + $0x220] sm:$0xfc]
    %v2242 = vld [vmem:[%s1374 + $0x228] sm:$0xfc]
    %v2243 = vld [vmem:[%s1374 + $0x230] sm:$0x3]
    %v2244 = vld [vmem:[%s1374 + $0x238] sm:$0x3]
    %v2309 = vrot.slane %v2181, 2
    %v2310 = vrot.slane %v2183, 2
    %v2311 = vsel %vm986, %v2309, %v2310
    %v2312 = vrot.slane %v2182, 2
    %v2313 = vrot.slane %v2184, 2
    %v2314 = vsel %vm986, %v2312, %v2313
    %v2315 = vrot.slane %v2185, 2
    %v2316 = vrot.slane %v2187, 2
    %v2317 = vsel %vm986, %v2315, %v2316
    %v2318 = vrot.slane %v2186, 2
    %v2319 = vrot.slane %v2188, 2
    %v2320 = vsel %vm986, %v2318, %v2319
    %v2321 = vrot.slane %v2189, 2
    %v2322 = vrot.slane %v2191, 2
    %v2323 = vsel %vm986, %v2321, %v2322
    %v2324 = vrot.slane %v2190, 2
    %v2325 = vrot.slane %v2192, 2
    %v2326 = vsel %vm986, %v2324, %v2325
    %v2327 = vrot.slane %v2193, 2
    %v2328 = vrot.slane %v2195, 2
    %v2329 = vsel %vm986, %v2327, %v2328
    %v2330 = vrot.slane %v2194, 2
    %v2331 = vrot.slane %v2196, 2
    %v2332 = vsel %vm986, %v2330, %v2331
    %v2333 = vrot.slane %v2197, 2
    %v2334 = vrot.slane %v2199, 2
    %v2335 = vsel %vm986, %v2333, %v2334
    %v2336 = vrot.slane %v2198, 2
    %v2337 = vrot.slane %v2200, 2
    %v2338 = vsel %vm986, %v2336, %v2337
    %v2339 = vrot.slane %v2201, 2
    %v2340 = vrot.slane %v2203, 2
    %v2341 = vsel %vm986, %v2339, %v2340
    %v2342 = vrot.slane %v2202, 2
    %v2343 = vrot.slane %v2204, 2
    %v2344 = vsel %vm986, %v2342, %v2343
    %v2345 = vrot.slane %v2205, 2
    %v2346 = vrot.slane %v2207, 2
    %v2347 = vsel %vm986, %v2345, %v2346
    %v2348 = vrot.slane %v2206, 2
    %v2349 = vrot.slane %v2208, 2
    %v2350 = vsel %vm986, %v2348, %v2349
    %v2351 = vrot.slane %v2209, 2
    %v2352 = vrot.slane %v2211, 2
    %v2353 = vsel %vm986, %v2351, %v2352
    %v2354 = vrot.slane %v2210, 2
    %v2355 = vrot.slane %v2212, 2
    %v2356 = vsel %vm986, %v2354, %v2355
    %v2357 = vrot.slane %v2213, 2
    %v2358 = vrot.slane %v2215, 2
    %v2359 = vsel %vm986, %v2357, %v2358
    %v2360 = vrot.slane %v2214, 2
    %v2361 = vrot.slane %v2216, 2
    %v2362 = vsel %vm986, %v2360, %v2361
    %v2363 = vrot.slane %v2217, 2
    %v2364 = vrot.slane %v2219, 2
    %v2365 = vsel %vm986, %v2363, %v2364
    %v2366 = vrot.slane %v2218, 2
    %v2367 = vrot.slane %v2220, 2
    %v2368 = vsel %vm986, %v2366, %v2367
    %v2369 = vrot.slane %v2221, 2
    %v2370 = vrot.slane %v2223, 2
    %v2371 = vsel %vm986, %v2369, %v2370
    %v2372 = vrot.slane %v2222, 2
    %v2373 = vrot.slane %v2224, 2
    %v2374 = vsel %vm986, %v2372, %v2373
    %v2375 = vrot.slane %v2225, 2
    %v2376 = vrot.slane %v2227, 2
    %v2377 = vsel %vm986, %v2375, %v2376
    %v2378 = vrot.slane %v2226, 2
    %v2379 = vrot.slane %v2228, 2
    %v2380 = vsel %vm986, %v2378, %v2379
    %v2381 = vrot.slane %v2229, 2
    %v2382 = vrot.slane %v2231, 2
    %v2383 = vsel %vm986, %v2381, %v2382
    %v2384 = vrot.slane %v2230, 2
    %v2385 = vrot.slane %v2232, 2
    %v2386 = vsel %vm986, %v2384, %v2385
    %v2387 = vrot.slane %v2233, 2
    %v2388 = vrot.slane %v2235, 2
    %v2389 = vsel %vm986, %v2387, %v2388
    %v2390 = vrot.slane %v2234, 2
    %v2391 = vrot.slane %v2236, 2
    %v2392 = vsel %vm986, %v2390, %v2391
    %v2393 = vrot.slane %v2237, 2
    %v2394 = vrot.slane %v2239, 2
    %v2395 = vsel %vm986, %v2393, %v2394
    %v2396 = vrot.slane %v2238, 2
    %v2397 = vrot.slane %v2240, 2
    %v2398 = vsel %vm986, %v2396, %v2397
    %v2399 = vrot.slane %v2241, 2
    %v2400 = vrot.slane %v2243, 2
    %v2401 = vsel %vm986, %v2399, %v2400
    %v2402 = vrot.slane %v2242, 2
    %v2403 = vrot.slane %v2244, 2
    %v2404 = vsel %vm986, %v2402, %v2403
    %v2437 = vpack.c.bf16 %v2317, %v2311
    %v2438 = vpack.c.bf16 %v2320, %v2314
    %v2439 = vpack.c.bf16 %v2329, %v2323
    %v2440 = vpack.c.bf16 %v2332, %v2326
    %v2441 = vpack.c.bf16 %v2341, %v2335
    %v2442 = vpack.c.bf16 %v2344, %v2338
    %v2443 = vpack.c.bf16 %v2353, %v2347
    %v2444 = vpack.c.bf16 %v2356, %v2350
    %v2445 = vpack.c.bf16 %v2365, %v2359
    %v2446 = vpack.c.bf16 %v2368, %v2362
    %v2447 = vpack.c.bf16 %v2377, %v2371
    %v2448 = vpack.c.bf16 %v2380, %v2374
    %v2449 = vpack.c.bf16 %v2389, %v2383
    %v2450 = vpack.c.bf16 %v2392, %v2386
    %v2451 = vpack.c.bf16 %v2401, %v2395
    %v2452 = vpack.c.bf16 %v2404, %v2398
    %s2453 = scalar_lea.vmem %s1, 640
    %v2454 = vld [vmem:[%s2453] sm:$0xf]
    %v2455 = vld [vmem:[%s2453 + $0x4] sm:$0xf]
    %v2456 = vld [vmem:[%s2453 + $0x8] sm:$0xf]
    %v2457 = vld [vmem:[%s2453 + $0xc] sm:$0xf]
    %v2458 = vld [vmem:[%s2453 + $0x10] sm:$0xf]
    %v2459 = vld [vmem:[%s2453 + $0x14] sm:$0xf]
    %v2460 = vld [vmem:[%s2453 + $0x18] sm:$0xf]
    %v2461 = vld [vmem:[%s2453 + $0x1c] sm:$0xf]
    %v2462 = vld [vmem:[%s2453 + $0x20] sm:$0xf]
    %v2463 = vld [vmem:[%s2453 + $0x24] sm:$0xf]
    %v2464 = vld [vmem:[%s2453 + $0x28] sm:$0xf]
    %v2465 = vld [vmem:[%s2453 + $0x2c] sm:$0xf]
    %v2466 = vld [vmem:[%s2453 + $0x30] sm:$0xf]
    %v2467 = vld [vmem:[%s2453 + $0x34] sm:$0xf]
    %v2468 = vld [vmem:[%s2453 + $0x38] sm:$0xf]
    %v2469 = vld [vmem:[%s2453 + $0x3c] sm:$0xf]
    %v2470 = vld [vmem:[%s2453 + $0x40] sm:$0xf]
    %v2471 = vld [vmem:[%s2453 + $0x44] sm:$0xf]
    %v2472 = vld [vmem:[%s2453 + $0x48] sm:$0xf]
    %v2473 = vld [vmem:[%s2453 + $0x4c] sm:$0xf]
    %v2474 = vld [vmem:[%s2453 + $0x50] sm:$0xf]
    %v2475 = vld [vmem:[%s2453 + $0x54] sm:$0xf]
    %v2476 = vld [vmem:[%s2453 + $0x58] sm:$0xf]
    %v2477 = vld [vmem:[%s2453 + $0x5c] sm:$0xf]
    %v2478 = vld [vmem:[%s2453 + $0x60] sm:$0xf]
    %v2479 = vld [vmem:[%s2453 + $0x64] sm:$0xf]
    %v2480 = vld [vmem:[%s2453 + $0x68] sm:$0xf]
    %v2481 = vld [vmem:[%s2453 + $0x6c] sm:$0xf]
    %v2482 = vld [vmem:[%s2453 + $0x70] sm:$0xf]
    %v2483 = vld [vmem:[%s2453 + $0x74] sm:$0xf]
    %v2484 = vld [vmem:[%s2453 + $0x78] sm:$0xf]
    %v2485 = vld [vmem:[%s2453 + $0x7c] sm:$0xf]
    %v2518 = vunpack.c.l.b16 %v2454
    %v2519 = vunpack.c.l.b16 %v2455
    %v2520 = vunpack.c.l.b16 %v2456
    %v2521 = vunpack.c.l.b16 %v2457
    %v2522 = vunpack.c.l.b16 %v2458
    %v2523 = vunpack.c.l.b16 %v2459
    %v2524 = vunpack.c.l.b16 %v2460
    %v2525 = vunpack.c.l.b16 %v2461
    %v2526 = vunpack.c.l.b16 %v2462
    %v2527 = vunpack.c.l.b16 %v2463
    %v2528 = vunpack.c.l.b16 %v2464
    %v2529 = vunpack.c.l.b16 %v2465
    %v2530 = vunpack.c.l.b16 %v2466
    %v2531 = vunpack.c.l.b16 %v2467
    %v2532 = vunpack.c.l.b16 %v2468
    %v2533 = vunpack.c.l.b16 %v2469
    %v2534 = vunpack.c.l.b16 %v2470
    %v2535 = vunpack.c.l.b16 %v2471
    %v2536 = vunpack.c.l.b16 %v2472
    %v2537 = vunpack.c.l.b16 %v2473
    %v2538 = vunpack.c.l.b16 %v2474
    %v2539 = vunpack.c.l.b16 %v2475
    %v2540 = vunpack.c.l.b16 %v2476
    %v2541 = vunpack.c.l.b16 %v2477
    %v2542 = vunpack.c.l.b16 %v2478
    %v2543 = vunpack.c.l.b16 %v2479
    %v2544 = vunpack.c.l.b16 %v2480
    %v2545 = vunpack.c.l.b16 %v2481
    %v2546 = vunpack.c.l.b16 %v2482
    %v2547 = vunpack.c.l.b16 %v2483
    %v2548 = vunpack.c.l.b16 %v2484
    %v2549 = vunpack.c.l.b16 %v2485
    %v2550 = vpack.c.b16 %v2519, %v2518
    %v2551 = vpack.c.b16 %v2521, %v2520
    %v2552 = vpack.c.b16 %v2523, %v2522
    %v2553 = vpack.c.b16 %v2525, %v2524
    %v2554 = vpack.c.b16 %v2527, %v2526
    %v2555 = vpack.c.b16 %v2529, %v2528
    %v2556 = vpack.c.b16 %v2531, %v2530
    %v2557 = vpack.c.b16 %v2533, %v2532
    %v2558 = vpack.c.b16 %v2535, %v2534
    %v2559 = vpack.c.b16 %v2537, %v2536
    %v2560 = vpack.c.b16 %v2539, %v2538
    %v2561 = vpack.c.b16 %v2541, %v2540
    %v2562 = vpack.c.b16 %v2543, %v2542
    %v2563 = vpack.c.b16 %v2545, %v2544
    %v2564 = vpack.c.b16 %v2547, %v2546
    %v2565 = vpack.c.b16 %v2549, %v2548
    %2582 = vmatpush.bf16.msra.mxu0 %v2557
    %2583 = vmatpush.bf16.msra.mxu0 %v2556
    %2584 = vmatpush.bf16.msra.mxu0 %v2555
    %2585 = vmatpush.bf16.msra.mxu0 %v2554
    %2586 = vmatpush.bf16.msra.mxu0 %v2553
    %2587 = vmatpush.bf16.msra.mxu0 %v2552
    %2588 = vmatpush.bf16.msra.mxu0 %v2551
    %2589 = vmatpush.bf16.msra.mxu0 %v2550
    %2590 = vmatmul.bf16.gmra.mxu0 %v2437
    %v2591 = vpop.f32.mrf.mxu0
    %v2592 = vadd.f32 0.0, %v2591
    %v2593 = vpop.f32.mrf.mxu0
    %v2594 = vadd.f32 0.0, %v2593
    %2595 = vmatmul.bf16.gmra.mxu0 %v2439
    %v2596 = vpop.f32.mrf.mxu0
    %v2597 = vadd.f32 0.0, %v2596
    %v2598 = vpop.f32.mrf.mxu0
    %v2599 = vadd.f32 0.0, %v2598
    %2600 = vmatmul.bf16.gmra.mxu0 %v2441
    %v2601 = vpop.f32.mrf.mxu0
    %v2602 = vadd.f32 0.0, %v2601
    %v2603 = vpop.f32.mrf.mxu0
    %v2604 = vadd.f32 0.0, %v2603
    %2605 = vmatmul.bf16.gmra.mxu0 %v2443
    %v2606 = vpop.f32.mrf.mxu0
    %v2607 = vadd.f32 0.0, %v2606
    %v2608 = vpop.f32.mrf.mxu0
    %v2609 = vadd.f32 0.0, %v2608
    %2610 = vmatmul.bf16.gmra.mxu0 %v2445
    %v2611 = vpop.f32.mrf.mxu0
    %v2612 = vadd.f32 0.0, %v2611
    %v2613 = vpop.f32.mrf.mxu0
    %v2614 = vadd.f32 0.0, %v2613
    %2615 = vmatmul.bf16.gmra.mxu0 %v2447
    %v2616 = vpop.f32.mrf.mxu0
    %v2617 = vadd.f32 0.0, %v2616
    %v2618 = vpop.f32.mrf.mxu0
    %v2619 = vadd.f32 0.0, %v2618
    %2620 = vmatmul.bf16.gmra.mxu0 %v2449
    %v2621 = vpop.f32.mrf.mxu0
    %v2622 = vadd.f32 0.0, %v2621
    %v2623 = vpop.f32.mrf.mxu0
    %v2624 = vadd.f32 0.0, %v2623
    %2625 = vmatmul.bf16.gmra.mxu0 %v2451
    %v2626 = vpop.f32.mrf.mxu0
    %v2627 = vadd.f32 0.0, %v2626
    %v2628 = vpop.f32.mrf.mxu0
    %v2629 = vadd.f32 0.0, %v2628
    %2630 = vdwg.mxu0
    %2631 = vmatpush.bf16.msra.mxu0 %v2565
    %2632 = vmatpush.bf16.msra.mxu0 %v2564
    %2633 = vmatpush.bf16.msra.mxu0 %v2563
    %2634 = vmatpush.bf16.msra.mxu0 %v2562
    %2635 = vmatpush.bf16.msra.mxu0 %v2561
    %2636 = vmatpush.bf16.msra.mxu0 %v2560
    %2637 = vmatpush.bf16.msra.mxu0 %v2559
    %2638 = vmatpush.bf16.msra.mxu0 %v2558
    %2639 = vmatmul.bf16.gmra.mxu0 %v2438
    %v2640 = vpop.f32.mrf.mxu0
    %v2641 = vadd.f32 %v2592, %v2640
    %v2642 = vpop.f32.mrf.mxu0
    %v2643 = vadd.f32 %v2594, %v2642
    %2644 = vmatmul.bf16.gmra.mxu0 %v2440
    %v2645 = vpop.f32.mrf.mxu0
    %v2646 = vadd.f32 %v2597, %v2645
    %v2647 = vpop.f32.mrf.mxu0
    %v2648 = vadd.f32 %v2599, %v2647
    %2649 = vmatmul.bf16.gmra.mxu0 %v2442
    %v2650 = vpop.f32.mrf.mxu0
    %v2651 = vadd.f32 %v2602, %v2650
    %v2652 = vpop.f32.mrf.mxu0
    %v2653 = vadd.f32 %v2604, %v2652
    %2654 = vmatmul.bf16.gmra.mxu0 %v2444
    %v2655 = vpop.f32.mrf.mxu0
    %v2656 = vadd.f32 %v2607, %v2655
    %v2657 = vpop.f32.mrf.mxu0
    %v2658 = vadd.f32 %v2609, %v2657
    %2659 = vmatmul.bf16.gmra.mxu0 %v2446
    %v2660 = vpop.f32.mrf.mxu0
    %v2661 = vadd.f32 %v2612, %v2660
    %v2662 = vpop.f32.mrf.mxu0
    %v2663 = vadd.f32 %v2614, %v2662
    %2664 = vmatmul.bf16.gmra.mxu0 %v2448
    %v2665 = vpop.f32.mrf.mxu0
    %v2666 = vadd.f32 %v2617, %v2665
    %v2667 = vpop.f32.mrf.mxu0
    %v2668 = vadd.f32 %v2619, %v2667
    %2669 = vmatmul.bf16.gmra.mxu0 %v2450
    %v2670 = vpop.f32.mrf.mxu0
    %v2671 = vadd.f32 %v2622, %v2670
    %v2672 = vpop.f32.mrf.mxu0
    %v2673 = vadd.f32 %v2624, %v2672
    %2674 = vmatmul.bf16.gmra.mxu0 %v2452
    %v2675 = vpop.f32.mrf.mxu0
    %v2676 = vadd.f32 %v2627, %v2675
    %v2677 = vpop.f32.mrf.mxu0
    %v2678 = vadd.f32 %v2629, %v2677
    %2679 = vdwg.mxu0
    %v2680 = vadd.f32 %v2165, %v2641
    %v2681 = vadd.f32 %v2166, %v2643
    %v2682 = vadd.f32 %v2167, %v2646
    %v2683 = vadd.f32 %v2168, %v2648
    %v2684 = vadd.f32 %v2169, %v2651
    %v2685 = vadd.f32 %v2170, %v2653
    %v2686 = vadd.f32 %v2171, %v2656
    %v2687 = vadd.f32 %v2172, %v2658
    %v2688 = vadd.f32 %v2173, %v2661
    %v2689 = vadd.f32 %v2174, %v2663
    %v2690 = vadd.f32 %v2175, %v2666
    %v2691 = vadd.f32 %v2176, %v2668
    %v2692 = vadd.f32 %v2177, %v2671
    %v2693 = vadd.f32 %v2178, %v2673
    %v2694 = vadd.f32 %v2179, %v2676
    %v2695 = vadd.f32 %v2180, %v2678
    %s2696 = scalar_lea.vmem %s0, 64
    %v2697 = vld [vmem:[%s2696] sm:$0xff]
    %v2698 = vld [vmem:[%s2696 + $0x8] sm:$0xff]
    %v2699 = vld [vmem:[%s2696 + $0x20] sm:$0xff]
    %v2700 = vld [vmem:[%s2696 + $0x28] sm:$0xff]
    %v2701 = vld [vmem:[%s2696 + $0x40] sm:$0xff]
    %v2702 = vld [vmem:[%s2696 + $0x48] sm:$0xff]
    %v2703 = vld [vmem:[%s2696 + $0x60] sm:$0xff]
    %v2704 = vld [vmem:[%s2696 + $0x68] sm:$0xff]
    %v2705 = vld [vmem:[%s2696 + $0x80] sm:$0xff]
    %v2706 = vld [vmem:[%s2696 + $0x88] sm:$0xff]
    %v2707 = vld [vmem:[%s2696 + $0xa0] sm:$0xff]
    %v2708 = vld [vmem:[%s2696 + $0xa8] sm:$0xff]
    %v2709 = vld [vmem:[%s2696 + $0xc0] sm:$0xff]
    %v2710 = vld [vmem:[%s2696 + $0xc8] sm:$0xff]
    %v2711 = vld [vmem:[%s2696 + $0xe0] sm:$0xff]
    %v2712 = vld [vmem:[%s2696 + $0xe8] sm:$0xff]
    %v2713 = vld [vmem:[%s2696 + $0x140] sm:$0xff]
    %v2714 = vld [vmem:[%s2696 + $0x148] sm:$0xff]
    %v2715 = vld [vmem:[%s2696 + $0x160] sm:$0xff]
    %v2716 = vld [vmem:[%s2696 + $0x168] sm:$0xff]
    %v2717 = vld [vmem:[%s2696 + $0x180] sm:$0xff]
    %v2718 = vld [vmem:[%s2696 + $0x188] sm:$0xff]
    %v2719 = vld [vmem:[%s2696 + $0x1a0] sm:$0xff]
    %v2720 = vld [vmem:[%s2696 + $0x1a8] sm:$0xff]
    %v2721 = vld [vmem:[%s2696 + $0x1c0] sm:$0xff]
    %v2722 = vld [vmem:[%s2696 + $0x1c8] sm:$0xff]
    %v2723 = vld [vmem:[%s2696 + $0x1e0] sm:$0xff]
    %v2724 = vld [vmem:[%s2696 + $0x1e8] sm:$0xff]
    %v2725 = vld [vmem:[%s2696 + $0x200] sm:$0xff]
    %v2726 = vld [vmem:[%s2696 + $0x208] sm:$0xff]
    %v2727 = vld [vmem:[%s2696 + $0x220] sm:$0xff]
    %v2728 = vld [vmem:[%s2696 + $0x228] sm:$0xff]
    %v2729 = vpack.c.bf16 %v2699, %v2697
    %v2730 = vpack.c.bf16 %v2700, %v2698
    %v2731 = vpack.c.bf16 %v2703, %v2701
    %v2732 = vpack.c.bf16 %v2704, %v2702
    %v2733 = vpack.c.bf16 %v2707, %v2705
    %v2734 = vpack.c.bf16 %v2708, %v2706
    %v2735 = vpack.c.bf16 %v2711, %v2709
    %v2736 = vpack.c.bf16 %v2712, %v2710
    %v2737 = vpack.c.bf16 %v2715, %v2713
    %v2738 = vpack.c.bf16 %v2716, %v2714
    %v2739 = vpack.c.bf16 %v2719, %v2717
    %v2740 = vpack.c.bf16 %v2720, %v2718
    %v2741 = vpack.c.bf16 %v2723, %v2721
    %v2742 = vpack.c.bf16 %v2724, %v2722
    %v2743 = vpack.c.bf16 %v2727, %v2725
    %v2744 = vpack.c.bf16 %v2728, %v2726
    %s2745 = scalar_lea.vmem %s1, 768
    %v2746 = vld [vmem:[%s2745] sm:$0xf]
    %v2747 = vld [vmem:[%s2745 + $0x4] sm:$0xf]
    %v2748 = vld [vmem:[%s2745 + $0x8] sm:$0xf]
    %v2749 = vld [vmem:[%s2745 + $0xc] sm:$0xf]
    %v2750 = vld [vmem:[%s2745 + $0x10] sm:$0xf]
    %v2751 = vld [vmem:[%s2745 + $0x14] sm:$0xf]
    %v2752 = vld [vmem:[%s2745 + $0x18] sm:$0xf]
    %v2753 = vld [vmem:[%s2745 + $0x1c] sm:$0xf]
    %v2754 = vld [vmem:[%s2745 + $0x20] sm:$0xf]
    %v2755 = vld [vmem:[%s2745 + $0x24] sm:$0xf]
    %v2756 = vld [vmem:[%s2745 + $0x28] sm:$0xf]
    %v2757 = vld [vmem:[%s2745 + $0x2c] sm:$0xf]
    %v2758 = vld [vmem:[%s2745 + $0x30] sm:$0xf]
    %v2759 = vld [vmem:[%s2745 + $0x34] sm:$0xf]
    %v2760 = vld [vmem:[%s2745 + $0x38] sm:$0xf]
    %v2761 = vld [vmem:[%s2745 + $0x3c] sm:$0xf]
    %v2762 = vld [vmem:[%s2745 + $0x40] sm:$0xf]
    %v2763 = vld [vmem:[%s2745 + $0x44] sm:$0xf]
    %v2764 = vld [vmem:[%s2745 + $0x48] sm:$0xf]
    %v2765 = vld [vmem:[%s2745 + $0x4c] sm:$0xf]
    %v2766 = vld [vmem:[%s2745 + $0x50] sm:$0xf]
    %v2767 = vld [vmem:[%s2745 + $0x54] sm:$0xf]
    %v2768 = vld [vmem:[%s2745 + $0x58] sm:$0xf]
    %v2769 = vld [vmem:[%s2745 + $0x5c] sm:$0xf]
    %v2770 = vld [vmem:[%s2745 + $0x60] sm:$0xf]
    %v2771 = vld [vmem:[%s2745 + $0x64] sm:$0xf]
    %v2772 = vld [vmem:[%s2745 + $0x68] sm:$0xf]
    %v2773 = vld [vmem:[%s2745 + $0x6c] sm:$0xf]
    %v2774 = vld [vmem:[%s2745 + $0x70] sm:$0xf]
    %v2775 = vld [vmem:[%s2745 + $0x74] sm:$0xf]
    %v2776 = vld [vmem:[%s2745 + $0x78] sm:$0xf]
    %v2777 = vld [vmem:[%s2745 + $0x7c] sm:$0xf]
    %v2810 = vunpack.c.l.b16 %v2746
    %v2811 = vunpack.c.l.b16 %v2747
    %v2812 = vunpack.c.l.b16 %v2748
    %v2813 = vunpack.c.l.b16 %v2749
    %v2814 = vunpack.c.l.b16 %v2750
    %v2815 = vunpack.c.l.b16 %v2751
    %v2816 = vunpack.c.l.b16 %v2752
    %v2817 = vunpack.c.l.b16 %v2753
    %v2818 = vunpack.c.l.b16 %v2754
    %v2819 = vunpack.c.l.b16 %v2755
    %v2820 = vunpack.c.l.b16 %v2756
    %v2821 = vunpack.c.l.b16 %v2757
    %v2822 = vunpack.c.l.b16 %v2758
    %v2823 = vunpack.c.l.b16 %v2759
    %v2824 = vunpack.c.l.b16 %v2760
    %v2825 = vunpack.c.l.b16 %v2761
    %v2826 = vunpack.c.l.b16 %v2762
    %v2827 = vunpack.c.l.b16 %v2763
    %v2828 = vunpack.c.l.b16 %v2764
    %v2829 = vunpack.c.l.b16 %v2765
    %v2830 = vunpack.c.l.b16 %v2766
    %v2831 = vunpack.c.l.b16 %v2767
    %v2832 = vunpack.c.l.b16 %v2768
    %v2833 = vunpack.c.l.b16 %v2769
    %v2834 = vunpack.c.l.b16 %v2770
    %v2835 = vunpack.c.l.b16 %v2771
    %v2836 = vunpack.c.l.b16 %v2772
    %v2837 = vunpack.c.l.b16 %v2773
    %v2838 = vunpack.c.l.b16 %v2774
    %v2839 = vunpack.c.l.b16 %v2775
    %v2840 = vunpack.c.l.b16 %v2776
    %v2841 = vunpack.c.l.b16 %v2777
    %v2842 = vpack.c.b16 %v2811, %v2810
    %v2843 = vpack.c.b16 %v2813, %v2812
    %v2844 = vpack.c.b16 %v2815, %v2814
    %v2845 = vpack.c.b16 %v2817, %v2816
    %v2846 = vpack.c.b16 %v2819, %v2818
    %v2847 = vpack.c.b16 %v2821, %v2820
    %v2848 = vpack.c.b16 %v2823, %v2822
    %v2849 = vpack.c.b16 %v2825, %v2824
    %v2850 = vpack.c.b16 %v2827, %v2826
    %v2851 = vpack.c.b16 %v2829, %v2828
    %v2852 = vpack.c.b16 %v2831, %v2830
    %v2853 = vpack.c.b16 %v2833, %v2832
    %v2854 = vpack.c.b16 %v2835, %v2834
    %v2855 = vpack.c.b16 %v2837, %v2836
    %v2856 = vpack.c.b16 %v2839, %v2838
    %v2857 = vpack.c.b16 %v2841, %v2840
    %2874 = vmatpush.bf16.msra.mxu0 %v2849
    %2875 = vmatpush.bf16.msra.mxu0 %v2848
    %2876 = vmatpush.bf16.msra.mxu0 %v2847
    %2877 = vmatpush.bf16.msra.mxu0 %v2846
    %2878 = vmatpush.bf16.msra.mxu0 %v2845
    %2879 = vmatpush.bf16.msra.mxu0 %v2844
    %2880 = vmatpush.bf16.msra.mxu0 %v2843
    %2881 = vmatpush.bf16.msra.mxu0 %v2842
    %2882 = vmatmul.bf16.gmra.mxu0 %v2729
    %v2883 = vpop.f32.mrf.mxu0
    %v2884 = vadd.f32 0.0, %v2883
    %v2885 = vpop.f32.mrf.mxu0
    %v2886 = vadd.f32 0.0, %v2885
    %2887 = vmatmul.bf16.gmra.mxu0 %v2731
    %v2888 = vpop.f32.mrf.mxu0
    %v2889 = vadd.f32 0.0, %v2888
    %v2890 = vpop.f32.mrf.mxu0
    %v2891 = vadd.f32 0.0, %v2890
    %2892 = vmatmul.bf16.gmra.mxu0 %v2733
    %v2893 = vpop.f32.mrf.mxu0
    %v2894 = vadd.f32 0.0, %v2893
    %v2895 = vpop.f32.mrf.mxu0
    %v2896 = vadd.f32 0.0, %v2895
    %2897 = vmatmul.bf16.gmra.mxu0 %v2735
    %v2898 = vpop.f32.mrf.mxu0
    %v2899 = vadd.f32 0.0, %v2898
    %v2900 = vpop.f32.mrf.mxu0
    %v2901 = vadd.f32 0.0, %v2900
    %2902 = vmatmul.bf16.gmra.mxu0 %v2737
    %v2903 = vpop.f32.mrf.mxu0
    %v2904 = vadd.f32 0.0, %v2903
    %v2905 = vpop.f32.mrf.mxu0
    %v2906 = vadd.f32 0.0, %v2905
    %2907 = vmatmul.bf16.gmra.mxu0 %v2739
    %v2908 = vpop.f32.mrf.mxu0
    %v2909 = vadd.f32 0.0, %v2908
    %v2910 = vpop.f32.mrf.mxu0
    %v2911 = vadd.f32 0.0, %v2910
    %2912 = vmatmul.bf16.gmra.mxu0 %v2741
    %v2913 = vpop.f32.mrf.mxu0
    %v2914 = vadd.f32 0.0, %v2913
    %v2915 = vpop.f32.mrf.mxu0
    %v2916 = vadd.f32 0.0, %v2915
    %2917 = vmatmul.bf16.gmra.mxu0 %v2743
    %v2918 = vpop.f32.mrf.mxu0
    %v2919 = vadd.f32 0.0, %v2918
    %v2920 = vpop.f32.mrf.mxu0
    %v2921 = vadd.f32 0.0, %v2920
    %2922 = vdwg.mxu0
    %2923 = vmatpush.bf16.msra.mxu0 %v2857
    %2924 = vmatpush.bf16.msra.mxu0 %v2856
    %2925 = vmatpush.bf16.msra.mxu0 %v2855
    %2926 = vmatpush.bf16.msra.mxu0 %v2854
    %2927 = vmatpush.bf16.msra.mxu0 %v2853
    %2928 = vmatpush.bf16.msra.mxu0 %v2852
    %2929 = vmatpush.bf16.msra.mxu0 %v2851
    %2930 = vmatpush.bf16.msra.mxu0 %v2850
    %2931 = vmatmul.bf16.gmra.mxu0 %v2730
    %v2932 = vpop.f32.mrf.mxu0
    %v2933 = vadd.f32 %v2884, %v2932
    %v2934 = vpop.f32.mrf.mxu0
    %v2935 = vadd.f32 %v2886, %v2934
    %2936 = vmatmul.bf16.gmra.mxu0 %v2732
    %v2937 = vpop.f32.mrf.mxu0
    %v2938 = vadd.f32 %v2889, %v2937
    %v2939 = vpop.f32.mrf.mxu0
    %v2940 = vadd.f32 %v2891, %v2939
    %2941 = vmatmul.bf16.gmra.mxu0 %v2734
    %v2942 = vpop.f32.mrf.mxu0
    %v2943 = vadd.f32 %v2894, %v2942
    %v2944 = vpop.f32.mrf.mxu0
    %v2945 = vadd.f32 %v2896, %v2944
    %2946 = vmatmul.bf16.gmra.mxu0 %v2736
    %v2947 = vpop.f32.mrf.mxu0
    %v2948 = vadd.f32 %v2899, %v2947
    %v2949 = vpop.f32.mrf.mxu0
    %v2950 = vadd.f32 %v2901, %v2949
    %2951 = vmatmul.bf16.gmra.mxu0 %v2738
    %v2952 = vpop.f32.mrf.mxu0
    %v2953 = vadd.f32 %v2904, %v2952
    %v2954 = vpop.f32.mrf.mxu0
    %v2955 = vadd.f32 %v2906, %v2954
    %2956 = vmatmul.bf16.gmra.mxu0 %v2740
    %v2957 = vpop.f32.mrf.mxu0
    %v2958 = vadd.f32 %v2909, %v2957
    %v2959 = vpop.f32.mrf.mxu0
    %v2960 = vadd.f32 %v2911, %v2959
    %2961 = vmatmul.bf16.gmra.mxu0 %v2742
    %v2962 = vpop.f32.mrf.mxu0
    %v2963 = vadd.f32 %v2914, %v2962
    %v2964 = vpop.f32.mrf.mxu0
    %v2965 = vadd.f32 %v2916, %v2964
    %2966 = vmatmul.bf16.gmra.mxu0 %v2744
    %v2967 = vpop.f32.mrf.mxu0
    %v2968 = vadd.f32 %v2919, %v2967
    %v2969 = vpop.f32.mrf.mxu0
    %v2970 = vadd.f32 %v2921, %v2969
    %2971 = vdwg.mxu0
    %v2972 = vadd.f32 %v2680, %v2933
    %v2973 = vadd.f32 %v2681, %v2935
    %v2974 = vadd.f32 %v2682, %v2938
    %v2975 = vadd.f32 %v2683, %v2940
    %v2976 = vadd.f32 %v2684, %v2943
    %v2977 = vadd.f32 %v2685, %v2945
    %v2978 = vadd.f32 %v2686, %v2948
    %v2979 = vadd.f32 %v2687, %v2950
    %v2980 = vadd.f32 %v2688, %v2953
    %v2981 = vadd.f32 %v2689, %v2955
    %v2982 = vadd.f32 %v2690, %v2958
    %v2983 = vadd.f32 %v2691, %v2960
    %v2984 = vadd.f32 %v2692, %v2963
    %v2985 = vadd.f32 %v2693, %v2965
    %v2986 = vadd.f32 %v2694, %v2968
    %v2987 = vadd.f32 %v2695, %v2970
    %v2988 = vld [vmem:[%s2696] sm:$0xfe]
    %v2989 = vld [vmem:[%s2696 + $0x8] sm:$0xfe]
    %v2990 = vld [vmem:[%s2696 + $0x10] sm:$0x1]
    %v2991 = vld [vmem:[%s2696 + $0x18] sm:$0x1]
    %v2992 = vld [vmem:[%s2696 + $0x20] sm:$0xfe]
    %v2993 = vld [vmem:[%s2696 + $0x28] sm:$0xfe]
    %v2994 = vld [vmem:[%s2696 + $0x30] sm:$0x1]
    %v2995 = vld [vmem:[%s2696 + $0x38] sm:$0x1]
    %v2996 = vld [vmem:[%s2696 + $0x40] sm:$0xfe]
    %v2997 = vld [vmem:[%s2696 + $0x48] sm:$0xfe]
    %v2998 = vld [vmem:[%s2696 + $0x50] sm:$0x1]
    %v2999 = vld [vmem:[%s2696 + $0x58] sm:$0x1]
    %v3000 = vld [vmem:[%s2696 + $0x60] sm:$0xfe]
    %v3001 = vld [vmem:[%s2696 + $0x68] sm:$0xfe]
    %v3002 = vld [vmem:[%s2696 + $0x70] sm:$0x1]
    %v3003 = vld [vmem:[%s2696 + $0x78] sm:$0x1]
    %v3004 = vld [vmem:[%s2696 + $0x80] sm:$0xfe]
    %v3005 = vld [vmem:[%s2696 + $0x88] sm:$0xfe]
    %v3006 = vld [vmem:[%s2696 + $0x90] sm:$0x1]
    %v3007 = vld [vmem:[%s2696 + $0x98] sm:$0x1]
    %v3008 = vld [vmem:[%s2696 + $0xa0] sm:$0xfe]
    %v3009 = vld [vmem:[%s2696 + $0xa8] sm:$0xfe]
    %v3010 = vld [vmem:[%s2696 + $0xb0] sm:$0x1]
    %v3011 = vld [vmem:[%s2696 + $0xb8] sm:$0x1]
    %v3012 = vld [vmem:[%s2696 + $0xc0] sm:$0xfe]
    %v3013 = vld [vmem:[%s2696 + $0xc8] sm:$0xfe]
    %v3014 = vld [vmem:[%s2696 + $0xd0] sm:$0x1]
    %v3015 = vld [vmem:[%s2696 + $0xd8] sm:$0x1]
    %v3016 = vld [vmem:[%s2696 + $0xe0] sm:$0xfe]
    %v3017 = vld [vmem:[%s2696 + $0xe8] sm:$0xfe]
    %v3018 = vld [vmem:[%s2696 + $0xf0] sm:$0x1]
    %v3019 = vld [vmem:[%s2696 + $0xf8] sm:$0x1]
    %v3020 = vld [vmem:[%s2696 + $0x140] sm:$0xfe]
    %v3021 = vld [vmem:[%s2696 + $0x148] sm:$0xfe]
    %v3022 = vld [vmem:[%s2696 + $0x150] sm:$0x1]
    %v3023 = vld [vmem:[%s2696 + $0x158] sm:$0x1]
    %v3024 = vld [vmem:[%s2696 + $0x160] sm:$0xfe]
    %v3025 = vld [vmem:[%s2696 + $0x168] sm:$0xfe]
    %v3026 = vld [vmem:[%s2696 + $0x170] sm:$0x1]
    %v3027 = vld [vmem:[%s2696 + $0x178] sm:$0x1]
    %v3028 = vld [vmem:[%s2696 + $0x180] sm:$0xfe]
    %v3029 = vld [vmem:[%s2696 + $0x188] sm:$0xfe]
    %v3030 = vld [vmem:[%s2696 + $0x190] sm:$0x1]
    %v3031 = vld [vmem:[%s2696 + $0x198] sm:$0x1]
    %v3032 = vld [vmem:[%s2696 + $0x1a0] sm:$0xfe]
    %v3033 = vld [vmem:[%s2696 + $0x1a8] sm:$0xfe]
    %v3034 = vld [vmem:[%s2696 + $0x1b0] sm:$0x1]
    %v3035 = vld [vmem:[%s2696 + $0x1b8] sm:$0x1]
    %v3036 = vld [vmem:[%s2696 + $0x1c0] sm:$0xfe]
    %v3037 = vld [vmem:[%s2696 + $0x1c8] sm:$0xfe]
    %v3038 = vld [vmem:[%s2696 + $0x1d0] sm:$0x1]
    %v3039 = vld [vmem:[%s2696 + $0x1d8] sm:$0x1]
    %v3040 = vld [vmem:[%s2696 + $0x1e0] sm:$0xfe]
    %v3041 = vld [vmem:[%s2696 + $0x1e8] sm:$0xfe]
    %v3042 = vld [vmem:[%s2696 + $0x1f0] sm:$0x1]
    %v3043 = vld [vmem:[%s2696 + $0x1f8] sm:$0x1]
    %v3044 = vld [vmem:[%s2696 + $0x200] sm:$0xfe]
    %v3045 = vld [vmem:[%s2696 + $0x208] sm:$0xfe]
    %v3046 = vld [vmem:[%s2696 + $0x210] sm:$0x1]
    %v3047 = vld [vmem:[%s2696 + $0x218] sm:$0x1]
    %v3048 = vld [vmem:[%s2696 + $0x220] sm:$0xfe]
    %v3049 = vld [vmem:[%s2696 + $0x228] sm:$0xfe]
    %v3050 = vld [vmem:[%s2696 + $0x230] sm:$0x1]
    %v3051 = vld [vmem:[%s2696 + $0x238] sm:$0x1]
    %v3116 = vrot.slane %v2988, 1
    %v3117 = vrot.slane %v2990, 1
    %v3118 = vsel %vm292, %v3116, %v3117
    %v3119 = vrot.slane %v2989, 1
    %v3120 = vrot.slane %v2991, 1
    %v3121 = vsel %vm292, %v3119, %v3120
    %v3122 = vrot.slane %v2992, 1
    %v3123 = vrot.slane %v2994, 1
    %v3124 = vsel %vm292, %v3122, %v3123
    %v3125 = vrot.slane %v2993, 1
    %v3126 = vrot.slane %v2995, 1
    %v3127 = vsel %vm292, %v3125, %v3126
    %v3128 = vrot.slane %v2996, 1
    %v3129 = vrot.slane %v2998, 1
    %v3130 = vsel %vm292, %v3128, %v3129
    %v3131 = vrot.slane %v2997, 1
    %v3132 = vrot.slane %v2999, 1
    %v3133 = vsel %vm292, %v3131, %v3132
    %v3134 = vrot.slane %v3000, 1
    %v3135 = vrot.slane %v3002, 1
    %v3136 = vsel %vm292, %v3134, %v3135
    %v3137 = vrot.slane %v3001, 1
    %v3138 = vrot.slane %v3003, 1
    %v3139 = vsel %vm292, %v3137, %v3138
    %v3140 = vrot.slane %v3004, 1
    %v3141 = vrot.slane %v3006, 1
    %v3142 = vsel %vm292, %v3140, %v3141
    %v3143 = vrot.slane %v3005, 1
    %v3144 = vrot.slane %v3007, 1
    %v3145 = vsel %vm292, %v3143, %v3144
    %v3146 = vrot.slane %v3008, 1
    %v3147 = vrot.slane %v3010, 1
    %v3148 = vsel %vm292, %v3146, %v3147
    %v3149 = vrot.slane %v3009, 1
    %v3150 = vrot.slane %v3011, 1
    %v3151 = vsel %vm292, %v3149, %v3150
    %v3152 = vrot.slane %v3012, 1
    %v3153 = vrot.slane %v3014, 1
    %v3154 = vsel %vm292, %v3152, %v3153
    %v3155 = vrot.slane %v3013, 1
    %v3156 = vrot.slane %v3015, 1
    %v3157 = vsel %vm292, %v3155, %v3156
    %v3158 = vrot.slane %v3016, 1
    %v3159 = vrot.slane %v3018, 1
    %v3160 = vsel %vm292, %v3158, %v3159
    %v3161 = vrot.slane %v3017, 1
    %v3162 = vrot.slane %v3019, 1
    %v3163 = vsel %vm292, %v3161, %v3162
    %v3164 = vrot.slane %v3020, 1
    %v3165 = vrot.slane %v3022, 1
    %v3166 = vsel %vm292, %v3164, %v3165
    %v3167 = vrot.slane %v3021, 1
    %v3168 = vrot.slane %v3023, 1
    %v3169 = vsel %vm292, %v3167, %v3168
    %v3170 = vrot.slane %v3024, 1
    %v3171 = vrot.slane %v3026, 1
    %v3172 = vsel %vm292, %v3170, %v3171
    %v3173 = vrot.slane %v3025, 1
    %v3174 = vrot.slane %v3027, 1
    %v3175 = vsel %vm292, %v3173, %v3174
    %v3176 = vrot.slane %v3028, 1
    %v3177 = vrot.slane %v3030, 1
    %v3178 = vsel %vm292, %v3176, %v3177
    %v3179 = vrot.slane %v3029, 1
    %v3180 = vrot.slane %v3031, 1
    %v3181 = vsel %vm292, %v3179, %v3180
    %v3182 = vrot.slane %v3032, 1
    %v3183 = vrot.slane %v3034, 1
    %v3184 = vsel %vm292, %v3182, %v3183
    %v3185 = vrot.slane %v3033, 1
    %v3186 = vrot.slane %v3035, 1
    %v3187 = vsel %vm292, %v3185, %v3186
    %v3188 = vrot.slane %v3036, 1
    %v3189 = vrot.slane %v3038, 1
    %v3190 = vsel %vm292, %v3188, %v3189
    %v3191 = vrot.slane %v3037, 1
    %v3192 = vrot.slane %v3039, 1
    %v3193 = vsel %vm292, %v3191, %v3192
    %v3194 = vrot.slane %v3040, 1
    %v3195 = vrot.slane %v3042, 1
    %v3196 = vsel %vm292, %v3194, %v3195
    %v3197 = vrot.slane %v3041, 1
    %v3198 = vrot.slane %v3043, 1
    %v3199 = vsel %vm292, %v3197, %v3198
    %v3200 = vrot.slane %v3044, 1
    %v3201 = vrot.slane %v3046, 1
    %v3202 = vsel %vm292, %v3200, %v3201
    %v3203 = vrot.slane %v3045, 1
    %v3204 = vrot.slane %v3047, 1
    %v3205 = vsel %vm292, %v3203, %v3204
    %v3206 = vrot.slane %v3048, 1
    %v3207 = vrot.slane %v3050, 1
    %v3208 = vsel %vm292, %v3206, %v3207
    %v3209 = vrot.slane %v3049, 1
    %v3210 = vrot.slane %v3051, 1
    %v3211 = vsel %vm292, %v3209, %v3210
    %v3244 = vpack.c.bf16 %v3124, %v3118
    %v3245 = vpack.c.bf16 %v3127, %v3121
    %v3246 = vpack.c.bf16 %v3136, %v3130
    %v3247 = vpack.c.bf16 %v3139, %v3133
    %v3248 = vpack.c.bf16 %v3148, %v3142
    %v3249 = vpack.c.bf16 %v3151, %v3145
    %v3250 = vpack.c.bf16 %v3160, %v3154
    %v3251 = vpack.c.bf16 %v3163, %v3157
    %v3252 = vpack.c.bf16 %v3172, %v3166
    %v3253 = vpack.c.bf16 %v3175, %v3169
    %v3254 = vpack.c.bf16 %v3184, %v3178
    %v3255 = vpack.c.bf16 %v3187, %v3181
    %v3256 = vpack.c.bf16 %v3196, %v3190
    %v3257 = vpack.c.bf16 %v3199, %v3193
    %v3258 = vpack.c.bf16 %v3208, %v3202
    %v3259 = vpack.c.bf16 %v3211, %v3205
    %s3260 = scalar_lea.vmem %s1, 896
    %v3261 = vld [vmem:[%s3260] sm:$0xf]
    %v3262 = vld [vmem:[%s3260 + $0x4] sm:$0xf]
    %v3263 = vld [vmem:[%s3260 + $0x8] sm:$0xf]
    %v3264 = vld [vmem:[%s3260 + $0xc] sm:$0xf]
    %v3265 = vld [vmem:[%s3260 + $0x10] sm:$0xf]
    %v3266 = vld [vmem:[%s3260 + $0x14] sm:$0xf]
    %v3267 = vld [vmem:[%s3260 + $0x18] sm:$0xf]
    %v3268 = vld [vmem:[%s3260 + $0x1c] sm:$0xf]
    %v3269 = vld [vmem:[%s3260 + $0x20] sm:$0xf]
    %v3270 = vld [vmem:[%s3260 + $0x24] sm:$0xf]
    %v3271 = vld [vmem:[%s3260 + $0x28] sm:$0xf]
    %v3272 = vld [vmem:[%s3260 + $0x2c] sm:$0xf]
    %v3273 = vld [vmem:[%s3260 + $0x30] sm:$0xf]
    %v3274 = vld [vmem:[%s3260 + $0x34] sm:$0xf]
    %v3275 = vld [vmem:[%s3260 + $0x38] sm:$0xf]
    %v3276 = vld [vmem:[%s3260 + $0x3c] sm:$0xf]
    %v3277 = vld [vmem:[%s3260 + $0x40] sm:$0xf]
    %v3278 = vld [vmem:[%s3260 + $0x44] sm:$0xf]
    %v3279 = vld [vmem:[%s3260 + $0x48] sm:$0xf]
    %v3280 = vld [vmem:[%s3260 + $0x4c] sm:$0xf]
    %v3281 = vld [vmem:[%s3260 + $0x50] sm:$0xf]
    %v3282 = vld [vmem:[%s3260 + $0x54] sm:$0xf]
    %v3283 = vld [vmem:[%s3260 + $0x58] sm:$0xf]
    %v3284 = vld [vmem:[%s3260 + $0x5c] sm:$0xf]
    %v3285 = vld [vmem:[%s3260 + $0x60] sm:$0xf]
    %v3286 = vld [vmem:[%s3260 + $0x64] sm:$0xf]
    %v3287 = vld [vmem:[%s3260 + $0x68] sm:$0xf]
    %v3288 = vld [vmem:[%s3260 + $0x6c] sm:$0xf]
    %v3289 = vld [vmem:[%s3260 + $0x70] sm:$0xf]
    %v3290 = vld [vmem:[%s3260 + $0x74] sm:$0xf]
    %v3291 = vld [vmem:[%s3260 + $0x78] sm:$0xf]
    %v3292 = vld [vmem:[%s3260 + $0x7c] sm:$0xf]
    %v3325 = vunpack.c.l.b16 %v3261
    %v3326 = vunpack.c.l.b16 %v3262
    %v3327 = vunpack.c.l.b16 %v3263
    %v3328 = vunpack.c.l.b16 %v3264
    %v3329 = vunpack.c.l.b16 %v3265
    %v3330 = vunpack.c.l.b16 %v3266
    %v3331 = vunpack.c.l.b16 %v3267
    %v3332 = vunpack.c.l.b16 %v3268
    %v3333 = vunpack.c.l.b16 %v3269
    %v3334 = vunpack.c.l.b16 %v3270
    %v3335 = vunpack.c.l.b16 %v3271
    %v3336 = vunpack.c.l.b16 %v3272
    %v3337 = vunpack.c.l.b16 %v3273
    %v3338 = vunpack.c.l.b16 %v3274
    %v3339 = vunpack.c.l.b16 %v3275
    %v3340 = vunpack.c.l.b16 %v3276
    %v3341 = vunpack.c.l.b16 %v3277
    %v3342 = vunpack.c.l.b16 %v3278
    %v3343 = vunpack.c.l.b16 %v3279
    %v3344 = vunpack.c.l.b16 %v3280
    %v3345 = vunpack.c.l.b16 %v3281
    %v3346 = vunpack.c.l.b16 %v3282
    %v3347 = vunpack.c.l.b16 %v3283
    %v3348 = vunpack.c.l.b16 %v3284
    %v3349 = vunpack.c.l.b16 %v3285
    %v3350 = vunpack.c.l.b16 %v3286
    %v3351 = vunpack.c.l.b16 %v3287
    %v3352 = vunpack.c.l.b16 %v3288
    %v3353 = vunpack.c.l.b16 %v3289
    %v3354 = vunpack.c.l.b16 %v3290
    %v3355 = vunpack.c.l.b16 %v3291
    %v3356 = vunpack.c.l.b16 %v3292
    %v3357 = vpack.c.b16 %v3326, %v3325
    %v3358 = vpack.c.b16 %v3328, %v3327
    %v3359 = vpack.c.b16 %v3330, %v3329
    %v3360 = vpack.c.b16 %v3332, %v3331
    %v3361 = vpack.c.b16 %v3334, %v3333
    %v3362 = vpack.c.b16 %v3336, %v3335
    %v3363 = vpack.c.b16 %v3338, %v3337
    %v3364 = vpack.c.b16 %v3340, %v3339
    %v3365 = vpack.c.b16 %v3342, %v3341
    %v3366 = vpack.c.b16 %v3344, %v3343
    %v3367 = vpack.c.b16 %v3346, %v3345
    %v3368 = vpack.c.b16 %v3348, %v3347
    %v3369 = vpack.c.b16 %v3350, %v3349
    %v3370 = vpack.c.b16 %v3352, %v3351
    %v3371 = vpack.c.b16 %v3354, %v3353
    %v3372 = vpack.c.b16 %v3356, %v3355
    %3389 = vmatpush.bf16.msra.mxu0 %v3364
    %3390 = vmatpush.bf16.msra.mxu0 %v3363
    %3391 = vmatpush.bf16.msra.mxu0 %v3362
    %3392 = vmatpush.bf16.msra.mxu0 %v3361
    %3393 = vmatpush.bf16.msra.mxu0 %v3360
    %3394 = vmatpush.bf16.msra.mxu0 %v3359
    %3395 = vmatpush.bf16.msra.mxu0 %v3358
    %3396 = vmatpush.bf16.msra.mxu0 %v3357
    %3397 = vmatmul.bf16.gmra.mxu0 %v3244
    %v3398 = vpop.f32.mrf.mxu0
    %v3399 = vadd.f32 0.0, %v3398
    %v3400 = vpop.f32.mrf.mxu0
    %v3401 = vadd.f32 0.0, %v3400
    %3402 = vmatmul.bf16.gmra.mxu0 %v3246
    %v3403 = vpop.f32.mrf.mxu0
    %v3404 = vadd.f32 0.0, %v3403
    %v3405 = vpop.f32.mrf.mxu0
    %v3406 = vadd.f32 0.0, %v3405
    %3407 = vmatmul.bf16.gmra.mxu0 %v3248
    %v3408 = vpop.f32.mrf.mxu0
    %v3409 = vadd.f32 0.0, %v3408
    %v3410 = vpop.f32.mrf.mxu0
    %v3411 = vadd.f32 0.0, %v3410
    %3412 = vmatmul.bf16.gmra.mxu0 %v3250
    %v3413 = vpop.f32.mrf.mxu0
    %v3414 = vadd.f32 0.0, %v3413
    %v3415 = vpop.f32.mrf.mxu0
    %v3416 = vadd.f32 0.0, %v3415
    %3417 = vmatmul.bf16.gmra.mxu0 %v3252
    %v3418 = vpop.f32.mrf.mxu0
    %v3419 = vadd.f32 0.0, %v3418
    %v3420 = vpop.f32.mrf.mxu0
    %v3421 = vadd.f32 0.0, %v3420
    %3422 = vmatmul.bf16.gmra.mxu0 %v3254
    %v3423 = vpop.f32.mrf.mxu0
    %v3424 = vadd.f32 0.0, %v3423
    %v3425 = vpop.f32.mrf.mxu0
    %v3426 = vadd.f32 0.0, %v3425
    %3427 = vmatmul.bf16.gmra.mxu0 %v3256
    %v3428 = vpop.f32.mrf.mxu0
    %v3429 = vadd.f32 0.0, %v3428
    %v3430 = vpop.f32.mrf.mxu0
    %v3431 = vadd.f32 0.0, %v3430
    %3432 = vmatmul.bf16.gmra.mxu0 %v3258
    %v3433 = vpop.f32.mrf.mxu0
    %v3434 = vadd.f32 0.0, %v3433
    %v3435 = vpop.f32.mrf.mxu0
    %v3436 = vadd.f32 0.0, %v3435
    %3437 = vdwg.mxu0
    %3438 = vmatpush.bf16.msra.mxu0 %v3372
    %3439 = vmatpush.bf16.msra.mxu0 %v3371
    %3440 = vmatpush.bf16.msra.mxu0 %v3370
    %3441 = vmatpush.bf16.msra.mxu0 %v3369
    %3442 = vmatpush.bf16.msra.mxu0 %v3368
    %3443 = vmatpush.bf16.msra.mxu0 %v3367
    %3444 = vmatpush.bf16.msra.mxu0 %v3366
    %3445 = vmatpush.bf16.msra.mxu0 %v3365
    %3446 = vmatmul.bf16.gmra.mxu0 %v3245
    %v3447 = vpop.f32.mrf.mxu0
    %v3448 = vadd.f32 %v3399, %v3447
    %v3449 = vpop.f32.mrf.mxu0
    %v3450 = vadd.f32 %v3401, %v3449
    %3451 = vmatmul.bf16.gmra.mxu0 %v3247
    %v3452 = vpop.f32.mrf.mxu0
    %v3453 = vadd.f32 %v3404, %v3452
    %v3454 = vpop.f32.mrf.mxu0
    %v3455 = vadd.f32 %v3406, %v3454
    %3456 = vmatmul.bf16.gmra.mxu0 %v3249
    %v3457 = vpop.f32.mrf.mxu0
    %v3458 = vadd.f32 %v3409, %v3457
    %v3459 = vpop.f32.mrf.mxu0
    %v3460 = vadd.f32 %v3411, %v3459
    %3461 = vmatmul.bf16.gmra.mxu0 %v3251
    %v3462 = vpop.f32.mrf.mxu0
    %v3463 = vadd.f32 %v3414, %v3462
    %v3464 = vpop.f32.mrf.mxu0
    %v3465 = vadd.f32 %v3416, %v3464
    %3466 = vmatmul.bf16.gmra.mxu0 %v3253
    %v3467 = vpop.f32.mrf.mxu0
    %v3468 = vadd.f32 %v3419, %v3467
    %v3469 = vpop.f32.mrf.mxu0
    %v3470 = vadd.f32 %v3421, %v3469
    %3471 = vmatmul.bf16.gmra.mxu0 %v3255
    %v3472 = vpop.f32.mrf.mxu0
    %v3473 = vadd.f32 %v3424, %v3472
    %v3474 = vpop.f32.mrf.mxu0
    %v3475 = vadd.f32 %v3426, %v3474
    %3476 = vmatmul.bf16.gmra.mxu0 %v3257
    %v3477 = vpop.f32.mrf.mxu0
    %v3478 = vadd.f32 %v3429, %v3477
    %v3479 = vpop.f32.mrf.mxu0
    %v3480 = vadd.f32 %v3431, %v3479
    %3481 = vmatmul.bf16.gmra.mxu0 %v3259
    %v3482 = vpop.f32.mrf.mxu0
    %v3483 = vadd.f32 %v3434, %v3482
    %v3484 = vpop.f32.mrf.mxu0
    %v3485 = vadd.f32 %v3436, %v3484
    %3486 = vdwg.mxu0
    %v3487 = vadd.f32 %v2972, %v3448
    %v3488 = vadd.f32 %v2973, %v3450
    %v3489 = vadd.f32 %v2974, %v3453
    %v3490 = vadd.f32 %v2975, %v3455
    %v3491 = vadd.f32 %v2976, %v3458
    %v3492 = vadd.f32 %v2977, %v3460
    %v3493 = vadd.f32 %v2978, %v3463
    %v3494 = vadd.f32 %v2979, %v3465
    %v3495 = vadd.f32 %v2980, %v3468
    %v3496 = vadd.f32 %v2981, %v3470
    %v3497 = vadd.f32 %v2982, %v3473
    %v3498 = vadd.f32 %v2983, %v3475
    %v3499 = vadd.f32 %v2984, %v3478
    %v3500 = vadd.f32 %v2985, %v3480
    %v3501 = vadd.f32 %v2986, %v3483
    %v3502 = vadd.f32 %v2987, %v3485
    %v3503 = vld [vmem:[%s2696] sm:$0xfc]
    %v3504 = vld [vmem:[%s2696 + $0x8] sm:$0xfc]
    %v3505 = vld [vmem:[%s2696 + $0x10] sm:$0x3]
    %v3506 = vld [vmem:[%s2696 + $0x18] sm:$0x3]
    %v3507 = vld [vmem:[%s2696 + $0x20] sm:$0xfc]
    %v3508 = vld [vmem:[%s2696 + $0x28] sm:$0xfc]
    %v3509 = vld [vmem:[%s2696 + $0x30] sm:$0x3]
    %v3510 = vld [vmem:[%s2696 + $0x38] sm:$0x3]
    %v3511 = vld [vmem:[%s2696 + $0x40] sm:$0xfc]
    %v3512 = vld [vmem:[%s2696 + $0x48] sm:$0xfc]
    %v3513 = vld [vmem:[%s2696 + $0x50] sm:$0x3]
    %v3514 = vld [vmem:[%s2696 + $0x58] sm:$0x3]
    %v3515 = vld [vmem:[%s2696 + $0x60] sm:$0xfc]
    %v3516 = vld [vmem:[%s2696 + $0x68] sm:$0xfc]
    %v3517 = vld [vmem:[%s2696 + $0x70] sm:$0x3]
    %v3518 = vld [vmem:[%s2696 + $0x78] sm:$0x3]
    %v3519 = vld [vmem:[%s2696 + $0x80] sm:$0xfc]
    %v3520 = vld [vmem:[%s2696 + $0x88] sm:$0xfc]
    %v3521 = vld [vmem:[%s2696 + $0x90] sm:$0x3]
    %v3522 = vld [vmem:[%s2696 + $0x98] sm:$0x3]
    %v3523 = vld [vmem:[%s2696 + $0xa0] sm:$0xfc]
    %v3524 = vld [vmem:[%s2696 + $0xa8] sm:$0xfc]
    %v3525 = vld [vmem:[%s2696 + $0xb0] sm:$0x3]
    %v3526 = vld [vmem:[%s2696 + $0xb8] sm:$0x3]
    %v3527 = vld [vmem:[%s2696 + $0xc0] sm:$0xfc]
    %v3528 = vld [vmem:[%s2696 + $0xc8] sm:$0xfc]
    %v3529 = vld [vmem:[%s2696 + $0xd0] sm:$0x3]
    %v3530 = vld [vmem:[%s2696 + $0xd8] sm:$0x3]
    %v3531 = vld [vmem:[%s2696 + $0xe0] sm:$0xfc]
    %v3532 = vld [vmem:[%s2696 + $0xe8] sm:$0xfc]
    %v3533 = vld [vmem:[%s2696 + $0xf0] sm:$0x3]
    %v3534 = vld [vmem:[%s2696 + $0xf8] sm:$0x3]
    %v3535 = vld [vmem:[%s2696 + $0x140] sm:$0xfc]
    %v3536 = vld [vmem:[%s2696 + $0x148] sm:$0xfc]
    %v3537 = vld [vmem:[%s2696 + $0x150] sm:$0x3]
    %v3538 = vld [vmem:[%s2696 + $0x158] sm:$0x3]
    %v3539 = vld [vmem:[%s2696 + $0x160] sm:$0xfc]
    %v3540 = vld [vmem:[%s2696 + $0x168] sm:$0xfc]
    %v3541 = vld [vmem:[%s2696 + $0x170] sm:$0x3]
    %v3542 = vld [vmem:[%s2696 + $0x178] sm:$0x3]
    %v3543 = vld [vmem:[%s2696 + $0x180] sm:$0xfc]
    %v3544 = vld [vmem:[%s2696 + $0x188] sm:$0xfc]
    %v3545 = vld [vmem:[%s2696 + $0x190] sm:$0x3]
    %v3546 = vld [vmem:[%s2696 + $0x198] sm:$0x3]
    %v3547 = vld [vmem:[%s2696 + $0x1a0] sm:$0xfc]
    %v3548 = vld [vmem:[%s2696 + $0x1a8] sm:$0xfc]
    %v3549 = vld [vmem:[%s2696 + $0x1b0] sm:$0x3]
    %v3550 = vld [vmem:[%s2696 + $0x1b8] sm:$0x3]
    %v3551 = vld [vmem:[%s2696 + $0x1c0] sm:$0xfc]
    %v3552 = vld [vmem:[%s2696 + $0x1c8] sm:$0xfc]
    %v3553 = vld [vmem:[%s2696 + $0x1d0] sm:$0x3]
    %v3554 = vld [vmem:[%s2696 + $0x1d8] sm:$0x3]
    %v3555 = vld [vmem:[%s2696 + $0x1e0] sm:$0xfc]
    %v3556 = vld [vmem:[%s2696 + $0x1e8] sm:$0xfc]
    %v3557 = vld [vmem:[%s2696 + $0x1f0] sm:$0x3]
    %v3558 = vld [vmem:[%s2696 + $0x1f8] sm:$0x3]
    %v3559 = vld [vmem:[%s2696 + $0x200] sm:$0xfc]
    %v3560 = vld [vmem:[%s2696 + $0x208] sm:$0xfc]
    %v3561 = vld [vmem:[%s2696 + $0x210] sm:$0x3]
    %v3562 = vld [vmem:[%s2696 + $0x218] sm:$0x3]
    %v3563 = vld [vmem:[%s2696 + $0x220] sm:$0xfc]
    %v3564 = vld [vmem:[%s2696 + $0x228] sm:$0xfc]
    %v3565 = vld [vmem:[%s2696 + $0x230] sm:$0x3]
    %v3566 = vld [vmem:[%s2696 + $0x238] sm:$0x3]
    %v3631 = vrot.slane %v3503, 2
    %v3632 = vrot.slane %v3505, 2
    %v3633 = vsel %vm986, %v3631, %v3632
    %v3634 = vrot.slane %v3504, 2
    %v3635 = vrot.slane %v3506, 2
    %v3636 = vsel %vm986, %v3634, %v3635
    %v3637 = vrot.slane %v3507, 2
    %v3638 = vrot.slane %v3509, 2
    %v3639 = vsel %vm986, %v3637, %v3638
    %v3640 = vrot.slane %v3508, 2
    %v3641 = vrot.slane %v3510, 2
    %v3642 = vsel %vm986, %v3640, %v3641
    %v3643 = vrot.slane %v3511, 2
    %v3644 = vrot.slane %v3513, 2
    %v3645 = vsel %vm986, %v3643, %v3644
    %v3646 = vrot.slane %v3512, 2
    %v3647 = vrot.slane %v3514, 2
    %v3648 = vsel %vm986, %v3646, %v3647
    %v3649 = vrot.slane %v3515, 2
    %v3650 = vrot.slane %v3517, 2
    %v3651 = vsel %vm986, %v3649, %v3650
    %v3652 = vrot.slane %v3516, 2
    %v3653 = vrot.slane %v3518, 2
    %v3654 = vsel %vm986, %v3652, %v3653
    %v3655 = vrot.slane %v3519, 2
    %v3656 = vrot.slane %v3521, 2
    %v3657 = vsel %vm986, %v3655, %v3656
    %v3658 = vrot.slane %v3520, 2
    %v3659 = vrot.slane %v3522, 2
    %v3660 = vsel %vm986, %v3658, %v3659
    %v3661 = vrot.slane %v3523, 2
    %v3662 = vrot.slane %v3525, 2
    %v3663 = vsel %vm986, %v3661, %v3662
    %v3664 = vrot.slane %v3524, 2
    %v3665 = vrot.slane %v3526, 2
    %v3666 = vsel %vm986, %v3664, %v3665
    %v3667 = vrot.slane %v3527, 2
    %v3668 = vrot.slane %v3529, 2
    %v3669 = vsel %vm986, %v3667, %v3668
    %v3670 = vrot.slane %v3528, 2
    %v3671 = vrot.slane %v3530, 2
    %v3672 = vsel %vm986, %v3670, %v3671
    %v3673 = vrot.slane %v3531, 2
    %v3674 = vrot.slane %v3533, 2
    %v3675 = vsel %vm986, %v3673, %v3674
    %v3676 = vrot.slane %v3532, 2
    %v3677 = vrot.slane %v3534, 2
    %v3678 = vsel %vm986, %v3676, %v3677
    %v3679 = vrot.slane %v3535, 2
    %v3680 = vrot.slane %v3537, 2
    %v3681 = vsel %vm986, %v3679, %v3680
    %v3682 = vrot.slane %v3536, 2
    %v3683 = vrot.slane %v3538, 2
    %v3684 = vsel %vm986, %v3682, %v3683
    %v3685 = vrot.slane %v3539, 2
    %v3686 = vrot.slane %v3541, 2
    %v3687 = vsel %vm986, %v3685, %v3686
    %v3688 = vrot.slane %v3540, 2
    %v3689 = vrot.slane %v3542, 2
    %v3690 = vsel %vm986, %v3688, %v3689
    %v3691 = vrot.slane %v3543, 2
    %v3692 = vrot.slane %v3545, 2
    %v3693 = vsel %vm986, %v3691, %v3692
    %v3694 = vrot.slane %v3544, 2
    %v3695 = vrot.slane %v3546, 2
    %v3696 = vsel %vm986, %v3694, %v3695
    %v3697 = vrot.slane %v3547, 2
    %v3698 = vrot.slane %v3549, 2
    %v3699 = vsel %vm986, %v3697, %v3698
    %v3700 = vrot.slane %v3548, 2
    %v3701 = vrot.slane %v3550, 2
    %v3702 = vsel %vm986, %v3700, %v3701
    %v3703 = vrot.slane %v3551, 2
    %v3704 = vrot.slane %v3553, 2
    %v3705 = vsel %vm986, %v3703, %v3704
    %v3706 = vrot.slane %v3552, 2
    %v3707 = vrot.slane %v3554, 2
    %v3708 = vsel %vm986, %v3706, %v3707
    %v3709 = vrot.slane %v3555, 2
    %v3710 = vrot.slane %v3557, 2
    %v3711 = vsel %vm986, %v3709, %v3710
    %v3712 = vrot.slane %v3556, 2
    %v3713 = vrot.slane %v3558, 2
    %v3714 = vsel %vm986, %v3712, %v3713
    %v3715 = vrot.slane %v3559, 2
    %v3716 = vrot.slane %v3561, 2
    %v3717 = vsel %vm986, %v3715, %v3716
    %v3718 = vrot.slane %v3560, 2
    %v3719 = vrot.slane %v3562, 2
    %v3720 = vsel %vm986, %v3718, %v3719
    %v3721 = vrot.slane %v3563, 2
    %v3722 = vrot.slane %v3565, 2
    %v3723 = vsel %vm986, %v3721, %v3722
    %v3724 = vrot.slane %v3564, 2
    %v3725 = vrot.slane %v3566, 2
    %v3726 = vsel %vm986, %v3724, %v3725
    %v3759 = vpack.c.bf16 %v3639, %v3633
    %v3760 = vpack.c.bf16 %v3642, %v3636
    %v3761 = vpack.c.bf16 %v3651, %v3645
    %v3762 = vpack.c.bf16 %v3654, %v3648
    %v3763 = vpack.c.bf16 %v3663, %v3657
    %v3764 = vpack.c.bf16 %v3666, %v3660
    %v3765 = vpack.c.bf16 %v3675, %v3669
    %v3766 = vpack.c.bf16 %v3678, %v3672
    %v3767 = vpack.c.bf16 %v3687, %v3681
    %v3768 = vpack.c.bf16 %v3690, %v3684
    %v3769 = vpack.c.bf16 %v3699, %v3693
    %v3770 = vpack.c.bf16 %v3702, %v3696
    %v3771 = vpack.c.bf16 %v3711, %v3705
    %v3772 = vpack.c.bf16 %v3714, %v3708
    %v3773 = vpack.c.bf16 %v3723, %v3717
    %v3774 = vpack.c.bf16 %v3726, %v3720
    %s3775 = scalar_lea.vmem %s1, 1024
    %v3776 = vld [vmem:[%s3775] sm:$0xf]
    %v3777 = vld [vmem:[%s3775 + $0x4] sm:$0xf]
    %v3778 = vld [vmem:[%s3775 + $0x8] sm:$0xf]
    %v3779 = vld [vmem:[%s3775 + $0xc] sm:$0xf]
    %v3780 = vld [vmem:[%s3775 + $0x10] sm:$0xf]
    %v3781 = vld [vmem:[%s3775 + $0x14] sm:$0xf]
    %v3782 = vld [vmem:[%s3775 + $0x18] sm:$0xf]
    %v3783 = vld [vmem:[%s3775 + $0x1c] sm:$0xf]
    %v3784 = vld [vmem:[%s3775 + $0x20] sm:$0xf]
    %v3785 = vld [vmem:[%s3775 + $0x24] sm:$0xf]
    %v3786 = vld [vmem:[%s3775 + $0x28] sm:$0xf]
    %v3787 = vld [vmem:[%s3775 + $0x2c] sm:$0xf]
    %v3788 = vld [vmem:[%s3775 + $0x30] sm:$0xf]
    %v3789 = vld [vmem:[%s3775 + $0x34] sm:$0xf]
    %v3790 = vld [vmem:[%s3775 + $0x38] sm:$0xf]
    %v3791 = vld [vmem:[%s3775 + $0x3c] sm:$0xf]
    %v3792 = vld [vmem:[%s3775 + $0x40] sm:$0xf]
    %v3793 = vld [vmem:[%s3775 + $0x44] sm:$0xf]
    %v3794 = vld [vmem:[%s3775 + $0x48] sm:$0xf]
    %v3795 = vld [vmem:[%s3775 + $0x4c] sm:$0xf]
    %v3796 = vld [vmem:[%s3775 + $0x50] sm:$0xf]
    %v3797 = vld [vmem:[%s3775 + $0x54] sm:$0xf]
    %v3798 = vld [vmem:[%s3775 + $0x58] sm:$0xf]
    %v3799 = vld [vmem:[%s3775 + $0x5c] sm:$0xf]
    %v3800 = vld [vmem:[%s3775 + $0x60] sm:$0xf]
    %v3801 = vld [vmem:[%s3775 + $0x64] sm:$0xf]
    %v3802 = vld [vmem:[%s3775 + $0x68] sm:$0xf]
    %v3803 = vld [vmem:[%s3775 + $0x6c] sm:$0xf]
    %v3804 = vld [vmem:[%s3775 + $0x70] sm:$0xf]
    %v3805 = vld [vmem:[%s3775 + $0x74] sm:$0xf]
    %v3806 = vld [vmem:[%s3775 + $0x78] sm:$0xf]
    %v3807 = vld [vmem:[%s3775 + $0x7c] sm:$0xf]
    %v3840 = vunpack.c.l.b16 %v3776
    %v3841 = vunpack.c.l.b16 %v3777
    %v3842 = vunpack.c.l.b16 %v3778
    %v3843 = vunpack.c.l.b16 %v3779
    %v3844 = vunpack.c.l.b16 %v3780
    %v3845 = vunpack.c.l.b16 %v3781
    %v3846 = vunpack.c.l.b16 %v3782
    %v3847 = vunpack.c.l.b16 %v3783
    %v3848 = vunpack.c.l.b16 %v3784
    %v3849 = vunpack.c.l.b16 %v3785
    %v3850 = vunpack.c.l.b16 %v3786
    %v3851 = vunpack.c.l.b16 %v3787
    %v3852 = vunpack.c.l.b16 %v3788
    %v3853 = vunpack.c.l.b16 %v3789
    %v3854 = vunpack.c.l.b16 %v3790
    %v3855 = vunpack.c.l.b16 %v3791
    %v3856 = vunpack.c.l.b16 %v3792
    %v3857 = vunpack.c.l.b16 %v3793
    %v3858 = vunpack.c.l.b16 %v3794
    %v3859 = vunpack.c.l.b16 %v3795
    %v3860 = vunpack.c.l.b16 %v3796
    %v3861 = vunpack.c.l.b16 %v3797
    %v3862 = vunpack.c.l.b16 %v3798
    %v3863 = vunpack.c.l.b16 %v3799
    %v3864 = vunpack.c.l.b16 %v3800
    %v3865 = vunpack.c.l.b16 %v3801
    %v3866 = vunpack.c.l.b16 %v3802
    %v3867 = vunpack.c.l.b16 %v3803
    %v3868 = vunpack.c.l.b16 %v3804
    %v3869 = vunpack.c.l.b16 %v3805
    %v3870 = vunpack.c.l.b16 %v3806
    %v3871 = vunpack.c.l.b16 %v3807
    %v3872 = vpack.c.b16 %v3841, %v3840
    %v3873 = vpack.c.b16 %v3843, %v3842
    %v3874 = vpack.c.b16 %v3845, %v3844
    %v3875 = vpack.c.b16 %v3847, %v3846
    %v3876 = vpack.c.b16 %v3849, %v3848
    %v3877 = vpack.c.b16 %v3851, %v3850
    %v3878 = vpack.c.b16 %v3853, %v3852
    %v3879 = vpack.c.b16 %v3855, %v3854
    %v3880 = vpack.c.b16 %v3857, %v3856
    %v3881 = vpack.c.b16 %v3859, %v3858
    %v3882 = vpack.c.b16 %v3861, %v3860
    %v3883 = vpack.c.b16 %v3863, %v3862
    %v3884 = vpack.c.b16 %v3865, %v3864
    %v3885 = vpack.c.b16 %v3867, %v3866
    %v3886 = vpack.c.b16 %v3869, %v3868
    %v3887 = vpack.c.b16 %v3871, %v3870
    %3904 = vmatpush.bf16.msra.mxu0 %v3879
    %3905 = vmatpush.bf16.msra.mxu0 %v3878
    %3906 = vmatpush.bf16.msra.mxu0 %v3877
    %3907 = vmatpush.bf16.msra.mxu0 %v3876
    %3908 = vmatpush.bf16.msra.mxu0 %v3875
    %3909 = vmatpush.bf16.msra.mxu0 %v3874
    %3910 = vmatpush.bf16.msra.mxu0 %v3873
    %3911 = vmatpush.bf16.msra.mxu0 %v3872
    %3912 = vmatmul.bf16.gmra.mxu0 %v3759
    %v3913 = vpop.f32.mrf.mxu0
    %v3914 = vadd.f32 0.0, %v3913
    %v3915 = vpop.f32.mrf.mxu0
    %v3916 = vadd.f32 0.0, %v3915
    %3917 = vmatmul.bf16.gmra.mxu0 %v3761
    %v3918 = vpop.f32.mrf.mxu0
    %v3919 = vadd.f32 0.0, %v3918
    %v3920 = vpop.f32.mrf.mxu0
    %v3921 = vadd.f32 0.0, %v3920
    %3922 = vmatmul.bf16.gmra.mxu0 %v3763
    %v3923 = vpop.f32.mrf.mxu0
    %v3924 = vadd.f32 0.0, %v3923
    %v3925 = vpop.f32.mrf.mxu0
    %v3926 = vadd.f32 0.0, %v3925
    %3927 = vmatmul.bf16.gmra.mxu0 %v3765
    %v3928 = vpop.f32.mrf.mxu0
    %v3929 = vadd.f32 0.0, %v3928
    %v3930 = vpop.f32.mrf.mxu0
    %v3931 = vadd.f32 0.0, %v3930
    %3932 = vmatmul.bf16.gmra.mxu0 %v3767
    %v3933 = vpop.f32.mrf.mxu0
    %v3934 = vadd.f32 0.0, %v3933
    %v3935 = vpop.f32.mrf.mxu0
    %v3936 = vadd.f32 0.0, %v3935
    %3937 = vmatmul.bf16.gmra.mxu0 %v3769
    %v3938 = vpop.f32.mrf.mxu0
    %v3939 = vadd.f32 0.0, %v3938
    %v3940 = vpop.f32.mrf.mxu0
    %v3941 = vadd.f32 0.0, %v3940
    %3942 = vmatmul.bf16.gmra.mxu0 %v3771
    %v3943 = vpop.f32.mrf.mxu0
    %v3944 = vadd.f32 0.0, %v3943
    %v3945 = vpop.f32.mrf.mxu0
    %v3946 = vadd.f32 0.0, %v3945
    %3947 = vmatmul.bf16.gmra.mxu0 %v3773
    %v3948 = vpop.f32.mrf.mxu0
    %v3949 = vadd.f32 0.0, %v3948
    %v3950 = vpop.f32.mrf.mxu0
    %v3951 = vadd.f32 0.0, %v3950
    %3952 = vdwg.mxu0
    %3953 = vmatpush.bf16.msra.mxu0 %v3887
    %3954 = vmatpush.bf16.msra.mxu0 %v3886
    %3955 = vmatpush.bf16.msra.mxu0 %v3885
    %3956 = vmatpush.bf16.msra.mxu0 %v3884
    %3957 = vmatpush.bf16.msra.mxu0 %v3883
    %3958 = vmatpush.bf16.msra.mxu0 %v3882
    %3959 = vmatpush.bf16.msra.mxu0 %v3881
    %3960 = vmatpush.bf16.msra.mxu0 %v3880
    %3961 = vmatmul.bf16.gmra.mxu0 %v3760
    %v3962 = vpop.f32.mrf.mxu0
    %v3963 = vadd.f32 %v3914, %v3962
    %v3964 = vpop.f32.mrf.mxu0
    %v3965 = vadd.f32 %v3916, %v3964
    %3966 = vmatmul.bf16.gmra.mxu0 %v3762
    %v3967 = vpop.f32.mrf.mxu0
    %v3968 = vadd.f32 %v3919, %v3967
    %v3969 = vpop.f32.mrf.mxu0
    %v3970 = vadd.f32 %v3921, %v3969
    %3971 = vmatmul.bf16.gmra.mxu0 %v3764
    %v3972 = vpop.f32.mrf.mxu0
    %v3973 = vadd.f32 %v3924, %v3972
    %v3974 = vpop.f32.mrf.mxu0
    %v3975 = vadd.f32 %v3926, %v3974
    %3976 = vmatmul.bf16.gmra.mxu0 %v3766
    %v3977 = vpop.f32.mrf.mxu0
    %v3978 = vadd.f32 %v3929, %v3977
    %v3979 = vpop.f32.mrf.mxu0
    %v3980 = vadd.f32 %v3931, %v3979
    %3981 = vmatmul.bf16.gmra.mxu0 %v3768
    %v3982 = vpop.f32.mrf.mxu0
    %v3983 = vadd.f32 %v3934, %v3982
    %v3984 = vpop.f32.mrf.mxu0
    %v3985 = vadd.f32 %v3936, %v3984
    %3986 = vmatmul.bf16.gmra.mxu0 %v3770
    %v3987 = vpop.f32.mrf.mxu0
    %v3988 = vadd.f32 %v3939, %v3987
    %v3989 = vpop.f32.mrf.mxu0
    %v3990 = vadd.f32 %v3941, %v3989
    %3991 = vmatmul.bf16.gmra.mxu0 %v3772
    %v3992 = vpop.f32.mrf.mxu0
    %v3993 = vadd.f32 %v3944, %v3992
    %v3994 = vpop.f32.mrf.mxu0
    %v3995 = vadd.f32 %v3946, %v3994
    %3996 = vmatmul.bf16.gmra.mxu0 %v3774
    %v3997 = vpop.f32.mrf.mxu0
    %v3998 = vadd.f32 %v3949, %v3997
    %v3999 = vpop.f32.mrf.mxu0
    %v4000 = vadd.f32 %v3951, %v3999
    %4001 = vdwg.mxu0
    %v4002 = vadd.f32 %v3487, %v3963
    %v4003 = vadd.f32 %v3488, %v3965
    %v4004 = vadd.f32 %v3489, %v3968
    %v4005 = vadd.f32 %v3490, %v3970
    %v4006 = vadd.f32 %v3491, %v3973
    %v4007 = vadd.f32 %v3492, %v3975
    %v4008 = vadd.f32 %v3493, %v3978
    %v4009 = vadd.f32 %v3494, %v3980
    %v4010 = vadd.f32 %v3495, %v3983
    %v4011 = vadd.f32 %v3496, %v3985
    %v4012 = vadd.f32 %v3497, %v3988
    %v4013 = vadd.f32 %v3498, %v3990
    %v4014 = vadd.f32 %v3499, %v3993
    %v4015 = vadd.f32 %v3500, %v3995
    %v4016 = vadd.f32 %v3501, %v3998
    %v4017 = vadd.f32 %v3502, %v4000
    %v4018 = vld [vmem:[#allocation4] sm:$0x1]
    %v4020 = vperm.slane %v4018, 0
    %v4022 = vadd.f32 %v4002, %v4020
    %v4023 = vadd.f32 %v4003, %v4020
    %v4024 = vadd.f32 %v4004, %v4020
    %v4025 = vadd.f32 %v4005, %v4020
    %v4026 = vadd.f32 %v4006, %v4020
    %v4027 = vadd.f32 %v4007, %v4020
    %v4028 = vadd.f32 %v4008, %v4020
    %v4029 = vadd.f32 %v4009, %v4020
    %v4030 = vadd.f32 %v4010, %v4020
    %v4031 = vadd.f32 %v4011, %v4020
    %v4032 = vadd.f32 %v4012, %v4020
    %v4033 = vadd.f32 %v4013, %v4020
    %v4034 = vadd.f32 %v4014, %v4020
    %v4035 = vadd.f32 %v4015, %v4020
    %v4036 = vadd.f32 %v4016, %v4020
    %v4037 = vadd.f32 %v4017, %v4020
    %v4038 = vmax.f32 %v4022, 0.0
    %v4039 = vmax.f32 %v4023, 0.0
    %v4040 = vmax.f32 %v4024, 0.0
    %v4041 = vmax.f32 %v4025, 0.0
    %v4042 = vmax.f32 %v4026, 0.0
    %v4043 = vmax.f32 %v4027, 0.0
    %v4044 = vmax.f32 %v4028, 0.0
    %v4045 = vmax.f32 %v4029, 0.0
    %v4046 = vmax.f32 %v4030, 0.0
    %v4047 = vmax.f32 %v4031, 0.0
    %v4048 = vmax.f32 %v4032, 0.0
    %v4049 = vmax.f32 %v4033, 0.0
    %v4050 = vmax.f32 %v4034, 0.0
    %v4051 = vmax.f32 %v4035, 0.0
    %v4052 = vmax.f32 %v4036, 0.0
    %v4053 = vmax.f32 %v4037, 0.0
    %vm4054 = vcmask 523264
    %4055 = vst.msk [vmem:[#allocation2] sm:$0xff] %vm4054, 0.0
    %4056 = vst.msk [vmem:[#allocation2 + $0x8] sm:$0xff] %vm4054, 0.0
    %vm4057 = vcmask 516096
    %4058 = vst.msk [vmem:[#allocation2 + $0x10] sm:$0x1] %vm4057, 0.0
    %4059 = vst.msk [vmem:[#allocation2 + $0x18] sm:$0xff] %vm4054, 0.0
    %4060 = vst.msk [vmem:[#allocation2 + $0x20] sm:$0xff] %vm4054, 0.0
    %4061 = vst.msk [vmem:[#allocation2 + $0x28] sm:$0x1] %vm4057, 0.0
    %4062 = vst.msk [vmem:[#allocation2 + $0x30] sm:$0xff] %vm4054, 0.0
    %4063 = vst.msk [vmem:[#allocation2 + $0x38] sm:$0xff] %vm4054, 0.0
    %4064 = vst.msk [vmem:[#allocation2 + $0x40] sm:$0x1] %vm4057, 0.0
    %4065 = vst.msk [vmem:[#allocation2 + $0x48] sm:$0xff] %vm4054, 0.0
    %4066 = vst.msk [vmem:[#allocation2 + $0x50] sm:$0xff] %vm4054, 0.0
    %4067 = vst.msk [vmem:[#allocation2 + $0x58] sm:$0x1] %vm4057, 0.0
    %4068 = vst.msk [vmem:[#allocation2 + $0x60] sm:$0xff] %vm4054, 0.0
    %4069 = vst.msk [vmem:[#allocation2 + $0x68] sm:$0xff] %vm4054, 0.0
    %4070 = vst.msk [vmem:[#allocation2 + $0x70] sm:$0x1] %vm4057, 0.0
    %4071 = vst.msk [vmem:[#allocation2 + $0x78] sm:$0xff] %vm4054, 0.0
    %4072 = vst.msk [vmem:[#allocation2 + $0x80] sm:$0xff] %vm4054, 0.0
    %4073 = vst.msk [vmem:[#allocation2 + $0x88] sm:$0x1] %vm4057, 0.0
    %4074 = vst.msk [vmem:[#allocation2 + $0x90] sm:$0xff] %vm4054, 0.0
    %4075 = vst.msk [vmem:[#allocation2 + $0x98] sm:$0xff] %vm4054, 0.0
    %4076 = vst.msk [vmem:[#allocation2 + $0xa0] sm:$0x1] %vm4057, 0.0
    %4077 = vst.msk [vmem:[#allocation2 + $0xa8] sm:$0xff] %vm4054, 0.0
    %4078 = vst.msk [vmem:[#allocation2 + $0xb0] sm:$0xff] %vm4054, 0.0
    %4079 = vst.msk [vmem:[#allocation2 + $0xb8] sm:$0x1] %vm4057, 0.0
    %4080 = vst.msk [vmem:[#allocation2 + $0xc0] sm:$0xff] %vm4054, 0.0
    %4081 = vst.msk [vmem:[#allocation2 + $0xc8] sm:$0xff] %vm4054, 0.0
    %4082 = vst.msk [vmem:[#allocation2 + $0xd0] sm:$0x1] %vm4057, 0.0
    %4083 = vst.msk [vmem:[#allocation2 + $0xd8] sm:$0xff] %vm4054, 0.0
    %4084 = vst.msk [vmem:[#allocation2 + $0xe0] sm:$0xff] %vm4054, 0.0
    %4085 = vst.msk [vmem:[#allocation2 + $0xe8] sm:$0x1] %vm4057, 0.0
    %4086 = vst.msk [vmem:[#allocation2 + $0xf0] sm:$0xff] %vm4054, 0.0
    %4087 = vst.msk [vmem:[#allocation2 + $0xf8] sm:$0xff] %vm4054, 0.0
    %4088 = vst.msk [vmem:[#allocation2 + $0x100] sm:$0x1] %vm4057, 0.0
    %4089 = vst.msk [vmem:[#allocation2 + $0x108] sm:$0xff] %vm4054, 0.0
    %4090 = vst.msk [vmem:[#allocation2 + $0x110] sm:$0xff] %vm4054, 0.0
    %4091 = vst.msk [vmem:[#allocation2 + $0x118] sm:$0x1] %vm4057, 0.0
    %4092 = vst.msk [vmem:[#allocation2 + $0x120] sm:$0xff] %vm4054, 0.0
    %4093 = vst.msk [vmem:[#allocation2 + $0x128] sm:$0xff] %vm4054, 0.0
    %4094 = vst.msk [vmem:[#allocation2 + $0x130] sm:$0x1] %vm4057, 0.0
    %4095 = vst.msk [vmem:[#allocation2 + $0x138] sm:$0xff] %vm4054, 0.0
    %4096 = vst.msk [vmem:[#allocation2 + $0x140] sm:$0xff] %vm4054, 0.0
    %4097 = vst.msk [vmem:[#allocation2 + $0x148] sm:$0x1] %vm4057, 0.0
    %4098 = vst.msk [vmem:[#allocation2 + $0x150] sm:$0xff] %vm4054, 0.0
    %4099 = vst.msk [vmem:[#allocation2 + $0x158] sm:$0xff] %vm4054, 0.0
    %4100 = vst.msk [vmem:[#allocation2 + $0x160] sm:$0x1] %vm4057, 0.0
    %4101 = vst.msk [vmem:[#allocation2 + $0x168] sm:$0xff] %vm4054, 0.0
    %4102 = vst.msk [vmem:[#allocation2 + $0x170] sm:$0xff] %vm4054, 0.0
    %4103 = vst.msk [vmem:[#allocation2 + $0x178] sm:$0x1] %vm4057, 0.0
    %4104 = vst.msk [vmem:[#allocation2 + $0x180] sm:$0xff] %vm4054, 0.0
    %4105 = vst.msk [vmem:[#allocation2 + $0x188] sm:$0xff] %vm4054, 0.0
    %4106 = vst.msk [vmem:[#allocation2 + $0x190] sm:$0x1] %vm4057, 0.0
    %4107 = vst.msk [vmem:[#allocation2 + $0x198] sm:$0xff] %vm4054, 0.0
    %4108 = vst.msk [vmem:[#allocation2 + $0x1a0] sm:$0xff] %vm4054, 0.0
    %4109 = vst.msk [vmem:[#allocation2 + $0x1a8] sm:$0x1] %vm4057, 0.0
    %4110 = vst.msk [vmem:[#allocation2 + $0x1b0] sm:$0xff] %vm4054, 0.0
    %4111 = vst.msk [vmem:[#allocation2 + $0x1b8] sm:$0xff] %vm4054, 0.0
    %4112 = vst.msk [vmem:[#allocation2 + $0x1c0] sm:$0x1] %vm4057, 0.0
    %4113 = vst.msk [vmem:[#allocation2 + $0x1c8] sm:$0xff] %vm4054, 0.0
    %4114 = vst.msk [vmem:[#allocation2 + $0x1d0] sm:$0xff] %vm4054, 0.0
    %4115 = vst.msk [vmem:[#allocation2 + $0x1d8] sm:$0x1] %vm4057, 0.0
    %s4116 = scalar_lea.vmem [#allocation2], 24
    %4117 = vst.msk [vmem:[%s4116 + $0x8] sm:$0xff] %vm4054, %v4038
    %4118 = vst.msk [vmem:[%s4116 + $0x20] sm:$0xff] %vm4054, %v4039
    %4119 = vst.msk [vmem:[%s4116 + $0x38] sm:$0xff] %vm4054, %v4040
    %4120 = vst.msk [vmem:[%s4116 + $0x50] sm:$0xff] %vm4054, %v4041
    %4121 = vst.msk [vmem:[%s4116 + $0x68] sm:$0xff] %vm4054, %v4042
    %4122 = vst.msk [vmem:[%s4116 + $0x80] sm:$0xff] %vm4054, %v4043
    %4123 = vst.msk [vmem:[%s4116 + $0x98] sm:$0xff] %vm4054, %v4044
    %4124 = vst.msk [vmem:[%s4116 + $0xb0] sm:$0xff] %vm4054, %v4045
    %4125 = vst.msk [vmem:[%s4116 + $0xf8] sm:$0xff] %vm4054, %v4046
    %4126 = vst.msk [vmem:[%s4116 + $0x110] sm:$0xff] %vm4054, %v4047
    %4127 = vst.msk [vmem:[%s4116 + $0x128] sm:$0xff] %vm4054, %v4048
    %4128 = vst.msk [vmem:[%s4116 + $0x140] sm:$0xff] %vm4054, %v4049
    %4129 = vst.msk [vmem:[%s4116 + $0x158] sm:$0xff] %vm4054, %v4050
    %4130 = vst.msk [vmem:[%s4116 + $0x170] sm:$0xff] %vm4054, %v4051
    %4131 = vst.msk [vmem:[%s4116 + $0x188] sm:$0xff] %vm4054, %v4052
    %4132 = vst.msk [vmem:[%s4116 + $0x1a0] sm:$0xff] %vm4054, %v4053
    %v4133 = vld [vmem:[#allocation2 + $0x7] sm:$0xff]
    %v4134 = vld [vmem:[#allocation2 + $0x1f] sm:$0xff]
    %v4135 = vld [vmem:[#allocation2 + $0x37] sm:$0xff]
    %v4136 = vld [vmem:[#allocation2 + $0x4f] sm:$0xff]
    %v4137 = vld [vmem:[#allocation2 + $0x67] sm:$0xff]
    %v4138 = vld [vmem:[#allocation2 + $0x7f] sm:$0xff]
    %v4139 = vld [vmem:[#allocation2 + $0x97] sm:$0xff]
    %v4140 = vld [vmem:[#allocation2 + $0xaf] sm:$0xff]
    %v4141 = vld [vmem:[#allocation2 + $0xf7] sm:$0xff]
    %v4142 = vld [vmem:[#allocation2 + $0x10f] sm:$0xff]
    %v4143 = vld [vmem:[#allocation2 + $0x127] sm:$0xff]
    %v4144 = vld [vmem:[#allocation2 + $0x13f] sm:$0xff]
    %v4145 = vld [vmem:[#allocation2 + $0x157] sm:$0xff]
    %v4146 = vld [vmem:[#allocation2 + $0x16f] sm:$0xff]
    %v4147 = vld [vmem:[#allocation2 + $0x187] sm:$0xff]
    %v4148 = vld [vmem:[#allocation2 + $0x19f] sm:$0xff]
    %v4149 = vpack.c.bf16 %v4134, %v4133
    %v4150 = vpack.c.bf16 %v4136, %v4135
    %v4151 = vpack.c.bf16 %v4138, %v4137
    %v4152 = vpack.c.bf16 %v4140, %v4139
    %v4153 = vpack.c.bf16 %v4142, %v4141
    %v4154 = vpack.c.bf16 %v4144, %v4143
    %v4155 = vpack.c.bf16 %v4146, %v4145
    %v4156 = vpack.c.bf16 %v4148, %v4147
    %v4157 = vld [vmem:[%s3] sm:$0xf]
    %v4158 = vld [vmem:[%s3 + $0x4] sm:$0xf]
    %v4159 = vld [vmem:[%s3 + $0x8] sm:$0xf]
    %v4160 = vld [vmem:[%s3 + $0xc] sm:$0xf]
    %v4161 = vld [vmem:[%s3 + $0x10] sm:$0xf]
    %v4162 = vld [vmem:[%s3 + $0x14] sm:$0xf]
    %v4163 = vld [vmem:[%s3 + $0x18] sm:$0xf]
    %v4164 = vld [vmem:[%s3 + $0x1c] sm:$0xf]
    %v4165 = vld [vmem:[#allocation2 + $0x8] sm:$0xff]
    %v4166 = vld [vmem:[#allocation2 + $0x20] sm:$0xff]
    %v4167 = vld [vmem:[#allocation2 + $0x38] sm:$0xff]
    %v4168 = vld [vmem:[#allocation2 + $0x50] sm:$0xff]
    %v4169 = vld [vmem:[#allocation2 + $0x68] sm:$0xff]
    %v4170 = vld [vmem:[#allocation2 + $0x80] sm:$0xff]
    %v4171 = vld [vmem:[#allocation2 + $0x98] sm:$0xff]
    %v4172 = vld [vmem:[#allocation2 + $0xb0] sm:$0xff]
    %v4173 = vld [vmem:[#allocation2 + $0xf8] sm:$0xff]
    %v4174 = vld [vmem:[#allocation2 + $0x110] sm:$0xff]
    %v4175 = vld [vmem:[#allocation2 + $0x128] sm:$0xff]
    %v4176 = vld [vmem:[#allocation2 + $0x140] sm:$0xff]
    %v4177 = vld [vmem:[#allocation2 + $0x158] sm:$0xff]
    %v4178 = vld [vmem:[#allocation2 + $0x170] sm:$0xff]
    %v4179 = vld [vmem:[#allocation2 + $0x188] sm:$0xff]
    %v4180 = vld [vmem:[#allocation2 + $0x1a0] sm:$0xff]
    %v4181 = vpack.c.bf16 %v4166, %v4165
    %v4182 = vpack.c.bf16 %v4168, %v4167
    %v4183 = vpack.c.bf16 %v4170, %v4169
    %v4184 = vpack.c.bf16 %v4172, %v4171
    %v4185 = vpack.c.bf16 %v4174, %v4173
    %v4186 = vpack.c.bf16 %v4176, %v4175
    %v4187 = vpack.c.bf16 %v4178, %v4177
    %v4188 = vpack.c.bf16 %v4180, %v4179
    %s4189 = scalar_lea.vmem %s3, 32
    %v4190 = vld [vmem:[%s4189] sm:$0xf]
    %v4191 = vld [vmem:[%s4189 + $0x4] sm:$0xf]
    %v4192 = vld [vmem:[%s4189 + $0x8] sm:$0xf]
    %v4193 = vld [vmem:[%s4189 + $0xc] sm:$0xf]
    %v4194 = vld [vmem:[%s4189 + $0x10] sm:$0xf]
    %v4195 = vld [vmem:[%s4189 + $0x14] sm:$0xf]
    %v4196 = vld [vmem:[%s4189 + $0x18] sm:$0xf]
    %v4197 = vld [vmem:[%s4189 + $0x1c] sm:$0xf]
    %v4206 = vunpack.c.l.b16 %v4190
    %v4207 = vunpack.c.l.b16 %v4191
    %v4208 = vunpack.c.l.b16 %v4192
    %v4209 = vunpack.c.l.b16 %v4193
    %v4210 = vunpack.c.l.b16 %v4194
    %v4211 = vunpack.c.l.b16 %v4195
    %v4212 = vunpack.c.l.b16 %v4196
    %v4213 = vunpack.c.l.b16 %v4197
    %v4214 = vpack.c.b16 %v4207, %v4206
    %v4215 = vpack.c.b16 %v4209, %v4208
    %v4216 = vpack.c.b16 %v4211, %v4210
    %v4217 = vpack.c.b16 %v4213, %v4212
    %v4223 = vsel %vm4054, %v4181, 0
    %v4226 = vsel %vm4054, %v4182, 0
    %v4229 = vsel %vm4054, %v4183, 0
    %v4232 = vsel %vm4054, %v4184, 0
    %v4235 = vsel %vm4054, %v4185, 0
    %v4238 = vsel %vm4054, %v4186, 0
    %v4241 = vsel %vm4054, %v4187, 0
    %v4244 = vsel %vm4054, %v4188, 0
    %4246 = vmatpush.bf16.msra.mxu0 0
    %4247 = vmatpush.bf16.msra.mxu0 0
    %4248 = vmatpush.bf16.msra.mxu0 0
    %4249 = vmatpush.bf16.msra.mxu0 0
    %4250 = vmatpush.bf16.msra.mxu0 %v4217
    %4251 = vmatpush.bf16.msra.mxu0 %v4216
    %4252 = vmatpush.bf16.msra.mxu0 %v4215
    %4253 = vmatpush.bf16.msra.mxu0 %v4214
    %4254 = vmatmul.bf16.gmra.mxu0 %v4223
    %v4255 = vpop.f32.mrf.mxu0
    %v4256 = vadd.f32 0.0, %v4255
    %v4257 = vpop.f32.mrf.mxu0
    %v4258 = vadd.f32 0.0, %v4257
    %4259 = vmatmul.bf16.gmra.mxu0 %v4226
    %v4260 = vpop.f32.mrf.mxu0
    %v4261 = vadd.f32 0.0, %v4260
    %v4262 = vpop.f32.mrf.mxu0
    %v4263 = vadd.f32 0.0, %v4262
    %4264 = vmatmul.bf16.gmra.mxu0 %v4229
    %v4265 = vpop.f32.mrf.mxu0
    %v4266 = vadd.f32 0.0, %v4265
    %v4267 = vpop.f32.mrf.mxu0
    %v4268 = vadd.f32 0.0, %v4267
    %4269 = vmatmul.bf16.gmra.mxu0 %v4232
    %v4270 = vpop.f32.mrf.mxu0
    %v4271 = vadd.f32 0.0, %v4270
    %v4272 = vpop.f32.mrf.mxu0
    %v4273 = vadd.f32 0.0, %v4272
    %4274 = vmatmul.bf16.gmra.mxu0 %v4235
    %v4275 = vpop.f32.mrf.mxu0
    %v4276 = vadd.f32 0.0, %v4275
    %v4277 = vpop.f32.mrf.mxu0
    %v4278 = vadd.f32 0.0, %v4277
    %4279 = vmatmul.bf16.gmra.mxu0 %v4238
    %v4280 = vpop.f32.mrf.mxu0
    %v4281 = vadd.f32 0.0, %v4280
    %v4282 = vpop.f32.mrf.mxu0
    %v4283 = vadd.f32 0.0, %v4282
    %4284 = vmatmul.bf16.gmra.mxu0 %v4241
    %v4285 = vpop.f32.mrf.mxu0
    %v4286 = vadd.f32 0.0, %v4285
    %v4287 = vpop.f32.mrf.mxu0
    %v4288 = vadd.f32 0.0, %v4287
    %4289 = vmatmul.bf16.gmra.mxu0 %v4244
    %v4290 = vpop.f32.mrf.mxu0
    %v4291 = vadd.f32 0.0, %v4290
    %v4292 = vpop.f32.mrf.mxu0
    %v4293 = vadd.f32 0.0, %v4292
    %4294 = vdwg.mxu0
    %v4303 = vunpack.c.l.b16 %v4157
    %v4304 = vunpack.c.l.b16 %v4158
    %v4305 = vunpack.c.l.b16 %v4159
    %v4306 = vunpack.c.l.b16 %v4160
    %v4307 = vunpack.c.l.b16 %v4161
    %v4308 = vunpack.c.l.b16 %v4162
    %v4309 = vunpack.c.l.b16 %v4163
    %v4310 = vunpack.c.l.b16 %v4164
    %v4311 = vpack.c.b16 %v4304, %v4303
    %v4312 = vpack.c.b16 %v4306, %v4305
    %v4313 = vpack.c.b16 %v4308, %v4307
    %v4314 = vpack.c.b16 %v4310, %v4309
    %v4320 = vsel %vm4054, %v4149, 0
    %v4323 = vsel %vm4054, %v4150, 0
    %v4326 = vsel %vm4054, %v4151, 0
    %v4329 = vsel %vm4054, %v4152, 0
    %v4332 = vsel %vm4054, %v4153, 0
    %v4335 = vsel %vm4054, %v4154, 0
    %v4338 = vsel %vm4054, %v4155, 0
    %v4341 = vsel %vm4054, %v4156, 0
    %4343 = vmatpush.bf16.msra.mxu0 0
    %4344 = vmatpush.bf16.msra.mxu0 0
    %4345 = vmatpush.bf16.msra.mxu0 0
    %4346 = vmatpush.bf16.msra.mxu0 0
    %4347 = vmatpush.bf16.msra.mxu0 %v4314
    %4348 = vmatpush.bf16.msra.mxu0 %v4313
    %4349 = vmatpush.bf16.msra.mxu0 %v4312
    %4350 = vmatpush.bf16.msra.mxu0 %v4311
    %4351 = vmatmul.bf16.gmra.mxu0 %v4320
    %v4352 = vpop.f32.mrf.mxu0
    %v4353 = vadd.f32 %v4256, %v4352
    %v4354 = vpop.f32.mrf.mxu0
    %v4355 = vadd.f32 %v4258, %v4354
    %4356 = vmatmul.bf16.gmra.mxu0 %v4323
    %v4357 = vpop.f32.mrf.mxu0
    %v4358 = vadd.f32 %v4261, %v4357
    %v4359 = vpop.f32.mrf.mxu0
    %v4360 = vadd.f32 %v4263, %v4359
    %4361 = vmatmul.bf16.gmra.mxu0 %v4326
    %v4362 = vpop.f32.mrf.mxu0
    %v4363 = vadd.f32 %v4266, %v4362
    %v4364 = vpop.f32.mrf.mxu0
    %v4365 = vadd.f32 %v4268, %v4364
    %4366 = vmatmul.bf16.gmra.mxu0 %v4329
    %v4367 = vpop.f32.mrf.mxu0
    %v4368 = vadd.f32 %v4271, %v4367
    %v4369 = vpop.f32.mrf.mxu0
    %v4370 = vadd.f32 %v4273, %v4369
    %4371 = vmatmul.bf16.gmra.mxu0 %v4332
    %v4372 = vpop.f32.mrf.mxu0
    %v4373 = vadd.f32 %v4276, %v4372
    %v4374 = vpop.f32.mrf.mxu0
    %v4375 = vadd.f32 %v4278, %v4374
    %4376 = vmatmul.bf16.gmra.mxu0 %v4335
    %v4377 = vpop.f32.mrf.mxu0
    %v4378 = vadd.f32 %v4281, %v4377
    %v4379 = vpop.f32.mrf.mxu0
    %v4380 = vadd.f32 %v4283, %v4379
    %4381 = vmatmul.bf16.gmra.mxu0 %v4338
    %v4382 = vpop.f32.mrf.mxu0
    %v4383 = vadd.f32 %v4286, %v4382
    %v4384 = vpop.f32.mrf.mxu0
    %v4385 = vadd.f32 %v4288, %v4384
    %4386 = vmatmul.bf16.gmra.mxu0 %v4341
    %v4387 = vpop.f32.mrf.mxu0
    %v4388 = vadd.f32 %v4291, %v4387
    %v4389 = vpop.f32.mrf.mxu0
    %v4390 = vadd.f32 %v4293, %v4389
    %4391 = vdwg.mxu0
    %v4392 = vld [vmem:[#allocation2 + $0x9] sm:$0xff]
    %v4393 = vld [vmem:[#allocation2 + $0x21] sm:$0xff]
    %v4394 = vld [vmem:[#allocation2 + $0x39] sm:$0xff]
    %v4395 = vld [vmem:[#allocation2 + $0x51] sm:$0xff]
    %v4396 = vld [vmem:[#allocation2 + $0x69] sm:$0xff]
    %v4397 = vld [vmem:[#allocation2 + $0x81] sm:$0xff]
    %v4398 = vld [vmem:[#allocation2 + $0x99] sm:$0xff]
    %v4399 = vld [vmem:[#allocation2 + $0xb1] sm:$0xff]
    %v4400 = vld [vmem:[#allocation2 + $0xf9] sm:$0xff]
    %v4401 = vld [vmem:[#allocation2 + $0x111] sm:$0xff]
    %v4402 = vld [vmem:[#allocation2 + $0x129] sm:$0xff]
    %v4403 = vld [vmem:[#allocation2 + $0x141] sm:$0xff]
    %v4404 = vld [vmem:[#allocation2 + $0x159] sm:$0xff]
    %v4405 = vld [vmem:[#allocation2 + $0x171] sm:$0xff]
    %v4406 = vld [vmem:[#allocation2 + $0x189] sm:$0xff]
    %v4407 = vld [vmem:[#allocation2 + $0x1a1] sm:$0xff]
    %v4408 = vpack.c.bf16 %v4393, %v4392
    %v4409 = vpack.c.bf16 %v4395, %v4394
    %v4410 = vpack.c.bf16 %v4397, %v4396
    %v4411 = vpack.c.bf16 %v4399, %v4398
    %v4412 = vpack.c.bf16 %v4401, %v4400
    %v4413 = vpack.c.bf16 %v4403, %v4402
    %v4414 = vpack.c.bf16 %v4405, %v4404
    %v4415 = vpack.c.bf16 %v4407, %v4406
    %s4416 = scalar_lea.vmem %s3, 64
    %v4417 = vld [vmem:[%s4416] sm:$0xf]
    %v4418 = vld [vmem:[%s4416 + $0x4] sm:$0xf]
    %v4419 = vld [vmem:[%s4416 + $0x8] sm:$0xf]
    %v4420 = vld [vmem:[%s4416 + $0xc] sm:$0xf]
    %v4421 = vld [vmem:[%s4416 + $0x10] sm:$0xf]
    %v4422 = vld [vmem:[%s4416 + $0x14] sm:$0xf]
    %v4423 = vld [vmem:[%s4416 + $0x18] sm:$0xf]
    %v4424 = vld [vmem:[%s4416 + $0x1c] sm:$0xf]
    %v4433 = vunpack.c.l.b16 %v4417
    %v4434 = vunpack.c.l.b16 %v4418
    %v4435 = vunpack.c.l.b16 %v4419
    %v4436 = vunpack.c.l.b16 %v4420
    %v4437 = vunpack.c.l.b16 %v4421
    %v4438 = vunpack.c.l.b16 %v4422
    %v4439 = vunpack.c.l.b16 %v4423
    %v4440 = vunpack.c.l.b16 %v4424
    %v4441 = vpack.c.b16 %v4434, %v4433
    %v4442 = vpack.c.b16 %v4436, %v4435
    %v4443 = vpack.c.b16 %v4438, %v4437
    %v4444 = vpack.c.b16 %v4440, %v4439
    %v4450 = vsel %vm4054, %v4408, 0
    %v4453 = vsel %vm4054, %v4409, 0
    %v4456 = vsel %vm4054, %v4410, 0
    %v4459 = vsel %vm4054, %v4411, 0
    %v4462 = vsel %vm4054, %v4412, 0
    %v4465 = vsel %vm4054, %v4413, 0
    %v4468 = vsel %vm4054, %v4414, 0
    %v4471 = vsel %vm4054, %v4415, 0
    %4473 = vmatpush.bf16.msra.mxu0 0
    %4474 = vmatpush.bf16.msra.mxu0 0
    %4475 = vmatpush.bf16.msra.mxu0 0
    %4476 = vmatpush.bf16.msra.mxu0 0
    %4477 = vmatpush.bf16.msra.mxu0 %v4444
    %4478 = vmatpush.bf16.msra.mxu0 %v4443
    %4479 = vmatpush.bf16.msra.mxu0 %v4442
    %4480 = vmatpush.bf16.msra.mxu0 %v4441
    %4481 = vmatmul.bf16.gmra.mxu0 %v4450
    %v4482 = vpop.f32.mrf.mxu0
    %v4483 = vadd.f32 0.0, %v4482
    %v4484 = vpop.f32.mrf.mxu0
    %v4485 = vadd.f32 0.0, %v4484
    %4486 = vmatmul.bf16.gmra.mxu0 %v4453
    %v4487 = vpop.f32.mrf.mxu0
    %v4488 = vadd.f32 0.0, %v4487
    %v4489 = vpop.f32.mrf.mxu0
    %v4490 = vadd.f32 0.0, %v4489
    %4491 = vmatmul.bf16.gmra.mxu0 %v4456
    %v4492 = vpop.f32.mrf.mxu0
    %v4493 = vadd.f32 0.0, %v4492
    %v4494 = vpop.f32.mrf.mxu0
    %v4495 = vadd.f32 0.0, %v4494
    %4496 = vmatmul.bf16.gmra.mxu0 %v4459
    %v4497 = vpop.f32.mrf.mxu0
    %v4498 = vadd.f32 0.0, %v4497
    %v4499 = vpop.f32.mrf.mxu0
    %v4500 = vadd.f32 0.0, %v4499
    %4501 = vmatmul.bf16.gmra.mxu0 %v4462
    %v4502 = vpop.f32.mrf.mxu0
    %v4503 = vadd.f32 0.0, %v4502
    %v4504 = vpop.f32.mrf.mxu0
    %v4505 = vadd.f32 0.0, %v4504
    %4506 = vmatmul.bf16.gmra.mxu0 %v4465
    %v4507 = vpop.f32.mrf.mxu0
    %v4508 = vadd.f32 0.0, %v4507
    %v4509 = vpop.f32.mrf.mxu0
    %v4510 = vadd.f32 0.0, %v4509
    %4511 = vmatmul.bf16.gmra.mxu0 %v4468
    %v4512 = vpop.f32.mrf.mxu0
    %v4513 = vadd.f32 0.0, %v4512
    %v4514 = vpop.f32.mrf.mxu0
    %v4515 = vadd.f32 0.0, %v4514
    %4516 = vmatmul.bf16.gmra.mxu0 %v4471
    %v4517 = vpop.f32.mrf.mxu0
    %v4518 = vadd.f32 0.0, %v4517
    %v4519 = vpop.f32.mrf.mxu0
    %v4520 = vadd.f32 0.0, %v4519
    %4521 = vdwg.mxu0
    %v4522 = vadd.f32 %v4353, %v4483
    %v4523 = vadd.f32 %v4355, %v4485
    %v4524 = vadd.f32 %v4358, %v4488
    %v4525 = vadd.f32 %v4360, %v4490
    %v4526 = vadd.f32 %v4363, %v4493
    %v4527 = vadd.f32 %v4365, %v4495
    %v4528 = vadd.f32 %v4368, %v4498
    %v4529 = vadd.f32 %v4370, %v4500
    %v4530 = vadd.f32 %v4373, %v4503
    %v4531 = vadd.f32 %v4375, %v4505
    %v4532 = vadd.f32 %v4378, %v4508
    %v4533 = vadd.f32 %v4380, %v4510
    %v4534 = vadd.f32 %v4383, %v4513
    %v4535 = vadd.f32 %v4385, %v4515
    %v4536 = vadd.f32 %v4388, %v4518
    %v4537 = vadd.f32 %v4390, %v4520
    %v4538 = vld [vmem:[%s4116 + $0x7] sm:$0xff]
    %v4539 = vld [vmem:[%s4116 + $0x1f] sm:$0xff]
    %v4540 = vld [vmem:[%s4116 + $0x37] sm:$0xff]
    %v4541 = vld [vmem:[%s4116 + $0x4f] sm:$0xff]
    %v4542 = vld [vmem:[%s4116 + $0x67] sm:$0xff]
    %v4543 = vld [vmem:[%s4116 + $0x7f] sm:$0xff]
    %v4544 = vld [vmem:[%s4116 + $0x97] sm:$0xff]
    %v4545 = vld [vmem:[%s4116 + $0xaf] sm:$0xff]
    %v4546 = vld [vmem:[%s4116 + $0xf7] sm:$0xff]
    %v4547 = vld [vmem:[%s4116 + $0x10f] sm:$0xff]
    %v4548 = vld [vmem:[%s4116 + $0x127] sm:$0xff]
    %v4549 = vld [vmem:[%s4116 + $0x13f] sm:$0xff]
    %v4550 = vld [vmem:[%s4116 + $0x157] sm:$0xff]
    %v4551 = vld [vmem:[%s4116 + $0x16f] sm:$0xff]
    %v4552 = vld [vmem:[%s4116 + $0x187] sm:$0xff]
    %v4553 = vld [vmem:[%s4116 + $0x19f] sm:$0xff]
    %v4554 = vpack.c.bf16 %v4539, %v4538
    %v4555 = vpack.c.bf16 %v4541, %v4540
    %v4556 = vpack.c.bf16 %v4543, %v4542
    %v4557 = vpack.c.bf16 %v4545, %v4544
    %v4558 = vpack.c.bf16 %v4547, %v4546
    %v4559 = vpack.c.bf16 %v4549, %v4548
    %v4560 = vpack.c.bf16 %v4551, %v4550
    %v4561 = vpack.c.bf16 %v4553, %v4552
    %s4562 = scalar_lea.vmem %s3, 96
    %v4563 = vld [vmem:[%s4562] sm:$0xf]
    %v4564 = vld [vmem:[%s4562 + $0x4] sm:$0xf]
    %v4565 = vld [vmem:[%s4562 + $0x8] sm:$0xf]
    %v4566 = vld [vmem:[%s4562 + $0xc] sm:$0xf]
    %v4567 = vld [vmem:[%s4562 + $0x10] sm:$0xf]
    %v4568 = vld [vmem:[%s4562 + $0x14] sm:$0xf]
    %v4569 = vld [vmem:[%s4562 + $0x18] sm:$0xf]
    %v4570 = vld [vmem:[%s4562 + $0x1c] sm:$0xf]
    %v4579 = vunpack.c.l.b16 %v4563
    %v4580 = vunpack.c.l.b16 %v4564
    %v4581 = vunpack.c.l.b16 %v4565
    %v4582 = vunpack.c.l.b16 %v4566
    %v4583 = vunpack.c.l.b16 %v4567
    %v4584 = vunpack.c.l.b16 %v4568
    %v4585 = vunpack.c.l.b16 %v4569
    %v4586 = vunpack.c.l.b16 %v4570
    %v4587 = vpack.c.b16 %v4580, %v4579
    %v4588 = vpack.c.b16 %v4582, %v4581
    %v4589 = vpack.c.b16 %v4584, %v4583
    %v4590 = vpack.c.b16 %v4586, %v4585
    %v4596 = vsel %vm4054, %v4554, 0
    %v4599 = vsel %vm4054, %v4555, 0
    %v4602 = vsel %vm4054, %v4556, 0
    %v4605 = vsel %vm4054, %v4557, 0
    %v4608 = vsel %vm4054, %v4558, 0
    %v4611 = vsel %vm4054, %v4559, 0
    %v4614 = vsel %vm4054, %v4560, 0
    %v4617 = vsel %vm4054, %v4561, 0
    %4619 = vmatpush.bf16.msra.mxu0 0
    %4620 = vmatpush.bf16.msra.mxu0 0
    %4621 = vmatpush.bf16.msra.mxu0 0
    %4622 = vmatpush.bf16.msra.mxu0 0
    %4623 = vmatpush.bf16.msra.mxu0 %v4590
    %4624 = vmatpush.bf16.msra.mxu0 %v4589
    %4625 = vmatpush.bf16.msra.mxu0 %v4588
    %4626 = vmatpush.bf16.msra.mxu0 %v4587
    %4627 = vmatmul.bf16.gmra.mxu0 %v4596
    %v4628 = vpop.f32.mrf.mxu0
    %v4629 = vadd.f32 0.0, %v4628
    %v4630 = vpop.f32.mrf.mxu0
    %v4631 = vadd.f32 0.0, %v4630
    %4632 = vmatmul.bf16.gmra.mxu0 %v4599
    %v4633 = vpop.f32.mrf.mxu0
    %v4634 = vadd.f32 0.0, %v4633
    %v4635 = vpop.f32.mrf.mxu0
    %v4636 = vadd.f32 0.0, %v4635
    %4637 = vmatmul.bf16.gmra.mxu0 %v4602
    %v4638 = vpop.f32.mrf.mxu0
    %v4639 = vadd.f32 0.0, %v4638
    %v4640 = vpop.f32.mrf.mxu0
    %v4641 = vadd.f32 0.0, %v4640
    %4642 = vmatmul.bf16.gmra.mxu0 %v4605
    %v4643 = vpop.f32.mrf.mxu0
    %v4644 = vadd.f32 0.0, %v4643
    %v4645 = vpop.f32.mrf.mxu0
    %v4646 = vadd.f32 0.0, %v4645
    %4647 = vmatmul.bf16.gmra.mxu0 %v4608
    %v4648 = vpop.f32.mrf.mxu0
    %v4649 = vadd.f32 0.0, %v4648
    %v4650 = vpop.f32.mrf.mxu0
    %v4651 = vadd.f32 0.0, %v4650
    %4652 = vmatmul.bf16.gmra.mxu0 %v4611
    %v4653 = vpop.f32.mrf.mxu0
    %v4654 = vadd.f32 0.0, %v4653
    %v4655 = vpop.f32.mrf.mxu0
    %v4656 = vadd.f32 0.0, %v4655
    %4657 = vmatmul.bf16.gmra.mxu0 %v4614
    %v4658 = vpop.f32.mrf.mxu0
    %v4659 = vadd.f32 0.0, %v4658
    %v4660 = vpop.f32.mrf.mxu0
    %v4661 = vadd.f32 0.0, %v4660
    %4662 = vmatmul.bf16.gmra.mxu0 %v4617
    %v4663 = vpop.f32.mrf.mxu0
    %v4664 = vadd.f32 0.0, %v4663
    %v4665 = vpop.f32.mrf.mxu0
    %v4666 = vadd.f32 0.0, %v4665
    %4667 = vdwg.mxu0
    %v4668 = vadd.f32 %v4522, %v4629
    %v4669 = vadd.f32 %v4523, %v4631
    %v4670 = vadd.f32 %v4524, %v4634
    %v4671 = vadd.f32 %v4525, %v4636
    %v4672 = vadd.f32 %v4526, %v4639
    %v4673 = vadd.f32 %v4527, %v4641
    %v4674 = vadd.f32 %v4528, %v4644
    %v4675 = vadd.f32 %v4529, %v4646
    %v4676 = vadd.f32 %v4530, %v4649
    %v4677 = vadd.f32 %v4531, %v4651
    %v4678 = vadd.f32 %v4532, %v4654
    %v4679 = vadd.f32 %v4533, %v4656
    %v4680 = vadd.f32 %v4534, %v4659
    %v4681 = vadd.f32 %v4535, %v4661
    %v4682 = vadd.f32 %v4536, %v4664
    %v4683 = vadd.f32 %v4537, %v4666
    %v4684 = vld [vmem:[%s4116 + $0x8] sm:$0xff]
    %v4685 = vld [vmem:[%s4116 + $0x20] sm:$0xff]
    %v4686 = vld [vmem:[%s4116 + $0x38] sm:$0xff]
    %v4687 = vld [vmem:[%s4116 + $0x50] sm:$0xff]
    %v4688 = vld [vmem:[%s4116 + $0x68] sm:$0xff]
    %v4689 = vld [vmem:[%s4116 + $0x80] sm:$0xff]
    %v4690 = vld [vmem:[%s4116 + $0x98] sm:$0xff]
    %v4691 = vld [vmem:[%s4116 + $0xb0] sm:$0xff]
    %v4692 = vld [vmem:[%s4116 + $0xf8] sm:$0xff]
    %v4693 = vld [vmem:[%s4116 + $0x110] sm:$0xff]
    %v4694 = vld [vmem:[%s4116 + $0x128] sm:$0xff]
    %v4695 = vld [vmem:[%s4116 + $0x140] sm:$0xff]
    %v4696 = vld [vmem:[%s4116 + $0x158] sm:$0xff]
    %v4697 = vld [vmem:[%s4116 + $0x170] sm:$0xff]
    %v4698 = vld [vmem:[%s4116 + $0x188] sm:$0xff]
    %v4699 = vld [vmem:[%s4116 + $0x1a0] sm:$0xff]
    %v4700 = vpack.c.bf16 %v4685, %v4684
    %v4701 = vpack.c.bf16 %v4687, %v4686
    %v4702 = vpack.c.bf16 %v4689, %v4688
    %v4703 = vpack.c.bf16 %v4691, %v4690
    %v4704 = vpack.c.bf16 %v4693, %v4692
    %v4705 = vpack.c.bf16 %v4695, %v4694
    %v4706 = vpack.c.bf16 %v4697, %v4696
    %v4707 = vpack.c.bf16 %v4699, %v4698
    %s4708 = scalar_lea.vmem %s3, 128
    %v4709 = vld [vmem:[%s4708] sm:$0xf]
    %v4710 = vld [vmem:[%s4708 + $0x4] sm:$0xf]
    %v4711 = vld [vmem:[%s4708 + $0x8] sm:$0xf]
    %v4712 = vld [vmem:[%s4708 + $0xc] sm:$0xf]
    %v4713 = vld [vmem:[%s4708 + $0x10] sm:$0xf]
    %v4714 = vld [vmem:[%s4708 + $0x14] sm:$0xf]
    %v4715 = vld [vmem:[%s4708 + $0x18] sm:$0xf]
    %v4716 = vld [vmem:[%s4708 + $0x1c] sm:$0xf]
    %v4725 = vunpack.c.l.b16 %v4709
    %v4726 = vunpack.c.l.b16 %v4710
    %v4727 = vunpack.c.l.b16 %v4711
    %v4728 = vunpack.c.l.b16 %v4712
    %v4729 = vunpack.c.l.b16 %v4713
    %v4730 = vunpack.c.l.b16 %v4714
    %v4731 = vunpack.c.l.b16 %v4715
    %v4732 = vunpack.c.l.b16 %v4716
    %v4733 = vpack.c.b16 %v4726, %v4725
    %v4734 = vpack.c.b16 %v4728, %v4727
    %v4735 = vpack.c.b16 %v4730, %v4729
    %v4736 = vpack.c.b16 %v4732, %v4731
    %v4742 = vsel %vm4054, %v4700, 0
    %v4745 = vsel %vm4054, %v4701, 0
    %v4748 = vsel %vm4054, %v4702, 0
    %v4751 = vsel %vm4054, %v4703, 0
    %v4754 = vsel %vm4054, %v4704, 0
    %v4757 = vsel %vm4054, %v4705, 0
    %v4760 = vsel %vm4054, %v4706, 0
    %v4763 = vsel %vm4054, %v4707, 0
    %4765 = vmatpush.bf16.msra.mxu0 0
    %4766 = vmatpush.bf16.msra.mxu0 0
    %4767 = vmatpush.bf16.msra.mxu0 0
    %4768 = vmatpush.bf16.msra.mxu0 0
    %4769 = vmatpush.bf16.msra.mxu0 %v4736
    %4770 = vmatpush.bf16.msra.mxu0 %v4735
    %4771 = vmatpush.bf16.msra.mxu0 %v4734
    %4772 = vmatpush.bf16.msra.mxu0 %v4733
    %4773 = vmatmul.bf16.gmra.mxu0 %v4742
    %v4774 = vpop.f32.mrf.mxu0
    %v4775 = vadd.f32 0.0, %v4774
    %v4776 = vpop.f32.mrf.mxu0
    %v4777 = vadd.f32 0.0, %v4776
    %4778 = vmatmul.bf16.gmra.mxu0 %v4745
    %v4779 = vpop.f32.mrf.mxu0
    %v4780 = vadd.f32 0.0, %v4779
    %v4781 = vpop.f32.mrf.mxu0
    %v4782 = vadd.f32 0.0, %v4781
    %4783 = vmatmul.bf16.gmra.mxu0 %v4748
    %v4784 = vpop.f32.mrf.mxu0
    %v4785 = vadd.f32 0.0, %v4784
    %v4786 = vpop.f32.mrf.mxu0
    %v4787 = vadd.f32 0.0, %v4786
    %4788 = vmatmul.bf16.gmra.mxu0 %v4751
    %v4789 = vpop.f32.mrf.mxu0
    %v4790 = vadd.f32 0.0, %v4789
    %v4791 = vpop.f32.mrf.mxu0
    %v4792 = vadd.f32 0.0, %v4791
    %4793 = vmatmul.bf16.gmra.mxu0 %v4754
    %v4794 = vpop.f32.mrf.mxu0
    %v4795 = vadd.f32 0.0, %v4794
    %v4796 = vpop.f32.mrf.mxu0
    %v4797 = vadd.f32 0.0, %v4796
    %4798 = vmatmul.bf16.gmra.mxu0 %v4757
    %v4799 = vpop.f32.mrf.mxu0
    %v4800 = vadd.f32 0.0, %v4799
    %v4801 = vpop.f32.mrf.mxu0
    %v4802 = vadd.f32 0.0, %v4801
    %4803 = vmatmul.bf16.gmra.mxu0 %v4760
    %v4804 = vpop.f32.mrf.mxu0
    %v4805 = vadd.f32 0.0, %v4804
    %v4806 = vpop.f32.mrf.mxu0
    %v4807 = vadd.f32 0.0, %v4806
    %4808 = vmatmul.bf16.gmra.mxu0 %v4763
    %v4809 = vpop.f32.mrf.mxu0
    %v4810 = vadd.f32 0.0, %v4809
    %v4811 = vpop.f32.mrf.mxu0
    %v4812 = vadd.f32 0.0, %v4811
    %4813 = vdwg.mxu0
    %v4814 = vadd.f32 %v4668, %v4775
    %v4815 = vadd.f32 %v4669, %v4777
    %v4816 = vadd.f32 %v4670, %v4780
    %v4817 = vadd.f32 %v4671, %v4782
    %v4818 = vadd.f32 %v4672, %v4785
    %v4819 = vadd.f32 %v4673, %v4787
    %v4820 = vadd.f32 %v4674, %v4790
    %v4821 = vadd.f32 %v4675, %v4792
    %v4822 = vadd.f32 %v4676, %v4795
    %v4823 = vadd.f32 %v4677, %v4797
    %v4824 = vadd.f32 %v4678, %v4800
    %v4825 = vadd.f32 %v4679, %v4802
    %v4826 = vadd.f32 %v4680, %v4805
    %v4827 = vadd.f32 %v4681, %v4807
    %v4828 = vadd.f32 %v4682, %v4810
    %v4829 = vadd.f32 %v4683, %v4812
    %v4830 = vld [vmem:[%s4116 + $0x9] sm:$0xff]
    %v4831 = vld [vmem:[%s4116 + $0x21] sm:$0xff]
    %v4832 = vld [vmem:[%s4116 + $0x39] sm:$0xff]
    %v4833 = vld [vmem:[%s4116 + $0x51] sm:$0xff]
    %v4834 = vld [vmem:[%s4116 + $0x69] sm:$0xff]
    %v4835 = vld [vmem:[%s4116 + $0x81] sm:$0xff]
    %v4836 = vld [vmem:[%s4116 + $0x99] sm:$0xff]
    %v4837 = vld [vmem:[%s4116 + $0xb1] sm:$0xff]
    %v4838 = vld [vmem:[%s4116 + $0xf9] sm:$0xff]
    %v4839 = vld [vmem:[%s4116 + $0x111] sm:$0xff]
    %v4840 = vld [vmem:[%s4116 + $0x129] sm:$0xff]
    %v4841 = vld [vmem:[%s4116 + $0x141] sm:$0xff]
    %v4842 = vld [vmem:[%s4116 + $0x159] sm:$0xff]
    %v4843 = vld [vmem:[%s4116 + $0x171] sm:$0xff]
    %v4844 = vld [vmem:[%s4116 + $0x189] sm:$0xff]
    %v4845 = vld [vmem:[%s4116 + $0x1a1] sm:$0xff]
    %v4846 = vpack.c.bf16 %v4831, %v4830
    %v4847 = vpack.c.bf16 %v4833, %v4832
    %v4848 = vpack.c.bf16 %v4835, %v4834
    %v4849 = vpack.c.bf16 %v4837, %v4836
    %v4850 = vpack.c.bf16 %v4839, %v4838
    %v4851 = vpack.c.bf16 %v4841, %v4840
    %v4852 = vpack.c.bf16 %v4843, %v4842
    %v4853 = vpack.c.bf16 %v4845, %v4844
    %s4854 = scalar_lea.vmem %s3, 160
    %v4855 = vld [vmem:[%s4854] sm:$0xf]
    %v4856 = vld [vmem:[%s4854 + $0x4] sm:$0xf]
    %v4857 = vld [vmem:[%s4854 + $0x8] sm:$0xf]
    %v4858 = vld [vmem:[%s4854 + $0xc] sm:$0xf]
    %v4859 = vld [vmem:[%s4854 + $0x10] sm:$0xf]
    %v4860 = vld [vmem:[%s4854 + $0x14] sm:$0xf]
    %v4861 = vld [vmem:[%s4854 + $0x18] sm:$0xf]
    %v4862 = vld [vmem:[%s4854 + $0x1c] sm:$0xf]
    %v4871 = vunpack.c.l.b16 %v4855
    %v4872 = vunpack.c.l.b16 %v4856
    %v4873 = vunpack.c.l.b16 %v4857
    %v4874 = vunpack.c.l.b16 %v4858
    %v4875 = vunpack.c.l.b16 %v4859
    %v4876 = vunpack.c.l.b16 %v4860
    %v4877 = vunpack.c.l.b16 %v4861
    %v4878 = vunpack.c.l.b16 %v4862
    %v4879 = vpack.c.b16 %v4872, %v4871
    %v4880 = vpack.c.b16 %v4874, %v4873
    %v4881 = vpack.c.b16 %v4876, %v4875
    %v4882 = vpack.c.b16 %v4878, %v4877
    %v4888 = vsel %vm4054, %v4846, 0
    %v4891 = vsel %vm4054, %v4847, 0
    %v4894 = vsel %vm4054, %v4848, 0
    %v4897 = vsel %vm4054, %v4849, 0
    %v4900 = vsel %vm4054, %v4850, 0
    %v4903 = vsel %vm4054, %v4851, 0
    %v4906 = vsel %vm4054, %v4852, 0
    %v4909 = vsel %vm4054, %v4853, 0
    %4911 = vmatpush.bf16.msra.mxu0 0
    %4912 = vmatpush.bf16.msra.mxu0 0
    %4913 = vmatpush.bf16.msra.mxu0 0
    %4914 = vmatpush.bf16.msra.mxu0 0
    %4915 = vmatpush.bf16.msra.mxu0 %v4882
    %4916 = vmatpush.bf16.msra.mxu0 %v4881
    %4917 = vmatpush.bf16.msra.mxu0 %v4880
    %4918 = vmatpush.bf16.msra.mxu0 %v4879
    %4919 = vmatmul.bf16.gmra.mxu0 %v4888
    %v4920 = vpop.f32.mrf.mxu0
    %v4921 = vadd.f32 0.0, %v4920
    %v4922 = vpop.f32.mrf.mxu0
    %v4923 = vadd.f32 0.0, %v4922
    %4924 = vmatmul.bf16.gmra.mxu0 %v4891
    %v4925 = vpop.f32.mrf.mxu0
    %v4926 = vadd.f32 0.0, %v4925
    %v4927 = vpop.f32.mrf.mxu0
    %v4928 = vadd.f32 0.0, %v4927
    %4929 = vmatmul.bf16.gmra.mxu0 %v4894
    %v4930 = vpop.f32.mrf.mxu0
    %v4931 = vadd.f32 0.0, %v4930
    %v4932 = vpop.f32.mrf.mxu0
    %v4933 = vadd.f32 0.0, %v4932
    %4934 = vmatmul.bf16.gmra.mxu0 %v4897
    %v4935 = vpop.f32.mrf.mxu0
    %v4936 = vadd.f32 0.0, %v4935
    %v4937 = vpop.f32.mrf.mxu0
    %v4938 = vadd.f32 0.0, %v4937
    %4939 = vmatmul.bf16.gmra.mxu0 %v4900
    %v4940 = vpop.f32.mrf.mxu0
    %v4941 = vadd.f32 0.0, %v4940
    %v4942 = vpop.f32.mrf.mxu0
    %v4943 = vadd.f32 0.0, %v4942
    %4944 = vmatmul.bf16.gmra.mxu0 %v4903
    %v4945 = vpop.f32.mrf.mxu0
    %v4946 = vadd.f32 0.0, %v4945
    %v4947 = vpop.f32.mrf.mxu0
    %v4948 = vadd.f32 0.0, %v4947
    %4949 = vmatmul.bf16.gmra.mxu0 %v4906
    %v4950 = vpop.f32.mrf.mxu0
    %v4951 = vadd.f32 0.0, %v4950
    %v4952 = vpop.f32.mrf.mxu0
    %v4953 = vadd.f32 0.0, %v4952
    %4954 = vmatmul.bf16.gmra.mxu0 %v4909
    %v4955 = vpop.f32.mrf.mxu0
    %v4956 = vadd.f32 0.0, %v4955
    %v4957 = vpop.f32.mrf.mxu0
    %v4958 = vadd.f32 0.0, %v4957
    %4959 = vdwg.mxu0
    %v4960 = vadd.f32 %v4814, %v4921
    %v4961 = vadd.f32 %v4815, %v4923
    %v4962 = vadd.f32 %v4816, %v4926
    %v4963 = vadd.f32 %v4817, %v4928
    %v4964 = vadd.f32 %v4818, %v4931
    %v4965 = vadd.f32 %v4819, %v4933
    %v4966 = vadd.f32 %v4820, %v4936
    %v4967 = vadd.f32 %v4821, %v4938
    %v4968 = vadd.f32 %v4822, %v4941
    %v4969 = vadd.f32 %v4823, %v4943
    %v4970 = vadd.f32 %v4824, %v4946
    %v4971 = vadd.f32 %v4825, %v4948
    %v4972 = vadd.f32 %v4826, %v4951
    %v4973 = vadd.f32 %v4827, %v4953
    %v4974 = vadd.f32 %v4828, %v4956
    %v4975 = vadd.f32 %v4829, %v4958
    %s4976 = scalar_lea.vmem [#allocation2], 48
    %v4977 = vld [vmem:[%s4976 + $0x7] sm:$0xff]
    %v4978 = vld [vmem:[%s4976 + $0x1f] sm:$0xff]
    %v4979 = vld [vmem:[%s4976 + $0x37] sm:$0xff]
    %v4980 = vld [vmem:[%s4976 + $0x4f] sm:$0xff]
    %v4981 = vld [vmem:[%s4976 + $0x67] sm:$0xff]
    %v4982 = vld [vmem:[%s4976 + $0x7f] sm:$0xff]
    %v4983 = vld [vmem:[%s4976 + $0x97] sm:$0xff]
    %v4984 = vld [vmem:[%s4976 + $0xaf] sm:$0xff]
    %v4985 = vld [vmem:[%s4976 + $0xf7] sm:$0xff]
    %v4986 = vld [vmem:[%s4976 + $0x10f] sm:$0xff]
    %v4987 = vld [vmem:[%s4976 + $0x127] sm:$0xff]
    %v4988 = vld [vmem:[%s4976 + $0x13f] sm:$0xff]
    %v4989 = vld [vmem:[%s4976 + $0x157] sm:$0xff]
    %v4990 = vld [vmem:[%s4976 + $0x16f] sm:$0xff]
    %v4991 = vld [vmem:[%s4976 + $0x187] sm:$0xff]
    %v4992 = vld [vmem:[%s4976 + $0x19f] sm:$0xff]
    %v4993 = vpack.c.bf16 %v4978, %v4977
    %v4994 = vpack.c.bf16 %v4980, %v4979
    %v4995 = vpack.c.bf16 %v4982, %v4981
    %v4996 = vpack.c.bf16 %v4984, %v4983
    %v4997 = vpack.c.bf16 %v4986, %v4985
    %v4998 = vpack.c.bf16 %v4988, %v4987
    %v4999 = vpack.c.bf16 %v4990, %v4989
    %v5000 = vpack.c.bf16 %v4992, %v4991
    %s5001 = scalar_lea.vmem %s3, 192
    %v5002 = vld [vmem:[%s5001] sm:$0xf]
    %v5003 = vld [vmem:[%s5001 + $0x4] sm:$0xf]
    %v5004 = vld [vmem:[%s5001 + $0x8] sm:$0xf]
    %v5005 = vld [vmem:[%s5001 + $0xc] sm:$0xf]
    %v5006 = vld [vmem:[%s5001 + $0x10] sm:$0xf]
    %v5007 = vld [vmem:[%s5001 + $0x14] sm:$0xf]
    %v5008 = vld [vmem:[%s5001 + $0x18] sm:$0xf]
    %v5009 = vld [vmem:[%s5001 + $0x1c] sm:$0xf]
    %v5018 = vunpack.c.l.b16 %v5002
    %v5019 = vunpack.c.l.b16 %v5003
    %v5020 = vunpack.c.l.b16 %v5004
    %v5021 = vunpack.c.l.b16 %v5005
    %v5022 = vunpack.c.l.b16 %v5006
    %v5023 = vunpack.c.l.b16 %v5007
    %v5024 = vunpack.c.l.b16 %v5008
    %v5025 = vunpack.c.l.b16 %v5009
    %v5026 = vpack.c.b16 %v5019, %v5018
    %v5027 = vpack.c.b16 %v5021, %v5020
    %v5028 = vpack.c.b16 %v5023, %v5022
    %v5029 = vpack.c.b16 %v5025, %v5024
    %v5035 = vsel %vm4054, %v4993, 0
    %v5038 = vsel %vm4054, %v4994, 0
    %v5041 = vsel %vm4054, %v4995, 0
    %v5044 = vsel %vm4054, %v4996, 0
    %v5047 = vsel %vm4054, %v4997, 0
    %v5050 = vsel %vm4054, %v4998, 0
    %v5053 = vsel %vm4054, %v4999, 0
    %v5056 = vsel %vm4054, %v5000, 0
    %5058 = vmatpush.bf16.msra.mxu0 0
    %5059 = vmatpush.bf16.msra.mxu0 0
    %5060 = vmatpush.bf16.msra.mxu0 0
    %5061 = vmatpush.bf16.msra.mxu0 0
    %5062 = vmatpush.bf16.msra.mxu0 %v5029
    %5063 = vmatpush.bf16.msra.mxu0 %v5028
    %5064 = vmatpush.bf16.msra.mxu0 %v5027
    %5065 = vmatpush.bf16.msra.mxu0 %v5026
    %5066 = vmatmul.bf16.gmra.mxu0 %v5035
    %v5067 = vpop.f32.mrf.mxu0
    %v5068 = vadd.f32 0.0, %v5067
    %v5069 = vpop.f32.mrf.mxu0
    %v5070 = vadd.f32 0.0, %v5069
    %5071 = vmatmul.bf16.gmra.mxu0 %v5038
    %v5072 = vpop.f32.mrf.mxu0
    %v5073 = vadd.f32 0.0, %v5072
    %v5074 = vpop.f32.mrf.mxu0
    %v5075 = vadd.f32 0.0, %v5074
    %5076 = vmatmul.bf16.gmra.mxu0 %v5041
    %v5077 = vpop.f32.mrf.mxu0
    %v5078 = vadd.f32 0.0, %v5077
    %v5079 = vpop.f32.mrf.mxu0
    %v5080 = vadd.f32 0.0, %v5079
    %5081 = vmatmul.bf16.gmra.mxu0 %v5044
    %v5082 = vpop.f32.mrf.mxu0
    %v5083 = vadd.f32 0.0, %v5082
    %v5084 = vpop.f32.mrf.mxu0
    %v5085 = vadd.f32 0.0, %v5084
    %5086 = vmatmul.bf16.gmra.mxu0 %v5047
    %v5087 = vpop.f32.mrf.mxu0
    %v5088 = vadd.f32 0.0, %v5087
    %v5089 = vpop.f32.mrf.mxu0
    %v5090 = vadd.f32 0.0, %v5089
    %5091 = vmatmul.bf16.gmra.mxu0 %v5050
    %v5092 = vpop.f32.mrf.mxu0
    %v5093 = vadd.f32 0.0, %v5092
    %v5094 = vpop.f32.mrf.mxu0
    %v5095 = vadd.f32 0.0, %v5094
    %5096 = vmatmul.bf16.gmra.mxu0 %v5053
    %v5097 = vpop.f32.mrf.mxu0
    %v5098 = vadd.f32 0.0, %v5097
    %v5099 = vpop.f32.mrf.mxu0
    %v5100 = vadd.f32 0.0, %v5099
    %5101 = vmatmul.bf16.gmra.mxu0 %v5056
    %v5102 = vpop.f32.mrf.mxu0
    %v5103 = vadd.f32 0.0, %v5102
    %v5104 = vpop.f32.mrf.mxu0
    %v5105 = vadd.f32 0.0, %v5104
    %5106 = vdwg.mxu0
    %v5107 = vadd.f32 %v4960, %v5068
    %v5108 = vadd.f32 %v4961, %v5070
    %v5109 = vadd.f32 %v4962, %v5073
    %v5110 = vadd.f32 %v4963, %v5075
    %v5111 = vadd.f32 %v4964, %v5078
    %v5112 = vadd.f32 %v4965, %v5080
    %v5113 = vadd.f32 %v4966, %v5083
    %v5114 = vadd.f32 %v4967, %v5085
    %v5115 = vadd.f32 %v4968, %v5088
    %v5116 = vadd.f32 %v4969, %v5090
    %v5117 = vadd.f32 %v4970, %v5093
    %v5118 = vadd.f32 %v4971, %v5095
    %v5119 = vadd.f32 %v4972, %v5098
    %v5120 = vadd.f32 %v4973, %v5100
    %v5121 = vadd.f32 %v4974, %v5103
    %v5122 = vadd.f32 %v4975, %v5105
    %v5123 = vld [vmem:[%s4976 + $0x8] sm:$0xff]
    %v5124 = vld [vmem:[%s4976 + $0x20] sm:$0xff]
    %v5125 = vld [vmem:[%s4976 + $0x38] sm:$0xff]
    %v5126 = vld [vmem:[%s4976 + $0x50] sm:$0xff]
    %v5127 = vld [vmem:[%s4976 + $0x68] sm:$0xff]
    %v5128 = vld [vmem:[%s4976 + $0x80] sm:$0xff]
    %v5129 = vld [vmem:[%s4976 + $0x98] sm:$0xff]
    %v5130 = vld [vmem:[%s4976 + $0xb0] sm:$0xff]
    %v5131 = vld [vmem:[%s4976 + $0xf8] sm:$0xff]
    %v5132 = vld [vmem:[%s4976 + $0x110] sm:$0xff]
    %v5133 = vld [vmem:[%s4976 + $0x128] sm:$0xff]
    %v5134 = vld [vmem:[%s4976 + $0x140] sm:$0xff]
    %v5135 = vld [vmem:[%s4976 + $0x158] sm:$0xff]
    %v5136 = vld [vmem:[%s4976 + $0x170] sm:$0xff]
    %v5137 = vld [vmem:[%s4976 + $0x188] sm:$0xff]
    %v5138 = vld [vmem:[%s4976 + $0x1a0] sm:$0xff]
    %v5139 = vpack.c.bf16 %v5124, %v5123
    %v5140 = vpack.c.bf16 %v5126, %v5125
    %v5141 = vpack.c.bf16 %v5128, %v5127
    %v5142 = vpack.c.bf16 %v5130, %v5129
    %v5143 = vpack.c.bf16 %v5132, %v5131
    %v5144 = vpack.c.bf16 %v5134, %v5133
    %v5145 = vpack.c.bf16 %v5136, %v5135
    %v5146 = vpack.c.bf16 %v5138, %v5137
    %s5147 = scalar_lea.vmem %s3, 224
    %v5148 = vld [vmem:[%s5147] sm:$0xf]
    %v5149 = vld [vmem:[%s5147 + $0x4] sm:$0xf]
    %v5150 = vld [vmem:[%s5147 + $0x8] sm:$0xf]
    %v5151 = vld [vmem:[%s5147 + $0xc] sm:$0xf]
    %v5152 = vld [vmem:[%s5147 + $0x10] sm:$0xf]
    %v5153 = vld [vmem:[%s5147 + $0x14] sm:$0xf]
    %v5154 = vld [vmem:[%s5147 + $0x18] sm:$0xf]
    %v5155 = vld [vmem:[%s5147 + $0x1c] sm:$0xf]
    %v5164 = vunpack.c.l.b16 %v5148
    %v5165 = vunpack.c.l.b16 %v5149
    %v5166 = vunpack.c.l.b16 %v5150
    %v5167 = vunpack.c.l.b16 %v5151
    %v5168 = vunpack.c.l.b16 %v5152
    %v5169 = vunpack.c.l.b16 %v5153
    %v5170 = vunpack.c.l.b16 %v5154
    %v5171 = vunpack.c.l.b16 %v5155
    %v5172 = vpack.c.b16 %v5165, %v5164
    %v5173 = vpack.c.b16 %v5167, %v5166
    %v5174 = vpack.c.b16 %v5169, %v5168
    %v5175 = vpack.c.b16 %v5171, %v5170
    %v5181 = vsel %vm4054, %v5139, 0
    %v5184 = vsel %vm4054, %v5140, 0
    %v5187 = vsel %vm4054, %v5141, 0
    %v5190 = vsel %vm4054, %v5142, 0
    %v5193 = vsel %vm4054, %v5143, 0
    %v5196 = vsel %vm4054, %v5144, 0
    %v5199 = vsel %vm4054, %v5145, 0
    %v5202 = vsel %vm4054, %v5146, 0
    %5204 = vmatpush.bf16.msra.mxu0 0
    %5205 = vmatpush.bf16.msra.mxu0 0
    %5206 = vmatpush.bf16.msra.mxu0 0
    %5207 = vmatpush.bf16.msra.mxu0 0
    %5208 = vmatpush.bf16.msra.mxu0 %v5175
    %5209 = vmatpush.bf16.msra.mxu0 %v5174
    %5210 = vmatpush.bf16.msra.mxu0 %v5173
    %5211 = vmatpush.bf16.msra.mxu0 %v5172
    %5212 = vmatmul.bf16.gmra.mxu0 %v5181
    %v5213 = vpop.f32.mrf.mxu0
    %v5214 = vadd.f32 0.0, %v5213
    %v5215 = vpop.f32.mrf.mxu0
    %v5216 = vadd.f32 0.0, %v5215
    %5217 = vmatmul.bf16.gmra.mxu0 %v5184
    %v5218 = vpop.f32.mrf.mxu0
    %v5219 = vadd.f32 0.0, %v5218
    %v5220 = vpop.f32.mrf.mxu0
    %v5221 = vadd.f32 0.0, %v5220
    %5222 = vmatmul.bf16.gmra.mxu0 %v5187
    %v5223 = vpop.f32.mrf.mxu0
    %v5224 = vadd.f32 0.0, %v5223
    %v5225 = vpop.f32.mrf.mxu0
    %v5226 = vadd.f32 0.0, %v5225
    %5227 = vmatmul.bf16.gmra.mxu0 %v5190
    %v5228 = vpop.f32.mrf.mxu0
    %v5229 = vadd.f32 0.0, %v5228
    %v5230 = vpop.f32.mrf.mxu0
    %v5231 = vadd.f32 0.0, %v5230
    %5232 = vmatmul.bf16.gmra.mxu0 %v5193
    %v5233 = vpop.f32.mrf.mxu0
    %v5234 = vadd.f32 0.0, %v5233
    %v5235 = vpop.f32.mrf.mxu0
    %v5236 = vadd.f32 0.0, %v5235
    %5237 = vmatmul.bf16.gmra.mxu0 %v5196
    %v5238 = vpop.f32.mrf.mxu0
    %v5239 = vadd.f32 0.0, %v5238
    %v5240 = vpop.f32.mrf.mxu0
    %v5241 = vadd.f32 0.0, %v5240
    %5242 = vmatmul.bf16.gmra.mxu0 %v5199
    %v5243 = vpop.f32.mrf.mxu0
    %v5244 = vadd.f32 0.0, %v5243
    %v5245 = vpop.f32.mrf.mxu0
    %v5246 = vadd.f32 0.0, %v5245
    %5247 = vmatmul.bf16.gmra.mxu0 %v5202
    %v5248 = vpop.f32.mrf.mxu0
    %v5249 = vadd.f32 0.0, %v5248
    %v5250 = vpop.f32.mrf.mxu0
    %v5251 = vadd.f32 0.0, %v5250
    %5252 = vdwg.mxu0
    %v5253 = vadd.f32 %v5107, %v5214
    %v5254 = vadd.f32 %v5108, %v5216
    %v5255 = vadd.f32 %v5109, %v5219
    %v5256 = vadd.f32 %v5110, %v5221
    %v5257 = vadd.f32 %v5111, %v5224
    %v5258 = vadd.f32 %v5112, %v5226
    %v5259 = vadd.f32 %v5113, %v5229
    %v5260 = vadd.f32 %v5114, %v5231
    %v5261 = vadd.f32 %v5115, %v5234
    %v5262 = vadd.f32 %v5116, %v5236
    %v5263 = vadd.f32 %v5117, %v5239
    %v5264 = vadd.f32 %v5118, %v5241
    %v5265 = vadd.f32 %v5119, %v5244
    %v5266 = vadd.f32 %v5120, %v5246
    %v5267 = vadd.f32 %v5121, %v5249
    %v5268 = vadd.f32 %v5122, %v5251
    %v5269 = vld [vmem:[%s4976 + $0x9] sm:$0xff]
    %v5270 = vld [vmem:[%s4976 + $0x21] sm:$0xff]
    %v5271 = vld [vmem:[%s4976 + $0x39] sm:$0xff]
    %v5272 = vld [vmem:[%s4976 + $0x51] sm:$0xff]
    %v5273 = vld [vmem:[%s4976 + $0x69] sm:$0xff]
    %v5274 = vld [vmem:[%s4976 + $0x81] sm:$0xff]
    %v5275 = vld [vmem:[%s4976 + $0x99] sm:$0xff]
    %v5276 = vld [vmem:[%s4976 + $0xb1] sm:$0xff]
    %v5277 = vld [vmem:[%s4976 + $0xf9] sm:$0xff]
    %v5278 = vld [vmem:[%s4976 + $0x111] sm:$0xff]
    %v5279 = vld [vmem:[%s4976 + $0x129] sm:$0xff]
    %v5280 = vld [vmem:[%s4976 + $0x141] sm:$0xff]
    %v5281 = vld [vmem:[%s4976 + $0x159] sm:$0xff]
    %v5282 = vld [vmem:[%s4976 + $0x171] sm:$0xff]
    %v5283 = vld [vmem:[%s4976 + $0x189] sm:$0xff]
    %v5284 = vld [vmem:[%s4976 + $0x1a1] sm:$0xff]
    %v5285 = vpack.c.bf16 %v5270, %v5269
    %v5286 = vpack.c.bf16 %v5272, %v5271
    %v5287 = vpack.c.bf16 %v5274, %v5273
    %v5288 = vpack.c.bf16 %v5276, %v5275
    %v5289 = vpack.c.bf16 %v5278, %v5277
    %v5290 = vpack.c.bf16 %v5280, %v5279
    %v5291 = vpack.c.bf16 %v5282, %v5281
    %v5292 = vpack.c.bf16 %v5284, %v5283
    %s5293 = scalar_lea.vmem %s3, 256
    %v5294 = vld [vmem:[%s5293] sm:$0xf]
    %v5295 = vld [vmem:[%s5293 + $0x4] sm:$0xf]
    %v5296 = vld [vmem:[%s5293 + $0x8] sm:$0xf]
    %v5297 = vld [vmem:[%s5293 + $0xc] sm:$0xf]
    %v5298 = vld [vmem:[%s5293 + $0x10] sm:$0xf]
    %v5299 = vld [vmem:[%s5293 + $0x14] sm:$0xf]
    %v5300 = vld [vmem:[%s5293 + $0x18] sm:$0xf]
    %v5301 = vld [vmem:[%s5293 + $0x1c] sm:$0xf]
    %v5310 = vunpack.c.l.b16 %v5294
    %v5311 = vunpack.c.l.b16 %v5295
    %v5312 = vunpack.c.l.b16 %v5296
    %v5313 = vunpack.c.l.b16 %v5297
    %v5314 = vunpack.c.l.b16 %v5298
    %v5315 = vunpack.c.l.b16 %v5299
    %v5316 = vunpack.c.l.b16 %v5300
    %v5317 = vunpack.c.l.b16 %v5301
    %v5318 = vpack.c.b16 %v5311, %v5310
    %v5319 = vpack.c.b16 %v5313, %v5312
    %v5320 = vpack.c.b16 %v5315, %v5314
    %v5321 = vpack.c.b16 %v5317, %v5316
    %v5327 = vsel %vm4054, %v5285, 0
    %v5330 = vsel %vm4054, %v5286, 0
    %v5333 = vsel %vm4054, %v5287, 0
    %v5336 = vsel %vm4054, %v5288, 0
    %v5339 = vsel %vm4054, %v5289, 0
    %v5342 = vsel %vm4054, %v5290, 0
    %v5345 = vsel %vm4054, %v5291, 0
    %v5348 = vsel %vm4054, %v5292, 0
    %5350 = vmatpush.bf16.msra.mxu0 0
    %5351 = vmatpush.bf16.msra.mxu0 0
    %5352 = vmatpush.bf16.msra.mxu0 0
    %5353 = vmatpush.bf16.msra.mxu0 0
    %5354 = vmatpush.bf16.msra.mxu0 %v5321
    %5355 = vmatpush.bf16.msra.mxu0 %v5320
    %5356 = vmatpush.bf16.msra.mxu0 %v5319
    %5357 = vmatpush.bf16.msra.mxu0 %v5318
    %5358 = vmatmul.bf16.gmra.mxu0 %v5327
    %v5359 = vpop.f32.mrf.mxu0
    %v5360 = vadd.f32 0.0, %v5359
    %v5361 = vpop.f32.mrf.mxu0
    %v5362 = vadd.f32 0.0, %v5361
    %5363 = vmatmul.bf16.gmra.mxu0 %v5330
    %v5364 = vpop.f32.mrf.mxu0
    %v5365 = vadd.f32 0.0, %v5364
    %v5366 = vpop.f32.mrf.mxu0
    %v5367 = vadd.f32 0.0, %v5366
    %5368 = vmatmul.bf16.gmra.mxu0 %v5333
    %v5369 = vpop.f32.mrf.mxu0
    %v5370 = vadd.f32 0.0, %v5369
    %v5371 = vpop.f32.mrf.mxu0
    %v5372 = vadd.f32 0.0, %v5371
    %5373 = vmatmul.bf16.gmra.mxu0 %v5336
    %v5374 = vpop.f32.mrf.mxu0
    %v5375 = vadd.f32 0.0, %v5374
    %v5376 = vpop.f32.mrf.mxu0
    %v5377 = vadd.f32 0.0, %v5376
    %5378 = vmatmul.bf16.gmra.mxu0 %v5339
    %v5379 = vpop.f32.mrf.mxu0
    %v5380 = vadd.f32 0.0, %v5379
    %v5381 = vpop.f32.mrf.mxu0
    %v5382 = vadd.f32 0.0, %v5381
    %5383 = vmatmul.bf16.gmra.mxu0 %v5342
    %v5384 = vpop.f32.mrf.mxu0
    %v5385 = vadd.f32 0.0, %v5384
    %v5386 = vpop.f32.mrf.mxu0
    %v5387 = vadd.f32 0.0, %v5386
    %5388 = vmatmul.bf16.gmra.mxu0 %v5345
    %v5389 = vpop.f32.mrf.mxu0
    %v5390 = vadd.f32 0.0, %v5389
    %v5391 = vpop.f32.mrf.mxu0
    %v5392 = vadd.f32 0.0, %v5391
    %5393 = vmatmul.bf16.gmra.mxu0 %v5348
    %v5394 = vpop.f32.mrf.mxu0
    %v5395 = vadd.f32 0.0, %v5394
    %v5396 = vpop.f32.mrf.mxu0
    %v5397 = vadd.f32 0.0, %v5396
    %5398 = vdwg.mxu0
    %v5399 = vadd.f32 %v5253, %v5360
    %v5400 = vadd.f32 %v5254, %v5362
    %v5401 = vadd.f32 %v5255, %v5365
    %v5402 = vadd.f32 %v5256, %v5367
    %v5403 = vadd.f32 %v5257, %v5370
    %v5404 = vadd.f32 %v5258, %v5372
    %v5405 = vadd.f32 %v5259, %v5375
    %v5406 = vadd.f32 %v5260, %v5377
    %v5407 = vadd.f32 %v5261, %v5380
    %v5408 = vadd.f32 %v5262, %v5382
    %v5409 = vadd.f32 %v5263, %v5385
    %v5410 = vadd.f32 %v5264, %v5387
    %v5411 = vadd.f32 %v5265, %v5390
    %v5412 = vadd.f32 %v5266, %v5392
    %v5413 = vadd.f32 %v5267, %v5395
    %v5414 = vadd.f32 %v5268, %v5397
    %v5415 = vld [vmem:[#allocation6] sm:$0x1]
    %v5417 = vperm.slane %v5415, 0
    %v5419 = vadd.f32 %v5399, %v5417
    %v5420 = vadd.f32 %v5400, %v5417
    %v5421 = vadd.f32 %v5401, %v5417
    %v5422 = vadd.f32 %v5402, %v5417
    %v5423 = vadd.f32 %v5403, %v5417
    %v5424 = vadd.f32 %v5404, %v5417
    %v5425 = vadd.f32 %v5405, %v5417
    %v5426 = vadd.f32 %v5406, %v5417
    %v5427 = vadd.f32 %v5407, %v5417
    %v5428 = vadd.f32 %v5408, %v5417
    %v5429 = vadd.f32 %v5409, %v5417
    %v5430 = vadd.f32 %v5410, %v5417
    %v5431 = vadd.f32 %v5411, %v5417
    %v5432 = vadd.f32 %v5412, %v5417
    %v5433 = vadd.f32 %v5413, %v5417
    %v5434 = vadd.f32 %v5414, %v5417
    %v5435 = vmax.f32 %v5419, 0.0
    %v5436 = vmax.f32 %v5420, 0.0
    %v5437 = vmax.f32 %v5421, 0.0
    %v5438 = vmax.f32 %v5422, 0.0
    %v5439 = vmax.f32 %v5423, 0.0
    %v5440 = vmax.f32 %v5424, 0.0
    %v5441 = vmax.f32 %v5425, 0.0
    %v5442 = vmax.f32 %v5426, 0.0
    %v5443 = vmax.f32 %v5427, 0.0
    %v5444 = vmax.f32 %v5428, 0.0
    %v5445 = vmax.f32 %v5429, 0.0
    %v5446 = vmax.f32 %v5430, 0.0
    %v5447 = vmax.f32 %v5431, 0.0
    %v5448 = vmax.f32 %v5432, 0.0
    %v5449 = vmax.f32 %v5433, 0.0
    %v5450 = vmax.f32 %v5434, 0.0
    %vm5451 = vcmask 261120
    %5452 = vst.msk [vmem:[#allocation3] sm:$0xff] %vm5451, 0.0
    %5453 = vst.msk [vmem:[#allocation3 + $0x8] sm:$0xff] %vm5451, 0.0
    %vm5454 = vcmask 253952
    %5455 = vst.msk [vmem:[#allocation3 + $0x10] sm:$0x1] %vm5454, 0.0
    %5456 = vst.msk [vmem:[#allocation3 + $0x18] sm:$0xff] %vm5451, 0.0
    %5457 = vst.msk [vmem:[#allocation3 + $0x20] sm:$0xff] %vm5451, 0.0
    %5458 = vst.msk [vmem:[#allocation3 + $0x28] sm:$0x1] %vm5454, 0.0
    %5459 = vst.msk [vmem:[#allocation3 + $0x30] sm:$0xff] %vm5451, 0.0
    %5460 = vst.msk [vmem:[#allocation3 + $0x38] sm:$0xff] %vm5451, 0.0
    %5461 = vst.msk [vmem:[#allocation3 + $0x40] sm:$0x1] %vm5454, 0.0
    %5462 = vst.msk [vmem:[#allocation3 + $0x48] sm:$0xff] %vm5451, 0.0
    %5463 = vst.msk [vmem:[#allocation3 + $0x50] sm:$0xff] %vm5451, 0.0
    %5464 = vst.msk [vmem:[#allocation3 + $0x58] sm:$0x1] %vm5454, 0.0
    %5465 = vst.msk [vmem:[#allocation3 + $0x60] sm:$0xff] %vm5451, 0.0
    %5466 = vst.msk [vmem:[#allocation3 + $0x68] sm:$0xff] %vm5451, 0.0
    %5467 = vst.msk [vmem:[#allocation3 + $0x70] sm:$0x1] %vm5454, 0.0
    %5468 = vst.msk [vmem:[#allocation3 + $0x78] sm:$0xff] %vm5451, 0.0
    %5469 = vst.msk [vmem:[#allocation3 + $0x80] sm:$0xff] %vm5451, 0.0
    %5470 = vst.msk [vmem:[#allocation3 + $0x88] sm:$0x1] %vm5454, 0.0
    %5471 = vst.msk [vmem:[#allocation3 + $0x90] sm:$0xff] %vm5451, 0.0
    %5472 = vst.msk [vmem:[#allocation3 + $0x98] sm:$0xff] %vm5451, 0.0
    %5473 = vst.msk [vmem:[#allocation3 + $0xa0] sm:$0x1] %vm5454, 0.0
    %5474 = vst.msk [vmem:[#allocation3 + $0xa8] sm:$0xff] %vm5451, 0.0
    %5475 = vst.msk [vmem:[#allocation3 + $0xb0] sm:$0xff] %vm5451, 0.0
    %5476 = vst.msk [vmem:[#allocation3 + $0xb8] sm:$0x1] %vm5454, 0.0
    %5477 = vst.msk [vmem:[#allocation3 + $0xc0] sm:$0xff] %vm5451, 0.0
    %5478 = vst.msk [vmem:[#allocation3 + $0xc8] sm:$0xff] %vm5451, 0.0
    %5479 = vst.msk [vmem:[#allocation3 + $0xd0] sm:$0x1] %vm5454, 0.0
    %5480 = vst.msk [vmem:[#allocation3 + $0xd8] sm:$0xff] %vm5451, 0.0
    %5481 = vst.msk [vmem:[#allocation3 + $0xe0] sm:$0xff] %vm5451, 0.0
    %5482 = vst.msk [vmem:[#allocation3 + $0xe8] sm:$0x1] %vm5454, 0.0
    %5483 = vst.msk [vmem:[#allocation3 + $0xf0] sm:$0xff] %vm5451, 0.0
    %5484 = vst.msk [vmem:[#allocation3 + $0xf8] sm:$0xff] %vm5451, 0.0
    %5485 = vst.msk [vmem:[#allocation3 + $0x100] sm:$0x1] %vm5454, 0.0
    %5486 = vst.msk [vmem:[#allocation3 + $0x108] sm:$0xff] %vm5451, 0.0
    %5487 = vst.msk [vmem:[#allocation3 + $0x110] sm:$0xff] %vm5451, 0.0
    %5488 = vst.msk [vmem:[#allocation3 + $0x118] sm:$0x1] %vm5454, 0.0
    %5489 = vst.msk [vmem:[#allocation3 + $0x120] sm:$0xff] %vm5451, 0.0
    %5490 = vst.msk [vmem:[#allocation3 + $0x128] sm:$0xff] %vm5451, 0.0
    %5491 = vst.msk [vmem:[#allocation3 + $0x130] sm:$0x1] %vm5454, 0.0
    %5492 = vst.msk [vmem:[#allocation3 + $0x138] sm:$0xff] %vm5451, 0.0
    %5493 = vst.msk [vmem:[#allocation3 + $0x140] sm:$0xff] %vm5451, 0.0
    %5494 = vst.msk [vmem:[#allocation3 + $0x148] sm:$0x1] %vm5454, 0.0
    %5495 = vst.msk [vmem:[#allocation3 + $0x150] sm:$0xff] %vm5451, 0.0
    %5496 = vst.msk [vmem:[#allocation3 + $0x158] sm:$0xff] %vm5451, 0.0
    %5497 = vst.msk [vmem:[#allocation3 + $0x160] sm:$0x1] %vm5454, 0.0
    %5498 = vst.msk [vmem:[#allocation3 + $0x168] sm:$0xff] %vm5451, 0.0
    %5499 = vst.msk [vmem:[#allocation3 + $0x170] sm:$0xff] %vm5451, 0.0
    %5500 = vst.msk [vmem:[#allocation3 + $0x178] sm:$0x1] %vm5454, 0.0
    %5501 = vst.msk [vmem:[#allocation3 + $0x180] sm:$0xff] %vm5451, 0.0
    %5502 = vst.msk [vmem:[#allocation3 + $0x188] sm:$0xff] %vm5451, 0.0
    %5503 = vst.msk [vmem:[#allocation3 + $0x190] sm:$0x1] %vm5454, 0.0
    %5504 = vst.msk [vmem:[#allocation3 + $0x198] sm:$0xff] %vm5451, 0.0
    %5505 = vst.msk [vmem:[#allocation3 + $0x1a0] sm:$0xff] %vm5451, 0.0
    %5506 = vst.msk [vmem:[#allocation3 + $0x1a8] sm:$0x1] %vm5454, 0.0
    %5507 = vst.msk [vmem:[#allocation3 + $0x1b0] sm:$0xff] %vm5451, 0.0
    %5508 = vst.msk [vmem:[#allocation3 + $0x1b8] sm:$0xff] %vm5451, 0.0
    %5509 = vst.msk [vmem:[#allocation3 + $0x1c0] sm:$0x1] %vm5454, 0.0
    %5510 = vst.msk [vmem:[#allocation3 + $0x1c8] sm:$0xff] %vm5451, 0.0
    %5511 = vst.msk [vmem:[#allocation3 + $0x1d0] sm:$0xff] %vm5451, 0.0
    %5512 = vst.msk [vmem:[#allocation3 + $0x1d8] sm:$0x1] %vm5454, 0.0
    %s5513 = scalar_lea.vmem [#allocation3], 24
    %5514 = vst.msk [vmem:[%s5513 + $0x8] sm:$0xff] %vm5451, %v5435
    %5515 = vst.msk [vmem:[%s5513 + $0x20] sm:$0xff] %vm5451, %v5436
    %5516 = vst.msk [vmem:[%s5513 + $0x38] sm:$0xff] %vm5451, %v5437
    %5517 = vst.msk [vmem:[%s5513 + $0x50] sm:$0xff] %vm5451, %v5438
    %5518 = vst.msk [vmem:[%s5513 + $0x68] sm:$0xff] %vm5451, %v5439
    %5519 = vst.msk [vmem:[%s5513 + $0x80] sm:$0xff] %vm5451, %v5440
    %5520 = vst.msk [vmem:[%s5513 + $0x98] sm:$0xff] %vm5451, %v5441
    %5521 = vst.msk [vmem:[%s5513 + $0xb0] sm:$0xff] %vm5451, %v5442
    %5522 = vst.msk [vmem:[%s5513 + $0xf8] sm:$0xff] %vm5451, %v5443
    %5523 = vst.msk [vmem:[%s5513 + $0x110] sm:$0xff] %vm5451, %v5444
    %5524 = vst.msk [vmem:[%s5513 + $0x128] sm:$0xff] %vm5451, %v5445
    %5525 = vst.msk [vmem:[%s5513 + $0x140] sm:$0xff] %vm5451, %v5446
    %5526 = vst.msk [vmem:[%s5513 + $0x158] sm:$0xff] %vm5451, %v5447
    %5527 = vst.msk [vmem:[%s5513 + $0x170] sm:$0xff] %vm5451, %v5448
    %5528 = vst.msk [vmem:[%s5513 + $0x188] sm:$0xff] %vm5451, %v5449
    %5529 = vst.msk [vmem:[%s5513 + $0x1a0] sm:$0xff] %vm5451, %v5450
    %v5530 = vld [vmem:[#allocation3 + $0x7] sm:$0xff]
    %v5531 = vld [vmem:[#allocation3 + $0x1f] sm:$0xff]
    %v5532 = vld [vmem:[#allocation3 + $0x37] sm:$0xff]
    %v5533 = vld [vmem:[#allocation3 + $0x4f] sm:$0xff]
    %v5534 = vld [vmem:[#allocation3 + $0x67] sm:$0xff]
    %v5535 = vld [vmem:[#allocation3 + $0x7f] sm:$0xff]
    %v5536 = vld [vmem:[#allocation3 + $0x97] sm:$0xff]
    %v5537 = vld [vmem:[#allocation3 + $0xaf] sm:$0xff]
    %v5538 = vld [vmem:[#allocation3 + $0xf7] sm:$0xff]
    %v5539 = vld [vmem:[#allocation3 + $0x10f] sm:$0xff]
    %v5540 = vld [vmem:[#allocation3 + $0x127] sm:$0xff]
    %v5541 = vld [vmem:[#allocation3 + $0x13f] sm:$0xff]
    %v5542 = vld [vmem:[#allocation3 + $0x157] sm:$0xff]
    %v5543 = vld [vmem:[#allocation3 + $0x16f] sm:$0xff]
    %v5544 = vld [vmem:[#allocation3 + $0x187] sm:$0xff]
    %v5545 = vld [vmem:[#allocation3 + $0x19f] sm:$0xff]
    %v5546 = vpack.c.bf16 %v5531, %v5530
    %v5547 = vpack.c.bf16 %v5533, %v5532
    %v5548 = vpack.c.bf16 %v5535, %v5534
    %v5549 = vpack.c.bf16 %v5537, %v5536
    %v5550 = vpack.c.bf16 %v5539, %v5538
    %v5551 = vpack.c.bf16 %v5541, %v5540
    %v5552 = vpack.c.bf16 %v5543, %v5542
    %v5553 = vpack.c.bf16 %v5545, %v5544
    %v5554 = vld [vmem:[#allocation8] sm:$0xf]
    %v5555 = vld [vmem:[#allocation8 + $0x4] sm:$0xf]
    %v5556 = vld [vmem:[#allocation8 + $0x8] sm:$0xf]
    %v5557 = vld [vmem:[#allocation8 + $0xc] sm:$0xf]
    %v5558 = vld [vmem:[#allocation3 + $0x8] sm:$0xff]
    %v5559 = vld [vmem:[#allocation3 + $0x20] sm:$0xff]
    %v5560 = vld [vmem:[#allocation3 + $0x38] sm:$0xff]
    %v5561 = vld [vmem:[#allocation3 + $0x50] sm:$0xff]
    %v5562 = vld [vmem:[#allocation3 + $0x68] sm:$0xff]
    %v5563 = vld [vmem:[#allocation3 + $0x80] sm:$0xff]
    %v5564 = vld [vmem:[#allocation3 + $0x98] sm:$0xff]
    %v5565 = vld [vmem:[#allocation3 + $0xb0] sm:$0xff]
    %v5566 = vld [vmem:[#allocation3 + $0xf8] sm:$0xff]
    %v5567 = vld [vmem:[#allocation3 + $0x110] sm:$0xff]
    %v5568 = vld [vmem:[#allocation3 + $0x128] sm:$0xff]
    %v5569 = vld [vmem:[#allocation3 + $0x140] sm:$0xff]
    %v5570 = vld [vmem:[#allocation3 + $0x158] sm:$0xff]
    %v5571 = vld [vmem:[#allocation3 + $0x170] sm:$0xff]
    %v5572 = vld [vmem:[#allocation3 + $0x188] sm:$0xff]
    %v5573 = vld [vmem:[#allocation3 + $0x1a0] sm:$0xff]
    %v5574 = vpack.c.bf16 %v5559, %v5558
    %v5575 = vpack.c.bf16 %v5561, %v5560
    %v5576 = vpack.c.bf16 %v5563, %v5562
    %v5577 = vpack.c.bf16 %v5565, %v5564
    %v5578 = vpack.c.bf16 %v5567, %v5566
    %v5579 = vpack.c.bf16 %v5569, %v5568
    %v5580 = vpack.c.bf16 %v5571, %v5570
    %v5581 = vpack.c.bf16 %v5573, %v5572
    %s5582 = scalar_lea.vmem [#allocation8], 16
    %v5583 = vld [vmem:[%s5582] sm:$0xf]
    %v5584 = vld [vmem:[%s5582 + $0x4] sm:$0xf]
    %v5585 = vld [vmem:[%s5582 + $0x8] sm:$0xf]
    %v5586 = vld [vmem:[%s5582 + $0xc] sm:$0xf]
    %v5591 = vunpack.c.l.b16 %v5583
    %v5592 = vunpack.c.l.b16 %v5584
    %v5593 = vunpack.c.l.b16 %v5585
    %v5594 = vunpack.c.l.b16 %v5586
    %v5595 = vpack.c.b16 %v5592, %v5591
    %v5596 = vpack.c.b16 %v5594, %v5593
    %v5600 = vsel %vm5451, %v5574, 0
    %v5603 = vsel %vm5451, %v5575, 0
    %v5606 = vsel %vm5451, %v5576, 0
    %v5609 = vsel %vm5451, %v5577, 0
    %v5612 = vsel %vm5451, %v5578, 0
    %v5615 = vsel %vm5451, %v5579, 0
    %v5618 = vsel %vm5451, %v5580, 0
    %v5621 = vsel %vm5451, %v5581, 0
    %5623 = vmatpush.bf16.msra.mxu0 0
    %5624 = vmatpush.bf16.msra.mxu0 0
    %5625 = vmatpush.bf16.msra.mxu0 0
    %5626 = vmatpush.bf16.msra.mxu0 0
    %5627 = vmatpush.bf16.msra.mxu0 0
    %5628 = vmatpush.bf16.msra.mxu0 0
    %5629 = vmatpush.bf16.msra.mxu0 %v5596
    %5630 = vmatpush.bf16.msra.mxu0 %v5595
    %5631 = vmatmul.bf16.gmra.mxu0 %v5600
    %v5632 = vpop.f32.mrf.mxu0
    %v5633 = vadd.f32 0.0, %v5632
    %v5634 = vpop.f32.mrf.mxu0
    %v5635 = vadd.f32 0.0, %v5634
    %5636 = vmatmul.bf16.gmra.mxu0 %v5603
    %v5637 = vpop.f32.mrf.mxu0
    %v5638 = vadd.f32 0.0, %v5637
    %v5639 = vpop.f32.mrf.mxu0
    %v5640 = vadd.f32 0.0, %v5639
    %5641 = vmatmul.bf16.gmra.mxu0 %v5606
    %v5642 = vpop.f32.mrf.mxu0
    %v5643 = vadd.f32 0.0, %v5642
    %v5644 = vpop.f32.mrf.mxu0
    %v5645 = vadd.f32 0.0, %v5644
    %5646 = vmatmul.bf16.gmra.mxu0 %v5609
    %v5647 = vpop.f32.mrf.mxu0
    %v5648 = vadd.f32 0.0, %v5647
    %v5649 = vpop.f32.mrf.mxu0
    %v5650 = vadd.f32 0.0, %v5649
    %5651 = vmatmul.bf16.gmra.mxu0 %v5612
    %v5652 = vpop.f32.mrf.mxu0
    %v5653 = vadd.f32 0.0, %v5652
    %v5654 = vpop.f32.mrf.mxu0
    %v5655 = vadd.f32 0.0, %v5654
    %5656 = vmatmul.bf16.gmra.mxu0 %v5615
    %v5657 = vpop.f32.mrf.mxu0
    %v5658 = vadd.f32 0.0, %v5657
    %v5659 = vpop.f32.mrf.mxu0
    %v5660 = vadd.f32 0.0, %v5659
    %5661 = vmatmul.bf16.gmra.mxu0 %v5618
    %v5662 = vpop.f32.mrf.mxu0
    %v5663 = vadd.f32 0.0, %v5662
    %v5664 = vpop.f32.mrf.mxu0
    %v5665 = vadd.f32 0.0, %v5664
    %5666 = vmatmul.bf16.gmra.mxu0 %v5621
    %v5667 = vpop.f32.mrf.mxu0
    %v5668 = vadd.f32 0.0, %v5667
    %v5669 = vpop.f32.mrf.mxu0
    %v5670 = vadd.f32 0.0, %v5669
    %5671 = vdwg.mxu0
    %v5676 = vunpack.c.l.b16 %v5554
    %v5677 = vunpack.c.l.b16 %v5555
    %v5678 = vunpack.c.l.b16 %v5556
    %v5679 = vunpack.c.l.b16 %v5557
    %v5680 = vpack.c.b16 %v5677, %v5676
    %v5681 = vpack.c.b16 %v5679, %v5678
    %v5685 = vsel %vm5451, %v5546, 0
    %v5688 = vsel %vm5451, %v5547, 0
    %v5691 = vsel %vm5451, %v5548, 0
    %v5694 = vsel %vm5451, %v5549, 0
    %v5697 = vsel %vm5451, %v5550, 0
    %v5700 = vsel %vm5451, %v5551, 0
    %v5703 = vsel %vm5451, %v5552, 0
    %v5706 = vsel %vm5451, %v5553, 0
    %5708 = vmatpush.bf16.msra.mxu0 0
    %5709 = vmatpush.bf16.msra.mxu0 0
    %5710 = vmatpush.bf16.msra.mxu0 0
    %5711 = vmatpush.bf16.msra.mxu0 0
    %5712 = vmatpush.bf16.msra.mxu0 0
    %5713 = vmatpush.bf16.msra.mxu0 0
    %5714 = vmatpush.bf16.msra.mxu0 %v5681
    %5715 = vmatpush.bf16.msra.mxu0 %v5680
    %5716 = vmatmul.bf16.gmra.mxu0 %v5685
    %v5717 = vpop.f32.mrf.mxu0
    %v5718 = vadd.f32 %v5633, %v5717
    %v5719 = vpop.f32.mrf.mxu0
    %v5720 = vadd.f32 %v5635, %v5719
    %5721 = vmatmul.bf16.gmra.mxu0 %v5688
    %v5722 = vpop.f32.mrf.mxu0
    %v5723 = vadd.f32 %v5638, %v5722
    %v5724 = vpop.f32.mrf.mxu0
    %v5725 = vadd.f32 %v5640, %v5724
    %5726 = vmatmul.bf16.gmra.mxu0 %v5691
    %v5727 = vpop.f32.mrf.mxu0
    %v5728 = vadd.f32 %v5643, %v5727
    %v5729 = vpop.f32.mrf.mxu0
    %v5730 = vadd.f32 %v5645, %v5729
    %5731 = vmatmul.bf16.gmra.mxu0 %v5694
    %v5732 = vpop.f32.mrf.mxu0
    %v5733 = vadd.f32 %v5648, %v5732
    %v5734 = vpop.f32.mrf.mxu0
    %v5735 = vadd.f32 %v5650, %v5734
    %5736 = vmatmul.bf16.gmra.mxu0 %v5697
    %v5737 = vpop.f32.mrf.mxu0
    %v5738 = vadd.f32 %v5653, %v5737
    %v5739 = vpop.f32.mrf.mxu0
    %v5740 = vadd.f32 %v5655, %v5739
    %5741 = vmatmul.bf16.gmra.mxu0 %v5700
    %v5742 = vpop.f32.mrf.mxu0
    %v5743 = vadd.f32 %v5658, %v5742
    %v5744 = vpop.f32.mrf.mxu0
    %v5745 = vadd.f32 %v5660, %v5744
    %5746 = vmatmul.bf16.gmra.mxu0 %v5703
    %v5747 = vpop.f32.mrf.mxu0
    %v5748 = vadd.f32 %v5663, %v5747
    %v5749 = vpop.f32.mrf.mxu0
    %v5750 = vadd.f32 %v5665, %v5749
    %5751 = vmatmul.bf16.gmra.mxu0 %v5706
    %v5752 = vpop.f32.mrf.mxu0
    %v5753 = vadd.f32 %v5668, %v5752
    %v5754 = vpop.f32.mrf.mxu0
    %v5755 = vadd.f32 %v5670, %v5754
    %5756 = vdwg.mxu0
    %v5757 = vld [vmem:[#allocation3 + $0x9] sm:$0xff]
    %v5758 = vld [vmem:[#allocation3 + $0x21] sm:$0xff]
    %v5759 = vld [vmem:[#allocation3 + $0x39] sm:$0xff]
    %v5760 = vld [vmem:[#allocation3 + $0x51] sm:$0xff]
    %v5761 = vld [vmem:[#allocation3 + $0x69] sm:$0xff]
    %v5762 = vld [vmem:[#allocation3 + $0x81] sm:$0xff]
    %v5763 = vld [vmem:[#allocation3 + $0x99] sm:$0xff]
    %v5764 = vld [vmem:[#allocation3 + $0xb1] sm:$0xff]
    %v5765 = vld [vmem:[#allocation3 + $0xf9] sm:$0xff]
    %v5766 = vld [vmem:[#allocation3 + $0x111] sm:$0xff]
    %v5767 = vld [vmem:[#allocation3 + $0x129] sm:$0xff]
    %v5768 = vld [vmem:[#allocation3 + $0x141] sm:$0xff]
    %v5769 = vld [vmem:[#allocation3 + $0x159] sm:$0xff]
    %v5770 = vld [vmem:[#allocation3 + $0x171] sm:$0xff]
    %v5771 = vld [vmem:[#allocation3 + $0x189] sm:$0xff]
    %v5772 = vld [vmem:[#allocation3 + $0x1a1] sm:$0xff]
    %v5773 = vpack.c.bf16 %v5758, %v5757
    %v5774 = vpack.c.bf16 %v5760, %v5759
    %v5775 = vpack.c.bf16 %v5762, %v5761
    %v5776 = vpack.c.bf16 %v5764, %v5763
    %v5777 = vpack.c.bf16 %v5766, %v5765
    %v5778 = vpack.c.bf16 %v5768, %v5767
    %v5779 = vpack.c.bf16 %v5770, %v5769
    %v5780 = vpack.c.bf16 %v5772, %v5771
    %s5781 = scalar_lea.vmem [#allocation8], 32
    %v5782 = vld [vmem:[%s5781] sm:$0xf]
    %v5783 = vld [vmem:[%s5781 + $0x4] sm:$0xf]
    %v5784 = vld [vmem:[%s5781 + $0x8] sm:$0xf]
    %v5785 = vld [vmem:[%s5781 + $0xc] sm:$0xf]
    %v5790 = vunpack.c.l.b16 %v5782
    %v5791 = vunpack.c.l.b16 %v5783
    %v5792 = vunpack.c.l.b16 %v5784
    %v5793 = vunpack.c.l.b16 %v5785
    %v5794 = vpack.c.b16 %v5791, %v5790
    %v5795 = vpack.c.b16 %v5793, %v5792
    %v5799 = vsel %vm5451, %v5773, 0
    %v5802 = vsel %vm5451, %v5774, 0
    %v5805 = vsel %vm5451, %v5775, 0
    %v5808 = vsel %vm5451, %v5776, 0
    %v5811 = vsel %vm5451, %v5777, 0
    %v5814 = vsel %vm5451, %v5778, 0
    %v5817 = vsel %vm5451, %v5779, 0
    %v5820 = vsel %vm5451, %v5780, 0
    %5822 = vmatpush.bf16.msra.mxu0 0
    %5823 = vmatpush.bf16.msra.mxu0 0
    %5824 = vmatpush.bf16.msra.mxu0 0
    %5825 = vmatpush.bf16.msra.mxu0 0
    %5826 = vmatpush.bf16.msra.mxu0 0
    %5827 = vmatpush.bf16.msra.mxu0 0
    %5828 = vmatpush.bf16.msra.mxu0 %v5795
    %5829 = vmatpush.bf16.msra.mxu0 %v5794
    %5830 = vmatmul.bf16.gmra.mxu0 %v5799
    %v5831 = vpop.f32.mrf.mxu0
    %v5832 = vadd.f32 0.0, %v5831
    %v5833 = vpop.f32.mrf.mxu0
    %v5834 = vadd.f32 0.0, %v5833
    %5835 = vmatmul.bf16.gmra.mxu0 %v5802
    %v5836 = vpop.f32.mrf.mxu0
    %v5837 = vadd.f32 0.0, %v5836
    %v5838 = vpop.f32.mrf.mxu0
    %v5839 = vadd.f32 0.0, %v5838
    %5840 = vmatmul.bf16.gmra.mxu0 %v5805
    %v5841 = vpop.f32.mrf.mxu0
    %v5842 = vadd.f32 0.0, %v5841
    %v5843 = vpop.f32.mrf.mxu0
    %v5844 = vadd.f32 0.0, %v5843
    %5845 = vmatmul.bf16.gmra.mxu0 %v5808
    %v5846 = vpop.f32.mrf.mxu0
    %v5847 = vadd.f32 0.0, %v5846
    %v5848 = vpop.f32.mrf.mxu0
    %v5849 = vadd.f32 0.0, %v5848
    %5850 = vmatmul.bf16.gmra.mxu0 %v5811
    %v5851 = vpop.f32.mrf.mxu0
    %v5852 = vadd.f32 0.0, %v5851
    %v5853 = vpop.f32.mrf.mxu0
    %v5854 = vadd.f32 0.0, %v5853
    %5855 = vmatmul.bf16.gmra.mxu0 %v5814
    %v5856 = vpop.f32.mrf.mxu0
    %v5857 = vadd.f32 0.0, %v5856
    %v5858 = vpop.f32.mrf.mxu0
    %v5859 = vadd.f32 0.0, %v5858
    %5860 = vmatmul.bf16.gmra.mxu0 %v5817
    %v5861 = vpop.f32.mrf.mxu0
    %v5862 = vadd.f32 0.0, %v5861
    %v5863 = vpop.f32.mrf.mxu0
    %v5864 = vadd.f32 0.0, %v5863
    %5865 = vmatmul.bf16.gmra.mxu0 %v5820
    %v5866 = vpop.f32.mrf.mxu0
    %v5867 = vadd.f32 0.0, %v5866
    %v5868 = vpop.f32.mrf.mxu0
    %v5869 = vadd.f32 0.0, %v5868
    %5870 = vdwg.mxu0
    %v5871 = vadd.f32 %v5718, %v5832
    %v5872 = vadd.f32 %v5720, %v5834
    %v5873 = vadd.f32 %v5723, %v5837
    %v5874 = vadd.f32 %v5725, %v5839
    %v5875 = vadd.f32 %v5728, %v5842
    %v5876 = vadd.f32 %v5730, %v5844
    %v5877 = vadd.f32 %v5733, %v5847
    %v5878 = vadd.f32 %v5735, %v5849
    %v5879 = vadd.f32 %v5738, %v5852
    %v5880 = vadd.f32 %v5740, %v5854
    %v5881 = vadd.f32 %v5743, %v5857
    %v5882 = vadd.f32 %v5745, %v5859
    %v5883 = vadd.f32 %v5748, %v5862
    %v5884 = vadd.f32 %v5750, %v5864
    %v5885 = vadd.f32 %v5753, %v5867
    %v5886 = vadd.f32 %v5755, %v5869
    %v5887 = vld [vmem:[%s5513 + $0x7] sm:$0xff]
    %v5888 = vld [vmem:[%s5513 + $0x1f] sm:$0xff]
    %v5889 = vld [vmem:[%s5513 + $0x37] sm:$0xff]
    %v5890 = vld [vmem:[%s5513 + $0x4f] sm:$0xff]
    %v5891 = vld [vmem:[%s5513 + $0x67] sm:$0xff]
    %v5892 = vld [vmem:[%s5513 + $0x7f] sm:$0xff]
    %v5893 = vld [vmem:[%s5513 + $0x97] sm:$0xff]
    %v5894 = vld [vmem:[%s5513 + $0xaf] sm:$0xff]
    %v5895 = vld [vmem:[%s5513 + $0xf7] sm:$0xff]
    %v5896 = vld [vmem:[%s5513 + $0x10f] sm:$0xff]
    %v5897 = vld [vmem:[%s5513 + $0x127] sm:$0xff]
    %v5898 = vld [vmem:[%s5513 + $0x13f] sm:$0xff]
    %v5899 = vld [vmem:[%s5513 + $0x157] sm:$0xff]
    %v5900 = vld [vmem:[%s5513 + $0x16f] sm:$0xff]
    %v5901 = vld [vmem:[%s5513 + $0x187] sm:$0xff]
    %v5902 = vld [vmem:[%s5513 + $0x19f] sm:$0xff]
    %v5903 = vpack.c.bf16 %v5888, %v5887
    %v5904 = vpack.c.bf16 %v5890, %v5889
    %v5905 = vpack.c.bf16 %v5892, %v5891
    %v5906 = vpack.c.bf16 %v5894, %v5893
    %v5907 = vpack.c.bf16 %v5896, %v5895
    %v5908 = vpack.c.bf16 %v5898, %v5897
    %v5909 = vpack.c.bf16 %v5900, %v5899
    %v5910 = vpack.c.bf16 %v5902, %v5901
    %s5911 = scalar_lea.vmem [#allocation8], 48
    %v5912 = vld [vmem:[%s5911] sm:$0xf]
    %v5913 = vld [vmem:[%s5911 + $0x4] sm:$0xf]
    %v5914 = vld [vmem:[%s5911 + $0x8] sm:$0xf]
    %v5915 = vld [vmem:[%s5911 + $0xc] sm:$0xf]
    %v5920 = vunpack.c.l.b16 %v5912
    %v5921 = vunpack.c.l.b16 %v5913
    %v5922 = vunpack.c.l.b16 %v5914
    %v5923 = vunpack.c.l.b16 %v5915
    %v5924 = vpack.c.b16 %v5921, %v5920
    %v5925 = vpack.c.b16 %v5923, %v5922
    %v5929 = vsel %vm5451, %v5903, 0
    %v5932 = vsel %vm5451, %v5904, 0
    %v5935 = vsel %vm5451, %v5905, 0
    %v5938 = vsel %vm5451, %v5906, 0
    %v5941 = vsel %vm5451, %v5907, 0
    %v5944 = vsel %vm5451, %v5908, 0
    %v5947 = vsel %vm5451, %v5909, 0
    %v5950 = vsel %vm5451, %v5910, 0
    %5952 = vmatpush.bf16.msra.mxu0 0
    %5953 = vmatpush.bf16.msra.mxu0 0
    %5954 = vmatpush.bf16.msra.mxu0 0
    %5955 = vmatpush.bf16.msra.mxu0 0
    %5956 = vmatpush.bf16.msra.mxu0 0
    %5957 = vmatpush.bf16.msra.mxu0 0
    %5958 = vmatpush.bf16.msra.mxu0 %v5925
    %5959 = vmatpush.bf16.msra.mxu0 %v5924
    %5960 = vmatmul.bf16.gmra.mxu0 %v5929
    %v5961 = vpop.f32.mrf.mxu0
    %v5962 = vadd.f32 0.0, %v5961
    %v5963 = vpop.f32.mrf.mxu0
    %v5964 = vadd.f32 0.0, %v5963
    %5965 = vmatmul.bf16.gmra.mxu0 %v5932
    %v5966 = vpop.f32.mrf.mxu0
    %v5967 = vadd.f32 0.0, %v5966
    %v5968 = vpop.f32.mrf.mxu0
    %v5969 = vadd.f32 0.0, %v5968
    %5970 = vmatmul.bf16.gmra.mxu0 %v5935
    %v5971 = vpop.f32.mrf.mxu0
    %v5972 = vadd.f32 0.0, %v5971
    %v5973 = vpop.f32.mrf.mxu0
    %v5974 = vadd.f32 0.0, %v5973
    %5975 = vmatmul.bf16.gmra.mxu0 %v5938
    %v5976 = vpop.f32.mrf.mxu0
    %v5977 = vadd.f32 0.0, %v5976
    %v5978 = vpop.f32.mrf.mxu0
    %v5979 = vadd.f32 0.0, %v5978
    %5980 = vmatmul.bf16.gmra.mxu0 %v5941
    %v5981 = vpop.f32.mrf.mxu0
    %v5982 = vadd.f32 0.0, %v5981
    %v5983 = vpop.f32.mrf.mxu0
    %v5984 = vadd.f32 0.0, %v5983
    %5985 = vmatmul.bf16.gmra.mxu0 %v5944
    %v5986 = vpop.f32.mrf.mxu0
    %v5987 = vadd.f32 0.0, %v5986
    %v5988 = vpop.f32.mrf.mxu0
    %v5989 = vadd.f32 0.0, %v5988
    %5990 = vmatmul.bf16.gmra.mxu0 %v5947
    %v5991 = vpop.f32.mrf.mxu0
    %v5992 = vadd.f32 0.0, %v5991
    %v5993 = vpop.f32.mrf.mxu0
    %v5994 = vadd.f32 0.0, %v5993
    %5995 = vmatmul.bf16.gmra.mxu0 %v5950
    %v5996 = vpop.f32.mrf.mxu0
    %v5997 = vadd.f32 0.0, %v5996
    %v5998 = vpop.f32.mrf.mxu0
    %v5999 = vadd.f32 0.0, %v5998
    %6000 = vdwg.mxu0
    %v6001 = vadd.f32 %v5871, %v5962
    %v6002 = vadd.f32 %v5872, %v5964
    %v6003 = vadd.f32 %v5873, %v5967
    %v6004 = vadd.f32 %v5874, %v5969
    %v6005 = vadd.f32 %v5875, %v5972
    %v6006 = vadd.f32 %v5876, %v5974
    %v6007 = vadd.f32 %v5877, %v5977
    %v6008 = vadd.f32 %v5878, %v5979
    %v6009 = vadd.f32 %v5879, %v5982
    %v6010 = vadd.f32 %v5880, %v5984
    %v6011 = vadd.f32 %v5881, %v5987
    %v6012 = vadd.f32 %v5882, %v5989
    %v6013 = vadd.f32 %v5883, %v5992
    %v6014 = vadd.f32 %v5884, %v5994
    %v6015 = vadd.f32 %v5885, %v5997
    %v6016 = vadd.f32 %v5886, %v5999
    %v6017 = vld [vmem:[%s5513 + $0x8] sm:$0xff]
    %v6018 = vld [vmem:[%s5513 + $0x20] sm:$0xff]
    %v6019 = vld [vmem:[%s5513 + $0x38] sm:$0xff]
    %v6020 = vld [vmem:[%s5513 + $0x50] sm:$0xff]
    %v6021 = vld [vmem:[%s5513 + $0x68] sm:$0xff]
    %v6022 = vld [vmem:[%s5513 + $0x80] sm:$0xff]
    %v6023 = vld [vmem:[%s5513 + $0x98] sm:$0xff]
    %v6024 = vld [vmem:[%s5513 + $0xb0] sm:$0xff]
    %v6025 = vld [vmem:[%s5513 + $0xf8] sm:$0xff]
    %v6026 = vld [vmem:[%s5513 + $0x110] sm:$0xff]
    %v6027 = vld [vmem:[%s5513 + $0x128] sm:$0xff]
    %v6028 = vld [vmem:[%s5513 + $0x140] sm:$0xff]
    %v6029 = vld [vmem:[%s5513 + $0x158] sm:$0xff]
    %v6030 = vld [vmem:[%s5513 + $0x170] sm:$0xff]
    %v6031 = vld [vmem:[%s5513 + $0x188] sm:$0xff]
    %v6032 = vld [vmem:[%s5513 + $0x1a0] sm:$0xff]
    %v6033 = vpack.c.bf16 %v6018, %v6017
    %v6034 = vpack.c.bf16 %v6020, %v6019
    %v6035 = vpack.c.bf16 %v6022, %v6021
    %v6036 = vpack.c.bf16 %v6024, %v6023
    %v6037 = vpack.c.bf16 %v6026, %v6025
    %v6038 = vpack.c.bf16 %v6028, %v6027
    %v6039 = vpack.c.bf16 %v6030, %v6029
    %v6040 = vpack.c.bf16 %v6032, %v6031
    %s6041 = scalar_lea.vmem [#allocation8], 64
    %v6042 = vld [vmem:[%s6041] sm:$0xf]
    %v6043 = vld [vmem:[%s6041 + $0x4] sm:$0xf]
    %v6044 = vld [vmem:[%s6041 + $0x8] sm:$0xf]
    %v6045 = vld [vmem:[%s6041 + $0xc] sm:$0xf]
    %v6050 = vunpack.c.l.b16 %v6042
    %v6051 = vunpack.c.l.b16 %v6043
    %v6052 = vunpack.c.l.b16 %v6044
    %v6053 = vunpack.c.l.b16 %v6045
    %v6054 = vpack.c.b16 %v6051, %v6050
    %v6055 = vpack.c.b16 %v6053, %v6052
    %v6059 = vsel %vm5451, %v6033, 0
    %v6062 = vsel %vm5451, %v6034, 0
    %v6065 = vsel %vm5451, %v6035, 0
    %v6068 = vsel %vm5451, %v6036, 0
    %v6071 = vsel %vm5451, %v6037, 0
    %v6074 = vsel %vm5451, %v6038, 0
    %v6077 = vsel %vm5451, %v6039, 0
    %v6080 = vsel %vm5451, %v6040, 0
    %6082 = vmatpush.bf16.msra.mxu0 0
    %6083 = vmatpush.bf16.msra.mxu0 0
    %6084 = vmatpush.bf16.msra.mxu0 0
    %6085 = vmatpush.bf16.msra.mxu0 0
    %6086 = vmatpush.bf16.msra.mxu0 0
    %6087 = vmatpush.bf16.msra.mxu0 0
    %6088 = vmatpush.bf16.msra.mxu0 %v6055
    %6089 = vmatpush.bf16.msra.mxu0 %v6054
    %6090 = vmatmul.bf16.gmra.mxu0 %v6059
    %v6091 = vpop.f32.mrf.mxu0
    %v6092 = vadd.f32 0.0, %v6091
    %v6093 = vpop.f32.mrf.mxu0
    %v6094 = vadd.f32 0.0, %v6093
    %6095 = vmatmul.bf16.gmra.mxu0 %v6062
    %v6096 = vpop.f32.mrf.mxu0
    %v6097 = vadd.f32 0.0, %v6096
    %v6098 = vpop.f32.mrf.mxu0
    %v6099 = vadd.f32 0.0, %v6098
    %6100 = vmatmul.bf16.gmra.mxu0 %v6065
    %v6101 = vpop.f32.mrf.mxu0
    %v6102 = vadd.f32 0.0, %v6101
    %v6103 = vpop.f32.mrf.mxu0
    %v6104 = vadd.f32 0.0, %v6103
    %6105 = vmatmul.bf16.gmra.mxu0 %v6068
    %v6106 = vpop.f32.mrf.mxu0
    %v6107 = vadd.f32 0.0, %v6106
    %v6108 = vpop.f32.mrf.mxu0
    %v6109 = vadd.f32 0.0, %v6108
    %6110 = vmatmul.bf16.gmra.mxu0 %v6071
    %v6111 = vpop.f32.mrf.mxu0
    %v6112 = vadd.f32 0.0, %v6111
    %v6113 = vpop.f32.mrf.mxu0
    %v6114 = vadd.f32 0.0, %v6113
    %6115 = vmatmul.bf16.gmra.mxu0 %v6074
    %v6116 = vpop.f32.mrf.mxu0
    %v6117 = vadd.f32 0.0, %v6116
    %v6118 = vpop.f32.mrf.mxu0
    %v6119 = vadd.f32 0.0, %v6118
    %6120 = vmatmul.bf16.gmra.mxu0 %v6077
    %v6121 = vpop.f32.mrf.mxu0
    %v6122 = vadd.f32 0.0, %v6121
    %v6123 = vpop.f32.mrf.mxu0
    %v6124 = vadd.f32 0.0, %v6123
    %6125 = vmatmul.bf16.gmra.mxu0 %v6080
    %v6126 = vpop.f32.mrf.mxu0
    %v6127 = vadd.f32 0.0, %v6126
    %v6128 = vpop.f32.mrf.mxu0
    %v6129 = vadd.f32 0.0, %v6128
    %6130 = vdwg.mxu0
    %v6131 = vadd.f32 %v6001, %v6092
    %v6132 = vadd.f32 %v6002, %v6094
    %v6133 = vadd.f32 %v6003, %v6097
    %v6134 = vadd.f32 %v6004, %v6099
    %v6135 = vadd.f32 %v6005, %v6102
    %v6136 = vadd.f32 %v6006, %v6104
    %v6137 = vadd.f32 %v6007, %v6107
    %v6138 = vadd.f32 %v6008, %v6109
    %v6139 = vadd.f32 %v6009, %v6112
    %v6140 = vadd.f32 %v6010, %v6114
    %v6141 = vadd.f32 %v6011, %v6117
    %v6142 = vadd.f32 %v6012, %v6119
    %v6143 = vadd.f32 %v6013, %v6122
    %v6144 = vadd.f32 %v6014, %v6124
    %v6145 = vadd.f32 %v6015, %v6127
    %v6146 = vadd.f32 %v6016, %v6129
    %v6147 = vld [vmem:[%s5513 + $0x9] sm:$0xff]
    %v6148 = vld [vmem:[%s5513 + $0x21] sm:$0xff]
    %v6149 = vld [vmem:[%s5513 + $0x39] sm:$0xff]
    %v6150 = vld [vmem:[%s5513 + $0x51] sm:$0xff]
    %v6151 = vld [vmem:[%s5513 + $0x69] sm:$0xff]
    %v6152 = vld [vmem:[%s5513 + $0x81] sm:$0xff]
    %v6153 = vld [vmem:[%s5513 + $0x99] sm:$0xff]
    %v6154 = vld [vmem:[%s5513 + $0xb1] sm:$0xff]
    %v6155 = vld [vmem:[%s5513 + $0xf9] sm:$0xff]
    %v6156 = vld [vmem:[%s5513 + $0x111] sm:$0xff]
    %v6157 = vld [vmem:[%s5513 + $0x129] sm:$0xff]
    %v6158 = vld [vmem:[%s5513 + $0x141] sm:$0xff]
    %v6159 = vld [vmem:[%s5513 + $0x159] sm:$0xff]
    %v6160 = vld [vmem:[%s5513 + $0x171] sm:$0xff]
    %v6161 = vld [vmem:[%s5513 + $0x189] sm:$0xff]
    %v6162 = vld [vmem:[%s5513 + $0x1a1] sm:$0xff]
    %v6163 = vpack.c.bf16 %v6148, %v6147
    %v6164 = vpack.c.bf16 %v6150, %v6149
    %v6165 = vpack.c.bf16 %v6152, %v6151
    %v6166 = vpack.c.bf16 %v6154, %v6153
    %v6167 = vpack.c.bf16 %v6156, %v6155
    %v6168 = vpack.c.bf16 %v6158, %v6157
    %v6169 = vpack.c.bf16 %v6160, %v6159
    %v6170 = vpack.c.bf16 %v6162, %v6161
    %s6171 = scalar_lea.vmem [#allocation8], 80
    %v6172 = vld [vmem:[%s6171] sm:$0xf]
    %v6173 = vld [vmem:[%s6171 + $0x4] sm:$0xf]
    %v6174 = vld [vmem:[%s6171 + $0x8] sm:$0xf]
    %v6175 = vld [vmem:[%s6171 + $0xc] sm:$0xf]
    %v6180 = vunpack.c.l.b16 %v6172
    %v6181 = vunpack.c.l.b16 %v6173
    %v6182 = vunpack.c.l.b16 %v6174
    %v6183 = vunpack.c.l.b16 %v6175
    %v6184 = vpack.c.b16 %v6181, %v6180
    %v6185 = vpack.c.b16 %v6183, %v6182
    %v6189 = vsel %vm5451, %v6163, 0
    %v6192 = vsel %vm5451, %v6164, 0
    %v6195 = vsel %vm5451, %v6165, 0
    %v6198 = vsel %vm5451, %v6166, 0
    %v6201 = vsel %vm5451, %v6167, 0
    %v6204 = vsel %vm5451, %v6168, 0
    %v6207 = vsel %vm5451, %v6169, 0
    %v6210 = vsel %vm5451, %v6170, 0
    %6212 = vmatpush.bf16.msra.mxu0 0
    %6213 = vmatpush.bf16.msra.mxu0 0
    %6214 = vmatpush.bf16.msra.mxu0 0
    %6215 = vmatpush.bf16.msra.mxu0 0
    %6216 = vmatpush.bf16.msra.mxu0 0
    %6217 = vmatpush.bf16.msra.mxu0 0
    %6218 = vmatpush.bf16.msra.mxu0 %v6185
    %6219 = vmatpush.bf16.msra.mxu0 %v6184
    %6220 = vmatmul.bf16.gmra.mxu0 %v6189
    %v6221 = vpop.f32.mrf.mxu0
    %v6222 = vadd.f32 0.0, %v6221
    %v6223 = vpop.f32.mrf.mxu0
    %v6224 = vadd.f32 0.0, %v6223
    %6225 = vmatmul.bf16.gmra.mxu0 %v6192
    %v6226 = vpop.f32.mrf.mxu0
    %v6227 = vadd.f32 0.0, %v6226
    %v6228 = vpop.f32.mrf.mxu0
    %v6229 = vadd.f32 0.0, %v6228
    %6230 = vmatmul.bf16.gmra.mxu0 %v6195
    %v6231 = vpop.f32.mrf.mxu0
    %v6232 = vadd.f32 0.0, %v6231
    %v6233 = vpop.f32.mrf.mxu0
    %v6234 = vadd.f32 0.0, %v6233
    %6235 = vmatmul.bf16.gmra.mxu0 %v6198
    %v6236 = vpop.f32.mrf.mxu0
    %v6237 = vadd.f32 0.0, %v6236
    %v6238 = vpop.f32.mrf.mxu0
    %v6239 = vadd.f32 0.0, %v6238
    %6240 = vmatmul.bf16.gmra.mxu0 %v6201
    %v6241 = vpop.f32.mrf.mxu0
    %v6242 = vadd.f32 0.0, %v6241
    %v6243 = vpop.f32.mrf.mxu0
    %v6244 = vadd.f32 0.0, %v6243
    %6245 = vmatmul.bf16.gmra.mxu0 %v6204
    %v6246 = vpop.f32.mrf.mxu0
    %v6247 = vadd.f32 0.0, %v6246
    %v6248 = vpop.f32.mrf.mxu0
    %v6249 = vadd.f32 0.0, %v6248
    %6250 = vmatmul.bf16.gmra.mxu0 %v6207
    %v6251 = vpop.f32.mrf.mxu0
    %v6252 = vadd.f32 0.0, %v6251
    %v6253 = vpop.f32.mrf.mxu0
    %v6254 = vadd.f32 0.0, %v6253
    %6255 = vmatmul.bf16.gmra.mxu0 %v6210
    %v6256 = vpop.f32.mrf.mxu0
    %v6257 = vadd.f32 0.0, %v6256
    %v6258 = vpop.f32.mrf.mxu0
    %v6259 = vadd.f32 0.0, %v6258
    %6260 = vdwg.mxu0
    %v6261 = vadd.f32 %v6131, %v6222
    %v6262 = vadd.f32 %v6132, %v6224
    %v6263 = vadd.f32 %v6133, %v6227
    %v6264 = vadd.f32 %v6134, %v6229
    %v6265 = vadd.f32 %v6135, %v6232
    %v6266 = vadd.f32 %v6136, %v6234
    %v6267 = vadd.f32 %v6137, %v6237
    %v6268 = vadd.f32 %v6138, %v6239
    %v6269 = vadd.f32 %v6139, %v6242
    %v6270 = vadd.f32 %v6140, %v6244
    %v6271 = vadd.f32 %v6141, %v6247
    %v6272 = vadd.f32 %v6142, %v6249
    %v6273 = vadd.f32 %v6143, %v6252
    %v6274 = vadd.f32 %v6144, %v6254
    %v6275 = vadd.f32 %v6145, %v6257
    %v6276 = vadd.f32 %v6146, %v6259
    %s6277 = scalar_lea.vmem [#allocation3], 48
    %v6278 = vld [vmem:[%s6277 + $0x7] sm:$0xff]
    %v6279 = vld [vmem:[%s6277 + $0x1f] sm:$0xff]
    %v6280 = vld [vmem:[%s6277 + $0x37] sm:$0xff]
    %v6281 = vld [vmem:[%s6277 + $0x4f] sm:$0xff]
    %v6282 = vld [vmem:[%s6277 + $0x67] sm:$0xff]
    %v6283 = vld [vmem:[%s6277 + $0x7f] sm:$0xff]
    %v6284 = vld [vmem:[%s6277 + $0x97] sm:$0xff]
    %v6285 = vld [vmem:[%s6277 + $0xaf] sm:$0xff]
    %v6286 = vld [vmem:[%s6277 + $0xf7] sm:$0xff]
    %v6287 = vld [vmem:[%s6277 + $0x10f] sm:$0xff]
    %v6288 = vld [vmem:[%s6277 + $0x127] sm:$0xff]
    %v6289 = vld [vmem:[%s6277 + $0x13f] sm:$0xff]
    %v6290 = vld [vmem:[%s6277 + $0x157] sm:$0xff]
    %v6291 = vld [vmem:[%s6277 + $0x16f] sm:$0xff]
    %v6292 = vld [vmem:[%s6277 + $0x187] sm:$0xff]
    %v6293 = vld [vmem:[%s6277 + $0x19f] sm:$0xff]
    %v6294 = vpack.c.bf16 %v6279, %v6278
    %v6295 = vpack.c.bf16 %v6281, %v6280
    %v6296 = vpack.c.bf16 %v6283, %v6282
    %v6297 = vpack.c.bf16 %v6285, %v6284
    %v6298 = vpack.c.bf16 %v6287, %v6286
    %v6299 = vpack.c.bf16 %v6289, %v6288
    %v6300 = vpack.c.bf16 %v6291, %v6290
    %v6301 = vpack.c.bf16 %v6293, %v6292
    %s6302 = scalar_lea.vmem [#allocation8], 96
    %v6303 = vld [vmem:[%s6302] sm:$0xf]
    %v6304 = vld [vmem:[%s6302 + $0x4] sm:$0xf]
    %v6305 = vld [vmem:[%s6302 + $0x8] sm:$0xf]
    %v6306 = vld [vmem:[%s6302 + $0xc] sm:$0xf]
    %v6311 = vunpack.c.l.b16 %v6303
    %v6312 = vunpack.c.l.b16 %v6304
    %v6313 = vunpack.c.l.b16 %v6305
    %v6314 = vunpack.c.l.b16 %v6306
    %v6315 = vpack.c.b16 %v6312, %v6311
    %v6316 = vpack.c.b16 %v6314, %v6313
    %v6320 = vsel %vm5451, %v6294, 0
    %v6323 = vsel %vm5451, %v6295, 0
    %v6326 = vsel %vm5451, %v6296, 0
    %v6329 = vsel %vm5451, %v6297, 0
    %v6332 = vsel %vm5451, %v6298, 0
    %v6335 = vsel %vm5451, %v6299, 0
    %v6338 = vsel %vm5451, %v6300, 0
    %v6341 = vsel %vm5451, %v6301, 0
    %6343 = vmatpush.bf16.msra.mxu0 0
    %6344 = vmatpush.bf16.msra.mxu0 0
    %6345 = vmatpush.bf16.msra.mxu0 0
    %6346 = vmatpush.bf16.msra.mxu0 0
    %6347 = vmatpush.bf16.msra.mxu0 0
    %6348 = vmatpush.bf16.msra.mxu0 0
    %6349 = vmatpush.bf16.msra.mxu0 %v6316
    %6350 = vmatpush.bf16.msra.mxu0 %v6315
    %6351 = vmatmul.bf16.gmra.mxu0 %v6320
    %v6352 = vpop.f32.mrf.mxu0
    %v6353 = vadd.f32 0.0, %v6352
    %v6354 = vpop.f32.mrf.mxu0
    %v6355 = vadd.f32 0.0, %v6354
    %6356 = vmatmul.bf16.gmra.mxu0 %v6323
    %v6357 = vpop.f32.mrf.mxu0
    %v6358 = vadd.f32 0.0, %v6357
    %v6359 = vpop.f32.mrf.mxu0
    %v6360 = vadd.f32 0.0, %v6359
    %6361 = vmatmul.bf16.gmra.mxu0 %v6326
    %v6362 = vpop.f32.mrf.mxu0
    %v6363 = vadd.f32 0.0, %v6362
    %v6364 = vpop.f32.mrf.mxu0
    %v6365 = vadd.f32 0.0, %v6364
    %6366 = vmatmul.bf16.gmra.mxu0 %v6329
    %v6367 = vpop.f32.mrf.mxu0
    %v6368 = vadd.f32 0.0, %v6367
    %v6369 = vpop.f32.mrf.mxu0
    %v6370 = vadd.f32 0.0, %v6369
    %6371 = vmatmul.bf16.gmra.mxu0 %v6332
    %v6372 = vpop.f32.mrf.mxu0
    %v6373 = vadd.f32 0.0, %v6372
    %v6374 = vpop.f32.mrf.mxu0
    %v6375 = vadd.f32 0.0, %v6374
    %6376 = vmatmul.bf16.gmra.mxu0 %v6335
    %v6377 = vpop.f32.mrf.mxu0
    %v6378 = vadd.f32 0.0, %v6377
    %v6379 = vpop.f32.mrf.mxu0
    %v6380 = vadd.f32 0.0, %v6379
    %6381 = vmatmul.bf16.gmra.mxu0 %v6338
    %v6382 = vpop.f32.mrf.mxu0
    %v6383 = vadd.f32 0.0, %v6382
    %v6384 = vpop.f32.mrf.mxu0
    %v6385 = vadd.f32 0.0, %v6384
    %6386 = vmatmul.bf16.gmra.mxu0 %v6341
    %v6387 = vpop.f32.mrf.mxu0
    %v6388 = vadd.f32 0.0, %v6387
    %v6389 = vpop.f32.mrf.mxu0
    %v6390 = vadd.f32 0.0, %v6389
    %6391 = vdwg.mxu0
    %v6392 = vadd.f32 %v6261, %v6353
    %v6393 = vadd.f32 %v6262, %v6355
    %v6394 = vadd.f32 %v6263, %v6358
    %v6395 = vadd.f32 %v6264, %v6360
    %v6396 = vadd.f32 %v6265, %v6363
    %v6397 = vadd.f32 %v6266, %v6365
    %v6398 = vadd.f32 %v6267, %v6368
    %v6399 = vadd.f32 %v6268, %v6370
    %v6400 = vadd.f32 %v6269, %v6373
    %v6401 = vadd.f32 %v6270, %v6375
    %v6402 = vadd.f32 %v6271, %v6378
    %v6403 = vadd.f32 %v6272, %v6380
    %v6404 = vadd.f32 %v6273, %v6383
    %v6405 = vadd.f32 %v6274, %v6385
    %v6406 = vadd.f32 %v6275, %v6388
    %v6407 = vadd.f32 %v6276, %v6390
    %v6408 = vld [vmem:[%s6277 + $0x8] sm:$0xff]
    %v6409 = vld [vmem:[%s6277 + $0x20] sm:$0xff]
    %v6410 = vld [vmem:[%s6277 + $0x38] sm:$0xff]
    %v6411 = vld [vmem:[%s6277 + $0x50] sm:$0xff]
    %v6412 = vld [vmem:[%s6277 + $0x68] sm:$0xff]
    %v6413 = vld [vmem:[%s6277 + $0x80] sm:$0xff]
    %v6414 = vld [vmem:[%s6277 + $0x98] sm:$0xff]
    %v6415 = vld [vmem:[%s6277 + $0xb0] sm:$0xff]
    %v6416 = vld [vmem:[%s6277 + $0xf8] sm:$0xff]
    %v6417 = vld [vmem:[%s6277 + $0x110] sm:$0xff]
    %v6418 = vld [vmem:[%s6277 + $0x128] sm:$0xff]
    %v6419 = vld [vmem:[%s6277 + $0x140] sm:$0xff]
    %v6420 = vld [vmem:[%s6277 + $0x158] sm:$0xff]
    %v6421 = vld [vmem:[%s6277 + $0x170] sm:$0xff]
    %v6422 = vld [vmem:[%s6277 + $0x188] sm:$0xff]
    %v6423 = vld [vmem:[%s6277 + $0x1a0] sm:$0xff]
    %v6424 = vpack.c.bf16 %v6409, %v6408
    %v6425 = vpack.c.bf16 %v6411, %v6410
    %v6426 = vpack.c.bf16 %v6413, %v6412
    %v6427 = vpack.c.bf16 %v6415, %v6414
    %v6428 = vpack.c.bf16 %v6417, %v6416
    %v6429 = vpack.c.bf16 %v6419, %v6418
    %v6430 = vpack.c.bf16 %v6421, %v6420
    %v6431 = vpack.c.bf16 %v6423, %v6422
    %s6432 = scalar_lea.vmem [#allocation8], 112
    %v6433 = vld [vmem:[%s6432] sm:$0xf]
    %v6434 = vld [vmem:[%s6432 + $0x4] sm:$0xf]
    %v6435 = vld [vmem:[%s6432 + $0x8] sm:$0xf]
    %v6436 = vld [vmem:[%s6432 + $0xc] sm:$0xf]
    %v6441 = vunpack.c.l.b16 %v6433
    %v6442 = vunpack.c.l.b16 %v6434
    %v6443 = vunpack.c.l.b16 %v6435
    %v6444 = vunpack.c.l.b16 %v6436
    %v6445 = vpack.c.b16 %v6442, %v6441
    %v6446 = vpack.c.b16 %v6444, %v6443
    %v6450 = vsel %vm5451, %v6424, 0
    %v6453 = vsel %vm5451, %v6425, 0
    %v6456 = vsel %vm5451, %v6426, 0
    %v6459 = vsel %vm5451, %v6427, 0
    %v6462 = vsel %vm5451, %v6428, 0
    %v6465 = vsel %vm5451, %v6429, 0
    %v6468 = vsel %vm5451, %v6430, 0
    %v6471 = vsel %vm5451, %v6431, 0
    %6473 = vmatpush.bf16.msra.mxu0 0
    %6474 = vmatpush.bf16.msra.mxu0 0
    %6475 = vmatpush.bf16.msra.mxu0 0
    %6476 = vmatpush.bf16.msra.mxu0 0
    %6477 = vmatpush.bf16.msra.mxu0 0
    %6478 = vmatpush.bf16.msra.mxu0 0
    %6479 = vmatpush.bf16.msra.mxu0 %v6446
    %6480 = vmatpush.bf16.msra.mxu0 %v6445
    %6481 = vmatmul.bf16.gmra.mxu0 %v6450
    %v6482 = vpop.f32.mrf.mxu0
    %v6483 = vadd.f32 0.0, %v6482
    %v6484 = vpop.f32.mrf.mxu0
    %v6485 = vadd.f32 0.0, %v6484
    %6486 = vmatmul.bf16.gmra.mxu0 %v6453
    %v6487 = vpop.f32.mrf.mxu0
    %v6488 = vadd.f32 0.0, %v6487
    %v6489 = vpop.f32.mrf.mxu0
    %v6490 = vadd.f32 0.0, %v6489
    %6491 = vmatmul.bf16.gmra.mxu0 %v6456
    %v6492 = vpop.f32.mrf.mxu0
    %v6493 = vadd.f32 0.0, %v6492
    %v6494 = vpop.f32.mrf.mxu0
    %v6495 = vadd.f32 0.0, %v6494
    %6496 = vmatmul.bf16.gmra.mxu0 %v6459
    %v6497 = vpop.f32.mrf.mxu0
    %v6498 = vadd.f32 0.0, %v6497
    %v6499 = vpop.f32.mrf.mxu0
    %v6500 = vadd.f32 0.0, %v6499
    %6501 = vmatmul.bf16.gmra.mxu0 %v6462
    %v6502 = vpop.f32.mrf.mxu0
    %v6503 = vadd.f32 0.0, %v6502
    %v6504 = vpop.f32.mrf.mxu0
    %v6505 = vadd.f32 0.0, %v6504
    %6506 = vmatmul.bf16.gmra.mxu0 %v6465
    %v6507 = vpop.f32.mrf.mxu0
    %v6508 = vadd.f32 0.0, %v6507
    %v6509 = vpop.f32.mrf.mxu0
    %v6510 = vadd.f32 0.0, %v6509
    %6511 = vmatmul.bf16.gmra.mxu0 %v6468
    %v6512 = vpop.f32.mrf.mxu0
    %v6513 = vadd.f32 0.0, %v6512
    %v6514 = vpop.f32.mrf.mxu0
    %v6515 = vadd.f32 0.0, %v6514
    %6516 = vmatmul.bf16.gmra.mxu0 %v6471
    %v6517 = vpop.f32.mrf.mxu0
    %v6518 = vadd.f32 0.0, %v6517
    %v6519 = vpop.f32.mrf.mxu0
    %v6520 = vadd.f32 0.0, %v6519
    %6521 = vdwg.mxu0
    %v6522 = vadd.f32 %v6392, %v6483
    %v6523 = vadd.f32 %v6393, %v6485
    %v6524 = vadd.f32 %v6394, %v6488
    %v6525 = vadd.f32 %v6395, %v6490
    %v6526 = vadd.f32 %v6396, %v6493
    %v6527 = vadd.f32 %v6397, %v6495
    %v6528 = vadd.f32 %v6398, %v6498
    %v6529 = vadd.f32 %v6399, %v6500
    %v6530 = vadd.f32 %v6400, %v6503
    %v6531 = vadd.f32 %v6401, %v6505
    %v6532 = vadd.f32 %v6402, %v6508
    %v6533 = vadd.f32 %v6403, %v6510
    %v6534 = vadd.f32 %v6404, %v6513
    %v6535 = vadd.f32 %v6405, %v6515
    %v6536 = vadd.f32 %v6406, %v6518
    %v6537 = vadd.f32 %v6407, %v6520
    %v6538 = vld [vmem:[%s6277 + $0x9] sm:$0xff]
    %v6539 = vld [vmem:[%s6277 + $0x21] sm:$0xff]
    %v6540 = vld [vmem:[%s6277 + $0x39] sm:$0xff]
    %v6541 = vld [vmem:[%s6277 + $0x51] sm:$0xff]
    %v6542 = vld [vmem:[%s6277 + $0x69] sm:$0xff]
    %v6543 = vld [vmem:[%s6277 + $0x81] sm:$0xff]
    %v6544 = vld [vmem:[%s6277 + $0x99] sm:$0xff]
    %v6545 = vld [vmem:[%s6277 + $0xb1] sm:$0xff]
    %v6546 = vld [vmem:[%s6277 + $0xf9] sm:$0xff]
    %v6547 = vld [vmem:[%s6277 + $0x111] sm:$0xff]
    %v6548 = vld [vmem:[%s6277 + $0x129] sm:$0xff]
    %v6549 = vld [vmem:[%s6277 + $0x141] sm:$0xff]
    %v6550 = vld [vmem:[%s6277 + $0x159] sm:$0xff]
    %v6551 = vld [vmem:[%s6277 + $0x171] sm:$0xff]
    %v6552 = vld [vmem:[%s6277 + $0x189] sm:$0xff]
    %v6553 = vld [vmem:[%s6277 + $0x1a1] sm:$0xff]
    %v6554 = vpack.c.bf16 %v6539, %v6538
    %v6555 = vpack.c.bf16 %v6541, %v6540
    %v6556 = vpack.c.bf16 %v6543, %v6542
    %v6557 = vpack.c.bf16 %v6545, %v6544
    %v6558 = vpack.c.bf16 %v6547, %v6546
    %v6559 = vpack.c.bf16 %v6549, %v6548
    %v6560 = vpack.c.bf16 %v6551, %v6550
    %v6561 = vpack.c.bf16 %v6553, %v6552
    %s6562 = scalar_lea.vmem [#allocation8], 128
    %v6563 = vld [vmem:[%s6562] sm:$0xf]
    %v6564 = vld [vmem:[%s6562 + $0x4] sm:$0xf]
    %v6565 = vld [vmem:[%s6562 + $0x8] sm:$0xf]
    %v6566 = vld [vmem:[%s6562 + $0xc] sm:$0xf]
    %v6571 = vunpack.c.l.b16 %v6563
    %v6572 = vunpack.c.l.b16 %v6564
    %v6573 = vunpack.c.l.b16 %v6565
    %v6574 = vunpack.c.l.b16 %v6566
    %v6575 = vpack.c.b16 %v6572, %v6571
    %v6576 = vpack.c.b16 %v6574, %v6573
    %v6580 = vsel %vm5451, %v6554, 0
    %v6583 = vsel %vm5451, %v6555, 0
    %v6586 = vsel %vm5451, %v6556, 0
    %v6589 = vsel %vm5451, %v6557, 0
    %v6592 = vsel %vm5451, %v6558, 0
    %v6595 = vsel %vm5451, %v6559, 0
    %v6598 = vsel %vm5451, %v6560, 0
    %v6601 = vsel %vm5451, %v6561, 0
    %6603 = vmatpush.bf16.msra.mxu0 0
    %6604 = vmatpush.bf16.msra.mxu0 0
    %6605 = vmatpush.bf16.msra.mxu0 0
    %6606 = vmatpush.bf16.msra.mxu0 0
    %6607 = vmatpush.bf16.msra.mxu0 0
    %6608 = vmatpush.bf16.msra.mxu0 0
    %6609 = vmatpush.bf16.msra.mxu0 %v6576
    %6610 = vmatpush.bf16.msra.mxu0 %v6575
    %6611 = vmatmul.bf16.gmra.mxu0 %v6580
    %v6612 = vpop.f32.mrf.mxu0
    %v6613 = vadd.f32 0.0, %v6612
    %v6614 = vpop.f32.mrf.mxu0
    %v6615 = vadd.f32 0.0, %v6614
    %6616 = vmatmul.bf16.gmra.mxu0 %v6583
    %v6617 = vpop.f32.mrf.mxu0
    %v6618 = vadd.f32 0.0, %v6617
    %v6619 = vpop.f32.mrf.mxu0
    %v6620 = vadd.f32 0.0, %v6619
    %6621 = vmatmul.bf16.gmra.mxu0 %v6586
    %v6622 = vpop.f32.mrf.mxu0
    %v6623 = vadd.f32 0.0, %v6622
    %v6624 = vpop.f32.mrf.mxu0
    %v6625 = vadd.f32 0.0, %v6624
    %6626 = vmatmul.bf16.gmra.mxu0 %v6589
    %v6627 = vpop.f32.mrf.mxu0
    %v6628 = vadd.f32 0.0, %v6627
    %v6629 = vpop.f32.mrf.mxu0
    %v6630 = vadd.f32 0.0, %v6629
    %6631 = vmatmul.bf16.gmra.mxu0 %v6592
    %v6632 = vpop.f32.mrf.mxu0
    %v6633 = vadd.f32 0.0, %v6632
    %v6634 = vpop.f32.mrf.mxu0
    %v6635 = vadd.f32 0.0, %v6634
    %6636 = vmatmul.bf16.gmra.mxu0 %v6595
    %v6637 = vpop.f32.mrf.mxu0
    %v6638 = vadd.f32 0.0, %v6637
    %v6639 = vpop.f32.mrf.mxu0
    %v6640 = vadd.f32 0.0, %v6639
    %6641 = vmatmul.bf16.gmra.mxu0 %v6598
    %v6642 = vpop.f32.mrf.mxu0
    %v6643 = vadd.f32 0.0, %v6642
    %v6644 = vpop.f32.mrf.mxu0
    %v6645 = vadd.f32 0.0, %v6644
    %6646 = vmatmul.bf16.gmra.mxu0 %v6601
    %v6647 = vpop.f32.mrf.mxu0
    %v6648 = vadd.f32 0.0, %v6647
    %v6649 = vpop.f32.mrf.mxu0
    %v6650 = vadd.f32 0.0, %v6649
    %6651 = vdwg.mxu0
    %v6652 = vadd.f32 %v6522, %v6613
    %v6653 = vadd.f32 %v6523, %v6615
    %v6654 = vadd.f32 %v6524, %v6618
    %v6655 = vadd.f32 %v6525, %v6620
    %v6656 = vadd.f32 %v6526, %v6623
    %v6657 = vadd.f32 %v6527, %v6625
    %v6658 = vadd.f32 %v6528, %v6628
    %v6659 = vadd.f32 %v6529, %v6630
    %v6660 = vadd.f32 %v6530, %v6633
    %v6661 = vadd.f32 %v6531, %v6635
    %v6662 = vadd.f32 %v6532, %v6638
    %v6663 = vadd.f32 %v6533, %v6640
    %v6664 = vadd.f32 %v6534, %v6643
    %v6665 = vadd.f32 %v6535, %v6645
    %v6666 = vadd.f32 %v6536, %v6648
    %v6667 = vadd.f32 %v6537, %v6650
    %v6668 = vld [vmem:[#allocation9] sm:$0x1]
    %v6670 = vperm.slane %v6668, 0
    %v6672 = vadd.f32 %v6652, %v6670
    %v6673 = vadd.f32 %v6653, %v6670
    %v6674 = vadd.f32 %v6654, %v6670
    %v6675 = vadd.f32 %v6655, %v6670
    %v6676 = vadd.f32 %v6656, %v6670
    %v6677 = vadd.f32 %v6657, %v6670
    %v6678 = vadd.f32 %v6658, %v6670
    %v6679 = vadd.f32 %v6659, %v6670
    %v6680 = vadd.f32 %v6660, %v6670
    %v6681 = vadd.f32 %v6661, %v6670
    %v6682 = vadd.f32 %v6662, %v6670
    %v6683 = vadd.f32 %v6663, %v6670
    %v6684 = vadd.f32 %v6664, %v6670
    %v6685 = vadd.f32 %v6665, %v6670
    %v6686 = vadd.f32 %v6666, %v6670
    %v6687 = vadd.f32 %v6667, %v6670
    %6688 = vxpose.xlu0.b32.start [1/16] %v6672, 128
    %6689 = vxpose.xlu0.b32.cont [2/16] %v6673, 128
    %6690 = vxpose.xlu0.b32.cont [3/16] %v6674, 128
    %6691 = vxpose.xlu0.b32.cont [4/16] %v6675, 128
    %6692 = vxpose.xlu0.b32.cont [5/16] %v6676, 128
    %6693 = vxpose.xlu0.b32.cont [6/16] %v6677, 128
    %6694 = vxpose.xlu0.b32.cont [7/16] %v6678, 128
    %6695 = vxpose.xlu0.b32.cont [8/16] %v6679, 128
    %6696 = vxpose.xlu0.b32.cont [9/16] 0.0, 128
    %6697 = vxpose.xlu0.b32.cont [10/16] 0.0, 128
    %6698 = vxpose.xlu0.b32.cont [11/16] 0.0, 128
    %6699 = vxpose.xlu0.b32.cont [12/16] 0.0, 128
    %6700 = vxpose.xlu0.b32.cont [13/16] 0.0, 128
    %6701 = vxpose.xlu0.b32.cont [14/16] 0.0, 128
    %6702 = vxpose.xlu0.b32.cont [15/16] 0.0, 128
    %6703 = vxpose.xlu0.b32.end [16/16] 0.0, 128
    %v6704 = vpop.trf.xlu0
    %v6705 = vpop.trf.xlu0
    %v6706 = vpop.trf.xlu0
    %v6707 = vpop.trf.xlu0
    %v6708 = vpop.trf.xlu0
    %v6709 = vpop.trf.xlu0
    %v6710 = vpop.trf.xlu0
    %v6711 = vpop.trf.xlu0
    %v6712 = vpop.trf.xlu0
    %v6713 = vpop.trf.xlu0
    %v6714 = vpop.trf.xlu0
    %v6715 = vpop.trf.xlu0
    %v6716 = vpop.trf.xlu0
    %v6717 = vpop.trf.xlu0
    %v6718 = vpop.trf.xlu0
    %v6719 = vpop.trf.xlu0
    %v6721 = vsel %vm4054, %v6704, 0
    %v6724 = vsel %vm4054, %v6705, 0
    %v6727 = vsel %vm4054, %v6706, 0
    %v6730 = vsel %vm4054, %v6707, 0
    %6732 = vmatpush.msra.mxu0 0.0
    %6733 = vmatpush.msra.mxu0 0.0
    %6734 = vmatpush.msra.mxu0 0.0
    %6735 = vmatpush.msra.mxu0 0.0
    %6736 = vmatpush.msra.mxu0 0.0
    %6737 = vmatpush.msra.mxu0 0.0
    %6738 = vmatpush.msra.mxu0 0.0
    %6739 = vmatpush.msra.mxu0 0.0
    %6740 = vmatpush.msra.mxu0 %v6679
    %6741 = vmatpush.msra.mxu0 %v6678
    %6742 = vmatpush.msra.mxu0 %v6677
    %6743 = vmatpush.msra.mxu0 %v6676
    %6744 = vmatpush.msra.mxu0 %v6675
    %6745 = vmatpush.msra.mxu0 %v6674
    %6746 = vmatpush.msra.mxu0 %v6673
    %6747 = vmatpush.msra.mxu0 %v6672
    %6748 = vmatmul.f32.gmra.mxu0 %v6721
    %v6749 = vpop.f32.mrf.mxu0
    %v6750 = vadd.f32 0.0, %v6749
    %6751 = vmatmul.f32.gmra.mxu0 %v6724
    %v6752 = vpop.f32.mrf.mxu0
    %v6753 = vadd.f32 0.0, %v6752
    %6754 = vmatmul.f32.gmra.mxu0 %v6727
    %v6755 = vpop.f32.mrf.mxu0
    %v6756 = vadd.f32 0.0, %v6755
    %6757 = vmatmul.f32.gmra.mxu0 %v6730
    %v6758 = vpop.f32.mrf.mxu0
    %v6759 = vadd.f32 0.0, %v6758
    %6760 = vdwg.mxu0
    %v6761 = vmul.f32 %v6750, 0.015625
    %v6762 = vmul.f32 %v6753, 0.015625
    %v6763 = vmul.f32 %v6756, 0.015625
    %v6764 = vmul.f32 %v6759, 0.015625
    %6765 = vst.msk [vmem:[%s7] sm:$0xff] %vm5451, %v6761
    %6766 = vst.msk [vmem:[%s7 + $0x8] sm:$0xff] %vm5451, %v6762
    %6767 = vst.msk [vmem:[%s7 + $0x10] sm:$0xff] %vm5451, %v6763
    %6768 = vst.msk [vmem:[%s7 + $0x18] sm:$0xff] %vm5451, %v6764
    %6769 = vxpose.xlu0.b32.start [1/16] %v6680, 128
    %6770 = vxpose.xlu0.b32.cont [2/16] %v6681, 128
    %6771 = vxpose.xlu0.b32.cont [3/16] %v6682, 128
    %6772 = vxpose.xlu0.b32.cont [4/16] %v6683, 128
    %6773 = vxpose.xlu0.b32.cont [5/16] %v6684, 128
    %6774 = vxpose.xlu0.b32.cont [6/16] %v6685, 128
    %6775 = vxpose.xlu0.b32.cont [7/16] %v6686, 128
    %6776 = vxpose.xlu0.b32.cont [8/16] %v6687, 128
    %6777 = vxpose.xlu0.b32.cont [9/16] 0.0, 128
    %6778 = vxpose.xlu0.b32.cont [10/16] 0.0, 128
    %6779 = vxpose.xlu0.b32.cont [11/16] 0.0, 128
    %6780 = vxpose.xlu0.b32.cont [12/16] 0.0, 128
    %6781 = vxpose.xlu0.b32.cont [13/16] 0.0, 128
    %6782 = vxpose.xlu0.b32.cont [14/16] 0.0, 128
    %6783 = vxpose.xlu0.b32.cont [15/16] 0.0, 128
    %6784 = vxpose.xlu0.b32.end [16/16] 0.0, 128
    %v6785 = vpop.trf.xlu0
    %v6786 = vpop.trf.xlu0
    %v6787 = vpop.trf.xlu0
    %v6788 = vpop.trf.xlu0
    %v6789 = vpop.trf.xlu0
    %v6790 = vpop.trf.xlu0
    %v6791 = vpop.trf.xlu0
    %v6792 = vpop.trf.xlu0
    %v6793 = vpop.trf.xlu0
    %v6794 = vpop.trf.xlu0
    %v6795 = vpop.trf.xlu0
    %v6796 = vpop.trf.xlu0
    %v6797 = vpop.trf.xlu0
    %v6798 = vpop.trf.xlu0
    %v6799 = vpop.trf.xlu0
    %v6800 = vpop.trf.xlu0
    %v6802 = vsel %vm4054, %v6785, 0
    %v6805 = vsel %vm4054, %v6786, 0
    %v6808 = vsel %vm4054, %v6787, 0
    %v6811 = vsel %vm4054, %v6788, 0
    %6813 = vmatpush.msra.mxu0 0.0
    %6814 = vmatpush.msra.mxu0 0.0
    %6815 = vmatpush.msra.mxu0 0.0
    %6816 = vmatpush.msra.mxu0 0.0
    %6817 = vmatpush.msra.mxu0 0.0
    %6818 = vmatpush.msra.mxu0 0.0
    %6819 = vmatpush.msra.mxu0 0.0
    %6820 = vmatpush.msra.mxu0 0.0
    %6821 = vmatpush.msra.mxu0 %v6687
    %6822 = vmatpush.msra.mxu0 %v6686
    %6823 = vmatpush.msra.mxu0 %v6685
    %6824 = vmatpush.msra.mxu0 %v6684
    %6825 = vmatpush.msra.mxu0 %v6683
    %6826 = vmatpush.msra.mxu0 %v6682
    %6827 = vmatpush.msra.mxu0 %v6681
    %6828 = vmatpush.msra.mxu0 %v6680
    %6829 = vmatmul.f32.gmra.mxu0 %v6802
    %v6830 = vpop.f32.mrf.mxu0
    %v6831 = vadd.f32 0.0, %v6830
    %6832 = vmatmul.f32.gmra.mxu0 %v6805
    %v6833 = vpop.f32.mrf.mxu0
    %v6834 = vadd.f32 0.0, %v6833
    %6835 = vmatmul.f32.gmra.mxu0 %v6808
    %v6836 = vpop.f32.mrf.mxu0
    %v6837 = vadd.f32 0.0, %v6836
    %6838 = vmatmul.f32.gmra.mxu0 %v6811
    %v6839 = vpop.f32.mrf.mxu0
    %v6840 = vadd.f32 0.0, %v6839
    %6841 = vdwg.mxu0
    %v6842 = vmul.f32 %v6831, 0.015625
    %v6843 = vmul.f32 %v6834, 0.015625
    %v6844 = vmul.f32 %v6837, 0.015625
    %v6845 = vmul.f32 %v6840, 0.015625
    %s6846 = scalar_lea.vmem %s7, 32
    %6847 = vst.msk [vmem:[%s6846] sm:$0xff] %vm5451, %v6842
    %6848 = vst.msk [vmem:[%s6846 + $0x8] sm:$0xff] %vm5451, %v6843
    %6849 = vst.msk [vmem:[%s6846 + $0x10] sm:$0xff] %vm5451, %v6844
    %6850 = vst.msk [vmem:[%s6846 + $0x18] sm:$0xff] %vm5451, %v6845
    // Predicated region
    $region46: #{cnn_forward.2} parent=1 // pred_check
      _
    $region47: #{cnn_forward.2} parent=1 // pred_check_branch
      %6852 = sbr.rel (0) target = $region49
    $region48: #{cnn_forward.2} parent=1 // pred_region
      _
    $region49: #{cnn_forward.2} parent=1 // pred_fallthru
      _
    // Predicated region
    $region50: #{cnn_forward.2} parent=1 // pred_check
      _
    $region51: #{cnn_forward.2} parent=1 // pred_check_branch
      %6854 = sbr.rel (0) target = $region53
    $region52: #{cnn_forward.2} parent=1 // pred_region
      _
    $region53: #{cnn_forward.2} parent=1 // pred_fallthru
      _
    %6855 = vsyncpa [#allocation5], 1
    %6856 = vsyncpa [#allocation7], 1
    %6857 = vsyncpa [#allocation10], 1

</llo_original>
